<compile_context>
chip_gen: v6e
topology: v6e:2x2x1
jax: 0.10.0
libtpu: 0.0.40
codegen_flags: <defaults>
</compile_context>

<pallas_src>
import jax
import jax.numpy as jnp
from jax import lax
from jax.experimental import pallas as pl
from jax.experimental.pallas import tpu as pltpu

_EPS = 1e-5                     # PyTorch BatchNorm2d default
_K = 4                          # all transposed-conv kernels are 4x4
_VMEM_LIMIT = 32 * 1024 * 1024
_LAYER_STRIDE_PAD = ((1, 0), (2, 1), (2, 1), (2, 1), (2, 1))


# ----------------------------------------------------------------------------
# In-kernel building blocks
# ----------------------------------------------------------------------------
def _deconv(a_bf16, l_ref, r_ref):
    """ConvTranspose2d as sum_kh L_kh @ (X @ R_kh), f32 accumulation.

    a_bf16 : (N*H, W*Cin)  bf16 activation, rows=(n,h), cols=(w,ci)
    r_ref  : (4, W*Cin, OW*Cout) bf16   width-scatter * weights per kernel row
    l_ref  : (4, N*OH, N*H)      bf16   one-hot height scatter per kernel row
    """
    acc = None
    for kh in range(_K):
        t = jnp.dot(a_bf16, r_ref[kh], preferred_element_type=jnp.float32)
        t = jnp.dot(l_ref[kh], t.astype(jnp.bfloat16),
                    preferred_element_type=jnp.float32)
        acc = t if acc is None else acc + t
    return acc                                   # (N*OH, OW*Cout) f32


def _bn_relu(y, avg_ref, gb_ref, bb_ref):
    """Train-mode BatchNorm (batch stats, biased var) + affine + ReLU.

    avg_ref : (cols, cols) f32 with entry[(ow,c),(ow',c')] = (c==c')/OW, so a
              per-column row-mean times it gives the per-channel mean broadcast
              back to every (ow, c) column.
    gb_ref / bb_ref : (1, cols) f32 gamma / beta pre-broadcast over ow.
    """
    mean_b = jnp.dot(jnp.mean(y, axis=0, keepdims=True), avg_ref[...],
                     preferred_element_type=jnp.float32)
    d = y - mean_b
    var_b = jnp.dot(jnp.mean(d * d, axis=0, keepdims=True), avg_ref[...],
                    preferred_element_type=jnp.float32)
    scale_b = gb_ref[...] * lax.rsqrt(var_b + _EPS)
    return jnp.maximum(d * scale_b + bb_ref[...], 0.0)


def _generator_kernel(*refs):
    """Entire generator in one kernel; activations never leave VMEM."""
    x_ref, out_ref = refs[0], refs[-1]
    a = x_ref[...].astype(jnp.bfloat16)
    idx = 1
    for _ in range(4):                                   # ConvT + BN + ReLU
        l_ref, r_ref, avg_ref, gb_ref, bb_ref = refs[idx:idx + 5]
        idx += 5
        y = _deconv(a, l_ref, r_ref)
        a = _bn_relu(y, avg_ref, gb_ref, bb_ref).astype(jnp.bfloat16)
    l_ref, r_ref = refs[idx:idx + 2]                     # final ConvT + Tanh
    out_ref[...] = jnp.tanh(_deconv(a, l_ref, r_ref))


# ----------------------------------------------------------------------------
# One-time (init) precompute of the GEMM-form operands
# ----------------------------------------------------------------------------
def _build_height_scatter(n, h, oh, stride, padding, pad_in_to=None):
    """L[kh, n*OH+oh, n*H+h] = [oh == stride*h + kh - padding] (one-hot)."""
    kh = jnp.arange(_K)[:, None, None]
    ohi = jnp.arange(oh)[None, :, None]
    hi = jnp.arange(h)[None, None, :]
    eq = (ohi == stride * hi + kh - padding).astype(jnp.float32)     # (K,OH,H)
    eyen = jnp.eye(n, dtype=jnp.float32)
    L = (eq[:, None, :, None, :] * eyen[None, :, None, :, None]
         ).reshape(_K, n * oh, n * h)
    if pad_in_to is not None and pad_in_to > n * h:
        L = jnp.pad(L, ((0, 0), (0, 0), (0, pad_in_to - n * h)))
    return L.astype(jnp.bfloat16)


def _build_width_weight(w, W, ow, stride, padding):
    """R[kh, w*Cin+ci, ow*Cout+co] = w[ci,co,kh,kw] where kw = ow - s*w + p."""
    cin, cout, K, _ = w.shape
    kw = jnp.arange(ow)[None, :] - stride * jnp.arange(W)[:, None] + padding
    valid = ((kw >= 0) & (kw < K)).astype(w.dtype)                   # (W, OW)
    kw_c = jnp.clip(kw, 0, K - 1)
    wt = jnp.transpose(w, (2, 3, 0, 1))                              # (kh,kw,ci,co)
    g = wt[:, kw_c] * valid[None, :, :, None, None]                  # (K,W,OW,ci,co)
    R = jnp.transpose(g, (0, 1, 3, 2, 4)).reshape(K, W * cin, ow * cout)
    return R.astype(jnp.bfloat16)


def _build_channel_avg(cout, ow):
    """A[(ow,c),(ow',c')] = (c==c')/OW : per-channel average + broadcast."""
    return jnp.tile(jnp.eye(cout, dtype=jnp.float32), (ow, ow)) / ow


def init_params(key, nz, nz2):
    chans = [(nz * 2, nz2 * 8), (nz2 * 8, nz2 * 4), (nz2 * 4, nz2 * 2),
             (nz2 * 2, nz2), (nz2, 3)]
    params = {}
    for i, (cin, cout) in enumerate(chans):
        key, k = jax.random.split(key)
        params[f"w{i}"] = 0.02 * jax.random.normal(k, (cin, cout, _K, _K),
                                                   jnp.float32)
    key, k = jax.random.split(key)
    # Kept for interface parity with the PyTorch module; mathematically absorbed
    # by the batch-statistics BatchNorm that follows (BN(x + b) == BN(x)).
    params["b0"] = 0.02 * jax.random.normal(k, (nz2 * 8,), jnp.float32)
    for i, cout in enumerate([nz2 * 8, nz2 * 4, nz2 * 2, nz2]):
        params[f"gamma{i}"] = jnp.ones((cout,), jnp.float32)
        params[f"beta{i}"] = jnp.zeros((cout,), jnp.float32)
    return params


def build_kernel_operands(params, batch, h0=1, w0=1):
    """Runs once at init: all weight reshuffling hoisted out of the forward."""
    ops = []
    H, W = h0, w0
    for l in range(5):
        stride, padding = _LAYER_STRIDE_PAD[l]
        w = params[f"w{l}"]
        cout = w.shape[1]
        oh = (H - 1) * stride + _K - 2 * padding
        ow = (W - 1) * stride + _K - 2 * padding
        pad_in = max(8, batch * H) if l == 0 else None   # keep matmul dims >= 8
        ops.append(_build_height_scatter(batch, H, oh, stride, padding, pad_in))
        ops.append(_build_width_weight(w, W, ow, stride, padding))
        if l < 4:
            ops.append(_build_channel_avg(cout, ow))
            ops.append(jnp.tile(params[f"gamma{l}"].reshape(1, cout),
                                (1, ow)).astype(jnp.float32))
            ops.append(jnp.tile(params[f"beta{l}"].reshape(1, cout),
                                (1, ow)).astype(jnp.float32))
        H, W = oh, ow
    return tuple(ops)


# ----------------------------------------------------------------------------
# Forward
# ----------------------------------------------------------------------------
def model_forward(ops, x_nchw):
    # TODO(synk): eval-mode BN with running statistics not implemented; this
    # reproduces the forward pass of a freshly constructed module (train mode).
    N, cin, h0, w0 = x_nchw.shape
    x2d = jnp.transpose(x_nchw, (0, 2, 3, 1)).reshape(N * h0, w0 * cin)
    in_rows = ops[0].shape[2]                       # layer-0 row dim (>= 8)
    if in_rows > x2d.shape[0]:
        x2d = jnp.pad(x2d, ((0, in_rows - x2d.shape[0]), (0, 0)))

    out_rows = ops[-2].shape[1]                     # N * 64
    out_cols = ops[-1].shape[2]                     # 64 * 3  (lane-dense >=128)
    args = (x2d,) + tuple(ops)

    def _full_block(a):
        return pl.BlockSpec(a.shape, lambda i, _nd=a.ndim: (0,) * _nd)

    out2d = pl.pallas_call(
        _generator_kernel,
        out_shape=jax.ShapeDtypeStruct((out_rows, out_cols), jnp.float32),
        grid=(1,),
        in_specs=[_full_block(a) for a in args],
        out_specs=pl.BlockSpec((out_rows, out_cols), lambda i: (0, 0)),
        compiler_params=pltpu.CompilerParams(
            # TODO(synk): single fused kernel runs on one TensorCore; a v7x
            # dual-core split (grid over batch with two-pass BN stats) is not
            # implemented -- fusion dominates at these micro shapes.
            dimension_semantics=("arbitrary",),
            vmem_limit_bytes=_VMEM_LIMIT),
    )(*args)

    oh, ow = out_rows // N, out_cols // 3
    img = out2d.reshape(N, oh, ow, 3)
    return jnp.transpose(img, (0, 3, 1, 2))         # NHWC -> NCHW


if __name__ == "__main__":
    nz, nz2, batch = 4, 8, 2
    key = jax.random.PRNGKey(0)
    kp, kx = jax.random.split(key)
    params = init_params(kp, nz, nz2)
    ops = build_kernel_operands(params, batch)      # one-time precompute
    x = jax.random.normal(kx, (batch, nz * 2, 1, 1), jnp.float32)   # latent

    fwd = jax.jit(model_forward)
    out = jax.block_until_ready(fwd(ops, x))

    assert out.shape == (batch, 3, 64, 64), out.shape
    assert bool(jnp.all(jnp.isfinite(out)))
    assert bool(jnp.all(jnp.abs(out) <= 1.0 + 1e-6))   # tanh range
    print("KERNEL_OK")
</pallas_src>

<mosaic_0001>
module attributes {stable_mosaic.version = 11 : i64} {
  func.func @_generator_kernel(%arg0: i32, %arg1: memref<8x8xf32, #tpu.memory_space<vmem>>, %arg2: memref<4x8x8xbf16, #tpu.memory_space<vmem>>, %arg3: memref<4x8x256xbf16, #tpu.memory_space<vmem>>, %arg4: memref<256x256xf32, #tpu.memory_space<vmem>>, %arg5: memref<1x256xf32, #tpu.memory_space<vmem>>, %arg6: memref<1x256xf32, #tpu.memory_space<vmem>>, %arg7: memref<4x16x8xbf16, #tpu.memory_space<vmem>>, %arg8: memref<4x256x256xbf16, #tpu.memory_space<vmem>>, %arg9: memref<256x256xf32, #tpu.memory_space<vmem>>, %arg10: memref<1x256xf32, #tpu.memory_space<vmem>>, %arg11: memref<1x256xf32, #tpu.memory_space<vmem>>, %arg12: memref<4x32x16xbf16, #tpu.memory_space<vmem>>, %arg13: memref<4x256x256xbf16, #tpu.memory_space<vmem>>, %arg14: memref<256x256xf32, #tpu.memory_space<vmem>>, %arg15: memref<1x256xf32, #tpu.memory_space<vmem>>, %arg16: memref<1x256xf32, #tpu.memory_space<vmem>>, %arg17: memref<4x64x32xbf16, #tpu.memory_space<vmem>>, %arg18: memref<4x256x256xbf16, #tpu.memory_space<vmem>>, %arg19: memref<256x256xf32, #tpu.memory_space<vmem>>, %arg20: memref<1x256xf32, #tpu.memory_space<vmem>>, %arg21: memref<1x256xf32, #tpu.memory_space<vmem>>, %arg22: memref<4x128x64xbf16, #tpu.memory_space<vmem>>, %arg23: memref<4x256x192xbf16, #tpu.memory_space<vmem>>, %arg24: memref<128x192xf32, #tpu.memory_space<vmem>>) attributes {dimension_semantics = [#tpu.dimension_semantics<arbitrary>], iteration_bounds = array<i64: 1>, scalar_prefetch = 0 : i64, scratch_operands = 0 : i64, tpu.core_type = #tpu.core_type<tc>, window_params = [{pipeline_mode = #tpu.pipeline_mode<synchronous>, transform_indices = @transform_0, window_bounds = array<i64: 8, 8>}, {pipeline_mode = #tpu.pipeline_mode<synchronous>, transform_indices = @transform_1, window_bounds = array<i64: 4, 8, 8>}, {pipeline_mode = #tpu.pipeline_mode<synchronous>, transform_indices = @transform_2, window_bounds = array<i64: 4, 8, 256>}, {pipeline_mode = #tpu.pipeline_mode<synchronous>, transform_indices = @transform_3, window_bounds = array<i64: 256, 256>}, {pipeline_mode = #tpu.pipeline_mode<synchronous>, transform_indices = @transform_4, window_bounds = array<i64: 1, 256>}, {pipeline_mode = #tpu.pipeline_mode<synchronous>, transform_indices = @transform_5, window_bounds = array<i64: 1, 256>}, {pipeline_mode = #tpu.pipeline_mode<synchronous>, transform_indices = @transform_6, window_bounds = array<i64: 4, 16, 8>}, {pipeline_mode = #tpu.pipeline_mode<synchronous>, transform_indices = @transform_7, window_bounds = array<i64: 4, 256, 256>}, {pipeline_mode = #tpu.pipeline_mode<synchronous>, transform_indices = @transform_8, window_bounds = array<i64: 256, 256>}, {pipeline_mode = #tpu.pipeline_mode<synchronous>, transform_indices = @transform_9, window_bounds = array<i64: 1, 256>}, {pipeline_mode = #tpu.pipeline_mode<synchronous>, transform_indices = @transform_10, window_bounds = array<i64: 1, 256>}, {pipeline_mode = #tpu.pipeline_mode<synchronous>, transform_indices = @transform_11, window_bounds = array<i64: 4, 32, 16>}, {pipeline_mode = #tpu.pipeline_mode<synchronous>, transform_indices = @transform_12, window_bounds = array<i64: 4, 256, 256>}, {pipeline_mode = #tpu.pipeline_mode<synchronous>, transform_indices = @transform_13, window_bounds = array<i64: 256, 256>}, {pipeline_mode = #tpu.pipeline_mode<synchronous>, transform_indices = @transform_14, window_bounds = array<i64: 1, 256>}, {pipeline_mode = #tpu.pipeline_mode<synchronous>, transform_indices = @transform_15, window_bounds = array<i64: 1, 256>}, {pipeline_mode = #tpu.pipeline_mode<synchronous>, transform_indices = @transform_16, window_bounds = array<i64: 4, 64, 32>}, {pipeline_mode = #tpu.pipeline_mode<synchronous>, transform_indices = @transform_17, window_bounds = array<i64: 4, 256, 256>}, {pipeline_mode = #tpu.pipeline_mode<synchronous>, transform_indices = @transform_18, window_bounds = array<i64: 256, 256>}, {pipeline_mode = #tpu.pipeline_mode<synchronous>, transform_indices = @transform_19, window_bounds = array<i64: 1, 256>}, {pipeline_mode = #tpu.pipeline_mode<synchronous>, transform_indices = @transform_20, window_bounds = array<i64: 1, 256>}, {pipeline_mode = #tpu.pipeline_mode<synchronous>, transform_indices = @transform_21, window_bounds = array<i64: 4, 128, 64>}, {pipeline_mode = #tpu.pipeline_mode<synchronous>, transform_indices = @transform_22, window_bounds = array<i64: 4, 256, 192>}, {pipeline_mode = #tpu.pipeline_mode<synchronous>, transform_indices = @transform_23, window_bounds = array<i64: 128, 192>}]} {
    %c0 = arith.constant 0 : index
    %c0_0 = arith.constant 0 : index
    %0 = vector.load %arg1[%c0, %c0_0] : memref<8x8xf32, #tpu.memory_space<vmem>>, vector<8x8xf32>
    %1 = arith.truncf %0 : vector<8x8xf32> to vector<8x8xbf16>
    %c0_1 = arith.constant 0 : index
    %c0_2 = arith.constant 0 : index
    %c0_3 = arith.constant 0 : index
    %2 = vector.load %arg3[%c0_1, %c0_2, %c0_3] : memref<4x8x256xbf16, #tpu.memory_space<vmem>>, vector<1x8x256xbf16>
    %3 = vector.shape_cast %2 : vector<1x8x256xbf16> to vector<8x256xbf16>
    %cst = arith.constant dense<0.000000e+00> : vector<8x256xf32>
    %4 = tpu.matmul %1, %3, %cst {dimension_numbers = #tpu.dot_dimension_numbers<[1], [0], [0], [1], [0, 0, 1, 1], [], []>} : vector<8x8xbf16>, vector<8x256xbf16>, vector<8x256xf32> -> vector<8x256xf32>
    %c0_4 = arith.constant 0 : index
    %c0_5 = arith.constant 0 : index
    %c0_6 = arith.constant 0 : index
    %5 = vector.load %arg2[%c0_4, %c0_5, %c0_6] : memref<4x8x8xbf16, #tpu.memory_space<vmem>>, vector<1x8x8xbf16>
    %6 = vector.shape_cast %5 : vector<1x8x8xbf16> to vector<8x8xbf16>
    %7 = arith.truncf %4 : vector<8x256xf32> to vector<8x256xbf16>
    %cst_7 = arith.constant dense<0.000000e+00> : vector<8x256xf32>
    %8 = tpu.matmul %6, %7, %cst_7 {dimension_numbers = #tpu.dot_dimension_numbers<[1], [0], [0], [1], [0, 0, 1, 1], [], []>} : vector<8x8xbf16>, vector<8x256xbf16>, vector<8x256xf32> -> vector<8x256xf32>
    %c1 = arith.constant 1 : index
    %c0_8 = arith.constant 0 : index
    %c0_9 = arith.constant 0 : index
    %9 = vector.load %arg3[%c1, %c0_8, %c0_9] : memref<4x8x256xbf16, #tpu.memory_space<vmem>>, vector<1x8x256xbf16>
    %10 = vector.shape_cast %9 : vector<1x8x256xbf16> to vector<8x256xbf16>
    %cst_10 = arith.constant dense<0.000000e+00> : vector<8x256xf32>
    %11 = tpu.matmul %1, %10, %cst_10 {dimension_numbers = #tpu.dot_dimension_numbers<[1], [0], [0], [1], [0, 0, 1, 1], [], []>} : vector<8x8xbf16>, vector<8x256xbf16>, vector<8x256xf32> -> vector<8x256xf32>
    %c1_11 = arith.constant 1 : index
    %c0_12 = arith.constant 0 : index
    %c0_13 = arith.constant 0 : index
    %12 = vector.load %arg2[%c1_11, %c0_12, %c0_13] : memref<4x8x8xbf16, #tpu.memory_space<vmem>>, vector<1x8x8xbf16>
    %13 = vector.shape_cast %12 : vector<1x8x8xbf16> to vector<8x8xbf16>
    %14 = arith.truncf %11 : vector<8x256xf32> to vector<8x256xbf16>
    %cst_14 = arith.constant dense<0.000000e+00> : vector<8x256xf32>
    %15 = tpu.matmul %13, %14, %cst_14 {dimension_numbers = #tpu.dot_dimension_numbers<[1], [0], [0], [1], [0, 0, 1, 1], [], []>} : vector<8x8xbf16>, vector<8x256xbf16>, vector<8x256xf32> -> vector<8x256xf32>
    %16 = arith.addf %8, %15 : vector<8x256xf32>
    %c2 = arith.constant 2 : index
    %c0_15 = arith.constant 0 : index
    %c0_16 = arith.constant 0 : index
    %17 = vector.load %arg3[%c2, %c0_15, %c0_16] : memref<4x8x256xbf16, #tpu.memory_space<vmem>>, vector<1x8x256xbf16>
    %18 = vector.shape_cast %17 : vector<1x8x256xbf16> to vector<8x256xbf16>
    %cst_17 = arith.constant dense<0.000000e+00> : vector<8x256xf32>
    %19 = tpu.matmul %1, %18, %cst_17 {dimension_numbers = #tpu.dot_dimension_numbers<[1], [0], [0], [1], [0, 0, 1, 1], [], []>} : vector<8x8xbf16>, vector<8x256xbf16>, vector<8x256xf32> -> vector<8x256xf32>
    %c2_18 = arith.constant 2 : index
    %c0_19 = arith.constant 0 : index
    %c0_20 = arith.constant 0 : index
    %20 = vector.load %arg2[%c2_18, %c0_19, %c0_20] : memref<4x8x8xbf16, #tpu.memory_space<vmem>>, vector<1x8x8xbf16>
    %21 = vector.shape_cast %20 : vector<1x8x8xbf16> to vector<8x8xbf16>
    %22 = arith.truncf %19 : vector<8x256xf32> to vector<8x256xbf16>
    %cst_21 = arith.constant dense<0.000000e+00> : vector<8x256xf32>
    %23 = tpu.matmul %21, %22, %cst_21 {dimension_numbers = #tpu.dot_dimension_numbers<[1], [0], [0], [1], [0, 0, 1, 1], [], []>} : vector<8x8xbf16>, vector<8x256xbf16>, vector<8x256xf32> -> vector<8x256xf32>
    %24 = arith.addf %16, %23 : vector<8x256xf32>
    %c3 = arith.constant 3 : index
    %c0_22 = arith.constant 0 : index
    %c0_23 = arith.constant 0 : index
    %25 = vector.load %arg3[%c3, %c0_22, %c0_23] : memref<4x8x256xbf16, #tpu.memory_space<vmem>>, vector<1x8x256xbf16>
    %26 = vector.shape_cast %25 : vector<1x8x256xbf16> to vector<8x256xbf16>
    %cst_24 = arith.constant dense<0.000000e+00> : vector<8x256xf32>
    %27 = tpu.matmul %1, %26, %cst_24 {dimension_numbers = #tpu.dot_dimension_numbers<[1], [0], [0], [1], [0, 0, 1, 1], [], []>} : vector<8x8xbf16>, vector<8x256xbf16>, vector<8x256xf32> -> vector<8x256xf32>
    %c3_25 = arith.constant 3 : index
    %c0_26 = arith.constant 0 : index
    %c0_27 = arith.constant 0 : index
    %28 = vector.load %arg2[%c3_25, %c0_26, %c0_27] : memref<4x8x8xbf16, #tpu.memory_space<vmem>>, vector<1x8x8xbf16>
    %29 = vector.shape_cast %28 : vector<1x8x8xbf16> to vector<8x8xbf16>
    %30 = arith.truncf %27 : vector<8x256xf32> to vector<8x256xbf16>
    %cst_28 = arith.constant dense<0.000000e+00> : vector<8x256xf32>
    %31 = tpu.matmul %29, %30, %cst_28 {dimension_numbers = #tpu.dot_dimension_numbers<[1], [0], [0], [1], [0, 0, 1, 1], [], []>} : vector<8x8xbf16>, vector<8x256xbf16>, vector<8x256xf32> -> vector<8x256xf32>
    %32 = arith.addf %24, %31 : vector<8x256xf32>
    %cst_29 = arith.constant dense<0.000000e+00> : vector<256xf32>
    %33 = vector.multi_reduction <add>, %32, %cst_29 [0] : vector<8x256xf32> to vector<256xf32>
    %34 = vector.shape_cast %33 : vector<256xf32> to vector<1x256xf32>
    %cst_30 = arith.constant 8.000000e+00 : f32
    %35 = vector.broadcast %cst_30 : f32 to vector<1x256xf32>
    %36 = arith.divf %34, %35 : vector<1x256xf32>
    %c0_31 = arith.constant 0 : index
    %c0_32 = arith.constant 0 : index
    %37 = vector.load %arg4[%c0_31, %c0_32] : memref<256x256xf32, #tpu.memory_space<vmem>>, vector<256x256xf32>
    %cst_33 = arith.constant dense<0.000000e+00> : vector<1x256xf32>
    %38 = tpu.matmul %36, %37, %cst_33 {dimension_numbers = #tpu.dot_dimension_numbers<[1], [0], [0], [1], [0, 0, 1, 1], [], []>} : vector<1x256xf32>, vector<256x256xf32>, vector<1x256xf32> -> vector<1x256xf32>
    %39 = vector.broadcast %38 : vector<1x256xf32> to vector<8x256xf32>
    %40 = arith.subf %32, %39 : vector<8x256xf32>
    %41 = arith.mulf %40, %40 : vector<8x256xf32>
    %cst_34 = arith.constant dense<0.000000e+00> : vector<256xf32>
    %42 = vector.multi_reduction <add>, %41, %cst_34 [0] : vector<8x256xf32> to vector<256xf32>
    %43 = vector.shape_cast %42 : vector<256xf32> to vector<1x256xf32>
    %cst_35 = arith.constant 8.000000e+00 : f32
    %44 = vector.broadcast %cst_35 : f32 to vector<1x256xf32>
    %45 = arith.divf %43, %44 : vector<1x256xf32>
    %c0_36 = arith.constant 0 : index
    %c0_37 = arith.constant 0 : index
    %46 = vector.load %arg4[%c0_36, %c0_37] : memref<256x256xf32, #tpu.memory_space<vmem>>, vector<256x256xf32>
    %cst_38 = arith.constant dense<0.000000e+00> : vector<1x256xf32>
    %47 = tpu.matmul %45, %46, %cst_38 {dimension_numbers = #tpu.dot_dimension_numbers<[1], [0], [0], [1], [0, 0, 1, 1], [], []>} : vector<1x256xf32>, vector<256x256xf32>, vector<1x256xf32> -> vector<1x256xf32>
    %c0_39 = arith.constant 0 : index
    %c0_40 = arith.constant 0 : index
    %48 = vector.load %arg5[%c0_39, %c0_40] : memref<1x256xf32, #tpu.memory_space<vmem>>, vector<1x256xf32>
    %cst_41 = arith.constant 9.99999974E-6 : f32
    %49 = vector.broadcast %cst_41 : f32 to vector<1x256xf32>
    %50 = arith.addf %47, %49 : vector<1x256xf32>
    %51 = math.rsqrt %50 : vector<1x256xf32>
    %52 = arith.mulf %48, %51 : vector<1x256xf32>
    %53 = vector.broadcast %52 : vector<1x256xf32> to vector<8x256xf32>
    %54 = arith.mulf %40, %53 : vector<8x256xf32>
    %c0_42 = arith.constant 0 : index
    %c0_43 = arith.constant 0 : index
    %55 = vector.load %arg6[%c0_42, %c0_43] : memref<1x256xf32, #tpu.memory_space<vmem>>, vector<1x256xf32>
    %56 = vector.broadcast %55 : vector<1x256xf32> to vector<8x256xf32>
    %57 = arith.addf %54, %56 : vector<8x256xf32>
    %cst_44 = arith.constant 0.000000e+00 : f32
    %58 = vector.broadcast %cst_44 : f32 to vector<8x256xf32>
    %59 = arith.maximumf %57, %58 : vector<8x256xf32>
    %60 = arith.truncf %59 : vector<8x256xf32> to vector<8x256xbf16>
    %c0_45 = arith.constant 0 : index
    %c0_46 = arith.constant 0 : index
    %c0_47 = arith.constant 0 : index
    %61 = vector.load %arg8[%c0_45, %c0_46, %c0_47] : memref<4x256x256xbf16, #tpu.memory_space<vmem>>, vector<1x256x256xbf16>
    %62 = vector.shape_cast %61 : vector<1x256x256xbf16> to vector<256x256xbf16>
    %cst_48 = arith.constant dense<0.000000e+00> : vector<8x256xf32>
    %63 = tpu.matmul %60, %62, %cst_48 {dimension_numbers = #tpu.dot_dimension_numbers<[1], [0], [0], [1], [0, 0, 1, 1], [], []>} : vector<8x256xbf16>, vector<256x256xbf16>, vector<8x256xf32> -> vector<8x256xf32>
    %c0_49 = arith.constant 0 : index
    %c0_50 = arith.constant 0 : index
    %c0_51 = arith.constant 0 : index
    %64 = vector.load %arg7[%c0_49, %c0_50, %c0_51] : memref<4x16x8xbf16, #tpu.memory_space<vmem>>, vector<1x16x8xbf16>
    %65 = vector.shape_cast %64 : vector<1x16x8xbf16> to vector<16x8xbf16>
    %66 = arith.truncf %63 : vector<8x256xf32> to vector<8x256xbf16>
    %cst_52 = arith.constant dense<0.000000e+00> : vector<16x256xf32>
    %67 = tpu.matmul %65, %66, %cst_52 {dimension_numbers = #tpu.dot_dimension_numbers<[1], [0], [0], [1], [0, 0, 1, 1], [], []>} : vector<16x8xbf16>, vector<8x256xbf16>, vector<16x256xf32> -> vector<16x256xf32>
    %c1_53 = arith.constant 1 : index
    %c0_54 = arith.constant 0 : index
    %c0_55 = arith.constant 0 : index
    %68 = vector.load %arg8[%c1_53, %c0_54, %c0_55] : memref<4x256x256xbf16, #tpu.memory_space<vmem>>, vector<1x256x256xbf16>
    %69 = vector.shape_cast %68 : vector<1x256x256xbf16> to vector<256x256xbf16>
    %cst_56 = arith.constant dense<0.000000e+00> : vector<8x256xf32>
    %70 = tpu.matmul %60, %69, %cst_56 {dimension_numbers = #tpu.dot_dimension_numbers<[1], [0], [0], [1], [0, 0, 1, 1], [], []>} : vector<8x256xbf16>, vector<256x256xbf16>, vector<8x256xf32> -> vector<8x256xf32>
    %c1_57 = arith.constant 1 : index
    %c0_58 = arith.constant 0 : index
    %c0_59 = arith.constant 0 : index
    %71 = vector.load %arg7[%c1_57, %c0_58, %c0_59] : memref<4x16x8xbf16, #tpu.memory_space<vmem>>, vector<1x16x8xbf16>
    %72 = vector.shape_cast %71 : vector<1x16x8xbf16> to vector<16x8xbf16>
    %73 = arith.truncf %70 : vector<8x256xf32> to vector<8x256xbf16>
    %cst_60 = arith.constant dense<0.000000e+00> : vector<16x256xf32>
    %74 = tpu.matmul %72, %73, %cst_60 {dimension_numbers = #tpu.dot_dimension_numbers<[1], [0], [0], [1], [0, 0, 1, 1], [], []>} : vector<16x8xbf16>, vector<8x256xbf16>, vector<16x256xf32> -> vector<16x256xf32>
    %75 = arith.addf %67, %74 : vector<16x256xf32>
    %c2_61 = arith.constant 2 : index
    %c0_62 = arith.constant 0 : index
    %c0_63 = arith.constant 0 : index
    %76 = vector.load %arg8[%c2_61, %c0_62, %c0_63] : memref<4x256x256xbf16, #tpu.memory_space<vmem>>, vector<1x256x256xbf16>
    %77 = vector.shape_cast %76 : vector<1x256x256xbf16> to vector<256x256xbf16>
    %cst_64 = arith.constant dense<0.000000e+00> : vector<8x256xf32>
    %78 = tpu.matmul %60, %77, %cst_64 {dimension_numbers = #tpu.dot_dimension_numbers<[1], [0], [0], [1], [0, 0, 1, 1], [], []>} : vector<8x256xbf16>, vector<256x256xbf16>, vector<8x256xf32> -> vector<8x256xf32>
    %c2_65 = arith.constant 2 : index
    %c0_66 = arith.constant 0 : index
    %c0_67 = arith.constant 0 : index
    %79 = vector.load %arg7[%c2_65, %c0_66, %c0_67] : memref<4x16x8xbf16, #tpu.memory_space<vmem>>, vector<1x16x8xbf16>
    %80 = vector.shape_cast %79 : vector<1x16x8xbf16> to vector<16x8xbf16>
    %81 = arith.truncf %78 : vector<8x256xf32> to vector<8x256xbf16>
    %cst_68 = arith.constant dense<0.000000e+00> : vector<16x256xf32>
    %82 = tpu.matmul %80, %81, %cst_68 {dimension_numbers = #tpu.dot_dimension_numbers<[1], [0], [0], [1], [0, 0, 1, 1], [], []>} : vector<16x8xbf16>, vector<8x256xbf16>, vector<16x256xf32> -> vector<16x256xf32>
    %83 = arith.addf %75, %82 : vector<16x256xf32>
    %c3_69 = arith.constant 3 : index
    %c0_70 = arith.constant 0 : index
    %c0_71 = arith.constant 0 : index
    %84 = vector.load %arg8[%c3_69, %c0_70, %c0_71] : memref<4x256x256xbf16, #tpu.memory_space<vmem>>, vector<1x256x256xbf16>
    %85 = vector.shape_cast %84 : vector<1x256x256xbf16> to vector<256x256xbf16>
    %cst_72 = arith.constant dense<0.000000e+00> : vector<8x256xf32>
    %86 = tpu.matmul %60, %85, %cst_72 {dimension_numbers = #tpu.dot_dimension_numbers<[1], [0], [0], [1], [0, 0, 1, 1], [], []>} : vector<8x256xbf16>, vector<256x256xbf16>, vector<8x256xf32> -> vector<8x256xf32>
    %c3_73 = arith.constant 3 : index
    %c0_74 = arith.constant 0 : index
    %c0_75 = arith.constant 0 : index
    %87 = vector.load %arg7[%c3_73, %c0_74, %c0_75] : memref<4x16x8xbf16, #tpu.memory_space<vmem>>, vector<1x16x8xbf16>
    %88 = vector.shape_cast %87 : vector<1x16x8xbf16> to vector<16x8xbf16>
    %89 = arith.truncf %86 : vector<8x256xf32> to vector<8x256xbf16>
    %cst_76 = arith.constant dense<0.000000e+00> : vector<16x256xf32>
    %90 = tpu.matmul %88, %89, %cst_76 {dimension_numbers = #tpu.dot_dimension_numbers<[1], [0], [0], [1], [0, 0, 1, 1], [], []>} : vector<16x8xbf16>, vector<8x256xbf16>, vector<16x256xf32> -> vector<16x256xf32>
    %91 = arith.addf %83, %90 : vector<16x256xf32>
    %cst_77 = arith.constant dense<0.000000e+00> : vector<256xf32>
    %92 = vector.multi_reduction <add>, %91, %cst_77 [0] : vector<16x256xf32> to vector<256xf32>
    %93 = vector.shape_cast %92 : vector<256xf32> to vector<1x256xf32>
    %cst_78 = arith.constant 1.600000e+01 : f32
    %94 = vector.broadcast %cst_78 : f32 to vector<1x256xf32>
    %95 = arith.divf %93, %94 : vector<1x256xf32>
    %c0_79 = arith.constant 0 : index
    %c0_80 = arith.constant 0 : index
    %96 = vector.load %arg9[%c0_79, %c0_80] : memref<256x256xf32, #tpu.memory_space<vmem>>, vector<256x256xf32>
    %cst_81 = arith.constant dense<0.000000e+00> : vector<1x256xf32>
    %97 = tpu.matmul %95, %96, %cst_81 {dimension_numbers = #tpu.dot_dimension_numbers<[1], [0], [0], [1], [0, 0, 1, 1], [], []>} : vector<1x256xf32>, vector<256x256xf32>, vector<1x256xf32> -> vector<1x256xf32>
    %98 = vector.broadcast %97 : vector<1x256xf32> to vector<16x256xf32>
    %99 = arith.subf %91, %98 : vector<16x256xf32>
    %100 = arith.mulf %99, %99 : vector<16x256xf32>
    %cst_82 = arith.constant dense<0.000000e+00> : vector<256xf32>
    %101 = vector.multi_reduction <add>, %100, %cst_82 [0] : vector<16x256xf32> to vector<256xf32>
    %102 = vector.shape_cast %101 : vector<256xf32> to vector<1x256xf32>
    %cst_83 = arith.constant 1.600000e+01 : f32
    %103 = vector.broadcast %cst_83 : f32 to vector<1x256xf32>
    %104 = arith.divf %102, %103 : vector<1x256xf32>
    %c0_84 = arith.constant 0 : index
    %c0_85 = arith.constant 0 : index
    %105 = vector.load %arg9[%c0_84, %c0_85] : memref<256x256xf32, #tpu.memory_space<vmem>>, vector<256x256xf32>
    %cst_86 = arith.constant dense<0.000000e+00> : vector<1x256xf32>
    %106 = tpu.matmul %104, %105, %cst_86 {dimension_numbers = #tpu.dot_dimension_numbers<[1], [0], [0], [1], [0, 0, 1, 1], [], []>} : vector<1x256xf32>, vector<256x256xf32>, vector<1x256xf32> -> vector<1x256xf32>
    %c0_87 = arith.constant 0 : index
    %c0_88 = arith.constant 0 : index
    %107 = vector.load %arg10[%c0_87, %c0_88] : memref<1x256xf32, #tpu.memory_space<vmem>>, vector<1x256xf32>
    %cst_89 = arith.constant 9.99999974E-6 : f32
    %108 = vector.broadcast %cst_89 : f32 to vector<1x256xf32>
    %109 = arith.addf %106, %108 : vector<1x256xf32>
    %110 = math.rsqrt %109 : vector<1x256xf32>
    %111 = arith.mulf %107, %110 : vector<1x256xf32>
    %112 = vector.broadcast %111 : vector<1x256xf32> to vector<16x256xf32>
    %113 = arith.mulf %99, %112 : vector<16x256xf32>
    %c0_90 = arith.constant 0 : index
    %c0_91 = arith.constant 0 : index
    %114 = vector.load %arg11[%c0_90, %c0_91] : memref<1x256xf32, #tpu.memory_space<vmem>>, vector<1x256xf32>
    %115 = vector.broadcast %114 : vector<1x256xf32> to vector<16x256xf32>
    %116 = arith.addf %113, %115 : vector<16x256xf32>
    %cst_92 = arith.constant 0.000000e+00 : f32
    %117 = vector.broadcast %cst_92 : f32 to vector<16x256xf32>
    %118 = arith.maximumf %116, %117 : vector<16x256xf32>
    %119 = arith.truncf %118 : vector<16x256xf32> to vector<16x256xbf16>
    %c0_93 = arith.constant 0 : index
    %c0_94 = arith.constant 0 : index
    %c0_95 = arith.constant 0 : index
    %120 = vector.load %arg13[%c0_93, %c0_94, %c0_95] : memref<4x256x256xbf16, #tpu.memory_space<vmem>>, vector<1x256x256xbf16>
    %121 = vector.shape_cast %120 : vector<1x256x256xbf16> to vector<256x256xbf16>
    %cst_96 = arith.constant dense<0.000000e+00> : vector<16x256xf32>
    %122 = tpu.matmul %119, %121, %cst_96 {dimension_numbers = #tpu.dot_dimension_numbers<[1], [0], [0], [1], [0, 0, 1, 1], [], []>} : vector<16x256xbf16>, vector<256x256xbf16>, vector<16x256xf32> -> vector<16x256xf32>
    %c0_97 = arith.constant 0 : index
    %c0_98 = arith.constant 0 : index
    %c0_99 = arith.constant 0 : index
    %123 = vector.load %arg12[%c0_97, %c0_98, %c0_99] : memref<4x32x16xbf16, #tpu.memory_space<vmem>>, vector<1x32x16xbf16>
    %124 = vector.shape_cast %123 : vector<1x32x16xbf16> to vector<32x16xbf16>
    %125 = arith.truncf %122 : vector<16x256xf32> to vector<16x256xbf16>
    %cst_100 = arith.constant dense<0.000000e+00> : vector<32x256xf32>
    %126 = tpu.matmul %124, %125, %cst_100 {dimension_numbers = #tpu.dot_dimension_numbers<[1], [0], [0], [1], [0, 0, 1, 1], [], []>} : vector<32x16xbf16>, vector<16x256xbf16>, vector<32x256xf32> -> vector<32x256xf32>
    %c1_101 = arith.constant 1 : index
    %c0_102 = arith.constant 0 : index
    %c0_103 = arith.constant 0 : index
    %127 = vector.load %arg13[%c1_101, %c0_102, %c0_103] : memref<4x256x256xbf16, #tpu.memory_space<vmem>>, vector<1x256x256xbf16>
    %128 = vector.shape_cast %127 : vector<1x256x256xbf16> to vector<256x256xbf16>
    %cst_104 = arith.constant dense<0.000000e+00> : vector<16x256xf32>
    %129 = tpu.matmul %119, %128, %cst_104 {dimension_numbers = #tpu.dot_dimension_numbers<[1], [0], [0], [1], [0, 0, 1, 1], [], []>} : vector<16x256xbf16>, vector<256x256xbf16>, vector<16x256xf32> -> vector<16x256xf32>
    %c1_105 = arith.constant 1 : index
    %c0_106 = arith.constant 0 : index
    %c0_107 = arith.constant 0 : index
    %130 = vector.load %arg12[%c1_105, %c0_106, %c0_107] : memref<4x32x16xbf16, #tpu.memory_space<vmem>>, vector<1x32x16xbf16>
    %131 = vector.shape_cast %130 : vector<1x32x16xbf16> to vector<32x16xbf16>
    %132 = arith.truncf %129 : vector<16x256xf32> to vector<16x256xbf16>
    %cst_108 = arith.constant dense<0.000000e+00> : vector<32x256xf32>
    %133 = tpu.matmul %131, %132, %cst_108 {dimension_numbers = #tpu.dot_dimension_numbers<[1], [0], [0], [1], [0, 0, 1, 1], [], []>} : vector<32x16xbf16>, vector<16x256xbf16>, vector<32x256xf32> -> vector<32x256xf32>
    %134 = arith.addf %126, %133 : vector<32x256xf32>
    %c2_109 = arith.constant 2 : index
    %c0_110 = arith.constant 0 : index
    %c0_111 = arith.constant 0 : index
    %135 = vector.load %arg13[%c2_109, %c0_110, %c0_111] : memref<4x256x256xbf16, #tpu.memory_space<vmem>>, vector<1x256x256xbf16>
    %136 = vector.shape_cast %135 : vector<1x256x256xbf16> to vector<256x256xbf16>
    %cst_112 = arith.constant dense<0.000000e+00> : vector<16x256xf32>
    %137 = tpu.matmul %119, %136, %cst_112 {dimension_numbers = #tpu.dot_dimension_numbers<[1], [0], [0], [1], [0, 0, 1, 1], [], []>} : vector<16x256xbf16>, vector<256x256xbf16>, vector<16x256xf32> -> vector<16x256xf32>
    %c2_113 = arith.constant 2 : index
    %c0_114 = arith.constant 0 : index
    %c0_115 = arith.constant 0 : index
    %138 = vector.load %arg12[%c2_113, %c0_114, %c0_115] : memref<4x32x16xbf16, #tpu.memory_space<vmem>>, vector<1x32x16xbf16>
    %139 = vector.shape_cast %138 : vector<1x32x16xbf16> to vector<32x16xbf16>
    %140 = arith.truncf %137 : vector<16x256xf32> to vector<16x256xbf16>
    %cst_116 = arith.constant dense<0.000000e+00> : vector<32x256xf32>
    %141 = tpu.matmul %139, %140, %cst_116 {dimension_numbers = #tpu.dot_dimension_numbers<[1], [0], [0], [1], [0, 0, 1, 1], [], []>} : vector<32x16xbf16>, vector<16x256xbf16>, vector<32x256xf32> -> vector<32x256xf32>
    %142 = arith.addf %134, %141 : vector<32x256xf32>
    %c3_117 = arith.constant 3 : index
    %c0_118 = arith.constant 0 : index
    %c0_119 = arith.constant 0 : index
    %143 = vector.load %arg13[%c3_117, %c0_118, %c0_119] : memref<4x256x256xbf16, #tpu.memory_space<vmem>>, vector<1x256x256xbf16>
    %144 = vector.shape_cast %143 : vector<1x256x256xbf16> to vector<256x256xbf16>
    %cst_120 = arith.constant dense<0.000000e+00> : vector<16x256xf32>
    %145 = tpu.matmul %119, %144, %cst_120 {dimension_numbers = #tpu.dot_dimension_numbers<[1], [0], [0], [1], [0, 0, 1, 1], [], []>} : vector<16x256xbf16>, vector<256x256xbf16>, vector<16x256xf32> -> vector<16x256xf32>
    %c3_121 = arith.constant 3 : index
    %c0_122 = arith.constant 0 : index
    %c0_123 = arith.constant 0 : index
    %146 = vector.load %arg12[%c3_121, %c0_122, %c0_123] : memref<4x32x16xbf16, #tpu.memory_space<vmem>>, vector<1x32x16xbf16>
    %147 = vector.shape_cast %146 : vector<1x32x16xbf16> to vector<32x16xbf16>
    %148 = arith.truncf %145 : vector<16x256xf32> to vector<16x256xbf16>
    %cst_124 = arith.constant dense<0.000000e+00> : vector<32x256xf32>
    %149 = tpu.matmul %147, %148, %cst_124 {dimension_numbers = #tpu.dot_dimension_numbers<[1], [0], [0], [1], [0, 0, 1, 1], [], []>} : vector<32x16xbf16>, vector<16x256xbf16>, vector<32x256xf32> -> vector<32x256xf32>
    %150 = arith.addf %142, %149 : vector<32x256xf32>
    %cst_125 = arith.constant dense<0.000000e+00> : vector<256xf32>
    %151 = vector.multi_reduction <add>, %150, %cst_125 [0] : vector<32x256xf32> to vector<256xf32>
    %152 = vector.shape_cast %151 : vector<256xf32> to vector<1x256xf32>
    %cst_126 = arith.constant 3.200000e+01 : f32
    %153 = vector.broadcast %cst_126 : f32 to vector<1x256xf32>
    %154 = arith.divf %152, %153 : vector<1x256xf32>
    %c0_127 = arith.constant 0 : index
    %c0_128 = arith.constant 0 : index
    %155 = vector.load %arg14[%c0_127, %c0_128] : memref<256x256xf32, #tpu.memory_space<vmem>>, vector<256x256xf32>
    %cst_129 = arith.constant dense<0.000000e+00> : vector<1x256xf32>
    %156 = tpu.matmul %154, %155, %cst_129 {dimension_numbers = #tpu.dot_dimension_numbers<[1], [0], [0], [1], [0, 0, 1, 1], [], []>} : vector<1x256xf32>, vector<256x256xf32>, vector<1x256xf32> -> vector<1x256xf32>
    %157 = vector.broadcast %156 : vector<1x256xf32> to vector<32x256xf32>
    %158 = arith.subf %150, %157 : vector<32x256xf32>
    %159 = arith.mulf %158, %158 : vector<32x256xf32>
    %cst_130 = arith.constant dense<0.000000e+00> : vector<256xf32>
    %160 = vector.multi_reduction <add>, %159, %cst_130 [0] : vector<32x256xf32> to vector<256xf32>
    %161 = vector.shape_cast %160 : vector<256xf32> to vector<1x256xf32>
    %cst_131 = arith.constant 3.200000e+01 : f32
    %162 = vector.broadcast %cst_131 : f32 to vector<1x256xf32>
    %163 = arith.divf %161, %162 : vector<1x256xf32>
    %c0_132 = arith.constant 0 : index
    %c0_133 = arith.constant 0 : index
    %164 = vector.load %arg14[%c0_132, %c0_133] : memref<256x256xf32, #tpu.memory_space<vmem>>, vector<256x256xf32>
    %cst_134 = arith.constant dense<0.000000e+00> : vector<1x256xf32>
    %165 = tpu.matmul %163, %164, %cst_134 {dimension_numbers = #tpu.dot_dimension_numbers<[1], [0], [0], [1], [0, 0, 1, 1], [], []>} : vector<1x256xf32>, vector<256x256xf32>, vector<1x256xf32> -> vector<1x256xf32>
    %c0_135 = arith.constant 0 : index
    %c0_136 = arith.constant 0 : index
    %166 = vector.load %arg15[%c0_135, %c0_136] : memref<1x256xf32, #tpu.memory_space<vmem>>, vector<1x256xf32>
    %cst_137 = arith.constant 9.99999974E-6 : f32
    %167 = vector.broadcast %cst_137 : f32 to vector<1x256xf32>
    %168 = arith.addf %165, %167 : vector<1x256xf32>
    %169 = math.rsqrt %168 : vector<1x256xf32>
    %170 = arith.mulf %166, %169 : vector<1x256xf32>
    %171 = vector.broadcast %170 : vector<1x256xf32> to vector<32x256xf32>
    %172 = arith.mulf %158, %171 : vector<32x256xf32>
    %c0_138 = arith.constant 0 : index
    %c0_139 = arith.constant 0 : index
    %173 = vector.load %arg16[%c0_138, %c0_139] : memref<1x256xf32, #tpu.memory_space<vmem>>, vector<1x256xf32>
    %174 = vector.broadcast %173 : vector<1x256xf32> to vector<32x256xf32>
    %175 = arith.addf %172, %174 : vector<32x256xf32>
    %cst_140 = arith.constant 0.000000e+00 : f32
    %176 = vector.broadcast %cst_140 : f32 to vector<32x256xf32>
    %177 = arith.maximumf %175, %176 : vector<32x256xf32>
    %178 = arith.truncf %177 : vector<32x256xf32> to vector<32x256xbf16>
    %c0_141 = arith.constant 0 : index
    %c0_142 = arith.constant 0 : index
    %c0_143 = arith.constant 0 : index
    %179 = vector.load %arg18[%c0_141, %c0_142, %c0_143] : memref<4x256x256xbf16, #tpu.memory_space<vmem>>, vector<1x256x256xbf16>
    %180 = vector.shape_cast %179 : vector<1x256x256xbf16> to vector<256x256xbf16>
    %cst_144 = arith.constant dense<0.000000e+00> : vector<32x256xf32>
    %181 = tpu.matmul %178, %180, %cst_144 {dimension_numbers = #tpu.dot_dimension_numbers<[1], [0], [0], [1], [0, 0, 1, 1], [], []>} : vector<32x256xbf16>, vector<256x256xbf16>, vector<32x256xf32> -> vector<32x256xf32>
    %c0_145 = arith.constant 0 : index
    %c0_146 = arith.constant 0 : index
    %c0_147 = arith.constant 0 : index
    %182 = vector.load %arg17[%c0_145, %c0_146, %c0_147] : memref<4x64x32xbf16, #tpu.memory_space<vmem>>, vector<1x64x32xbf16>
    %183 = vector.shape_cast %182 : vector<1x64x32xbf16> to vector<64x32xbf16>
    %184 = arith.truncf %181 : vector<32x256xf32> to vector<32x256xbf16>
    %cst_148 = arith.constant dense<0.000000e+00> : vector<64x256xf32>
    %185 = tpu.matmul %183, %184, %cst_148 {dimension_numbers = #tpu.dot_dimension_numbers<[1], [0], [0], [1], [0, 0, 1, 1], [], []>} : vector<64x32xbf16>, vector<32x256xbf16>, vector<64x256xf32> -> vector<64x256xf32>
    %c1_149 = arith.constant 1 : index
    %c0_150 = arith.constant 0 : index
    %c0_151 = arith.constant 0 : index
    %186 = vector.load %arg18[%c1_149, %c0_150, %c0_151] : memref<4x256x256xbf16, #tpu.memory_space<vmem>>, vector<1x256x256xbf16>
    %187 = vector.shape_cast %186 : vector<1x256x256xbf16> to vector<256x256xbf16>
    %cst_152 = arith.constant dense<0.000000e+00> : vector<32x256xf32>
    %188 = tpu.matmul %178, %187, %cst_152 {dimension_numbers = #tpu.dot_dimension_numbers<[1], [0], [0], [1], [0, 0, 1, 1], [], []>} : vector<32x256xbf16>, vector<256x256xbf16>, vector<32x256xf32> -> vector<32x256xf32>
    %c1_153 = arith.constant 1 : index
    %c0_154 = arith.constant 0 : index
    %c0_155 = arith.constant 0 : index
    %189 = vector.load %arg17[%c1_153, %c0_154, %c0_155] : memref<4x64x32xbf16, #tpu.memory_space<vmem>>, vector<1x64x32xbf16>
    %190 = vector.shape_cast %189 : vector<1x64x32xbf16> to vector<64x32xbf16>
    %191 = arith.truncf %188 : vector<32x256xf32> to vector<32x256xbf16>
    %cst_156 = arith.constant dense<0.000000e+00> : vector<64x256xf32>
    %192 = tpu.matmul %190, %191, %cst_156 {dimension_numbers = #tpu.dot_dimension_numbers<[1], [0], [0], [1], [0, 0, 1, 1], [], []>} : vector<64x32xbf16>, vector<32x256xbf16>, vector<64x256xf32> -> vector<64x256xf32>
    %193 = arith.addf %185, %192 : vector<64x256xf32>
    %c2_157 = arith.constant 2 : index
    %c0_158 = arith.constant 0 : index
    %c0_159 = arith.constant 0 : index
    %194 = vector.load %arg18[%c2_157, %c0_158, %c0_159] : memref<4x256x256xbf16, #tpu.memory_space<vmem>>, vector<1x256x256xbf16>
    %195 = vector.shape_cast %194 : vector<1x256x256xbf16> to vector<256x256xbf16>
    %cst_160 = arith.constant dense<0.000000e+00> : vector<32x256xf32>
    %196 = tpu.matmul %178, %195, %cst_160 {dimension_numbers = #tpu.dot_dimension_numbers<[1], [0], [0], [1], [0, 0, 1, 1], [], []>} : vector<32x256xbf16>, vector<256x256xbf16>, vector<32x256xf32> -> vector<32x256xf32>
    %c2_161 = arith.constant 2 : index
    %c0_162 = arith.constant 0 : index
    %c0_163 = arith.constant 0 : index
    %197 = vector.load %arg17[%c2_161, %c0_162, %c0_163] : memref<4x64x32xbf16, #tpu.memory_space<vmem>>, vector<1x64x32xbf16>
    %198 = vector.shape_cast %197 : vector<1x64x32xbf16> to vector<64x32xbf16>
    %199 = arith.truncf %196 : vector<32x256xf32> to vector<32x256xbf16>
    %cst_164 = arith.constant dense<0.000000e+00> : vector<64x256xf32>
    %200 = tpu.matmul %198, %199, %cst_164 {dimension_numbers = #tpu.dot_dimension_numbers<[1], [0], [0], [1], [0, 0, 1, 1], [], []>} : vector<64x32xbf16>, vector<32x256xbf16>, vector<64x256xf32> -> vector<64x256xf32>
    %201 = arith.addf %193, %200 : vector<64x256xf32>
    %c3_165 = arith.constant 3 : index
    %c0_166 = arith.constant 0 : index
    %c0_167 = arith.constant 0 : index
    %202 = vector.load %arg18[%c3_165, %c0_166, %c0_167] : memref<4x256x256xbf16, #tpu.memory_space<vmem>>, vector<1x256x256xbf16>
    %203 = vector.shape_cast %202 : vector<1x256x256xbf16> to vector<256x256xbf16>
    %cst_168 = arith.constant dense<0.000000e+00> : vector<32x256xf32>
    %204 = tpu.matmul %178, %203, %cst_168 {dimension_numbers = #tpu.dot_dimension_numbers<[1], [0], [0], [1], [0, 0, 1, 1], [], []>} : vector<32x256xbf16>, vector<256x256xbf16>, vector<32x256xf32> -> vector<32x256xf32>
    %c3_169 = arith.constant 3 : index
    %c0_170 = arith.constant 0 : index
    %c0_171 = arith.constant 0 : index
    %205 = vector.load %arg17[%c3_169, %c0_170, %c0_171] : memref<4x64x32xbf16, #tpu.memory_space<vmem>>, vector<1x64x32xbf16>
    %206 = vector.shape_cast %205 : vector<1x64x32xbf16> to vector<64x32xbf16>
    %207 = arith.truncf %204 : vector<32x256xf32> to vector<32x256xbf16>
    %cst_172 = arith.constant dense<0.000000e+00> : vector<64x256xf32>
    %208 = tpu.matmul %206, %207, %cst_172 {dimension_numbers = #tpu.dot_dimension_numbers<[1], [0], [0], [1], [0, 0, 1, 1], [], []>} : vector<64x32xbf16>, vector<32x256xbf16>, vector<64x256xf32> -> vector<64x256xf32>
    %209 = arith.addf %201, %208 : vector<64x256xf32>
    %cst_173 = arith.constant dense<0.000000e+00> : vector<256xf32>
    %210 = vector.multi_reduction <add>, %209, %cst_173 [0] : vector<64x256xf32> to vector<256xf32>
    %211 = vector.shape_cast %210 : vector<256xf32> to vector<1x256xf32>
    %cst_174 = arith.constant 6.400000e+01 : f32
    %212 = vector.broadcast %cst_174 : f32 to vector<1x256xf32>
    %213 = arith.divf %211, %212 : vector<1x256xf32>
    %c0_175 = arith.constant 0 : index
    %c0_176 = arith.constant 0 : index
    %214 = vector.load %arg19[%c0_175, %c0_176] : memref<256x256xf32, #tpu.memory_space<vmem>>, vector<256x256xf32>
    %cst_177 = arith.constant dense<0.000000e+00> : vector<1x256xf32>
    %215 = tpu.matmul %213, %214, %cst_177 {dimension_numbers = #tpu.dot_dimension_numbers<[1], [0], [0], [1], [0, 0, 1, 1], [], []>} : vector<1x256xf32>, vector<256x256xf32>, vector<1x256xf32> -> vector<1x256xf32>
    %216 = vector.broadcast %215 : vector<1x256xf32> to vector<64x256xf32>
    %217 = arith.subf %209, %216 : vector<64x256xf32>
    %218 = arith.mulf %217, %217 : vector<64x256xf32>
    %cst_178 = arith.constant dense<0.000000e+00> : vector<256xf32>
    %219 = vector.multi_reduction <add>, %218, %cst_178 [0] : vector<64x256xf32> to vector<256xf32>
    %220 = vector.shape_cast %219 : vector<256xf32> to vector<1x256xf32>
    %cst_179 = arith.constant 6.400000e+01 : f32
    %221 = vector.broadcast %cst_179 : f32 to vector<1x256xf32>
    %222 = arith.divf %220, %221 : vector<1x256xf32>
    %c0_180 = arith.constant 0 : index
    %c0_181 = arith.constant 0 : index
    %223 = vector.load %arg19[%c0_180, %c0_181] : memref<256x256xf32, #tpu.memory_space<vmem>>, vector<256x256xf32>
    %cst_182 = arith.constant dense<0.000000e+00> : vector<1x256xf32>
    %224 = tpu.matmul %222, %223, %cst_182 {dimension_numbers = #tpu.dot_dimension_numbers<[1], [0], [0], [1], [0, 0, 1, 1], [], []>} : vector<1x256xf32>, vector<256x256xf32>, vector<1x256xf32> -> vector<1x256xf32>
    %c0_183 = arith.constant 0 : index
    %c0_184 = arith.constant 0 : index
    %225 = vector.load %arg20[%c0_183, %c0_184] : memref<1x256xf32, #tpu.memory_space<vmem>>, vector<1x256xf32>
    %cst_185 = arith.constant 9.99999974E-6 : f32
    %226 = vector.broadcast %cst_185 : f32 to vector<1x256xf32>
    %227 = arith.addf %224, %226 : vector<1x256xf32>
    %228 = math.rsqrt %227 : vector<1x256xf32>
    %229 = arith.mulf %225, %228 : vector<1x256xf32>
    %230 = vector.broadcast %229 : vector<1x256xf32> to vector<64x256xf32>
    %231 = arith.mulf %217, %230 : vector<64x256xf32>
    %c0_186 = arith.constant 0 : index
    %c0_187 = arith.constant 0 : index
    %232 = vector.load %arg21[%c0_186, %c0_187] : memref<1x256xf32, #tpu.memory_space<vmem>>, vector<1x256xf32>
    %233 = vector.broadcast %232 : vector<1x256xf32> to vector<64x256xf32>
    %234 = arith.addf %231, %233 : vector<64x256xf32>
    %cst_188 = arith.constant 0.000000e+00 : f32
    %235 = vector.broadcast %cst_188 : f32 to vector<64x256xf32>
    %236 = arith.maximumf %234, %235 : vector<64x256xf32>
    %237 = arith.truncf %236 : vector<64x256xf32> to vector<64x256xbf16>
    %c0_189 = arith.constant 0 : index
    %c0_190 = arith.constant 0 : index
    %c0_191 = arith.constant 0 : index
    %238 = vector.load %arg23[%c0_189, %c0_190, %c0_191] : memref<4x256x192xbf16, #tpu.memory_space<vmem>>, vector<1x256x192xbf16>
    %239 = vector.shape_cast %238 : vector<1x256x192xbf16> to vector<256x192xbf16>
    %cst_192 = arith.constant dense<0.000000e+00> : vector<64x192xf32>
    %240 = tpu.matmul %237, %239, %cst_192 {dimension_numbers = #tpu.dot_dimension_numbers<[1], [0], [0], [1], [0, 0, 1, 1], [], []>} : vector<64x256xbf16>, vector<256x192xbf16>, vector<64x192xf32> -> vector<64x192xf32>
    %c0_193 = arith.constant 0 : index
    %c0_194 = arith.constant 0 : index
    %c0_195 = arith.constant 0 : index
    %241 = vector.load %arg22[%c0_193, %c0_194, %c0_195] : memref<4x128x64xbf16, #tpu.memory_space<vmem>>, vector<1x128x64xbf16>
    %242 = vector.shape_cast %241 : vector<1x128x64xbf16> to vector<128x64xbf16>
    %243 = arith.truncf %240 : vector<64x192xf32> to vector<64x192xbf16>
    %cst_196 = arith.constant dense<0.000000e+00> : vector<128x192xf32>
    %244 = tpu.matmul %242, %243, %cst_196 {dimension_numbers = #tpu.dot_dimension_numbers<[1], [0], [0], [1], [0, 0, 1, 1], [], []>} : vector<128x64xbf16>, vector<64x192xbf16>, vector<128x192xf32> -> vector<128x192xf32>
    %c1_197 = arith.constant 1 : index
    %c0_198 = arith.constant 0 : index
    %c0_199 = arith.constant 0 : index
    %245 = vector.load %arg23[%c1_197, %c0_198, %c0_199] : memref<4x256x192xbf16, #tpu.memory_space<vmem>>, vector<1x256x192xbf16>
    %246 = vector.shape_cast %245 : vector<1x256x192xbf16> to vector<256x192xbf16>
    %cst_200 = arith.constant dense<0.000000e+00> : vector<64x192xf32>
    %247 = tpu.matmul %237, %246, %cst_200 {dimension_numbers = #tpu.dot_dimension_numbers<[1], [0], [0], [1], [0, 0, 1, 1], [], []>} : vector<64x256xbf16>, vector<256x192xbf16>, vector<64x192xf32> -> vector<64x192xf32>
    %c1_201 = arith.constant 1 : index
    %c0_202 = arith.constant 0 : index
    %c0_203 = arith.constant 0 : index
    %248 = vector.load %arg22[%c1_201, %c0_202, %c0_203] : memref<4x128x64xbf16, #tpu.memory_space<vmem>>, vector<1x128x64xbf16>
    %249 = vector.shape_cast %248 : vector<1x128x64xbf16> to vector<128x64xbf16>
    %250 = arith.truncf %247 : vector<64x192xf32> to vector<64x192xbf16>
    %cst_204 = arith.constant dense<0.000000e+00> : vector<128x192xf32>
    %251 = tpu.matmul %249, %250, %cst_204 {dimension_numbers = #tpu.dot_dimension_numbers<[1], [0], [0], [1], [0, 0, 1, 1], [], []>} : vector<128x64xbf16>, vector<64x192xbf16>, vector<128x192xf32> -> vector<128x192xf32>
    %252 = arith.addf %244, %251 : vector<128x192xf32>
    %c2_205 = arith.constant 2 : index
    %c0_206 = arith.constant 0 : index
    %c0_207 = arith.constant 0 : index
    %253 = vector.load %arg23[%c2_205, %c0_206, %c0_207] : memref<4x256x192xbf16, #tpu.memory_space<vmem>>, vector<1x256x192xbf16>
    %254 = vector.shape_cast %253 : vector<1x256x192xbf16> to vector<256x192xbf16>
    %cst_208 = arith.constant dense<0.000000e+00> : vector<64x192xf32>
    %255 = tpu.matmul %237, %254, %cst_208 {dimension_numbers = #tpu.dot_dimension_numbers<[1], [0], [0], [1], [0, 0, 1, 1], [], []>} : vector<64x256xbf16>, vector<256x192xbf16>, vector<64x192xf32> -> vector<64x192xf32>
    %c2_209 = arith.constant 2 : index
    %c0_210 = arith.constant 0 : index
    %c0_211 = arith.constant 0 : index
    %256 = vector.load %arg22[%c2_209, %c0_210, %c0_211] : memref<4x128x64xbf16, #tpu.memory_space<vmem>>, vector<1x128x64xbf16>
    %257 = vector.shape_cast %256 : vector<1x128x64xbf16> to vector<128x64xbf16>
    %258 = arith.truncf %255 : vector<64x192xf32> to vector<64x192xbf16>
    %cst_212 = arith.constant dense<0.000000e+00> : vector<128x192xf32>
    %259 = tpu.matmul %257, %258, %cst_212 {dimension_numbers = #tpu.dot_dimension_numbers<[1], [0], [0], [1], [0, 0, 1, 1], [], []>} : vector<128x64xbf16>, vector<64x192xbf16>, vector<128x192xf32> -> vector<128x192xf32>
    %260 = arith.addf %252, %259 : vector<128x192xf32>
    %c3_213 = arith.constant 3 : index
    %c0_214 = arith.constant 0 : index
    %c0_215 = arith.constant 0 : index
    %261 = vector.load %arg23[%c3_213, %c0_214, %c0_215] : memref<4x256x192xbf16, #tpu.memory_space<vmem>>, vector<1x256x192xbf16>
    %262 = vector.shape_cast %261 : vector<1x256x192xbf16> to vector<256x192xbf16>
    %cst_216 = arith.constant dense<0.000000e+00> : vector<64x192xf32>
    %263 = tpu.matmul %237, %262, %cst_216 {dimension_numbers = #tpu.dot_dimension_numbers<[1], [0], [0], [1], [0, 0, 1, 1], [], []>} : vector<64x256xbf16>, vector<256x192xbf16>, vector<64x192xf32> -> vector<64x192xf32>
    %c3_217 = arith.constant 3 : index
    %c0_218 = arith.constant 0 : index
    %c0_219 = arith.constant 0 : index
    %264 = vector.load %arg22[%c3_217, %c0_218, %c0_219] : memref<4x128x64xbf16, #tpu.memory_space<vmem>>, vector<1x128x64xbf16>
    %265 = vector.shape_cast %264 : vector<1x128x64xbf16> to vector<128x64xbf16>
    %266 = arith.truncf %263 : vector<64x192xf32> to vector<64x192xbf16>
    %cst_220 = arith.constant dense<0.000000e+00> : vector<128x192xf32>
    %267 = tpu.matmul %265, %266, %cst_220 {dimension_numbers = #tpu.dot_dimension_numbers<[1], [0], [0], [1], [0, 0, 1, 1], [], []>} : vector<128x64xbf16>, vector<64x192xbf16>, vector<128x192xf32> -> vector<128x192xf32>
    %268 = arith.addf %260, %267 : vector<128x192xf32>
    %269 = math.tanh %268 : vector<128x192xf32>
    %c0_221 = arith.constant 0 : index
    %c0_222 = arith.constant 0 : index
    %270 = vector.load %arg24[%c0_221, %c0_222] : memref<128x192xf32, #tpu.memory_space<vmem>>, vector<128x192xf32>
    tpu.vector_store %arg24[%c0_221, %c0_222], %269 {strides = array<i32>} : memref<128x192xf32, #tpu.memory_space<vmem>>, vector<128x192xf32>,
    return
  }
  func.func @transform_0(%arg0: i32) -> (i32, i32) {
    %c0_i32 = arith.constant 0 : i32
    %c0_i32_0 = arith.constant 0 : i32
    %c0_i32_1 = arith.constant 0 : i32
    return %c0_i32, %c0_i32_0 : i32, i32
  }
  func.func @transform_1(%arg0: i32) -> (i32, i32, i32) {
    %c0_i32 = arith.constant 0 : i32
    %c0_i32_0 = arith.constant 0 : i32
    %c0_i32_1 = arith.constant 0 : i32
    %c0_i32_2 = arith.constant 0 : i32
    return %c0_i32, %c0_i32_0, %c0_i32_1 : i32, i32, i32
  }
  func.func @transform_2(%arg0: i32) -> (i32, i32, i32) {
    %c0_i32 = arith.constant 0 : i32
    %c0_i32_0 = arith.constant 0 : i32
    %c0_i32_1 = arith.constant 0 : i32
    %c0_i32_2 = arith.constant 0 : i32
    return %c0_i32, %c0_i32_0, %c0_i32_1 : i32, i32, i32
  }
  func.func @transform_3(%arg0: i32) -> (i32, i32) {
    %c0_i32 = arith.constant 0 : i32
    %c0_i32_0 = arith.constant 0 : i32
    %c0_i32_1 = arith.constant 0 : i32
    return %c0_i32, %c0_i32_0 : i32, i32
  }
  func.func @transform_4(%arg0: i32) -> (i32, i32) {
    %c0_i32 = arith.constant 0 : i32
    %c0_i32_0 = arith.constant 0 : i32
    %c0_i32_1 = arith.constant 0 : i32
    return %c0_i32, %c0_i32_0 : i32, i32
  }
  func.func @transform_5(%arg0: i32) -> (i32, i32) {
    %c0_i32 = arith.constant 0 : i32
    %c0_i32_0 = arith.constant 0 : i32
    %c0_i32_1 = arith.constant 0 : i32
    return %c0_i32, %c0_i32_0 : i32, i32
  }
  func.func @transform_6(%arg0: i32) -> (i32, i32, i32) {
    %c0_i32 = arith.constant 0 : i32
    %c0_i32_0 = arith.constant 0 : i32
    %c0_i32_1 = arith.constant 0 : i32
    %c0_i32_2 = arith.constant 0 : i32
    return %c0_i32, %c0_i32_0, %c0_i32_1 : i32, i32, i32
  }
  func.func @transform_7(%arg0: i32) -> (i32, i32, i32) {
    %c0_i32 = arith.constant 0 : i32
    %c0_i32_0 = arith.constant 0 : i32
    %c0_i32_1 = arith.constant 0 : i32
    %c0_i32_2 = arith.constant 0 : i32
    return %c0_i32, %c0_i32_0, %c0_i32_1 : i32, i32, i32
  }
  func.func @transform_8(%arg0: i32) -> (i32, i32) {
    %c0_i32 = arith.constant 0 : i32
    %c0_i32_0 = arith.constant 0 : i32
    %c0_i32_1 = arith.constant 0 : i32
    return %c0_i32, %c0_i32_0 : i32, i32
  }
  func.func @transform_9(%arg0: i32) -> (i32, i32) {
    %c0_i32 = arith.constant 0 : i32
    %c0_i32_0 = arith.constant 0 : i32
    %c0_i32_1 = arith.constant 0 : i32
    return %c0_i32, %c0_i32_0 : i32, i32
  }
  func.func @transform_10(%arg0: i32) -> (i32, i32) {
    %c0_i32 = arith.constant 0 : i32
    %c0_i32_0 = arith.constant 0 : i32
    %c0_i32_1 = arith.constant 0 : i32
    return %c0_i32, %c0_i32_0 : i32, i32
  }
  func.func @transform_11(%arg0: i32) -> (i32, i32, i32) {
    %c0_i32 = arith.constant 0 : i32
    %c0_i32_0 = arith.constant 0 : i32
    %c0_i32_1 = arith.constant 0 : i32
    %c0_i32_2 = arith.constant 0 : i32
    return %c0_i32, %c0_i32_0, %c0_i32_1 : i32, i32, i32
  }
  func.func @transform_12(%arg0: i32) -> (i32, i32, i32) {
    %c0_i32 = arith.constant 0 : i32
    %c0_i32_0 = arith.constant 0 : i32
    %c0_i32_1 = arith.constant 0 : i32
    %c0_i32_2 = arith.constant 0 : i32
    return %c0_i32, %c0_i32_0, %c0_i32_1 : i32, i32, i32
  }
  func.func @transform_13(%arg0: i32) -> (i32, i32) {
    %c0_i32 = arith.constant 0 : i32
    %c0_i32_0 = arith.constant 0 : i32
    %c0_i32_1 = arith.constant 0 : i32
    return %c0_i32, %c0_i32_0 : i32, i32
  }
  func.func @transform_14(%arg0: i32) -> (i32, i32) {
    %c0_i32 = arith.constant 0 : i32
    %c0_i32_0 = arith.constant 0 : i32
    %c0_i32_1 = arith.constant 0 : i32
    return %c0_i32, %c0_i32_0 : i32, i32
  }
  func.func @transform_15(%arg0: i32) -> (i32, i32) {
    %c0_i32 = arith.constant 0 : i32
    %c0_i32_0 = arith.constant 0 : i32
    %c0_i32_1 = arith.constant 0 : i32
    return %c0_i32, %c0_i32_0 : i32, i32
  }
  func.func @transform_16(%arg0: i32) -> (i32, i32, i32) {
    %c0_i32 = arith.constant 0 : i32
    %c0_i32_0 = arith.constant 0 : i32
    %c0_i32_1 = arith.constant 0 : i32
    %c0_i32_2 = arith.constant 0 : i32
    return %c0_i32, %c0_i32_0, %c0_i32_1 : i32, i32, i32
  }
  func.func @transform_17(%arg0: i32) -> (i32, i32, i32) {
    %c0_i32 = arith.constant 0 : i32
    %c0_i32_0 = arith.constant 0 : i32
    %c0_i32_1 = arith.constant 0 : i32
    %c0_i32_2 = arith.constant 0 : i32
    return %c0_i32, %c0_i32_0, %c0_i32_1 : i32, i32, i32
  }
  func.func @transform_18(%arg0: i32) -> (i32, i32) {
    %c0_i32 = arith.constant 0 : i32
    %c0_i32_0 = arith.constant 0 : i32
    %c0_i32_1 = arith.constant 0 : i32
    return %c0_i32, %c0_i32_0 : i32, i32
  }
  func.func @transform_19(%arg0: i32) -> (i32, i32) {
    %c0_i32 = arith.constant 0 : i32
    %c0_i32_0 = arith.constant 0 : i32
    %c0_i32_1 = arith.constant 0 : i32
    return %c0_i32, %c0_i32_0 : i32, i32
  }
  func.func @transform_20(%arg0: i32) -> (i32, i32) {
    %c0_i32 = arith.constant 0 : i32
    %c0_i32_0 = arith.constant 0 : i32
    %c0_i32_1 = arith.constant 0 : i32
    return %c0_i32, %c0_i32_0 : i32, i32
  }
  func.func @transform_21(%arg0: i32) -> (i32, i32, i32) {
    %c0_i32 = arith.constant 0 : i32
    %c0_i32_0 = arith.constant 0 : i32
    %c0_i32_1 = arith.constant 0 : i32
    %c0_i32_2 = arith.constant 0 : i32
    return %c0_i32, %c0_i32_0, %c0_i32_1 : i32, i32, i32
  }
  func.func @transform_22(%arg0: i32) -> (i32, i32, i32) {
    %c0_i32 = arith.constant 0 : i32
    %c0_i32_0 = arith.constant 0 : i32
    %c0_i32_1 = arith.constant 0 : i32
    %c0_i32_2 = arith.constant 0 : i32
    return %c0_i32, %c0_i32_0, %c0_i32_1 : i32, i32, i32
  }
  func.func @transform_23(%arg0: i32) -> (i32, i32) {
    %c0_i32 = arith.constant 0 : i32
    %c0_i32_0 = arith.constant 0 : i32
    %c0_i32_1 = arith.constant 0 : i32
    return %c0_i32, %c0_i32_0 : i32, i32
  }
}

</mosaic_0001>

<llo_original>
// kernel: model_forward.1
$region0: #{model_forward.1}
  #allocation0 [shape = 'u32[]', space=smem, size = 0x4, offset = 0x4, fixed_abs, tag = 'smem constant byte address 0x4 - core index']
  #allocation1 [shape = 'u32[144,128]{1,0:T(1,128)}', space=vmem, size = 0x12000, scoped, tag = 'internal scratch']
  %s0 = inlined_call_operand.vmem [shape: f32[8,8], index: 0, kind: input, shape index: {}]
  %s1 = inlined_call_operand.vmem [shape: bf16[4,8,8], index: 1, kind: input, shape index: {}]
  %s2 = inlined_call_operand.vmem [shape: bf16[4,8,256], index: 2, kind: input, shape index: {}]
  %s3 = inlined_call_operand.hbm [shape: f32[256,256], index: 3, kind: input, shape index: {}]
  %s4 = inlined_call_operand.vmem [shape: f32[1,256], index: 4, kind: input, shape index: {}]
  %s5 = inlined_call_operand.vmem [shape: f32[1,256], index: 5, kind: input, shape index: {}]
  %s6 = inlined_call_operand.vmem [shape: bf16[4,16,8], index: 6, kind: input, shape index: {}]
  %s7 = inlined_call_operand.vmem [shape: bf16[4,256,256], index: 7, kind: input, shape index: {}]
  %s8 = inlined_call_operand.hbm [shape: f32[256,256], index: 8, kind: input, shape index: {}]
  %s9 = inlined_call_operand.vmem [shape: f32[1,256], index: 9, kind: input, shape index: {}]
  %s10 = inlined_call_operand.vmem [shape: f32[1,256], index: 10, kind: input, shape index: {}]
  %s11 = inlined_call_operand.vmem [shape: bf16[4,32,16], index: 11, kind: input, shape index: {}]
  %s12 = inlined_call_operand.vmem [shape: bf16[4,256,256], index: 12, kind: input, shape index: {}]
  %s13 = inlined_call_operand.hbm [shape: f32[256,256], index: 13, kind: input, shape index: {}]
  %s14 = inlined_call_operand.vmem [shape: f32[1,256], index: 14, kind: input, shape index: {}]
  %s15 = inlined_call_operand.vmem [shape: f32[1,256], index: 15, kind: input, shape index: {}]
  %s16 = inlined_call_operand.vmem [shape: bf16[4,64,32], index: 16, kind: input, shape index: {}]
  %s17 = inlined_call_operand.hbm [shape: bf16[4,256,256], index: 17, kind: input, shape index: {}]
  %s18 = inlined_call_operand.hbm [shape: f32[256,256], index: 18, kind: input, shape index: {}]
  %s19 = inlined_call_operand.vmem [shape: f32[1,256], index: 19, kind: input, shape index: {}]
  %s20 = inlined_call_operand.vmem [shape: f32[1,256], index: 20, kind: input, shape index: {}]
  %s21 = inlined_call_operand.vmem [shape: bf16[4,128,64], index: 21, kind: input, shape index: {}]
  %s22 = inlined_call_operand.vmem [shape: bf16[4,256,192], index: 22, kind: input, shape index: {}]
  %s23 = inlined_call_operand.vmem [shape: f32[128,192], index: 23, kind: output, shape index: {}]
  %s24 = sld [smem:[#allocation0]]
  $region122: #{model_forward.1} parent=0
    _
  %s26 = ssub.s32 1, %s24
  %s27 = scalar_select 0, %s26, %s24
  $region1: #{model_forward.1} parent=0
    #allocation2 [shape = 'u8[262144]{0}', space=vmem, size = 0x40000, scoped, tag = 'input window, operand 3, single buffered']
    #allocation3 [shape = 's32[1]{0}', space=sflag, size = 0x4, scoped, tag = 'scoped memory for model_forward.1']
    #allocation4 [shape = 'u8[262144]{0}', space=vmem, size = 0x40000, scoped, tag = 'input window, operand 8, single buffered']
    #allocation5 [shape = 's32[1]{0}', space=sflag, size = 0x4, scoped, tag = 'scoped memory for model_forward.1']
    #allocation6 [shape = 'u8[262144]{0}', space=vmem, size = 0x40000, scoped, tag = 'input window, operand 13, single buffered']
    #allocation7 [shape = 'u8[524288]{0}', space=vmem, size = 0x80000, scoped, tag = 'input window, operand 17, single buffered']
    #allocation8 [shape = 's32[1]{0}', space=sflag, size = 0x4, scoped, tag = 'scoped memory for model_forward.1']
    #allocation9 [shape = 'u8[262144]{0}', space=vmem, size = 0x40000, scoped, tag = 'input window, operand 18, single buffered']
    %28 = vsyncpa [#allocation3], 0
    %29 = vsyncpa [#allocation5], 0
    %30 = vsyncpa [#allocation8], 0
    // Predicated region
    $region2: #{model_forward.1} parent=1 // pred_check
      _
    $region3: #{model_forward.1} parent=1 // pred_check_branch
      %32 = sbr.rel (0) target = $region5
    $region4: #{model_forward.1} parent=1 // pred_region
      _
    $region5: #{model_forward.1} parent=1 // pred_fallthru
      _
    // Predicated region
    $region6: #{model_forward.1} parent=1 // pred_check
      _
    $region7: #{model_forward.1} parent=1 // pred_check_branch
      %34 = sbr.rel (0) target = $region9
    $region8: #{model_forward.1} parent=1 // pred_region
      _
    $region9: #{model_forward.1} parent=1 // pred_fallthru
      _
    // Predicated region
    $region10: #{model_forward.1} parent=1 // pred_check
      _
    $region11: #{model_forward.1} parent=1 // pred_check_branch
      %36 = sbr.rel (0) target = $region13
    $region12: #{model_forward.1} parent=1 // pred_region
      _
    $region13: #{model_forward.1} parent=1 // pred_fallthru
      _
    // Predicated region
    $region14: #{model_forward.1} parent=1 // pred_check
      _
    $region15: #{model_forward.1} parent=1 // pred_check_branch
      %38 = sbr.rel (0) target = $region17
    $region16: #{model_forward.1} parent=1 // pred_region
      %s40 = ssub.s32 8192, 8192
      %41 = vsyncadd [#allocation3], %s40
      %s42 = sshll.u32 [#allocation2], 4
      %s43 = int_to_ptr.vmem [resolvable:$true] %s42
      %48 = dma.hbm_to_vmem [thread:$0]  %s3, 8192, %s43, [#allocation3], 256, 256, 16
    $region17: #{model_forward.1} parent=1 // pred_fallthru
      _
    // Predicated region
    $region18: #{model_forward.1} parent=1 // pred_check
      _
    $region19: #{model_forward.1} parent=1 // pred_check_branch
      %50 = sbr.rel (0) target = $region21
    $region20: #{model_forward.1} parent=1 // pred_region
      _
    $region21: #{model_forward.1} parent=1 // pred_fallthru
      _
    // Predicated region
    $region22: #{model_forward.1} parent=1 // pred_check
      _
    $region23: #{model_forward.1} parent=1 // pred_check_branch
      %52 = sbr.rel (0) target = $region25
    $region24: #{model_forward.1} parent=1 // pred_region
      _
    $region25: #{model_forward.1} parent=1 // pred_fallthru
      _
    // Predicated region
    $region26: #{model_forward.1} parent=1 // pred_check
      _
    $region27: #{model_forward.1} parent=1 // pred_check_branch
      %54 = sbr.rel (0) target = $region29
    $region28: #{model_forward.1} parent=1 // pred_region
      _
    $region29: #{model_forward.1} parent=1 // pred_fallthru
      _
    // Predicated region
    $region30: #{model_forward.1} parent=1 // pred_check
      _
    $region31: #{model_forward.1} parent=1 // pred_check_branch
      %56 = sbr.rel (0) target = $region33
    $region32: #{model_forward.1} parent=1 // pred_region
      _
    $region33: #{model_forward.1} parent=1 // pred_fallthru
      _
    // Predicated region
    $region34: #{model_forward.1} parent=1 // pred_check
      _
    $region35: #{model_forward.1} parent=1 // pred_check_branch
      %58 = sbr.rel (0) target = $region37
    $region36: #{model_forward.1} parent=1 // pred_region
      %s60 = ssub.s32 8192, 8192
      %61 = vsyncadd [#allocation5], %s60
      %s62 = sshll.u32 [#allocation4], 4
      %s63 = int_to_ptr.vmem [resolvable:$true] %s62
      %68 = dma.hbm_to_vmem [thread:$0]  %s8, 8192, %s63, [#allocation5], 256, 256, 16
    $region37: #{model_forward.1} parent=1 // pred_fallthru
      _
    // Predicated region
    $region38: #{model_forward.1} parent=1 // pred_check
      _
    $region39: #{model_forward.1} parent=1 // pred_check_branch
      %70 = sbr.rel (0) target = $region41
    $region40: #{model_forward.1} parent=1 // pred_region
      _
    $region41: #{model_forward.1} parent=1 // pred_fallthru
      _
    // Predicated region
    $region42: #{model_forward.1} parent=1 // pred_check
      _
    $region43: #{model_forward.1} parent=1 // pred_check_branch
      %72 = sbr.rel (0) target = $region45
    $region44: #{model_forward.1} parent=1 // pred_region
      _
    $region45: #{model_forward.1} parent=1 // pred_fallthru
      _
    // Predicated region
    $region46: #{model_forward.1} parent=1 // pred_check
      _
    $region47: #{model_forward.1} parent=1 // pred_check_branch
      %74 = sbr.rel (0) target = $region49
    $region48: #{model_forward.1} parent=1 // pred_region
      _
    $region49: #{model_forward.1} parent=1 // pred_fallthru
      _
    // Predicated region
    $region50: #{model_forward.1} parent=1 // pred_check
      _
    $region51: #{model_forward.1} parent=1 // pred_check_branch
      %76 = sbr.rel (0) target = $region53
    $region52: #{model_forward.1} parent=1 // pred_region
      _
    $region53: #{model_forward.1} parent=1 // pred_fallthru
      _
    // Predicated region
    $region54: #{model_forward.1} parent=1 // pred_check
      _
    $region55: #{model_forward.1} parent=1 // pred_check_branch
      %78 = sbr.rel (0) target = $region57
    $region56: #{model_forward.1} parent=1 // pred_region
      %s80 = ssub.s32 8192, 8192
      %81 = vsyncadd [#allocation5], %s80
      %s82 = sshll.u32 [#allocation6], 4
      %s83 = int_to_ptr.vmem [resolvable:$true] %s82
      %88 = dma.hbm_to_vmem [thread:$0]  %s13, 8192, %s83, [#allocation5], 256, 256, 16
    $region57: #{model_forward.1} parent=1 // pred_fallthru
      _
    // Predicated region
    $region58: #{model_forward.1} parent=1 // pred_check
      _
    $region59: #{model_forward.1} parent=1 // pred_check_branch
      %90 = sbr.rel (0) target = $region61
    $region60: #{model_forward.1} parent=1 // pred_region
      _
    $region61: #{model_forward.1} parent=1 // pred_fallthru
      _
    // Predicated region
    $region62: #{model_forward.1} parent=1 // pred_check
      _
    $region63: #{model_forward.1} parent=1 // pred_check_branch
      %92 = sbr.rel (0) target = $region65
    $region64: #{model_forward.1} parent=1 // pred_region
      _
    $region65: #{model_forward.1} parent=1 // pred_fallthru
      _
    // Predicated region
    $region66: #{model_forward.1} parent=1 // pred_check
      _
    $region67: #{model_forward.1} parent=1 // pred_check_branch
      %94 = sbr.rel (0) target = $region69
    $region68: #{model_forward.1} parent=1 // pred_region
      _
    $region69: #{model_forward.1} parent=1 // pred_fallthru
      _
    // Predicated region
    $region70: #{model_forward.1} parent=1 // pred_check
      _
    $region71: #{model_forward.1} parent=1 // pred_check_branch
      %96 = sbr.rel (0) target = $region73
    $region72: #{model_forward.1} parent=1 // pred_region
      %s98 = ssub.s32 16384, 16384
      %99 = vsyncadd [#allocation8], %s98
      %s100 = sshll.u32 [#allocation7], 4
      %s101 = int_to_ptr.vmem [resolvable:$true] %s100
      %106 = dma.hbm_to_vmem [thread:$0]  %s17, 16384, %s101, [#allocation8], 128, 128, 8
    $region73: #{model_forward.1} parent=1 // pred_fallthru
      _
    // Predicated region
    $region74: #{model_forward.1} parent=1 // pred_check
      _
    $region75: #{model_forward.1} parent=1 // pred_check_branch
      %108 = sbr.rel (0) target = $region77
    $region76: #{model_forward.1} parent=1 // pred_region
      %s110 = ssub.s32 8192, 8192
      %111 = vsyncadd [#allocation8], %s110
      %s112 = sshll.u32 [#allocation9], 4
      %s113 = int_to_ptr.vmem [resolvable:$true] %s112
      %118 = dma.hbm_to_vmem [thread:$0]  %s18, 8192, %s113, [#allocation8], 256, 256, 16
    $region77: #{model_forward.1} parent=1 // pred_fallthru
      _
    // Predicated region
    $region78: #{model_forward.1} parent=1 // pred_check
      _
    $region79: #{model_forward.1} parent=1 // pred_check_branch
      %120 = sbr.rel (0) target = $region81
    $region80: #{model_forward.1} parent=1 // pred_region
      _
    $region81: #{model_forward.1} parent=1 // pred_fallthru
      _
    // Predicated region
    $region82: #{model_forward.1} parent=1 // pred_check
      _
    $region83: #{model_forward.1} parent=1 // pred_check_branch
      %122 = sbr.rel (0) target = $region85
    $region84: #{model_forward.1} parent=1 // pred_region
      _
    $region85: #{model_forward.1} parent=1 // pred_fallthru
      _
    // Predicated region
    $region86: #{model_forward.1} parent=1 // pred_check
      _
    $region87: #{model_forward.1} parent=1 // pred_check_branch
      %124 = sbr.rel (0) target = $region89
    $region88: #{model_forward.1} parent=1 // pred_region
      _
    $region89: #{model_forward.1} parent=1 // pred_fallthru
      _
    // Predicated region
    $region90: #{model_forward.1} parent=1 // pred_check
      _
    $region91: #{model_forward.1} parent=1 // pred_check_branch
      %126 = sbr.rel (0) target = $region93
    $region92: #{model_forward.1} parent=1 // pred_region
      _
    $region93: #{model_forward.1} parent=1 // pred_fallthru
      _
    // Predicated region
    $region94: #{model_forward.1} parent=1 // pred_check
      _
    $region95: #{model_forward.1} parent=1 // pred_check_branch
      %128 = sbr.rel (0) target = $region97
    $region96: #{model_forward.1} parent=1 // pred_region
      %129 = dma.done [#allocation3], 8192
    $region97: #{model_forward.1} parent=1 // pred_fallthru
      _
    // Predicated region
    $region98: #{model_forward.1} parent=1 // pred_check
      _
    $region99: #{model_forward.1} parent=1 // pred_check_branch
      %131 = sbr.rel (0) target = $region101
    $region100: #{model_forward.1} parent=1 // pred_region
      %132 = dma.done [#allocation5], 8192
    $region101: #{model_forward.1} parent=1 // pred_fallthru
      _
    // Predicated region
    $region102: #{model_forward.1} parent=1 // pred_check
      _
    $region103: #{model_forward.1} parent=1 // pred_check_branch
      %134 = sbr.rel (0) target = $region105
    $region104: #{model_forward.1} parent=1 // pred_region
      %135 = dma.done [#allocation5], 8192
    $region105: #{model_forward.1} parent=1 // pred_fallthru
      _
    // Predicated region
    $region106: #{model_forward.1} parent=1 // pred_check
      _
    $region107: #{model_forward.1} parent=1 // pred_check_branch
      %137 = sbr.rel (0) target = $region109
    $region108: #{model_forward.1} parent=1 // pred_region
      %138 = dma.done [#allocation8], 16384
    $region109: #{model_forward.1} parent=1 // pred_fallthru
      _
    // Predicated region
    $region110: #{model_forward.1} parent=1 // pred_check
      _
    $region111: #{model_forward.1} parent=1 // pred_check_branch
      %140 = sbr.rel (0) target = $region113
    $region112: #{model_forward.1} parent=1 // pred_region
      %141 = dma.done [#allocation8], 8192
    $region113: #{model_forward.1} parent=1 // pred_fallthru
      _
    %v143 = vld [vmem:[%s0] sm:$0xff]
    %v144 = vpack.c.bf16 %v143, %v143
    %v145 = vld [vmem:[%s2] sm:$0xff]
    %v147 = vunpack.c.l.b16 %v145
    %v148 = vunpack.c.h.b16 %v145
    %v149 = vpack.c.b16 %v147, %v147
    %v150 = vpack.c.b16 %v148, %v148
    %vm151 = vcmask 64512
    %v153 = vsel %vm151, %v144, 0
    %vm155 = vcmask 1043456
    %v157 = vsel %vm155, %v149, 0
    %v160 = vsel %vm155, %v150, 0
    %162 = vmatprep.subr.bf16.mxu0 0
    %163 = vmatpush1.bf16.msra.mxu0 0
    %164 = vmatprep.subr.bf16.mxu0 0
    %165 = vmatpush1.bf16.msra.mxu0 0
    %166 = vmatprep.subr.bf16.mxu0 0
    %167 = vmatpush1.bf16.msra.mxu0 0
    %168 = vmatprep.subr.bf16.mxu0 0
    %169 = vmatpush1.bf16.msra.mxu0 0
    %170 = vmatprep.subr.bf16.mxu0 0
    %171 = vmatpush1.bf16.msra.mxu0 0
    %172 = vmatprep.subr.bf16.mxu0 0
    %173 = vmatpush1.bf16.msra.mxu0 0
    %174 = vmatprep.subr.bf16.mxu0 0
    %175 = vmatpush1.bf16.msra.mxu0 0
    %176 = vmatprep.subr.bf16.mxu0 %v160
    %177 = vmatpush1.bf16.msra.mxu0 %v157
    %178 = vmatprep.subr.bf16.mxu0 0
    %179 = vmatpush2.bf16.msra.mxu0 0
    %180 = vmatprep.subr.bf16.mxu0 0
    %181 = vmatpush2.bf16.msra.mxu0 0
    %182 = vmatprep.subr.bf16.mxu0 0
    %183 = vmatpush2.bf16.msra.mxu0 0
    %184 = vmatprep.subr.bf16.mxu0 0
    %185 = vmatpush2.bf16.msra.mxu0 0
    %186 = vmatprep.subr.bf16.mxu0 0
    %187 = vmatpush2.bf16.msra.mxu0 0
    %188 = vmatprep.subr.bf16.mxu0 0
    %189 = vmatpush2.bf16.msra.mxu0 0
    %190 = vmatprep.subr.bf16.mxu0 0
    %191 = vmatpush2.bf16.msra.mxu0 0
    %192 = vmatprep.subr.bf16.mxu0 0
    %193 = vmatpush2.bf16.msra.mxu0 0
    %194 = vmatprep.mubr.bf16.mxu0 0
    %195 = vmatmul.mubr.bf16.gmra.mxu0 %v153
    %v196 = vpop.f32.mrf.mxu0
    %v197 = vadd.f32 0.0, %v196
    %v198 = vpop.f32.mrf.mxu0
    %v199 = vadd.f32 0.0, %v198
    %v200 = vpop.f32.mrf.mxu0
    %v201 = vpop.f32.mrf.mxu0
    %202 = vdwg.mxu0
    %v203 = vld [vmem:[%s1] sm:$0xf]
    %v204 = vpack.c.bf16 %v197, %v197
    %v205 = vpack.c.bf16 %v199, %v199
    %s206 = scalar_lea.vmem %s2, 8
    %v207 = vld [vmem:[%s206] sm:$0xff]
    %v209 = vunpack.c.l.b16 %v207
    %v210 = vunpack.c.h.b16 %v207
    %v211 = vpack.c.b16 %v209, %v209
    %v212 = vpack.c.b16 %v210, %v210
    %v214 = vsel %vm155, %v211, 0
    %v217 = vsel %vm155, %v212, 0
    %219 = vmatprep.subr.bf16.mxu0 0
    %220 = vmatpush1.bf16.msra.mxu0 0
    %221 = vmatprep.subr.bf16.mxu0 0
    %222 = vmatpush1.bf16.msra.mxu0 0
    %223 = vmatprep.subr.bf16.mxu0 0
    %224 = vmatpush1.bf16.msra.mxu0 0
    %225 = vmatprep.subr.bf16.mxu0 0
    %226 = vmatpush1.bf16.msra.mxu0 0
    %227 = vmatprep.subr.bf16.mxu0 0
    %228 = vmatpush1.bf16.msra.mxu0 0
    %229 = vmatprep.subr.bf16.mxu0 0
    %230 = vmatpush1.bf16.msra.mxu0 0
    %231 = vmatprep.subr.bf16.mxu0 0
    %232 = vmatpush1.bf16.msra.mxu0 0
    %233 = vmatprep.subr.bf16.mxu0 %v217
    %234 = vmatpush1.bf16.msra.mxu0 %v214
    %235 = vmatprep.subr.bf16.mxu0 0
    %236 = vmatpush2.bf16.msra.mxu0 0
    %237 = vmatprep.subr.bf16.mxu0 0
    %238 = vmatpush2.bf16.msra.mxu0 0
    %239 = vmatprep.subr.bf16.mxu0 0
    %240 = vmatpush2.bf16.msra.mxu0 0
    %241 = vmatprep.subr.bf16.mxu0 0
    %242 = vmatpush2.bf16.msra.mxu0 0
    %243 = vmatprep.subr.bf16.mxu0 0
    %244 = vmatpush2.bf16.msra.mxu0 0
    %245 = vmatprep.subr.bf16.mxu0 0
    %246 = vmatpush2.bf16.msra.mxu0 0
    %247 = vmatprep.subr.bf16.mxu0 0
    %248 = vmatpush2.bf16.msra.mxu0 0
    %249 = vmatprep.subr.bf16.mxu0 0
    %250 = vmatpush2.bf16.msra.mxu0 0
    %251 = vmatprep.mubr.bf16.mxu0 0
    %252 = vmatmul.mubr.bf16.gmra.mxu0 %v153
    %v253 = vpop.f32.mrf.mxu0
    %v254 = vadd.f32 0.0, %v253
    %v255 = vpop.f32.mrf.mxu0
    %v256 = vadd.f32 0.0, %v255
    %v257 = vpop.f32.mrf.mxu0
    %v258 = vpop.f32.mrf.mxu0
    %259 = vdwg.mxu0
    %s260 = scalar_lea.vmem %s1, 4
    %v261 = vld [vmem:[%s260] sm:$0xf]
    %v262 = vpack.c.bf16 %v254, %v254
    %v263 = vpack.c.bf16 %v256, %v256
    %v265 = vsel %vm151, %v261, 0
    %v268 = vsel %vm155, %v262, 0
    %v271 = vsel %vm155, %v263, 0
    %273 = vmatprep.subr.bf16.mxu0 0
    %274 = vmatpush1.bf16.msra.mxu0 0
    %275 = vmatprep.subr.bf16.mxu0 0
    %276 = vmatpush1.bf16.msra.mxu0 0
    %277 = vmatprep.subr.bf16.mxu0 0
    %278 = vmatpush1.bf16.msra.mxu0 0
    %279 = vmatprep.subr.bf16.mxu0 0
    %280 = vmatpush1.bf16.msra.mxu0 0
    %281 = vmatprep.subr.bf16.mxu0 0
    %282 = vmatpush1.bf16.msra.mxu0 0
    %283 = vmatprep.subr.bf16.mxu0 0
    %284 = vmatpush1.bf16.msra.mxu0 0
    %285 = vmatprep.subr.bf16.mxu0 0
    %286 = vmatpush1.bf16.msra.mxu0 0
    %287 = vmatprep.subr.bf16.mxu0 %v271
    %288 = vmatpush1.bf16.msra.mxu0 %v268
    %289 = vmatprep.subr.bf16.mxu0 0
    %290 = vmatpush2.bf16.msra.mxu0 0
    %291 = vmatprep.subr.bf16.mxu0 0
    %292 = vmatpush2.bf16.msra.mxu0 0
    %293 = vmatprep.subr.bf16.mxu0 0
    %294 = vmatpush2.bf16.msra.mxu0 0
    %295 = vmatprep.subr.bf16.mxu0 0
    %296 = vmatpush2.bf16.msra.mxu0 0
    %297 = vmatprep.subr.bf16.mxu0 0
    %298 = vmatpush2.bf16.msra.mxu0 0
    %299 = vmatprep.subr.bf16.mxu0 0
    %300 = vmatpush2.bf16.msra.mxu0 0
    %301 = vmatprep.subr.bf16.mxu0 0
    %302 = vmatpush2.bf16.msra.mxu0 0
    %303 = vmatprep.subr.bf16.mxu0 0
    %304 = vmatpush2.bf16.msra.mxu0 0
    %305 = vmatprep.mubr.bf16.mxu0 0
    %306 = vmatmul.mubr.bf16.gmra.mxu0 %v265
    %v307 = vpop.f32.mrf.mxu0
    %v308 = vadd.f32 0.0, %v307
    %v309 = vpop.f32.mrf.mxu0
    %v310 = vadd.f32 0.0, %v309
    %v311 = vpop.f32.mrf.mxu0
    %v312 = vpop.f32.mrf.mxu0
    %313 = vdwg.mxu0
    %v315 = vsel %vm151, %v203, 0
    %v318 = vsel %vm155, %v204, 0
    %v321 = vsel %vm155, %v205, 0
    %323 = vmatprep.subr.bf16.mxu0 0
    %324 = vmatpush1.bf16.msra.mxu0 0
    %325 = vmatprep.subr.bf16.mxu0 0
    %326 = vmatpush1.bf16.msra.mxu0 0
    %327 = vmatprep.subr.bf16.mxu0 0
    %328 = vmatpush1.bf16.msra.mxu0 0
    %329 = vmatprep.subr.bf16.mxu0 0
    %330 = vmatpush1.bf16.msra.mxu0 0
    %331 = vmatprep.subr.bf16.mxu0 0
    %332 = vmatpush1.bf16.msra.mxu0 0
    %333 = vmatprep.subr.bf16.mxu0 0
    %334 = vmatpush1.bf16.msra.mxu0 0
    %335 = vmatprep.subr.bf16.mxu0 0
    %336 = vmatpush1.bf16.msra.mxu0 0
    %337 = vmatprep.subr.bf16.mxu0 %v321
    %338 = vmatpush1.bf16.msra.mxu0 %v318
    %339 = vmatprep.subr.bf16.mxu0 0
    %340 = vmatpush2.bf16.msra.mxu0 0
    %341 = vmatprep.subr.bf16.mxu0 0
    %342 = vmatpush2.bf16.msra.mxu0 0
    %343 = vmatprep.subr.bf16.mxu0 0
    %344 = vmatpush2.bf16.msra.mxu0 0
    %345 = vmatprep.subr.bf16.mxu0 0
    %346 = vmatpush2.bf16.msra.mxu0 0
    %347 = vmatprep.subr.bf16.mxu0 0
    %348 = vmatpush2.bf16.msra.mxu0 0
    %349 = vmatprep.subr.bf16.mxu0 0
    %350 = vmatpush2.bf16.msra.mxu0 0
    %351 = vmatprep.subr.bf16.mxu0 0
    %352 = vmatpush2.bf16.msra.mxu0 0
    %353 = vmatprep.subr.bf16.mxu0 0
    %354 = vmatpush2.bf16.msra.mxu0 0
    %355 = vmatprep.mubr.bf16.mxu0 0
    %356 = vmatmul.mubr.bf16.gmra.mxu0 %v315
    %v357 = vpop.f32.mrf.mxu0
    %v358 = vadd.f32 %v308, %v357
    %v359 = vpop.f32.mrf.mxu0
    %v360 = vadd.f32 %v310, %v359
    %v361 = vpop.f32.mrf.mxu0
    %v362 = vpop.f32.mrf.mxu0
    %363 = vdwg.mxu0
    %s364 = scalar_lea.vmem %s2, 16
    %v365 = vld [vmem:[%s364] sm:$0xff]
    %v367 = vunpack.c.l.b16 %v365
    %v368 = vunpack.c.h.b16 %v365
    %v369 = vpack.c.b16 %v367, %v367
    %v370 = vpack.c.b16 %v368, %v368
    %v372 = vsel %vm155, %v369, 0
    %v375 = vsel %vm155, %v370, 0
    %377 = vmatprep.subr.bf16.mxu0 0
    %378 = vmatpush1.bf16.msra.mxu0 0
    %379 = vmatprep.subr.bf16.mxu0 0
    %380 = vmatpush1.bf16.msra.mxu0 0
    %381 = vmatprep.subr.bf16.mxu0 0
    %382 = vmatpush1.bf16.msra.mxu0 0
    %383 = vmatprep.subr.bf16.mxu0 0
    %384 = vmatpush1.bf16.msra.mxu0 0
    %385 = vmatprep.subr.bf16.mxu0 0
    %386 = vmatpush1.bf16.msra.mxu0 0
    %387 = vmatprep.subr.bf16.mxu0 0
    %388 = vmatpush1.bf16.msra.mxu0 0
    %389 = vmatprep.subr.bf16.mxu0 0
    %390 = vmatpush1.bf16.msra.mxu0 0
    %391 = vmatprep.subr.bf16.mxu0 %v375
    %392 = vmatpush1.bf16.msra.mxu0 %v372
    %393 = vmatprep.subr.bf16.mxu0 0
    %394 = vmatpush2.bf16.msra.mxu0 0
    %395 = vmatprep.subr.bf16.mxu0 0
    %396 = vmatpush2.bf16.msra.mxu0 0
    %397 = vmatprep.subr.bf16.mxu0 0
    %398 = vmatpush2.bf16.msra.mxu0 0
    %399 = vmatprep.subr.bf16.mxu0 0
    %400 = vmatpush2.bf16.msra.mxu0 0
    %401 = vmatprep.subr.bf16.mxu0 0
    %402 = vmatpush2.bf16.msra.mxu0 0
    %403 = vmatprep.subr.bf16.mxu0 0
    %404 = vmatpush2.bf16.msra.mxu0 0
    %405 = vmatprep.subr.bf16.mxu0 0
    %406 = vmatpush2.bf16.msra.mxu0 0
    %407 = vmatprep.subr.bf16.mxu0 0
    %408 = vmatpush2.bf16.msra.mxu0 0
    %409 = vmatprep.mubr.bf16.mxu0 0
    %410 = vmatmul.mubr.bf16.gmra.mxu0 %v153
    %v411 = vpop.f32.mrf.mxu0
    %v412 = vadd.f32 0.0, %v411
    %v413 = vpop.f32.mrf.mxu0
    %v414 = vadd.f32 0.0, %v413
    %v415 = vpop.f32.mrf.mxu0
    %v416 = vpop.f32.mrf.mxu0
    %417 = vdwg.mxu0
    %s418 = scalar_lea.vmem %s1, 8
    %v419 = vld [vmem:[%s418] sm:$0xf]
    %v420 = vpack.c.bf16 %v412, %v412
    %v421 = vpack.c.bf16 %v414, %v414
    %v423 = vsel %vm151, %v419, 0
    %v426 = vsel %vm155, %v420, 0
    %v429 = vsel %vm155, %v421, 0
    %431 = vmatprep.subr.bf16.mxu0 0
    %432 = vmatpush1.bf16.msra.mxu0 0
    %433 = vmatprep.subr.bf16.mxu0 0
    %434 = vmatpush1.bf16.msra.mxu0 0
    %435 = vmatprep.subr.bf16.mxu0 0
    %436 = vmatpush1.bf16.msra.mxu0 0
    %437 = vmatprep.subr.bf16.mxu0 0
    %438 = vmatpush1.bf16.msra.mxu0 0
    %439 = vmatprep.subr.bf16.mxu0 0
    %440 = vmatpush1.bf16.msra.mxu0 0
    %441 = vmatprep.subr.bf16.mxu0 0
    %442 = vmatpush1.bf16.msra.mxu0 0
    %443 = vmatprep.subr.bf16.mxu0 0
    %444 = vmatpush1.bf16.msra.mxu0 0
    %445 = vmatprep.subr.bf16.mxu0 %v429
    %446 = vmatpush1.bf16.msra.mxu0 %v426
    %447 = vmatprep.subr.bf16.mxu0 0
    %448 = vmatpush2.bf16.msra.mxu0 0
    %449 = vmatprep.subr.bf16.mxu0 0
    %450 = vmatpush2.bf16.msra.mxu0 0
    %451 = vmatprep.subr.bf16.mxu0 0
    %452 = vmatpush2.bf16.msra.mxu0 0
    %453 = vmatprep.subr.bf16.mxu0 0
    %454 = vmatpush2.bf16.msra.mxu0 0
    %455 = vmatprep.subr.bf16.mxu0 0
    %456 = vmatpush2.bf16.msra.mxu0 0
    %457 = vmatprep.subr.bf16.mxu0 0
    %458 = vmatpush2.bf16.msra.mxu0 0
    %459 = vmatprep.subr.bf16.mxu0 0
    %460 = vmatpush2.bf16.msra.mxu0 0
    %461 = vmatprep.subr.bf16.mxu0 0
    %462 = vmatpush2.bf16.msra.mxu0 0
    %463 = vmatprep.mubr.bf16.mxu0 0
    %464 = vmatmul.mubr.bf16.gmra.mxu0 %v423
    %v465 = vpop.f32.mrf.mxu0
    %v466 = vadd.f32 0.0, %v465
    %v467 = vpop.f32.mrf.mxu0
    %v468 = vadd.f32 0.0, %v467
    %v469 = vpop.f32.mrf.mxu0
    %v470 = vpop.f32.mrf.mxu0
    %471 = vdwg.mxu0
    %v472 = vadd.f32 %v358, %v466
    %v473 = vadd.f32 %v360, %v468
    %s474 = scalar_lea.vmem %s2, 24
    %v475 = vld [vmem:[%s474] sm:$0xff]
    %v477 = vunpack.c.l.b16 %v475
    %v478 = vunpack.c.h.b16 %v475
    %v479 = vpack.c.b16 %v477, %v477
    %v480 = vpack.c.b16 %v478, %v478
    %v482 = vsel %vm155, %v479, 0
    %v485 = vsel %vm155, %v480, 0
    %487 = vmatprep.subr.bf16.mxu0 0
    %488 = vmatpush1.bf16.msra.mxu0 0
    %489 = vmatprep.subr.bf16.mxu0 0
    %490 = vmatpush1.bf16.msra.mxu0 0
    %491 = vmatprep.subr.bf16.mxu0 0
    %492 = vmatpush1.bf16.msra.mxu0 0
    %493 = vmatprep.subr.bf16.mxu0 0
    %494 = vmatpush1.bf16.msra.mxu0 0
    %495 = vmatprep.subr.bf16.mxu0 0
    %496 = vmatpush1.bf16.msra.mxu0 0
    %497 = vmatprep.subr.bf16.mxu0 0
    %498 = vmatpush1.bf16.msra.mxu0 0
    %499 = vmatprep.subr.bf16.mxu0 0
    %500 = vmatpush1.bf16.msra.mxu0 0
    %501 = vmatprep.subr.bf16.mxu0 %v485
    %502 = vmatpush1.bf16.msra.mxu0 %v482
    %503 = vmatprep.subr.bf16.mxu0 0
    %504 = vmatpush2.bf16.msra.mxu0 0
    %505 = vmatprep.subr.bf16.mxu0 0
    %506 = vmatpush2.bf16.msra.mxu0 0
    %507 = vmatprep.subr.bf16.mxu0 0
    %508 = vmatpush2.bf16.msra.mxu0 0
    %509 = vmatprep.subr.bf16.mxu0 0
    %510 = vmatpush2.bf16.msra.mxu0 0
    %511 = vmatprep.subr.bf16.mxu0 0
    %512 = vmatpush2.bf16.msra.mxu0 0
    %513 = vmatprep.subr.bf16.mxu0 0
    %514 = vmatpush2.bf16.msra.mxu0 0
    %515 = vmatprep.subr.bf16.mxu0 0
    %516 = vmatpush2.bf16.msra.mxu0 0
    %517 = vmatprep.subr.bf16.mxu0 0
    %518 = vmatpush2.bf16.msra.mxu0 0
    %519 = vmatprep.mubr.bf16.mxu0 0
    %520 = vmatmul.mubr.bf16.gmra.mxu0 %v153
    %v521 = vpop.f32.mrf.mxu0
    %v522 = vadd.f32 0.0, %v521
    %v523 = vpop.f32.mrf.mxu0
    %v524 = vadd.f32 0.0, %v523
    %v525 = vpop.f32.mrf.mxu0
    %v526 = vpop.f32.mrf.mxu0
    %527 = vdwg.mxu0
    %s528 = scalar_lea.vmem %s1, 12
    %v529 = vld [vmem:[%s528] sm:$0xf]
    %v530 = vpack.c.bf16 %v522, %v522
    %v531 = vpack.c.bf16 %v524, %v524
    %v533 = vsel %vm151, %v529, 0
    %v536 = vsel %vm155, %v530, 0
    %v539 = vsel %vm155, %v531, 0
    %541 = vmatprep.subr.bf16.mxu0 0
    %542 = vmatpush1.bf16.msra.mxu0 0
    %543 = vmatprep.subr.bf16.mxu0 0
    %544 = vmatpush1.bf16.msra.mxu0 0
    %545 = vmatprep.subr.bf16.mxu0 0
    %546 = vmatpush1.bf16.msra.mxu0 0
    %547 = vmatprep.subr.bf16.mxu0 0
    %548 = vmatpush1.bf16.msra.mxu0 0
    %549 = vmatprep.subr.bf16.mxu0 0
    %550 = vmatpush1.bf16.msra.mxu0 0
    %551 = vmatprep.subr.bf16.mxu0 0
    %552 = vmatpush1.bf16.msra.mxu0 0
    %553 = vmatprep.subr.bf16.mxu0 0
    %554 = vmatpush1.bf16.msra.mxu0 0
    %555 = vmatprep.subr.bf16.mxu0 %v539
    %556 = vmatpush1.bf16.msra.mxu0 %v536
    %557 = vmatprep.subr.bf16.mxu0 0
    %558 = vmatpush2.bf16.msra.mxu0 0
    %559 = vmatprep.subr.bf16.mxu0 0
    %560 = vmatpush2.bf16.msra.mxu0 0
    %561 = vmatprep.subr.bf16.mxu0 0
    %562 = vmatpush2.bf16.msra.mxu0 0
    %563 = vmatprep.subr.bf16.mxu0 0
    %564 = vmatpush2.bf16.msra.mxu0 0
    %565 = vmatprep.subr.bf16.mxu0 0
    %566 = vmatpush2.bf16.msra.mxu0 0
    %567 = vmatprep.subr.bf16.mxu0 0
    %568 = vmatpush2.bf16.msra.mxu0 0
    %569 = vmatprep.subr.bf16.mxu0 0
    %570 = vmatpush2.bf16.msra.mxu0 0
    %571 = vmatprep.subr.bf16.mxu0 0
    %572 = vmatpush2.bf16.msra.mxu0 0
    %573 = vmatprep.mubr.bf16.mxu0 0
    %574 = vmatmul.mubr.bf16.gmra.mxu0 %v533
    %v575 = vpop.f32.mrf.mxu0
    %v576 = vadd.f32 0.0, %v575
    %v577 = vpop.f32.mrf.mxu0
    %v578 = vadd.f32 0.0, %v577
    %v579 = vpop.f32.mrf.mxu0
    %v580 = vpop.f32.mrf.mxu0
    %581 = vdwg.mxu0
    %v582 = vadd.f32 %v472, %v576
    %v583 = vadd.f32 %v473, %v578
    %v584 = vrot.slane %v582, 4
    %v585 = vadd.f32 %v582, %v584
    %v586 = vrot.slane %v585, 2
    %v587 = vadd.f32 %v585, %v586
    %v588 = vrot.slane %v587, 1
    %v589 = vadd.f32 %v587, %v588
    %v590 = vrot.slane %v583, 4
    %v591 = vadd.f32 %v583, %v590
    %v592 = vrot.slane %v591, 2
    %v593 = vadd.f32 %v591, %v592
    %v594 = vrot.slane %v593, 1
    %v595 = vadd.f32 %v593, %v594
    %v596 = vrcp.pop 8.0
    %v597 = vmul.f32 %v589, %v596
    %v598 = vmul.f32 %v595, %v596
    %v599 = vld [vmem:[#allocation2] sm:$0xff]
    %v600 = vld [vmem:[#allocation2 + $0x8] sm:$0xff]
    %v601 = vld [vmem:[#allocation2 + $0x10] sm:$0xff]
    %v602 = vld [vmem:[#allocation2 + $0x18] sm:$0xff]
    %v603 = vld [vmem:[#allocation2 + $0x20] sm:$0xff]
    %v604 = vld [vmem:[#allocation2 + $0x28] sm:$0xff]
    %v605 = vld [vmem:[#allocation2 + $0x30] sm:$0xff]
    %v606 = vld [vmem:[#allocation2 + $0x38] sm:$0xff]
    %v607 = vld [vmem:[#allocation2 + $0x40] sm:$0xff]
    %v608 = vld [vmem:[#allocation2 + $0x48] sm:$0xff]
    %v609 = vld [vmem:[#allocation2 + $0x50] sm:$0xff]
    %v610 = vld [vmem:[#allocation2 + $0x58] sm:$0xff]
    %v611 = vld [vmem:[#allocation2 + $0x60] sm:$0xff]
    %v612 = vld [vmem:[#allocation2 + $0x68] sm:$0xff]
    %v613 = vld [vmem:[#allocation2 + $0x70] sm:$0xff]
    %v614 = vld [vmem:[#allocation2 + $0x78] sm:$0xff]
    %v615 = vld [vmem:[#allocation2 + $0x80] sm:$0xff]
    %v616 = vld [vmem:[#allocation2 + $0x88] sm:$0xff]
    %v617 = vld [vmem:[#allocation2 + $0x90] sm:$0xff]
    %v618 = vld [vmem:[#allocation2 + $0x98] sm:$0xff]
    %v619 = vld [vmem:[#allocation2 + $0xa0] sm:$0xff]
    %v620 = vld [vmem:[#allocation2 + $0xa8] sm:$0xff]
    %v621 = vld [vmem:[#allocation2 + $0xb0] sm:$0xff]
    %v622 = vld [vmem:[#allocation2 + $0xb8] sm:$0xff]
    %v623 = vld [vmem:[#allocation2 + $0xc0] sm:$0xff]
    %v624 = vld [vmem:[#allocation2 + $0xc8] sm:$0xff]
    %v625 = vld [vmem:[#allocation2 + $0xd0] sm:$0xff]
    %v626 = vld [vmem:[#allocation2 + $0xd8] sm:$0xff]
    %v627 = vld [vmem:[#allocation2 + $0xe0] sm:$0xff]
    %v628 = vld [vmem:[#allocation2 + $0xe8] sm:$0xff]
    %v629 = vld [vmem:[#allocation2 + $0xf0] sm:$0xff]
    %v630 = vld [vmem:[#allocation2 + $0xf8] sm:$0xff]
    %v631 = vld [vmem:[#allocation2 + $0x100] sm:$0xff]
    %v632 = vld [vmem:[#allocation2 + $0x108] sm:$0xff]
    %v633 = vld [vmem:[#allocation2 + $0x110] sm:$0xff]
    %v634 = vld [vmem:[#allocation2 + $0x118] sm:$0xff]
    %v635 = vld [vmem:[#allocation2 + $0x120] sm:$0xff]
    %v636 = vld [vmem:[#allocation2 + $0x128] sm:$0xff]
    %v637 = vld [vmem:[#allocation2 + $0x130] sm:$0xff]
    %v638 = vld [vmem:[#allocation2 + $0x138] sm:$0xff]
    %v639 = vld [vmem:[#allocation2 + $0x140] sm:$0xff]
    %v640 = vld [vmem:[#allocation2 + $0x148] sm:$0xff]
    %v641 = vld [vmem:[#allocation2 + $0x150] sm:$0xff]
    %v642 = vld [vmem:[#allocation2 + $0x158] sm:$0xff]
    %v643 = vld [vmem:[#allocation2 + $0x160] sm:$0xff]
    %v644 = vld [vmem:[#allocation2 + $0x168] sm:$0xff]
    %v645 = vld [vmem:[#allocation2 + $0x170] sm:$0xff]
    %v646 = vld [vmem:[#allocation2 + $0x178] sm:$0xff]
    %v647 = vld [vmem:[#allocation2 + $0x180] sm:$0xff]
    %v648 = vld [vmem:[#allocation2 + $0x188] sm:$0xff]
    %v649 = vld [vmem:[#allocation2 + $0x190] sm:$0xff]
    %v650 = vld [vmem:[#allocation2 + $0x198] sm:$0xff]
    %v651 = vld [vmem:[#allocation2 + $0x1a0] sm:$0xff]
    %v652 = vld [vmem:[#allocation2 + $0x1a8] sm:$0xff]
    %v653 = vld [vmem:[#allocation2 + $0x1b0] sm:$0xff]
    %v654 = vld [vmem:[#allocation2 + $0x1b8] sm:$0xff]
    %v655 = vld [vmem:[#allocation2 + $0x1c0] sm:$0xff]
    %v656 = vld [vmem:[#allocation2 + $0x1c8] sm:$0xff]
    %v657 = vld [vmem:[#allocation2 + $0x1d0] sm:$0xff]
    %v658 = vld [vmem:[#allocation2 + $0x1d8] sm:$0xff]
    %v659 = vld [vmem:[#allocation2 + $0x1e0] sm:$0xff]
    %v660 = vld [vmem:[#allocation2 + $0x1e8] sm:$0xff]
    %v661 = vld [vmem:[#allocation2 + $0x1f0] sm:$0xff]
    %v662 = vld [vmem:[#allocation2 + $0x1f8] sm:$0xff]
    %663 = vmatprep.subr.mxu0 %v630
    %664 = vmatpush1.msra.mxu0 %v629
    %665 = vmatprep.subr.mxu0 %v628
    %666 = vmatpush1.msra.mxu0 %v627
    %667 = vmatprep.subr.mxu0 %v626
    %668 = vmatpush1.msra.mxu0 %v625
    %669 = vmatprep.subr.mxu0 %v624
    %670 = vmatpush1.msra.mxu0 %v623
    %671 = vmatprep.subr.mxu0 %v622
    %672 = vmatpush1.msra.mxu0 %v621
    %673 = vmatprep.subr.mxu0 %v620
    %674 = vmatpush1.msra.mxu0 %v619
    %675 = vmatprep.subr.mxu0 %v618
    %676 = vmatpush1.msra.mxu0 %v617
    %677 = vmatprep.subr.mxu0 %v616
    %678 = vmatpush1.msra.mxu0 %v615
    %679 = vmatprep.subr.mxu0 %v614
    %680 = vmatpush1.msra.mxu0 %v613
    %681 = vmatprep.subr.mxu0 %v612
    %682 = vmatpush1.msra.mxu0 %v611
    %683 = vmatprep.subr.mxu0 %v610
    %684 = vmatpush1.msra.mxu0 %v609
    %685 = vmatprep.subr.mxu0 %v608
    %686 = vmatpush1.msra.mxu0 %v607
    %687 = vmatprep.subr.mxu0 %v606
    %688 = vmatpush1.msra.mxu0 %v605
    %689 = vmatprep.subr.mxu0 %v604
    %690 = vmatpush1.msra.mxu0 %v603
    %691 = vmatprep.subr.mxu0 %v602
    %692 = vmatpush1.msra.mxu0 %v601
    %693 = vmatprep.subr.mxu0 %v600
    %694 = vmatpush1.msra.mxu0 %v599
    %695 = vmatprep.subr.mxu0 %v662
    %696 = vmatpush2.msra.mxu0 %v661
    %697 = vmatprep.subr.mxu0 %v660
    %698 = vmatpush2.msra.mxu0 %v659
    %699 = vmatprep.subr.mxu0 %v658
    %700 = vmatpush2.msra.mxu0 %v657
    %701 = vmatprep.subr.mxu0 %v656
    %702 = vmatpush2.msra.mxu0 %v655
    %703 = vmatprep.subr.mxu0 %v654
    %704 = vmatpush2.msra.mxu0 %v653
    %705 = vmatprep.subr.mxu0 %v652
    %706 = vmatpush2.msra.mxu0 %v651
    %707 = vmatprep.subr.mxu0 %v650
    %708 = vmatpush2.msra.mxu0 %v649
    %709 = vmatprep.subr.mxu0 %v648
    %710 = vmatpush2.msra.mxu0 %v647
    %711 = vmatprep.subr.mxu0 %v646
    %712 = vmatpush2.msra.mxu0 %v645
    %713 = vmatprep.subr.mxu0 %v644
    %714 = vmatpush2.msra.mxu0 %v643
    %715 = vmatprep.subr.mxu0 %v642
    %716 = vmatpush2.msra.mxu0 %v641
    %717 = vmatprep.subr.mxu0 %v640
    %718 = vmatpush2.msra.mxu0 %v639
    %719 = vmatprep.subr.mxu0 %v638
    %720 = vmatpush2.msra.mxu0 %v637
    %721 = vmatprep.subr.mxu0 %v636
    %722 = vmatpush2.msra.mxu0 %v635
    %723 = vmatprep.subr.mxu0 %v634
    %724 = vmatpush2.msra.mxu0 %v633
    %725 = vmatprep.subr.mxu0 %v632
    %726 = vmatpush2.msra.mxu0 %v631
    %727 = vmatprep.mubr.f32.mxu0 %v598
    %728 = vmatmul.mubr.f32.gmra.mxu0 %v597
    %v729 = vpop.f32.mrf.mxu0
    %v730 = vadd.f32 0.0, %v729
    %v731 = vpop.f32.mrf.mxu0
    %v732 = vadd.f32 0.0, %v731
    %733 = vdwg.mxu0
    %v734 = vlaneseq
    %v735 = vshrl.u32 %v734, 7
    %v736 = vsub.s32 0, %v735
    %v737 = vrot.slane %v730, %v736
    %v738 = vlaneseq
    %v739 = vshrl.u32 %v738, 7
    %v740 = vsub.s32 0, %v739
    %v741 = vrot.slane %v732, %v740
    %v742 = vsub.f32 %v582, %v737
    %v743 = vsub.f32 %v583, %v741
    %v744 = vmul.f32 %v742, %v742
    %v745 = vmul.f32 %v743, %v743
    %v746 = vrot.slane %v744, 4
    %v747 = vadd.f32 %v744, %v746
    %v748 = vrot.slane %v747, 2
    %v749 = vadd.f32 %v747, %v748
    %v750 = vrot.slane %v749, 1
    %v751 = vadd.f32 %v749, %v750
    %v752 = vrot.slane %v745, 4
    %v753 = vadd.f32 %v745, %v752
    %v754 = vrot.slane %v753, 2
    %v755 = vadd.f32 %v753, %v754
    %v756 = vrot.slane %v755, 1
    %v757 = vadd.f32 %v755, %v756
    %v758 = vmul.f32 %v751, %v596
    %v759 = vmul.f32 %v757, %v596
    %v760 = vld [vmem:[%s4] sm:$0x3]
    %761 = vmatprep.subr.mxu0 %v630
    %762 = vmatpush1.msra.mxu0 %v629
    %763 = vmatprep.subr.mxu0 %v628
    %764 = vmatpush1.msra.mxu0 %v627
    %765 = vmatprep.subr.mxu0 %v626
    %766 = vmatpush1.msra.mxu0 %v625
    %767 = vmatprep.subr.mxu0 %v624
    %768 = vmatpush1.msra.mxu0 %v623
    %769 = vmatprep.subr.mxu0 %v622
    %770 = vmatpush1.msra.mxu0 %v621
    %771 = vmatprep.subr.mxu0 %v620
    %772 = vmatpush1.msra.mxu0 %v619
    %773 = vmatprep.subr.mxu0 %v618
    %774 = vmatpush1.msra.mxu0 %v617
    %775 = vmatprep.subr.mxu0 %v616
    %776 = vmatpush1.msra.mxu0 %v615
    %777 = vmatprep.subr.mxu0 %v614
    %778 = vmatpush1.msra.mxu0 %v613
    %779 = vmatprep.subr.mxu0 %v612
    %780 = vmatpush1.msra.mxu0 %v611
    %781 = vmatprep.subr.mxu0 %v610
    %782 = vmatpush1.msra.mxu0 %v609
    %783 = vmatprep.subr.mxu0 %v608
    %784 = vmatpush1.msra.mxu0 %v607
    %785 = vmatprep.subr.mxu0 %v606
    %786 = vmatpush1.msra.mxu0 %v605
    %787 = vmatprep.subr.mxu0 %v604
    %788 = vmatpush1.msra.mxu0 %v603
    %789 = vmatprep.subr.mxu0 %v602
    %790 = vmatpush1.msra.mxu0 %v601
    %791 = vmatprep.subr.mxu0 %v600
    %792 = vmatpush1.msra.mxu0 %v599
    %793 = vmatprep.subr.mxu0 %v662
    %794 = vmatpush2.msra.mxu0 %v661
    %795 = vmatprep.subr.mxu0 %v660
    %796 = vmatpush2.msra.mxu0 %v659
    %797 = vmatprep.subr.mxu0 %v658
    %798 = vmatpush2.msra.mxu0 %v657
    %799 = vmatprep.subr.mxu0 %v656
    %800 = vmatpush2.msra.mxu0 %v655
    %801 = vmatprep.subr.mxu0 %v654
    %802 = vmatpush2.msra.mxu0 %v653
    %803 = vmatprep.subr.mxu0 %v652
    %804 = vmatpush2.msra.mxu0 %v651
    %805 = vmatprep.subr.mxu0 %v650
    %806 = vmatpush2.msra.mxu0 %v649
    %807 = vmatprep.subr.mxu0 %v648
    %808 = vmatpush2.msra.mxu0 %v647
    %809 = vmatprep.subr.mxu0 %v646
    %810 = vmatpush2.msra.mxu0 %v645
    %811 = vmatprep.subr.mxu0 %v644
    %812 = vmatpush2.msra.mxu0 %v643
    %813 = vmatprep.subr.mxu0 %v642
    %814 = vmatpush2.msra.mxu0 %v641
    %815 = vmatprep.subr.mxu0 %v640
    %816 = vmatpush2.msra.mxu0 %v639
    %817 = vmatprep.subr.mxu0 %v638
    %818 = vmatpush2.msra.mxu0 %v637
    %819 = vmatprep.subr.mxu0 %v636
    %820 = vmatpush2.msra.mxu0 %v635
    %821 = vmatprep.subr.mxu0 %v634
    %822 = vmatpush2.msra.mxu0 %v633
    %823 = vmatprep.subr.mxu0 %v632
    %824 = vmatpush2.msra.mxu0 %v631
    %825 = vmatprep.mubr.f32.mxu0 %v759
    %826 = vmatmul.mubr.f32.gmra.mxu0 %v758
    %v827 = vpop.f32.mrf.mxu0
    %v828 = vadd.f32 1e-05, %v827
    %v829 = vpop.f32.mrf.mxu0
    %v830 = vadd.f32 1e-05, %v829
    %831 = vdwg.mxu0
    %v832 = vrsqrt.pop %v828
    %v833 = vrsqrt.pop %v830
    %v836 = vcombine.low %v832, %v833
    %v838 = vunpack.c.l.s4 1966171168
    %v839 = vunpack.c.0.s8 %v838
    %v840 = vlaneseq
    %v841 = vshrl.u32 %v840, 7
    %v842 = vsub.s32 %v839, %v841
    %v843 = vrot.slane %v836, %v842
    %v845 = vunpack.c.l.s4 1966171168
    %v846 = vunpack.c.0.s8 %v845
    %v847 = vlaneseq
    %v848 = vshrl.u32 %v847, 7
    %v849 = vsub.s32 %v846, %v848
    %v850 = vrot.slane %v843, %v849
    %v852 = vmul.f32 %v760, %v850
    %v854 = vlaneseq
    %v855 = vshrl.u32 %v854, 7
    %v856 = vsub.s32 0, %v855
    %v857 = vrot.slane %v852, %v856
    %v858 = vlaneseq
    %v859 = vshrl.u32 %v858, 7
    %v860 = vsub.s32 1, %v859
    %v861 = vrot.slane %v852, %v860
    %v864 = vmul.f32 %v742, %v857
    %v865 = vmul.f32 %v743, %v861
    %v866 = vld [vmem:[%s5] sm:$0x3]
    %v868 = vlaneseq
    %v869 = vshrl.u32 %v868, 7
    %v870 = vsub.s32 0, %v869
    %v871 = vrot.slane %v866, %v870
    %v872 = vlaneseq
    %v873 = vshrl.u32 %v872, 7
    %v874 = vsub.s32 1, %v873
    %v875 = vrot.slane %v866, %v874
    %v878 = vadd.f32 %v864, %v871
    %v879 = vadd.f32 %v865, %v875
    %v880 = vmax.f32 %v878, 0.0
    %v881 = vmax.f32 %v879, 0.0
    %v882 = vpack.c.bf16 %v880, %v880
    %v883 = vpack.c.bf16 %v881, %v881
    %v884 = vld [vmem:[%s7] sm:$0xff]
    %v885 = vld [vmem:[%s7 + $0x8] sm:$0xff]
    %v886 = vld [vmem:[%s7 + $0x10] sm:$0xff]
    %v887 = vld [vmem:[%s7 + $0x18] sm:$0xff]
    %v888 = vld [vmem:[%s7 + $0x20] sm:$0xff]
    %v889 = vld [vmem:[%s7 + $0x28] sm:$0xff]
    %v890 = vld [vmem:[%s7 + $0x30] sm:$0xff]
    %v891 = vld [vmem:[%s7 + $0x38] sm:$0xff]
    %v892 = vld [vmem:[%s7 + $0x40] sm:$0xff]
    %v893 = vld [vmem:[%s7 + $0x48] sm:$0xff]
    %v894 = vld [vmem:[%s7 + $0x50] sm:$0xff]
    %v895 = vld [vmem:[%s7 + $0x58] sm:$0xff]
    %v896 = vld [vmem:[%s7 + $0x60] sm:$0xff]
    %v897 = vld [vmem:[%s7 + $0x68] sm:$0xff]
    %v898 = vld [vmem:[%s7 + $0x70] sm:$0xff]
    %v899 = vld [vmem:[%s7 + $0x78] sm:$0xff]
    %v900 = vld [vmem:[%s7 + $0x80] sm:$0xff]
    %v901 = vld [vmem:[%s7 + $0x88] sm:$0xff]
    %v902 = vld [vmem:[%s7 + $0x90] sm:$0xff]
    %v903 = vld [vmem:[%s7 + $0x98] sm:$0xff]
    %v904 = vld [vmem:[%s7 + $0xa0] sm:$0xff]
    %v905 = vld [vmem:[%s7 + $0xa8] sm:$0xff]
    %v906 = vld [vmem:[%s7 + $0xb0] sm:$0xff]
    %v907 = vld [vmem:[%s7 + $0xb8] sm:$0xff]
    %v908 = vld [vmem:[%s7 + $0xc0] sm:$0xff]
    %v909 = vld [vmem:[%s7 + $0xc8] sm:$0xff]
    %v910 = vld [vmem:[%s7 + $0xd0] sm:$0xff]
    %v911 = vld [vmem:[%s7 + $0xd8] sm:$0xff]
    %v912 = vld [vmem:[%s7 + $0xe0] sm:$0xff]
    %v913 = vld [vmem:[%s7 + $0xe8] sm:$0xff]
    %v914 = vld [vmem:[%s7 + $0xf0] sm:$0xff]
    %v915 = vld [vmem:[%s7 + $0xf8] sm:$0xff]
    %v948 = vunpack.c.l.b16 %v884
    %v949 = vunpack.c.h.b16 %v884
    %v950 = vunpack.c.l.b16 %v885
    %v951 = vunpack.c.h.b16 %v885
    %v952 = vunpack.c.l.b16 %v886
    %v953 = vunpack.c.h.b16 %v886
    %v954 = vunpack.c.l.b16 %v887
    %v955 = vunpack.c.h.b16 %v887
    %v956 = vunpack.c.l.b16 %v888
    %v957 = vunpack.c.h.b16 %v888
    %v958 = vunpack.c.l.b16 %v889
    %v959 = vunpack.c.h.b16 %v889
    %v960 = vunpack.c.l.b16 %v890
    %v961 = vunpack.c.h.b16 %v890
    %v962 = vunpack.c.l.b16 %v891
    %v963 = vunpack.c.h.b16 %v891
    %v964 = vunpack.c.l.b16 %v892
    %v965 = vunpack.c.h.b16 %v892
    %v966 = vunpack.c.l.b16 %v893
    %v967 = vunpack.c.h.b16 %v893
    %v968 = vunpack.c.l.b16 %v894
    %v969 = vunpack.c.h.b16 %v894
    %v970 = vunpack.c.l.b16 %v895
    %v971 = vunpack.c.h.b16 %v895
    %v972 = vunpack.c.l.b16 %v896
    %v973 = vunpack.c.h.b16 %v896
    %v974 = vunpack.c.l.b16 %v897
    %v975 = vunpack.c.h.b16 %v897
    %v976 = vunpack.c.l.b16 %v898
    %v977 = vunpack.c.h.b16 %v898
    %v978 = vunpack.c.l.b16 %v899
    %v979 = vunpack.c.h.b16 %v899
    %v980 = vunpack.c.l.b16 %v900
    %v981 = vunpack.c.h.b16 %v900
    %v982 = vunpack.c.l.b16 %v901
    %v983 = vunpack.c.h.b16 %v901
    %v984 = vunpack.c.l.b16 %v902
    %v985 = vunpack.c.h.b16 %v902
    %v986 = vunpack.c.l.b16 %v903
    %v987 = vunpack.c.h.b16 %v903
    %v988 = vunpack.c.l.b16 %v904
    %v989 = vunpack.c.h.b16 %v904
    %v990 = vunpack.c.l.b16 %v905
    %v991 = vunpack.c.h.b16 %v905
    %v992 = vunpack.c.l.b16 %v906
    %v993 = vunpack.c.h.b16 %v906
    %v994 = vunpack.c.l.b16 %v907
    %v995 = vunpack.c.h.b16 %v907
    %v996 = vunpack.c.l.b16 %v908
    %v997 = vunpack.c.h.b16 %v908
    %v998 = vunpack.c.l.b16 %v909
    %v999 = vunpack.c.h.b16 %v909
    %v1000 = vunpack.c.l.b16 %v910
    %v1001 = vunpack.c.h.b16 %v910
    %v1002 = vunpack.c.l.b16 %v911
    %v1003 = vunpack.c.h.b16 %v911
    %v1004 = vunpack.c.l.b16 %v912
    %v1005 = vunpack.c.h.b16 %v912
    %v1006 = vunpack.c.l.b16 %v913
    %v1007 = vunpack.c.h.b16 %v913
    %v1008 = vunpack.c.l.b16 %v914
    %v1009 = vunpack.c.h.b16 %v914
    %v1010 = vunpack.c.l.b16 %v915
    %v1011 = vunpack.c.h.b16 %v915
    %v1012 = vpack.c.b16 %v950, %v948
    %v1013 = vpack.c.b16 %v951, %v949
    %v1014 = vpack.c.b16 %v954, %v952
    %v1015 = vpack.c.b16 %v955, %v953
    %v1016 = vpack.c.b16 %v958, %v956
    %v1017 = vpack.c.b16 %v959, %v957
    %v1018 = vpack.c.b16 %v962, %v960
    %v1019 = vpack.c.b16 %v963, %v961
    %v1020 = vpack.c.b16 %v966, %v964
    %v1021 = vpack.c.b16 %v967, %v965
    %v1022 = vpack.c.b16 %v970, %v968
    %v1023 = vpack.c.b16 %v971, %v969
    %v1024 = vpack.c.b16 %v974, %v972
    %v1025 = vpack.c.b16 %v975, %v973
    %v1026 = vpack.c.b16 %v978, %v976
    %v1027 = vpack.c.b16 %v979, %v977
    %v1028 = vpack.c.b16 %v982, %v980
    %v1029 = vpack.c.b16 %v983, %v981
    %v1030 = vpack.c.b16 %v986, %v984
    %v1031 = vpack.c.b16 %v987, %v985
    %v1032 = vpack.c.b16 %v990, %v988
    %v1033 = vpack.c.b16 %v991, %v989
    %v1034 = vpack.c.b16 %v994, %v992
    %v1035 = vpack.c.b16 %v995, %v993
    %v1036 = vpack.c.b16 %v998, %v996
    %v1037 = vpack.c.b16 %v999, %v997
    %v1038 = vpack.c.b16 %v1002, %v1000
    %v1039 = vpack.c.b16 %v1003, %v1001
    %v1040 = vpack.c.b16 %v1006, %v1004
    %v1041 = vpack.c.b16 %v1007, %v1005
    %v1042 = vpack.c.b16 %v1010, %v1008
    %v1043 = vpack.c.b16 %v1011, %v1009
    %1076 = vmatprep.subr.bf16.mxu0 %v1027
    %1077 = vmatpush1.bf16.msra.mxu0 %v1026
    %1078 = vmatprep.subr.bf16.mxu0 %v1025
    %1079 = vmatpush1.bf16.msra.mxu0 %v1024
    %1080 = vmatprep.subr.bf16.mxu0 %v1023
    %1081 = vmatpush1.bf16.msra.mxu0 %v1022
    %1082 = vmatprep.subr.bf16.mxu0 %v1021
    %1083 = vmatpush1.bf16.msra.mxu0 %v1020
    %1084 = vmatprep.subr.bf16.mxu0 %v1019
    %1085 = vmatpush1.bf16.msra.mxu0 %v1018
    %1086 = vmatprep.subr.bf16.mxu0 %v1017
    %1087 = vmatpush1.bf16.msra.mxu0 %v1016
    %1088 = vmatprep.subr.bf16.mxu0 %v1015
    %1089 = vmatpush1.bf16.msra.mxu0 %v1014
    %1090 = vmatprep.subr.bf16.mxu0 %v1013
    %1091 = vmatpush1.bf16.msra.mxu0 %v1012
    %1092 = vmatprep.subr.bf16.mxu0 %v1043
    %1093 = vmatpush2.bf16.msra.mxu0 %v1042
    %1094 = vmatprep.subr.bf16.mxu0 %v1041
    %1095 = vmatpush2.bf16.msra.mxu0 %v1040
    %1096 = vmatprep.subr.bf16.mxu0 %v1039
    %1097 = vmatpush2.bf16.msra.mxu0 %v1038
    %1098 = vmatprep.subr.bf16.mxu0 %v1037
    %1099 = vmatpush2.bf16.msra.mxu0 %v1036
    %1100 = vmatprep.subr.bf16.mxu0 %v1035
    %1101 = vmatpush2.bf16.msra.mxu0 %v1034
    %1102 = vmatprep.subr.bf16.mxu0 %v1033
    %1103 = vmatpush2.bf16.msra.mxu0 %v1032
    %1104 = vmatprep.subr.bf16.mxu0 %v1031
    %1105 = vmatpush2.bf16.msra.mxu0 %v1030
    %1106 = vmatprep.subr.bf16.mxu0 %v1029
    %1107 = vmatpush2.bf16.msra.mxu0 %v1028
    %1108 = vmatprep.mubr.bf16.mxu0 %v883
    %1109 = vmatmul.mubr.bf16.gmra.mxu0 %v882
    %v1110 = vpop.f32.mrf.mxu0
    %v1111 = vadd.f32 0.0, %v1110
    %v1112 = vpop.f32.mrf.mxu0
    %v1113 = vadd.f32 0.0, %v1112
    %v1114 = vpop.f32.mrf.mxu0
    %v1115 = vpop.f32.mrf.mxu0
    %1116 = vdwg.mxu0
    %v1117 = vld [vmem:[%s6] sm:$0xf]
    %v1118 = vld [vmem:[%s6 + $0x4] sm:$0xf]
    %v1119 = vpack.c.bf16 %v1111, %v1111
    %v1120 = vpack.c.bf16 %v1113, %v1113
    %s1121 = scalar_lea.vmem %s7, 256
    %v1122 = vld [vmem:[%s1121] sm:$0xff]
    %v1123 = vld [vmem:[%s1121 + $0x8] sm:$0xff]
    %v1124 = vld [vmem:[%s1121 + $0x10] sm:$0xff]
    %v1125 = vld [vmem:[%s1121 + $0x18] sm:$0xff]
    %v1126 = vld [vmem:[%s1121 + $0x20] sm:$0xff]
    %v1127 = vld [vmem:[%s1121 + $0x28] sm:$0xff]
    %v1128 = vld [vmem:[%s1121 + $0x30] sm:$0xff]
    %v1129 = vld [vmem:[%s1121 + $0x38] sm:$0xff]
    %v1130 = vld [vmem:[%s1121 + $0x40] sm:$0xff]
    %v1131 = vld [vmem:[%s1121 + $0x48] sm:$0xff]
    %v1132 = vld [vmem:[%s1121 + $0x50] sm:$0xff]
    %v1133 = vld [vmem:[%s1121 + $0x58] sm:$0xff]
    %v1134 = vld [vmem:[%s1121 + $0x60] sm:$0xff]
    %v1135 = vld [vmem:[%s1121 + $0x68] sm:$0xff]
    %v1136 = vld [vmem:[%s1121 + $0x70] sm:$0xff]
    %v1137 = vld [vmem:[%s1121 + $0x78] sm:$0xff]
    %v1138 = vld [vmem:[%s1121 + $0x80] sm:$0xff]
    %v1139 = vld [vmem:[%s1121 + $0x88] sm:$0xff]
    %v1140 = vld [vmem:[%s1121 + $0x90] sm:$0xff]
    %v1141 = vld [vmem:[%s1121 + $0x98] sm:$0xff]
    %v1142 = vld [vmem:[%s1121 + $0xa0] sm:$0xff]
    %v1143 = vld [vmem:[%s1121 + $0xa8] sm:$0xff]
    %v1144 = vld [vmem:[%s1121 + $0xb0] sm:$0xff]
    %v1145 = vld [vmem:[%s1121 + $0xb8] sm:$0xff]
    %v1146 = vld [vmem:[%s1121 + $0xc0] sm:$0xff]
    %v1147 = vld [vmem:[%s1121 + $0xc8] sm:$0xff]
    %v1148 = vld [vmem:[%s1121 + $0xd0] sm:$0xff]
    %v1149 = vld [vmem:[%s1121 + $0xd8] sm:$0xff]
    %v1150 = vld [vmem:[%s1121 + $0xe0] sm:$0xff]
    %v1151 = vld [vmem:[%s1121 + $0xe8] sm:$0xff]
    %v1152 = vld [vmem:[%s1121 + $0xf0] sm:$0xff]
    %v1153 = vld [vmem:[%s1121 + $0xf8] sm:$0xff]
    %v1186 = vunpack.c.l.b16 %v1122
    %v1187 = vunpack.c.h.b16 %v1122
    %v1188 = vunpack.c.l.b16 %v1123
    %v1189 = vunpack.c.h.b16 %v1123
    %v1190 = vunpack.c.l.b16 %v1124
    %v1191 = vunpack.c.h.b16 %v1124
    %v1192 = vunpack.c.l.b16 %v1125
    %v1193 = vunpack.c.h.b16 %v1125
    %v1194 = vunpack.c.l.b16 %v1126
    %v1195 = vunpack.c.h.b16 %v1126
    %v1196 = vunpack.c.l.b16 %v1127
    %v1197 = vunpack.c.h.b16 %v1127
    %v1198 = vunpack.c.l.b16 %v1128
    %v1199 = vunpack.c.h.b16 %v1128
    %v1200 = vunpack.c.l.b16 %v1129
    %v1201 = vunpack.c.h.b16 %v1129
    %v1202 = vunpack.c.l.b16 %v1130
    %v1203 = vunpack.c.h.b16 %v1130
    %v1204 = vunpack.c.l.b16 %v1131
    %v1205 = vunpack.c.h.b16 %v1131
    %v1206 = vunpack.c.l.b16 %v1132
    %v1207 = vunpack.c.h.b16 %v1132
    %v1208 = vunpack.c.l.b16 %v1133
    %v1209 = vunpack.c.h.b16 %v1133
    %v1210 = vunpack.c.l.b16 %v1134
    %v1211 = vunpack.c.h.b16 %v1134
    %v1212 = vunpack.c.l.b16 %v1135
    %v1213 = vunpack.c.h.b16 %v1135
    %v1214 = vunpack.c.l.b16 %v1136
    %v1215 = vunpack.c.h.b16 %v1136
    %v1216 = vunpack.c.l.b16 %v1137
    %v1217 = vunpack.c.h.b16 %v1137
    %v1218 = vunpack.c.l.b16 %v1138
    %v1219 = vunpack.c.h.b16 %v1138
    %v1220 = vunpack.c.l.b16 %v1139
    %v1221 = vunpack.c.h.b16 %v1139
    %v1222 = vunpack.c.l.b16 %v1140
    %v1223 = vunpack.c.h.b16 %v1140
    %v1224 = vunpack.c.l.b16 %v1141
    %v1225 = vunpack.c.h.b16 %v1141
    %v1226 = vunpack.c.l.b16 %v1142
    %v1227 = vunpack.c.h.b16 %v1142
    %v1228 = vunpack.c.l.b16 %v1143
    %v1229 = vunpack.c.h.b16 %v1143
    %v1230 = vunpack.c.l.b16 %v1144
    %v1231 = vunpack.c.h.b16 %v1144
    %v1232 = vunpack.c.l.b16 %v1145
    %v1233 = vunpack.c.h.b16 %v1145
    %v1234 = vunpack.c.l.b16 %v1146
    %v1235 = vunpack.c.h.b16 %v1146
    %v1236 = vunpack.c.l.b16 %v1147
    %v1237 = vunpack.c.h.b16 %v1147
    %v1238 = vunpack.c.l.b16 %v1148
    %v1239 = vunpack.c.h.b16 %v1148
    %v1240 = vunpack.c.l.b16 %v1149
    %v1241 = vunpack.c.h.b16 %v1149
    %v1242 = vunpack.c.l.b16 %v1150
    %v1243 = vunpack.c.h.b16 %v1150
    %v1244 = vunpack.c.l.b16 %v1151
    %v1245 = vunpack.c.h.b16 %v1151
    %v1246 = vunpack.c.l.b16 %v1152
    %v1247 = vunpack.c.h.b16 %v1152
    %v1248 = vunpack.c.l.b16 %v1153
    %v1249 = vunpack.c.h.b16 %v1153
    %v1250 = vpack.c.b16 %v1188, %v1186
    %v1251 = vpack.c.b16 %v1189, %v1187
    %v1252 = vpack.c.b16 %v1192, %v1190
    %v1253 = vpack.c.b16 %v1193, %v1191
    %v1254 = vpack.c.b16 %v1196, %v1194
    %v1255 = vpack.c.b16 %v1197, %v1195
    %v1256 = vpack.c.b16 %v1200, %v1198
    %v1257 = vpack.c.b16 %v1201, %v1199
    %v1258 = vpack.c.b16 %v1204, %v1202
    %v1259 = vpack.c.b16 %v1205, %v1203
    %v1260 = vpack.c.b16 %v1208, %v1206
    %v1261 = vpack.c.b16 %v1209, %v1207
    %v1262 = vpack.c.b16 %v1212, %v1210
    %v1263 = vpack.c.b16 %v1213, %v1211
    %v1264 = vpack.c.b16 %v1216, %v1214
    %v1265 = vpack.c.b16 %v1217, %v1215
    %v1266 = vpack.c.b16 %v1220, %v1218
    %v1267 = vpack.c.b16 %v1221, %v1219
    %v1268 = vpack.c.b16 %v1224, %v1222
    %v1269 = vpack.c.b16 %v1225, %v1223
    %v1270 = vpack.c.b16 %v1228, %v1226
    %v1271 = vpack.c.b16 %v1229, %v1227
    %v1272 = vpack.c.b16 %v1232, %v1230
    %v1273 = vpack.c.b16 %v1233, %v1231
    %v1274 = vpack.c.b16 %v1236, %v1234
    %v1275 = vpack.c.b16 %v1237, %v1235
    %v1276 = vpack.c.b16 %v1240, %v1238
    %v1277 = vpack.c.b16 %v1241, %v1239
    %v1278 = vpack.c.b16 %v1244, %v1242
    %v1279 = vpack.c.b16 %v1245, %v1243
    %v1280 = vpack.c.b16 %v1248, %v1246
    %v1281 = vpack.c.b16 %v1249, %v1247
    %1314 = vmatprep.subr.bf16.mxu0 %v1265
    %1315 = vmatpush1.bf16.msra.mxu0 %v1264
    %1316 = vmatprep.subr.bf16.mxu0 %v1263
    %1317 = vmatpush1.bf16.msra.mxu0 %v1262
    %1318 = vmatprep.subr.bf16.mxu0 %v1261
    %1319 = vmatpush1.bf16.msra.mxu0 %v1260
    %1320 = vmatprep.subr.bf16.mxu0 %v1259
    %1321 = vmatpush1.bf16.msra.mxu0 %v1258
    %1322 = vmatprep.subr.bf16.mxu0 %v1257
    %1323 = vmatpush1.bf16.msra.mxu0 %v1256
    %1324 = vmatprep.subr.bf16.mxu0 %v1255
    %1325 = vmatpush1.bf16.msra.mxu0 %v1254
    %1326 = vmatprep.subr.bf16.mxu0 %v1253
    %1327 = vmatpush1.bf16.msra.mxu0 %v1252
    %1328 = vmatprep.subr.bf16.mxu0 %v1251
    %1329 = vmatpush1.bf16.msra.mxu0 %v1250
    %1330 = vmatprep.subr.bf16.mxu0 %v1281
    %1331 = vmatpush2.bf16.msra.mxu0 %v1280
    %1332 = vmatprep.subr.bf16.mxu0 %v1279
    %1333 = vmatpush2.bf16.msra.mxu0 %v1278
    %1334 = vmatprep.subr.bf16.mxu0 %v1277
    %1335 = vmatpush2.bf16.msra.mxu0 %v1276
    %1336 = vmatprep.subr.bf16.mxu0 %v1275
    %1337 = vmatpush2.bf16.msra.mxu0 %v1274
    %1338 = vmatprep.subr.bf16.mxu0 %v1273
    %1339 = vmatpush2.bf16.msra.mxu0 %v1272
    %1340 = vmatprep.subr.bf16.mxu0 %v1271
    %1341 = vmatpush2.bf16.msra.mxu0 %v1270
    %1342 = vmatprep.subr.bf16.mxu0 %v1269
    %1343 = vmatpush2.bf16.msra.mxu0 %v1268
    %1344 = vmatprep.subr.bf16.mxu0 %v1267
    %1345 = vmatpush2.bf16.msra.mxu0 %v1266
    %1346 = vmatprep.mubr.bf16.mxu0 %v883
    %1347 = vmatmul.mubr.bf16.gmra.mxu0 %v882
    %v1348 = vpop.f32.mrf.mxu0
    %v1349 = vadd.f32 0.0, %v1348
    %v1350 = vpop.f32.mrf.mxu0
    %v1351 = vadd.f32 0.0, %v1350
    %v1352 = vpop.f32.mrf.mxu0
    %v1353 = vpop.f32.mrf.mxu0
    %1354 = vdwg.mxu0
    %s1355 = scalar_lea.vmem %s6, 8
    %v1356 = vld [vmem:[%s1355] sm:$0xf]
    %v1357 = vld [vmem:[%s1355 + $0x4] sm:$0xf]
    %v1358 = vpack.c.bf16 %v1349, %v1349
    %v1359 = vpack.c.bf16 %v1351, %v1351
    %v1362 = vunpack.c.l.b16 %v1356
    %v1363 = vunpack.c.l.b16 %v1357
    %v1364 = vpack.c.b16 %v1363, %v1362
    %v1366 = vsel %vm151, %v1364, 0
    %v1369 = vsel %vm155, %v1358, 0
    %v1372 = vsel %vm155, %v1359, 0
    %1374 = vmatprep.subr.bf16.mxu0 0
    %1375 = vmatpush1.bf16.msra.mxu0 0
    %1376 = vmatprep.subr.bf16.mxu0 0
    %1377 = vmatpush1.bf16.msra.mxu0 0
    %1378 = vmatprep.subr.bf16.mxu0 0
    %1379 = vmatpush1.bf16.msra.mxu0 0
    %1380 = vmatprep.subr.bf16.mxu0 0
    %1381 = vmatpush1.bf16.msra.mxu0 0
    %1382 = vmatprep.subr.bf16.mxu0 0
    %1383 = vmatpush1.bf16.msra.mxu0 0
    %1384 = vmatprep.subr.bf16.mxu0 0
    %1385 = vmatpush1.bf16.msra.mxu0 0
    %1386 = vmatprep.subr.bf16.mxu0 0
    %1387 = vmatpush1.bf16.msra.mxu0 0
    %1388 = vmatprep.subr.bf16.mxu0 %v1372
    %1389 = vmatpush1.bf16.msra.mxu0 %v1369
    %1390 = vmatprep.subr.bf16.mxu0 0
    %1391 = vmatpush2.bf16.msra.mxu0 0
    %1392 = vmatprep.subr.bf16.mxu0 0
    %1393 = vmatpush2.bf16.msra.mxu0 0
    %1394 = vmatprep.subr.bf16.mxu0 0
    %1395 = vmatpush2.bf16.msra.mxu0 0
    %1396 = vmatprep.subr.bf16.mxu0 0
    %1397 = vmatpush2.bf16.msra.mxu0 0
    %1398 = vmatprep.subr.bf16.mxu0 0
    %1399 = vmatpush2.bf16.msra.mxu0 0
    %1400 = vmatprep.subr.bf16.mxu0 0
    %1401 = vmatpush2.bf16.msra.mxu0 0
    %1402 = vmatprep.subr.bf16.mxu0 0
    %1403 = vmatpush2.bf16.msra.mxu0 0
    %1404 = vmatprep.subr.bf16.mxu0 0
    %1405 = vmatpush2.bf16.msra.mxu0 0
    %1406 = vmatprep.mubr.bf16.mxu0 0
    %1407 = vmatmul.mubr.bf16.gmra.mxu0 %v1366
    %v1408 = vpop.f32.mrf.mxu0
    %v1409 = vadd.f32 0.0, %v1408
    %v1410 = vpop.f32.mrf.mxu0
    %v1411 = vadd.f32 0.0, %v1410
    %v1412 = vpop.f32.mrf.mxu0
    %v1413 = vadd.f32 0.0, %v1412
    %v1414 = vpop.f32.mrf.mxu0
    %v1415 = vadd.f32 0.0, %v1414
    %1416 = vdwg.mxu0
    %v1419 = vunpack.c.l.b16 %v1117
    %v1420 = vunpack.c.l.b16 %v1118
    %v1421 = vpack.c.b16 %v1420, %v1419
    %v1423 = vsel %vm151, %v1421, 0
    %v1426 = vsel %vm155, %v1119, 0
    %v1429 = vsel %vm155, %v1120, 0
    %1431 = vmatprep.subr.bf16.mxu0 0
    %1432 = vmatpush1.bf16.msra.mxu0 0
    %1433 = vmatprep.subr.bf16.mxu0 0
    %1434 = vmatpush1.bf16.msra.mxu0 0
    %1435 = vmatprep.subr.bf16.mxu0 0
    %1436 = vmatpush1.bf16.msra.mxu0 0
    %1437 = vmatprep.subr.bf16.mxu0 0
    %1438 = vmatpush1.bf16.msra.mxu0 0
    %1439 = vmatprep.subr.bf16.mxu0 0
    %1440 = vmatpush1.bf16.msra.mxu0 0
    %1441 = vmatprep.subr.bf16.mxu0 0
    %1442 = vmatpush1.bf16.msra.mxu0 0
    %1443 = vmatprep.subr.bf16.mxu0 0
    %1444 = vmatpush1.bf16.msra.mxu0 0
    %1445 = vmatprep.subr.bf16.mxu0 %v1429
    %1446 = vmatpush1.bf16.msra.mxu0 %v1426
    %1447 = vmatprep.subr.bf16.mxu0 0
    %1448 = vmatpush2.bf16.msra.mxu0 0
    %1449 = vmatprep.subr.bf16.mxu0 0
    %1450 = vmatpush2.bf16.msra.mxu0 0
    %1451 = vmatprep.subr.bf16.mxu0 0
    %1452 = vmatpush2.bf16.msra.mxu0 0
    %1453 = vmatprep.subr.bf16.mxu0 0
    %1454 = vmatpush2.bf16.msra.mxu0 0
    %1455 = vmatprep.subr.bf16.mxu0 0
    %1456 = vmatpush2.bf16.msra.mxu0 0
    %1457 = vmatprep.subr.bf16.mxu0 0
    %1458 = vmatpush2.bf16.msra.mxu0 0
    %1459 = vmatprep.subr.bf16.mxu0 0
    %1460 = vmatpush2.bf16.msra.mxu0 0
    %1461 = vmatprep.subr.bf16.mxu0 0
    %1462 = vmatpush2.bf16.msra.mxu0 0
    %1463 = vmatprep.mubr.bf16.mxu0 0
    %1464 = vmatmul.mubr.bf16.gmra.mxu0 %v1423
    %v1465 = vpop.f32.mrf.mxu0
    %v1466 = vadd.f32 %v1409, %v1465
    %v1467 = vpop.f32.mrf.mxu0
    %v1468 = vadd.f32 %v1411, %v1467
    %v1469 = vpop.f32.mrf.mxu0
    %v1470 = vadd.f32 %v1413, %v1469
    %v1471 = vpop.f32.mrf.mxu0
    %v1472 = vadd.f32 %v1415, %v1471
    %1473 = vdwg.mxu0
    %s1474 = scalar_lea.vmem %s7, 512
    %v1475 = vld [vmem:[%s1474] sm:$0xff]
    %v1476 = vld [vmem:[%s1474 + $0x8] sm:$0xff]
    %v1477 = vld [vmem:[%s1474 + $0x10] sm:$0xff]
    %v1478 = vld [vmem:[%s1474 + $0x18] sm:$0xff]
    %v1479 = vld [vmem:[%s1474 + $0x20] sm:$0xff]
    %v1480 = vld [vmem:[%s1474 + $0x28] sm:$0xff]
    %v1481 = vld [vmem:[%s1474 + $0x30] sm:$0xff]
    %v1482 = vld [vmem:[%s1474 + $0x38] sm:$0xff]
    %v1483 = vld [vmem:[%s1474 + $0x40] sm:$0xff]
    %v1484 = vld [vmem:[%s1474 + $0x48] sm:$0xff]
    %v1485 = vld [vmem:[%s1474 + $0x50] sm:$0xff]
    %v1486 = vld [vmem:[%s1474 + $0x58] sm:$0xff]
    %v1487 = vld [vmem:[%s1474 + $0x60] sm:$0xff]
    %v1488 = vld [vmem:[%s1474 + $0x68] sm:$0xff]
    %v1489 = vld [vmem:[%s1474 + $0x70] sm:$0xff]
    %v1490 = vld [vmem:[%s1474 + $0x78] sm:$0xff]
    %v1491 = vld [vmem:[%s1474 + $0x80] sm:$0xff]
    %v1492 = vld [vmem:[%s1474 + $0x88] sm:$0xff]
    %v1493 = vld [vmem:[%s1474 + $0x90] sm:$0xff]
    %v1494 = vld [vmem:[%s1474 + $0x98] sm:$0xff]
    %v1495 = vld [vmem:[%s1474 + $0xa0] sm:$0xff]
    %v1496 = vld [vmem:[%s1474 + $0xa8] sm:$0xff]
    %v1497 = vld [vmem:[%s1474 + $0xb0] sm:$0xff]
    %v1498 = vld [vmem:[%s1474 + $0xb8] sm:$0xff]
    %v1499 = vld [vmem:[%s1474 + $0xc0] sm:$0xff]
    %v1500 = vld [vmem:[%s1474 + $0xc8] sm:$0xff]
    %v1501 = vld [vmem:[%s1474 + $0xd0] sm:$0xff]
    %v1502 = vld [vmem:[%s1474 + $0xd8] sm:$0xff]
    %v1503 = vld [vmem:[%s1474 + $0xe0] sm:$0xff]
    %v1504 = vld [vmem:[%s1474 + $0xe8] sm:$0xff]
    %v1505 = vld [vmem:[%s1474 + $0xf0] sm:$0xff]
    %v1506 = vld [vmem:[%s1474 + $0xf8] sm:$0xff]
    %v1539 = vunpack.c.l.b16 %v1475
    %v1540 = vunpack.c.h.b16 %v1475
    %v1541 = vunpack.c.l.b16 %v1476
    %v1542 = vunpack.c.h.b16 %v1476
    %v1543 = vunpack.c.l.b16 %v1477
    %v1544 = vunpack.c.h.b16 %v1477
    %v1545 = vunpack.c.l.b16 %v1478
    %v1546 = vunpack.c.h.b16 %v1478
    %v1547 = vunpack.c.l.b16 %v1479
    %v1548 = vunpack.c.h.b16 %v1479
    %v1549 = vunpack.c.l.b16 %v1480
    %v1550 = vunpack.c.h.b16 %v1480
    %v1551 = vunpack.c.l.b16 %v1481
    %v1552 = vunpack.c.h.b16 %v1481
    %v1553 = vunpack.c.l.b16 %v1482
    %v1554 = vunpack.c.h.b16 %v1482
    %v1555 = vunpack.c.l.b16 %v1483
    %v1556 = vunpack.c.h.b16 %v1483
    %v1557 = vunpack.c.l.b16 %v1484
    %v1558 = vunpack.c.h.b16 %v1484
    %v1559 = vunpack.c.l.b16 %v1485
    %v1560 = vunpack.c.h.b16 %v1485
    %v1561 = vunpack.c.l.b16 %v1486
    %v1562 = vunpack.c.h.b16 %v1486
    %v1563 = vunpack.c.l.b16 %v1487
    %v1564 = vunpack.c.h.b16 %v1487
    %v1565 = vunpack.c.l.b16 %v1488
    %v1566 = vunpack.c.h.b16 %v1488
    %v1567 = vunpack.c.l.b16 %v1489
    %v1568 = vunpack.c.h.b16 %v1489
    %v1569 = vunpack.c.l.b16 %v1490
    %v1570 = vunpack.c.h.b16 %v1490
    %v1571 = vunpack.c.l.b16 %v1491
    %v1572 = vunpack.c.h.b16 %v1491
    %v1573 = vunpack.c.l.b16 %v1492
    %v1574 = vunpack.c.h.b16 %v1492
    %v1575 = vunpack.c.l.b16 %v1493
    %v1576 = vunpack.c.h.b16 %v1493
    %v1577 = vunpack.c.l.b16 %v1494
    %v1578 = vunpack.c.h.b16 %v1494
    %v1579 = vunpack.c.l.b16 %v1495
    %v1580 = vunpack.c.h.b16 %v1495
    %v1581 = vunpack.c.l.b16 %v1496
    %v1582 = vunpack.c.h.b16 %v1496
    %v1583 = vunpack.c.l.b16 %v1497
    %v1584 = vunpack.c.h.b16 %v1497
    %v1585 = vunpack.c.l.b16 %v1498
    %v1586 = vunpack.c.h.b16 %v1498
    %v1587 = vunpack.c.l.b16 %v1499
    %v1588 = vunpack.c.h.b16 %v1499
    %v1589 = vunpack.c.l.b16 %v1500
    %v1590 = vunpack.c.h.b16 %v1500
    %v1591 = vunpack.c.l.b16 %v1501
    %v1592 = vunpack.c.h.b16 %v1501
    %v1593 = vunpack.c.l.b16 %v1502
    %v1594 = vunpack.c.h.b16 %v1502
    %v1595 = vunpack.c.l.b16 %v1503
    %v1596 = vunpack.c.h.b16 %v1503
    %v1597 = vunpack.c.l.b16 %v1504
    %v1598 = vunpack.c.h.b16 %v1504
    %v1599 = vunpack.c.l.b16 %v1505
    %v1600 = vunpack.c.h.b16 %v1505
    %v1601 = vunpack.c.l.b16 %v1506
    %v1602 = vunpack.c.h.b16 %v1506
    %v1603 = vpack.c.b16 %v1541, %v1539
    %v1604 = vpack.c.b16 %v1542, %v1540
    %v1605 = vpack.c.b16 %v1545, %v1543
    %v1606 = vpack.c.b16 %v1546, %v1544
    %v1607 = vpack.c.b16 %v1549, %v1547
    %v1608 = vpack.c.b16 %v1550, %v1548
    %v1609 = vpack.c.b16 %v1553, %v1551
    %v1610 = vpack.c.b16 %v1554, %v1552
    %v1611 = vpack.c.b16 %v1557, %v1555
    %v1612 = vpack.c.b16 %v1558, %v1556
    %v1613 = vpack.c.b16 %v1561, %v1559
    %v1614 = vpack.c.b16 %v1562, %v1560
    %v1615 = vpack.c.b16 %v1565, %v1563
    %v1616 = vpack.c.b16 %v1566, %v1564
    %v1617 = vpack.c.b16 %v1569, %v1567
    %v1618 = vpack.c.b16 %v1570, %v1568
    %v1619 = vpack.c.b16 %v1573, %v1571
    %v1620 = vpack.c.b16 %v1574, %v1572
    %v1621 = vpack.c.b16 %v1577, %v1575
    %v1622 = vpack.c.b16 %v1578, %v1576
    %v1623 = vpack.c.b16 %v1581, %v1579
    %v1624 = vpack.c.b16 %v1582, %v1580
    %v1625 = vpack.c.b16 %v1585, %v1583
    %v1626 = vpack.c.b16 %v1586, %v1584
    %v1627 = vpack.c.b16 %v1589, %v1587
    %v1628 = vpack.c.b16 %v1590, %v1588
    %v1629 = vpack.c.b16 %v1593, %v1591
    %v1630 = vpack.c.b16 %v1594, %v1592
    %v1631 = vpack.c.b16 %v1597, %v1595
    %v1632 = vpack.c.b16 %v1598, %v1596
    %v1633 = vpack.c.b16 %v1601, %v1599
    %v1634 = vpack.c.b16 %v1602, %v1600
    %1667 = vmatprep.subr.bf16.mxu0 %v1618
    %1668 = vmatpush1.bf16.msra.mxu0 %v1617
    %1669 = vmatprep.subr.bf16.mxu0 %v1616
    %1670 = vmatpush1.bf16.msra.mxu0 %v1615
    %1671 = vmatprep.subr.bf16.mxu0 %v1614
    %1672 = vmatpush1.bf16.msra.mxu0 %v1613
    %1673 = vmatprep.subr.bf16.mxu0 %v1612
    %1674 = vmatpush1.bf16.msra.mxu0 %v1611
    %1675 = vmatprep.subr.bf16.mxu0 %v1610
    %1676 = vmatpush1.bf16.msra.mxu0 %v1609
    %1677 = vmatprep.subr.bf16.mxu0 %v1608
    %1678 = vmatpush1.bf16.msra.mxu0 %v1607
    %1679 = vmatprep.subr.bf16.mxu0 %v1606
    %1680 = vmatpush1.bf16.msra.mxu0 %v1605
    %1681 = vmatprep.subr.bf16.mxu0 %v1604
    %1682 = vmatpush1.bf16.msra.mxu0 %v1603
    %1683 = vmatprep.subr.bf16.mxu0 %v1634
    %1684 = vmatpush2.bf16.msra.mxu0 %v1633
    %1685 = vmatprep.subr.bf16.mxu0 %v1632
    %1686 = vmatpush2.bf16.msra.mxu0 %v1631
    %1687 = vmatprep.subr.bf16.mxu0 %v1630
    %1688 = vmatpush2.bf16.msra.mxu0 %v1629
    %1689 = vmatprep.subr.bf16.mxu0 %v1628
    %1690 = vmatpush2.bf16.msra.mxu0 %v1627
    %1691 = vmatprep.subr.bf16.mxu0 %v1626
    %1692 = vmatpush2.bf16.msra.mxu0 %v1625
    %1693 = vmatprep.subr.bf16.mxu0 %v1624
    %1694 = vmatpush2.bf16.msra.mxu0 %v1623
    %1695 = vmatprep.subr.bf16.mxu0 %v1622
    %1696 = vmatpush2.bf16.msra.mxu0 %v1621
    %1697 = vmatprep.subr.bf16.mxu0 %v1620
    %1698 = vmatpush2.bf16.msra.mxu0 %v1619
    %1699 = vmatprep.mubr.bf16.mxu0 %v883
    %1700 = vmatmul.mubr.bf16.gmra.mxu0 %v882
    %v1701 = vpop.f32.mrf.mxu0
    %v1702 = vadd.f32 0.0, %v1701
    %v1703 = vpop.f32.mrf.mxu0
    %v1704 = vadd.f32 0.0, %v1703
    %v1705 = vpop.f32.mrf.mxu0
    %v1706 = vpop.f32.mrf.mxu0
    %1707 = vdwg.mxu0
    %s1708 = scalar_lea.vmem %s6, 16
    %v1709 = vld [vmem:[%s1708] sm:$0xf]
    %v1710 = vld [vmem:[%s1708 + $0x4] sm:$0xf]
    %v1711 = vpack.c.bf16 %v1702, %v1702
    %v1712 = vpack.c.bf16 %v1704, %v1704
    %v1715 = vunpack.c.l.b16 %v1709
    %v1716 = vunpack.c.l.b16 %v1710
    %v1717 = vpack.c.b16 %v1716, %v1715
    %v1719 = vsel %vm151, %v1717, 0
    %v1722 = vsel %vm155, %v1711, 0
    %v1725 = vsel %vm155, %v1712, 0
    %1727 = vmatprep.subr.bf16.mxu0 0
    %1728 = vmatpush1.bf16.msra.mxu0 0
    %1729 = vmatprep.subr.bf16.mxu0 0
    %1730 = vmatpush1.bf16.msra.mxu0 0
    %1731 = vmatprep.subr.bf16.mxu0 0
    %1732 = vmatpush1.bf16.msra.mxu0 0
    %1733 = vmatprep.subr.bf16.mxu0 0
    %1734 = vmatpush1.bf16.msra.mxu0 0
    %1735 = vmatprep.subr.bf16.mxu0 0
    %1736 = vmatpush1.bf16.msra.mxu0 0
    %1737 = vmatprep.subr.bf16.mxu0 0
    %1738 = vmatpush1.bf16.msra.mxu0 0
    %1739 = vmatprep.subr.bf16.mxu0 0
    %1740 = vmatpush1.bf16.msra.mxu0 0
    %1741 = vmatprep.subr.bf16.mxu0 %v1725
    %1742 = vmatpush1.bf16.msra.mxu0 %v1722
    %1743 = vmatprep.subr.bf16.mxu0 0
    %1744 = vmatpush2.bf16.msra.mxu0 0
    %1745 = vmatprep.subr.bf16.mxu0 0
    %1746 = vmatpush2.bf16.msra.mxu0 0
    %1747 = vmatprep.subr.bf16.mxu0 0
    %1748 = vmatpush2.bf16.msra.mxu0 0
    %1749 = vmatprep.subr.bf16.mxu0 0
    %1750 = vmatpush2.bf16.msra.mxu0 0
    %1751 = vmatprep.subr.bf16.mxu0 0
    %1752 = vmatpush2.bf16.msra.mxu0 0
    %1753 = vmatprep.subr.bf16.mxu0 0
    %1754 = vmatpush2.bf16.msra.mxu0 0
    %1755 = vmatprep.subr.bf16.mxu0 0
    %1756 = vmatpush2.bf16.msra.mxu0 0
    %1757 = vmatprep.subr.bf16.mxu0 0
    %1758 = vmatpush2.bf16.msra.mxu0 0
    %1759 = vmatprep.mubr.bf16.mxu0 0
    %1760 = vmatmul.mubr.bf16.gmra.mxu0 %v1719
    %v1761 = vpop.f32.mrf.mxu0
    %v1762 = vadd.f32 0.0, %v1761
    %v1763 = vpop.f32.mrf.mxu0
    %v1764 = vadd.f32 0.0, %v1763
    %v1765 = vpop.f32.mrf.mxu0
    %v1766 = vadd.f32 0.0, %v1765
    %v1767 = vpop.f32.mrf.mxu0
    %v1768 = vadd.f32 0.0, %v1767
    %1769 = vdwg.mxu0
    %v1770 = vadd.f32 %v1466, %v1762
    %v1771 = vadd.f32 %v1468, %v1764
    %v1772 = vadd.f32 %v1470, %v1766
    %v1773 = vadd.f32 %v1472, %v1768
    %s1774 = scalar_lea.vmem %s7, 768
    %v1775 = vld [vmem:[%s1774] sm:$0xff]
    %v1776 = vld [vmem:[%s1774 + $0x8] sm:$0xff]
    %v1777 = vld [vmem:[%s1774 + $0x10] sm:$0xff]
    %v1778 = vld [vmem:[%s1774 + $0x18] sm:$0xff]
    %v1779 = vld [vmem:[%s1774 + $0x20] sm:$0xff]
    %v1780 = vld [vmem:[%s1774 + $0x28] sm:$0xff]
    %v1781 = vld [vmem:[%s1774 + $0x30] sm:$0xff]
    %v1782 = vld [vmem:[%s1774 + $0x38] sm:$0xff]
    %v1783 = vld [vmem:[%s1774 + $0x40] sm:$0xff]
    %v1784 = vld [vmem:[%s1774 + $0x48] sm:$0xff]
    %v1785 = vld [vmem:[%s1774 + $0x50] sm:$0xff]
    %v1786 = vld [vmem:[%s1774 + $0x58] sm:$0xff]
    %v1787 = vld [vmem:[%s1774 + $0x60] sm:$0xff]
    %v1788 = vld [vmem:[%s1774 + $0x68] sm:$0xff]
    %v1789 = vld [vmem:[%s1774 + $0x70] sm:$0xff]
    %v1790 = vld [vmem:[%s1774 + $0x78] sm:$0xff]
    %v1791 = vld [vmem:[%s1774 + $0x80] sm:$0xff]
    %v1792 = vld [vmem:[%s1774 + $0x88] sm:$0xff]
    %v1793 = vld [vmem:[%s1774 + $0x90] sm:$0xff]
    %v1794 = vld [vmem:[%s1774 + $0x98] sm:$0xff]
    %v1795 = vld [vmem:[%s1774 + $0xa0] sm:$0xff]
    %v1796 = vld [vmem:[%s1774 + $0xa8] sm:$0xff]
    %v1797 = vld [vmem:[%s1774 + $0xb0] sm:$0xff]
    %v1798 = vld [vmem:[%s1774 + $0xb8] sm:$0xff]
    %v1799 = vld [vmem:[%s1774 + $0xc0] sm:$0xff]
    %v1800 = vld [vmem:[%s1774 + $0xc8] sm:$0xff]
    %v1801 = vld [vmem:[%s1774 + $0xd0] sm:$0xff]
    %v1802 = vld [vmem:[%s1774 + $0xd8] sm:$0xff]
    %v1803 = vld [vmem:[%s1774 + $0xe0] sm:$0xff]
    %v1804 = vld [vmem:[%s1774 + $0xe8] sm:$0xff]
    %v1805 = vld [vmem:[%s1774 + $0xf0] sm:$0xff]
    %v1806 = vld [vmem:[%s1774 + $0xf8] sm:$0xff]
    %v1839 = vunpack.c.l.b16 %v1775
    %v1840 = vunpack.c.h.b16 %v1775
    %v1841 = vunpack.c.l.b16 %v1776
    %v1842 = vunpack.c.h.b16 %v1776
    %v1843 = vunpack.c.l.b16 %v1777
    %v1844 = vunpack.c.h.b16 %v1777
    %v1845 = vunpack.c.l.b16 %v1778
    %v1846 = vunpack.c.h.b16 %v1778
    %v1847 = vunpack.c.l.b16 %v1779
    %v1848 = vunpack.c.h.b16 %v1779
    %v1849 = vunpack.c.l.b16 %v1780
    %v1850 = vunpack.c.h.b16 %v1780
    %v1851 = vunpack.c.l.b16 %v1781
    %v1852 = vunpack.c.h.b16 %v1781
    %v1853 = vunpack.c.l.b16 %v1782
    %v1854 = vunpack.c.h.b16 %v1782
    %v1855 = vunpack.c.l.b16 %v1783
    %v1856 = vunpack.c.h.b16 %v1783
    %v1857 = vunpack.c.l.b16 %v1784
    %v1858 = vunpack.c.h.b16 %v1784
    %v1859 = vunpack.c.l.b16 %v1785
    %v1860 = vunpack.c.h.b16 %v1785
    %v1861 = vunpack.c.l.b16 %v1786
    %v1862 = vunpack.c.h.b16 %v1786
    %v1863 = vunpack.c.l.b16 %v1787
    %v1864 = vunpack.c.h.b16 %v1787
    %v1865 = vunpack.c.l.b16 %v1788
    %v1866 = vunpack.c.h.b16 %v1788
    %v1867 = vunpack.c.l.b16 %v1789
    %v1868 = vunpack.c.h.b16 %v1789
    %v1869 = vunpack.c.l.b16 %v1790
    %v1870 = vunpack.c.h.b16 %v1790
    %v1871 = vunpack.c.l.b16 %v1791
    %v1872 = vunpack.c.h.b16 %v1791
    %v1873 = vunpack.c.l.b16 %v1792
    %v1874 = vunpack.c.h.b16 %v1792
    %v1875 = vunpack.c.l.b16 %v1793
    %v1876 = vunpack.c.h.b16 %v1793
    %v1877 = vunpack.c.l.b16 %v1794
    %v1878 = vunpack.c.h.b16 %v1794
    %v1879 = vunpack.c.l.b16 %v1795
    %v1880 = vunpack.c.h.b16 %v1795
    %v1881 = vunpack.c.l.b16 %v1796
    %v1882 = vunpack.c.h.b16 %v1796
    %v1883 = vunpack.c.l.b16 %v1797
    %v1884 = vunpack.c.h.b16 %v1797
    %v1885 = vunpack.c.l.b16 %v1798
    %v1886 = vunpack.c.h.b16 %v1798
    %v1887 = vunpack.c.l.b16 %v1799
    %v1888 = vunpack.c.h.b16 %v1799
    %v1889 = vunpack.c.l.b16 %v1800
    %v1890 = vunpack.c.h.b16 %v1800
    %v1891 = vunpack.c.l.b16 %v1801
    %v1892 = vunpack.c.h.b16 %v1801
    %v1893 = vunpack.c.l.b16 %v1802
    %v1894 = vunpack.c.h.b16 %v1802
    %v1895 = vunpack.c.l.b16 %v1803
    %v1896 = vunpack.c.h.b16 %v1803
    %v1897 = vunpack.c.l.b16 %v1804
    %v1898 = vunpack.c.h.b16 %v1804
    %v1899 = vunpack.c.l.b16 %v1805
    %v1900 = vunpack.c.h.b16 %v1805
    %v1901 = vunpack.c.l.b16 %v1806
    %v1902 = vunpack.c.h.b16 %v1806
    %v1903 = vpack.c.b16 %v1841, %v1839
    %v1904 = vpack.c.b16 %v1842, %v1840
    %v1905 = vpack.c.b16 %v1845, %v1843
    %v1906 = vpack.c.b16 %v1846, %v1844
    %v1907 = vpack.c.b16 %v1849, %v1847
    %v1908 = vpack.c.b16 %v1850, %v1848
    %v1909 = vpack.c.b16 %v1853, %v1851
    %v1910 = vpack.c.b16 %v1854, %v1852
    %v1911 = vpack.c.b16 %v1857, %v1855
    %v1912 = vpack.c.b16 %v1858, %v1856
    %v1913 = vpack.c.b16 %v1861, %v1859
    %v1914 = vpack.c.b16 %v1862, %v1860
    %v1915 = vpack.c.b16 %v1865, %v1863
    %v1916 = vpack.c.b16 %v1866, %v1864
    %v1917 = vpack.c.b16 %v1869, %v1867
    %v1918 = vpack.c.b16 %v1870, %v1868
    %v1919 = vpack.c.b16 %v1873, %v1871
    %v1920 = vpack.c.b16 %v1874, %v1872
    %v1921 = vpack.c.b16 %v1877, %v1875
    %v1922 = vpack.c.b16 %v1878, %v1876
    %v1923 = vpack.c.b16 %v1881, %v1879
    %v1924 = vpack.c.b16 %v1882, %v1880
    %v1925 = vpack.c.b16 %v1885, %v1883
    %v1926 = vpack.c.b16 %v1886, %v1884
    %v1927 = vpack.c.b16 %v1889, %v1887
    %v1928 = vpack.c.b16 %v1890, %v1888
    %v1929 = vpack.c.b16 %v1893, %v1891
    %v1930 = vpack.c.b16 %v1894, %v1892
    %v1931 = vpack.c.b16 %v1897, %v1895
    %v1932 = vpack.c.b16 %v1898, %v1896
    %v1933 = vpack.c.b16 %v1901, %v1899
    %v1934 = vpack.c.b16 %v1902, %v1900
    %1967 = vmatprep.subr.bf16.mxu0 %v1918
    %1968 = vmatpush1.bf16.msra.mxu0 %v1917
    %1969 = vmatprep.subr.bf16.mxu0 %v1916
    %1970 = vmatpush1.bf16.msra.mxu0 %v1915
    %1971 = vmatprep.subr.bf16.mxu0 %v1914
    %1972 = vmatpush1.bf16.msra.mxu0 %v1913
    %1973 = vmatprep.subr.bf16.mxu0 %v1912
    %1974 = vmatpush1.bf16.msra.mxu0 %v1911
    %1975 = vmatprep.subr.bf16.mxu0 %v1910
    %1976 = vmatpush1.bf16.msra.mxu0 %v1909
    %1977 = vmatprep.subr.bf16.mxu0 %v1908
    %1978 = vmatpush1.bf16.msra.mxu0 %v1907
    %1979 = vmatprep.subr.bf16.mxu0 %v1906
    %1980 = vmatpush1.bf16.msra.mxu0 %v1905
    %1981 = vmatprep.subr.bf16.mxu0 %v1904
    %1982 = vmatpush1.bf16.msra.mxu0 %v1903
    %1983 = vmatprep.subr.bf16.mxu0 %v1934
    %1984 = vmatpush2.bf16.msra.mxu0 %v1933
    %1985 = vmatprep.subr.bf16.mxu0 %v1932
    %1986 = vmatpush2.bf16.msra.mxu0 %v1931
    %1987 = vmatprep.subr.bf16.mxu0 %v1930
    %1988 = vmatpush2.bf16.msra.mxu0 %v1929
    %1989 = vmatprep.subr.bf16.mxu0 %v1928
    %1990 = vmatpush2.bf16.msra.mxu0 %v1927
    %1991 = vmatprep.subr.bf16.mxu0 %v1926
    %1992 = vmatpush2.bf16.msra.mxu0 %v1925
    %1993 = vmatprep.subr.bf16.mxu0 %v1924
    %1994 = vmatpush2.bf16.msra.mxu0 %v1923
    %1995 = vmatprep.subr.bf16.mxu0 %v1922
    %1996 = vmatpush2.bf16.msra.mxu0 %v1921
    %1997 = vmatprep.subr.bf16.mxu0 %v1920
    %1998 = vmatpush2.bf16.msra.mxu0 %v1919
    %1999 = vmatprep.mubr.bf16.mxu0 %v883
    %2000 = vmatmul.mubr.bf16.gmra.mxu0 %v882
    %v2001 = vpop.f32.mrf.mxu0
    %v2002 = vadd.f32 0.0, %v2001
    %v2003 = vpop.f32.mrf.mxu0
    %v2004 = vadd.f32 0.0, %v2003
    %v2005 = vpop.f32.mrf.mxu0
    %v2006 = vpop.f32.mrf.mxu0
    %2007 = vdwg.mxu0
    %s2008 = scalar_lea.vmem %s6, 24
    %v2009 = vld [vmem:[%s2008] sm:$0xf]
    %v2010 = vld [vmem:[%s2008 + $0x4] sm:$0xf]
    %v2011 = vpack.c.bf16 %v2002, %v2002
    %v2012 = vpack.c.bf16 %v2004, %v2004
    %v2015 = vunpack.c.l.b16 %v2009
    %v2016 = vunpack.c.l.b16 %v2010
    %v2017 = vpack.c.b16 %v2016, %v2015
    %v2019 = vsel %vm151, %v2017, 0
    %v2022 = vsel %vm155, %v2011, 0
    %v2025 = vsel %vm155, %v2012, 0
    %2027 = vmatprep.subr.bf16.mxu0 0
    %2028 = vmatpush1.bf16.msra.mxu0 0
    %2029 = vmatprep.subr.bf16.mxu0 0
    %2030 = vmatpush1.bf16.msra.mxu0 0
    %2031 = vmatprep.subr.bf16.mxu0 0
    %2032 = vmatpush1.bf16.msra.mxu0 0
    %2033 = vmatprep.subr.bf16.mxu0 0
    %2034 = vmatpush1.bf16.msra.mxu0 0
    %2035 = vmatprep.subr.bf16.mxu0 0
    %2036 = vmatpush1.bf16.msra.mxu0 0
    %2037 = vmatprep.subr.bf16.mxu0 0
    %2038 = vmatpush1.bf16.msra.mxu0 0
    %2039 = vmatprep.subr.bf16.mxu0 0
    %2040 = vmatpush1.bf16.msra.mxu0 0
    %2041 = vmatprep.subr.bf16.mxu0 %v2025
    %2042 = vmatpush1.bf16.msra.mxu0 %v2022
    %2043 = vmatprep.subr.bf16.mxu0 0
    %2044 = vmatpush2.bf16.msra.mxu0 0
    %2045 = vmatprep.subr.bf16.mxu0 0
    %2046 = vmatpush2.bf16.msra.mxu0 0
    %2047 = vmatprep.subr.bf16.mxu0 0
    %2048 = vmatpush2.bf16.msra.mxu0 0
    %2049 = vmatprep.subr.bf16.mxu0 0
    %2050 = vmatpush2.bf16.msra.mxu0 0
    %2051 = vmatprep.subr.bf16.mxu0 0
    %2052 = vmatpush2.bf16.msra.mxu0 0
    %2053 = vmatprep.subr.bf16.mxu0 0
    %2054 = vmatpush2.bf16.msra.mxu0 0
    %2055 = vmatprep.subr.bf16.mxu0 0
    %2056 = vmatpush2.bf16.msra.mxu0 0
    %2057 = vmatprep.subr.bf16.mxu0 0
    %2058 = vmatpush2.bf16.msra.mxu0 0
    %2059 = vmatprep.mubr.bf16.mxu0 0
    %2060 = vmatmul.mubr.bf16.gmra.mxu0 %v2019
    %v2061 = vpop.f32.mrf.mxu0
    %v2062 = vadd.f32 0.0, %v2061
    %v2063 = vpop.f32.mrf.mxu0
    %v2064 = vadd.f32 0.0, %v2063
    %v2065 = vpop.f32.mrf.mxu0
    %v2066 = vadd.f32 0.0, %v2065
    %v2067 = vpop.f32.mrf.mxu0
    %v2068 = vadd.f32 0.0, %v2067
    %2069 = vdwg.mxu0
    %v2070 = vadd.f32 %v1770, %v2062
    %v2071 = vadd.f32 %v1771, %v2064
    %v2072 = vadd.f32 %v1772, %v2066
    %v2073 = vadd.f32 %v1773, %v2068
    %v2074 = vadd.f32 %v2070, %v2072
    %v2075 = vrot.slane %v2074, 4
    %v2076 = vadd.f32 %v2074, %v2075
    %v2077 = vrot.slane %v2076, 2
    %v2078 = vadd.f32 %v2076, %v2077
    %v2079 = vrot.slane %v2078, 1
    %v2080 = vadd.f32 %v2078, %v2079
    %v2081 = vadd.f32 %v2071, %v2073
    %v2082 = vrot.slane %v2081, 4
    %v2083 = vadd.f32 %v2081, %v2082
    %v2084 = vrot.slane %v2083, 2
    %v2085 = vadd.f32 %v2083, %v2084
    %v2086 = vrot.slane %v2085, 1
    %v2087 = vadd.f32 %v2085, %v2086
    %v2088 = vrcp.pop 16.0
    %v2089 = vmul.f32 %v2080, %v2088
    %v2090 = vmul.f32 %v2087, %v2088
    %v2091 = vld [vmem:[#allocation4] sm:$0xff]
    %v2092 = vld [vmem:[#allocation4 + $0x8] sm:$0xff]
    %v2093 = vld [vmem:[#allocation4 + $0x10] sm:$0xff]
    %v2094 = vld [vmem:[#allocation4 + $0x18] sm:$0xff]
    %v2095 = vld [vmem:[#allocation4 + $0x20] sm:$0xff]
    %v2096 = vld [vmem:[#allocation4 + $0x28] sm:$0xff]
    %v2097 = vld [vmem:[#allocation4 + $0x30] sm:$0xff]
    %v2098 = vld [vmem:[#allocation4 + $0x38] sm:$0xff]
    %v2099 = vld [vmem:[#allocation4 + $0x40] sm:$0xff]
    %v2100 = vld [vmem:[#allocation4 + $0x48] sm:$0xff]
    %v2101 = vld [vmem:[#allocation4 + $0x50] sm:$0xff]
    %v2102 = vld [vmem:[#allocation4 + $0x58] sm:$0xff]
    %v2103 = vld [vmem:[#allocation4 + $0x60] sm:$0xff]
    %v2104 = vld [vmem:[#allocation4 + $0x68] sm:$0xff]
    %v2105 = vld [vmem:[#allocation4 + $0x70] sm:$0xff]
    %v2106 = vld [vmem:[#allocation4 + $0x78] sm:$0xff]
    %v2107 = vld [vmem:[#allocation4 + $0x80] sm:$0xff]
    %v2108 = vld [vmem:[#allocation4 + $0x88] sm:$0xff]
    %v2109 = vld [vmem:[#allocation4 + $0x90] sm:$0xff]
    %v2110 = vld [vmem:[#allocation4 + $0x98] sm:$0xff]
    %v2111 = vld [vmem:[#allocation4 + $0xa0] sm:$0xff]
    %v2112 = vld [vmem:[#allocation4 + $0xa8] sm:$0xff]
    %v2113 = vld [vmem:[#allocation4 + $0xb0] sm:$0xff]
    %v2114 = vld [vmem:[#allocation4 + $0xb8] sm:$0xff]
    %v2115 = vld [vmem:[#allocation4 + $0xc0] sm:$0xff]
    %v2116 = vld [vmem:[#allocation4 + $0xc8] sm:$0xff]
    %v2117 = vld [vmem:[#allocation4 + $0xd0] sm:$0xff]
    %v2118 = vld [vmem:[#allocation4 + $0xd8] sm:$0xff]
    %v2119 = vld [vmem:[#allocation4 + $0xe0] sm:$0xff]
    %v2120 = vld [vmem:[#allocation4 + $0xe8] sm:$0xff]
    %v2121 = vld [vmem:[#allocation4 + $0xf0] sm:$0xff]
    %v2122 = vld [vmem:[#allocation4 + $0xf8] sm:$0xff]
    %v2123 = vld [vmem:[#allocation4 + $0x100] sm:$0xff]
    %v2124 = vld [vmem:[#allocation4 + $0x108] sm:$0xff]
    %v2125 = vld [vmem:[#allocation4 + $0x110] sm:$0xff]
    %v2126 = vld [vmem:[#allocation4 + $0x118] sm:$0xff]
    %v2127 = vld [vmem:[#allocation4 + $0x120] sm:$0xff]
    %v2128 = vld [vmem:[#allocation4 + $0x128] sm:$0xff]
    %v2129 = vld [vmem:[#allocation4 + $0x130] sm:$0xff]
    %v2130 = vld [vmem:[#allocation4 + $0x138] sm:$0xff]
    %v2131 = vld [vmem:[#allocation4 + $0x140] sm:$0xff]
    %v2132 = vld [vmem:[#allocation4 + $0x148] sm:$0xff]
    %v2133 = vld [vmem:[#allocation4 + $0x150] sm:$0xff]
    %v2134 = vld [vmem:[#allocation4 + $0x158] sm:$0xff]
    %v2135 = vld [vmem:[#allocation4 + $0x160] sm:$0xff]
    %v2136 = vld [vmem:[#allocation4 + $0x168] sm:$0xff]
    %v2137 = vld [vmem:[#allocation4 + $0x170] sm:$0xff]
    %v2138 = vld [vmem:[#allocation4 + $0x178] sm:$0xff]
    %v2139 = vld [vmem:[#allocation4 + $0x180] sm:$0xff]
    %v2140 = vld [vmem:[#allocation4 + $0x188] sm:$0xff]
    %v2141 = vld [vmem:[#allocation4 + $0x190] sm:$0xff]
    %v2142 = vld [vmem:[#allocation4 + $0x198] sm:$0xff]
    %v2143 = vld [vmem:[#allocation4 + $0x1a0] sm:$0xff]
    %v2144 = vld [vmem:[#allocation4 + $0x1a8] sm:$0xff]
    %v2145 = vld [vmem:[#allocation4 + $0x1b0] sm:$0xff]
    %v2146 = vld [vmem:[#allocation4 + $0x1b8] sm:$0xff]
    %v2147 = vld [vmem:[#allocation4 + $0x1c0] sm:$0xff]
    %v2148 = vld [vmem:[#allocation4 + $0x1c8] sm:$0xff]
    %v2149 = vld [vmem:[#allocation4 + $0x1d0] sm:$0xff]
    %v2150 = vld [vmem:[#allocation4 + $0x1d8] sm:$0xff]
    %v2151 = vld [vmem:[#allocation4 + $0x1e0] sm:$0xff]
    %v2152 = vld [vmem:[#allocation4 + $0x1e8] sm:$0xff]
    %v2153 = vld [vmem:[#allocation4 + $0x1f0] sm:$0xff]
    %v2154 = vld [vmem:[#allocation4 + $0x1f8] sm:$0xff]
    %2155 = vmatprep.subr.mxu0 %v2122
    %2156 = vmatpush1.msra.mxu0 %v2121
    %2157 = vmatprep.subr.mxu0 %v2120
    %2158 = vmatpush1.msra.mxu0 %v2119
    %2159 = vmatprep.subr.mxu0 %v2118
    %2160 = vmatpush1.msra.mxu0 %v2117
    %2161 = vmatprep.subr.mxu0 %v2116
    %2162 = vmatpush1.msra.mxu0 %v2115
    %2163 = vmatprep.subr.mxu0 %v2114
    %2164 = vmatpush1.msra.mxu0 %v2113
    %2165 = vmatprep.subr.mxu0 %v2112
    %2166 = vmatpush1.msra.mxu0 %v2111
    %2167 = vmatprep.subr.mxu0 %v2110
    %2168 = vmatpush1.msra.mxu0 %v2109
    %2169 = vmatprep.subr.mxu0 %v2108
    %2170 = vmatpush1.msra.mxu0 %v2107
    %2171 = vmatprep.subr.mxu0 %v2106
    %2172 = vmatpush1.msra.mxu0 %v2105
    %2173 = vmatprep.subr.mxu0 %v2104
    %2174 = vmatpush1.msra.mxu0 %v2103
    %2175 = vmatprep.subr.mxu0 %v2102
    %2176 = vmatpush1.msra.mxu0 %v2101
    %2177 = vmatprep.subr.mxu0 %v2100
    %2178 = vmatpush1.msra.mxu0 %v2099
    %2179 = vmatprep.subr.mxu0 %v2098
    %2180 = vmatpush1.msra.mxu0 %v2097
    %2181 = vmatprep.subr.mxu0 %v2096
    %2182 = vmatpush1.msra.mxu0 %v2095
    %2183 = vmatprep.subr.mxu0 %v2094
    %2184 = vmatpush1.msra.mxu0 %v2093
    %2185 = vmatprep.subr.mxu0 %v2092
    %2186 = vmatpush1.msra.mxu0 %v2091
    %2187 = vmatprep.subr.mxu0 %v2154
    %2188 = vmatpush2.msra.mxu0 %v2153
    %2189 = vmatprep.subr.mxu0 %v2152
    %2190 = vmatpush2.msra.mxu0 %v2151
    %2191 = vmatprep.subr.mxu0 %v2150
    %2192 = vmatpush2.msra.mxu0 %v2149
    %2193 = vmatprep.subr.mxu0 %v2148
    %2194 = vmatpush2.msra.mxu0 %v2147
    %2195 = vmatprep.subr.mxu0 %v2146
    %2196 = vmatpush2.msra.mxu0 %v2145
    %2197 = vmatprep.subr.mxu0 %v2144
    %2198 = vmatpush2.msra.mxu0 %v2143
    %2199 = vmatprep.subr.mxu0 %v2142
    %2200 = vmatpush2.msra.mxu0 %v2141
    %2201 = vmatprep.subr.mxu0 %v2140
    %2202 = vmatpush2.msra.mxu0 %v2139
    %2203 = vmatprep.subr.mxu0 %v2138
    %2204 = vmatpush2.msra.mxu0 %v2137
    %2205 = vmatprep.subr.mxu0 %v2136
    %2206 = vmatpush2.msra.mxu0 %v2135
    %2207 = vmatprep.subr.mxu0 %v2134
    %2208 = vmatpush2.msra.mxu0 %v2133
    %2209 = vmatprep.subr.mxu0 %v2132
    %2210 = vmatpush2.msra.mxu0 %v2131
    %2211 = vmatprep.subr.mxu0 %v2130
    %2212 = vmatpush2.msra.mxu0 %v2129
    %2213 = vmatprep.subr.mxu0 %v2128
    %2214 = vmatpush2.msra.mxu0 %v2127
    %2215 = vmatprep.subr.mxu0 %v2126
    %2216 = vmatpush2.msra.mxu0 %v2125
    %2217 = vmatprep.subr.mxu0 %v2124
    %2218 = vmatpush2.msra.mxu0 %v2123
    %2219 = vmatprep.mubr.f32.mxu0 %v2090
    %2220 = vmatmul.mubr.f32.gmra.mxu0 %v2089
    %v2221 = vpop.f32.mrf.mxu0
    %v2222 = vadd.f32 0.0, %v2221
    %v2223 = vpop.f32.mrf.mxu0
    %v2224 = vadd.f32 0.0, %v2223
    %2225 = vdwg.mxu0
    %v2226 = vlaneseq
    %v2227 = vshrl.u32 %v2226, 7
    %v2228 = vsub.s32 0, %v2227
    %v2229 = vrot.slane %v2222, %v2228
    %v2230 = vlaneseq
    %v2231 = vshrl.u32 %v2230, 7
    %v2232 = vsub.s32 0, %v2231
    %v2233 = vrot.slane %v2224, %v2232
    %v2234 = vsub.f32 %v2070, %v2229
    %v2235 = vsub.f32 %v2071, %v2233
    %v2236 = vsub.f32 %v2072, %v2229
    %v2237 = vsub.f32 %v2073, %v2233
    %v2238 = vmul.f32 %v2234, %v2234
    %v2239 = vmul.f32 %v2235, %v2235
    %v2240 = vmul.f32 %v2236, %v2236
    %v2241 = vmul.f32 %v2237, %v2237
    %v2242 = vadd.f32 %v2238, %v2240
    %v2243 = vrot.slane %v2242, 4
    %v2244 = vadd.f32 %v2242, %v2243
    %v2245 = vrot.slane %v2244, 2
    %v2246 = vadd.f32 %v2244, %v2245
    %v2247 = vrot.slane %v2246, 1
    %v2248 = vadd.f32 %v2246, %v2247
    %v2249 = vadd.f32 %v2239, %v2241
    %v2250 = vrot.slane %v2249, 4
    %v2251 = vadd.f32 %v2249, %v2250
    %v2252 = vrot.slane %v2251, 2
    %v2253 = vadd.f32 %v2251, %v2252
    %v2254 = vrot.slane %v2253, 1
    %v2255 = vadd.f32 %v2253, %v2254
    %v2256 = vmul.f32 %v2248, %v2088
    %v2257 = vmul.f32 %v2255, %v2088
    %v2258 = vld [vmem:[%s9] sm:$0x3]
    %2259 = vmatprep.subr.mxu0 %v2122
    %2260 = vmatpush1.msra.mxu0 %v2121
    %2261 = vmatprep.subr.mxu0 %v2120
    %2262 = vmatpush1.msra.mxu0 %v2119
    %2263 = vmatprep.subr.mxu0 %v2118
    %2264 = vmatpush1.msra.mxu0 %v2117
    %2265 = vmatprep.subr.mxu0 %v2116
    %2266 = vmatpush1.msra.mxu0 %v2115
    %2267 = vmatprep.subr.mxu0 %v2114
    %2268 = vmatpush1.msra.mxu0 %v2113
    %2269 = vmatprep.subr.mxu0 %v2112
    %2270 = vmatpush1.msra.mxu0 %v2111
    %2271 = vmatprep.subr.mxu0 %v2110
    %2272 = vmatpush1.msra.mxu0 %v2109
    %2273 = vmatprep.subr.mxu0 %v2108
    %2274 = vmatpush1.msra.mxu0 %v2107
    %2275 = vmatprep.subr.mxu0 %v2106
    %2276 = vmatpush1.msra.mxu0 %v2105
    %2277 = vmatprep.subr.mxu0 %v2104
    %2278 = vmatpush1.msra.mxu0 %v2103
    %2279 = vmatprep.subr.mxu0 %v2102
    %2280 = vmatpush1.msra.mxu0 %v2101
    %2281 = vmatprep.subr.mxu0 %v2100
    %2282 = vmatpush1.msra.mxu0 %v2099
    %2283 = vmatprep.subr.mxu0 %v2098
    %2284 = vmatpush1.msra.mxu0 %v2097
    %2285 = vmatprep.subr.mxu0 %v2096
    %2286 = vmatpush1.msra.mxu0 %v2095
    %2287 = vmatprep.subr.mxu0 %v2094
    %2288 = vmatpush1.msra.mxu0 %v2093
    %2289 = vmatprep.subr.mxu0 %v2092
    %2290 = vmatpush1.msra.mxu0 %v2091
    %2291 = vmatprep.subr.mxu0 %v2154
    %2292 = vmatpush2.msra.mxu0 %v2153
    %2293 = vmatprep.subr.mxu0 %v2152
    %2294 = vmatpush2.msra.mxu0 %v2151
    %2295 = vmatprep.subr.mxu0 %v2150
    %2296 = vmatpush2.msra.mxu0 %v2149
    %2297 = vmatprep.subr.mxu0 %v2148
    %2298 = vmatpush2.msra.mxu0 %v2147
    %2299 = vmatprep.subr.mxu0 %v2146
    %2300 = vmatpush2.msra.mxu0 %v2145
    %2301 = vmatprep.subr.mxu0 %v2144
    %2302 = vmatpush2.msra.mxu0 %v2143
    %2303 = vmatprep.subr.mxu0 %v2142
    %2304 = vmatpush2.msra.mxu0 %v2141
    %2305 = vmatprep.subr.mxu0 %v2140
    %2306 = vmatpush2.msra.mxu0 %v2139
    %2307 = vmatprep.subr.mxu0 %v2138
    %2308 = vmatpush2.msra.mxu0 %v2137
    %2309 = vmatprep.subr.mxu0 %v2136
    %2310 = vmatpush2.msra.mxu0 %v2135
    %2311 = vmatprep.subr.mxu0 %v2134
    %2312 = vmatpush2.msra.mxu0 %v2133
    %2313 = vmatprep.subr.mxu0 %v2132
    %2314 = vmatpush2.msra.mxu0 %v2131
    %2315 = vmatprep.subr.mxu0 %v2130
    %2316 = vmatpush2.msra.mxu0 %v2129
    %2317 = vmatprep.subr.mxu0 %v2128
    %2318 = vmatpush2.msra.mxu0 %v2127
    %2319 = vmatprep.subr.mxu0 %v2126
    %2320 = vmatpush2.msra.mxu0 %v2125
    %2321 = vmatprep.subr.mxu0 %v2124
    %2322 = vmatpush2.msra.mxu0 %v2123
    %2323 = vmatprep.mubr.f32.mxu0 %v2257
    %2324 = vmatmul.mubr.f32.gmra.mxu0 %v2256
    %v2325 = vpop.f32.mrf.mxu0
    %v2326 = vadd.f32 1e-05, %v2325
    %v2327 = vpop.f32.mrf.mxu0
    %v2328 = vadd.f32 1e-05, %v2327
    %2329 = vdwg.mxu0
    %v2330 = vrsqrt.pop %v2326
    %v2331 = vrsqrt.pop %v2328
    %v2334 = vcombine.low %v2330, %v2331
    %v2336 = vunpack.c.l.s4 1966171168
    %v2337 = vunpack.c.0.s8 %v2336
    %v2338 = vlaneseq
    %v2339 = vshrl.u32 %v2338, 7
    %v2340 = vsub.s32 %v2337, %v2339
    %v2341 = vrot.slane %v2334, %v2340
    %v2343 = vunpack.c.l.s4 1966171168
    %v2344 = vunpack.c.0.s8 %v2343
    %v2345 = vlaneseq
    %v2346 = vshrl.u32 %v2345, 7
    %v2347 = vsub.s32 %v2344, %v2346
    %v2348 = vrot.slane %v2341, %v2347
    %v2350 = vmul.f32 %v2258, %v2348
    %v2352 = vlaneseq
    %v2353 = vshrl.u32 %v2352, 7
    %v2354 = vsub.s32 0, %v2353
    %v2355 = vrot.slane %v2350, %v2354
    %v2356 = vlaneseq
    %v2357 = vshrl.u32 %v2356, 7
    %v2358 = vsub.s32 1, %v2357
    %v2359 = vrot.slane %v2350, %v2358
    %v2362 = vmul.f32 %v2234, %v2355
    %v2363 = vmul.f32 %v2235, %v2359
    %v2364 = vmul.f32 %v2236, %v2355
    %v2365 = vmul.f32 %v2237, %v2359
    %v2366 = vld [vmem:[%s10] sm:$0x3]
    %v2368 = vlaneseq
    %v2369 = vshrl.u32 %v2368, 7
    %v2370 = vsub.s32 0, %v2369
    %v2371 = vrot.slane %v2366, %v2370
    %v2372 = vlaneseq
    %v2373 = vshrl.u32 %v2372, 7
    %v2374 = vsub.s32 1, %v2373
    %v2375 = vrot.slane %v2366, %v2374
    %v2378 = vadd.f32 %v2362, %v2371
    %v2379 = vadd.f32 %v2363, %v2375
    %v2380 = vadd.f32 %v2364, %v2371
    %v2381 = vadd.f32 %v2365, %v2375
    %v2382 = vmax.f32 %v2378, 0.0
    %v2383 = vmax.f32 %v2379, 0.0
    %v2384 = vmax.f32 %v2380, 0.0
    %v2385 = vmax.f32 %v2381, 0.0
    %v2386 = vpack.c.bf16 %v2384, %v2382
    %v2387 = vpack.c.bf16 %v2385, %v2383
    %v2388 = vld [vmem:[%s12] sm:$0xff]
    %v2389 = vld [vmem:[%s12 + $0x8] sm:$0xff]
    %v2390 = vld [vmem:[%s12 + $0x10] sm:$0xff]
    %v2391 = vld [vmem:[%s12 + $0x18] sm:$0xff]
    %v2392 = vld [vmem:[%s12 + $0x20] sm:$0xff]
    %v2393 = vld [vmem:[%s12 + $0x28] sm:$0xff]
    %v2394 = vld [vmem:[%s12 + $0x30] sm:$0xff]
    %v2395 = vld [vmem:[%s12 + $0x38] sm:$0xff]
    %v2396 = vld [vmem:[%s12 + $0x40] sm:$0xff]
    %v2397 = vld [vmem:[%s12 + $0x48] sm:$0xff]
    %v2398 = vld [vmem:[%s12 + $0x50] sm:$0xff]
    %v2399 = vld [vmem:[%s12 + $0x58] sm:$0xff]
    %v2400 = vld [vmem:[%s12 + $0x60] sm:$0xff]
    %v2401 = vld [vmem:[%s12 + $0x68] sm:$0xff]
    %v2402 = vld [vmem:[%s12 + $0x70] sm:$0xff]
    %v2403 = vld [vmem:[%s12 + $0x78] sm:$0xff]
    %v2404 = vld [vmem:[%s12 + $0x80] sm:$0xff]
    %v2405 = vld [vmem:[%s12 + $0x88] sm:$0xff]
    %v2406 = vld [vmem:[%s12 + $0x90] sm:$0xff]
    %v2407 = vld [vmem:[%s12 + $0x98] sm:$0xff]
    %v2408 = vld [vmem:[%s12 + $0xa0] sm:$0xff]
    %v2409 = vld [vmem:[%s12 + $0xa8] sm:$0xff]
    %v2410 = vld [vmem:[%s12 + $0xb0] sm:$0xff]
    %v2411 = vld [vmem:[%s12 + $0xb8] sm:$0xff]
    %v2412 = vld [vmem:[%s12 + $0xc0] sm:$0xff]
    %v2413 = vld [vmem:[%s12 + $0xc8] sm:$0xff]
    %v2414 = vld [vmem:[%s12 + $0xd0] sm:$0xff]
    %v2415 = vld [vmem:[%s12 + $0xd8] sm:$0xff]
    %v2416 = vld [vmem:[%s12 + $0xe0] sm:$0xff]
    %v2417 = vld [vmem:[%s12 + $0xe8] sm:$0xff]
    %v2418 = vld [vmem:[%s12 + $0xf0] sm:$0xff]
    %v2419 = vld [vmem:[%s12 + $0xf8] sm:$0xff]
    %v2452 = vunpack.c.l.b16 %v2388
    %v2453 = vunpack.c.h.b16 %v2388
    %v2454 = vunpack.c.l.b16 %v2389
    %v2455 = vunpack.c.h.b16 %v2389
    %v2456 = vunpack.c.l.b16 %v2390
    %v2457 = vunpack.c.h.b16 %v2390
    %v2458 = vunpack.c.l.b16 %v2391
    %v2459 = vunpack.c.h.b16 %v2391
    %v2460 = vunpack.c.l.b16 %v2392
    %v2461 = vunpack.c.h.b16 %v2392
    %v2462 = vunpack.c.l.b16 %v2393
    %v2463 = vunpack.c.h.b16 %v2393
    %v2464 = vunpack.c.l.b16 %v2394
    %v2465 = vunpack.c.h.b16 %v2394
    %v2466 = vunpack.c.l.b16 %v2395
    %v2467 = vunpack.c.h.b16 %v2395
    %v2468 = vunpack.c.l.b16 %v2396
    %v2469 = vunpack.c.h.b16 %v2396
    %v2470 = vunpack.c.l.b16 %v2397
    %v2471 = vunpack.c.h.b16 %v2397
    %v2472 = vunpack.c.l.b16 %v2398
    %v2473 = vunpack.c.h.b16 %v2398
    %v2474 = vunpack.c.l.b16 %v2399
    %v2475 = vunpack.c.h.b16 %v2399
    %v2476 = vunpack.c.l.b16 %v2400
    %v2477 = vunpack.c.h.b16 %v2400
    %v2478 = vunpack.c.l.b16 %v2401
    %v2479 = vunpack.c.h.b16 %v2401
    %v2480 = vunpack.c.l.b16 %v2402
    %v2481 = vunpack.c.h.b16 %v2402
    %v2482 = vunpack.c.l.b16 %v2403
    %v2483 = vunpack.c.h.b16 %v2403
    %v2484 = vunpack.c.l.b16 %v2404
    %v2485 = vunpack.c.h.b16 %v2404
    %v2486 = vunpack.c.l.b16 %v2405
    %v2487 = vunpack.c.h.b16 %v2405
    %v2488 = vunpack.c.l.b16 %v2406
    %v2489 = vunpack.c.h.b16 %v2406
    %v2490 = vunpack.c.l.b16 %v2407
    %v2491 = vunpack.c.h.b16 %v2407
    %v2492 = vunpack.c.l.b16 %v2408
    %v2493 = vunpack.c.h.b16 %v2408
    %v2494 = vunpack.c.l.b16 %v2409
    %v2495 = vunpack.c.h.b16 %v2409
    %v2496 = vunpack.c.l.b16 %v2410
    %v2497 = vunpack.c.h.b16 %v2410
    %v2498 = vunpack.c.l.b16 %v2411
    %v2499 = vunpack.c.h.b16 %v2411
    %v2500 = vunpack.c.l.b16 %v2412
    %v2501 = vunpack.c.h.b16 %v2412
    %v2502 = vunpack.c.l.b16 %v2413
    %v2503 = vunpack.c.h.b16 %v2413
    %v2504 = vunpack.c.l.b16 %v2414
    %v2505 = vunpack.c.h.b16 %v2414
    %v2506 = vunpack.c.l.b16 %v2415
    %v2507 = vunpack.c.h.b16 %v2415
    %v2508 = vunpack.c.l.b16 %v2416
    %v2509 = vunpack.c.h.b16 %v2416
    %v2510 = vunpack.c.l.b16 %v2417
    %v2511 = vunpack.c.h.b16 %v2417
    %v2512 = vunpack.c.l.b16 %v2418
    %v2513 = vunpack.c.h.b16 %v2418
    %v2514 = vunpack.c.l.b16 %v2419
    %v2515 = vunpack.c.h.b16 %v2419
    %v2516 = vpack.c.b16 %v2454, %v2452
    %v2517 = vpack.c.b16 %v2455, %v2453
    %v2518 = vpack.c.b16 %v2458, %v2456
    %v2519 = vpack.c.b16 %v2459, %v2457
    %v2520 = vpack.c.b16 %v2462, %v2460
    %v2521 = vpack.c.b16 %v2463, %v2461
    %v2522 = vpack.c.b16 %v2466, %v2464
    %v2523 = vpack.c.b16 %v2467, %v2465
    %v2524 = vpack.c.b16 %v2470, %v2468
    %v2525 = vpack.c.b16 %v2471, %v2469
    %v2526 = vpack.c.b16 %v2474, %v2472
    %v2527 = vpack.c.b16 %v2475, %v2473
    %v2528 = vpack.c.b16 %v2478, %v2476
    %v2529 = vpack.c.b16 %v2479, %v2477
    %v2530 = vpack.c.b16 %v2482, %v2480
    %v2531 = vpack.c.b16 %v2483, %v2481
    %v2532 = vpack.c.b16 %v2486, %v2484
    %v2533 = vpack.c.b16 %v2487, %v2485
    %v2534 = vpack.c.b16 %v2490, %v2488
    %v2535 = vpack.c.b16 %v2491, %v2489
    %v2536 = vpack.c.b16 %v2494, %v2492
    %v2537 = vpack.c.b16 %v2495, %v2493
    %v2538 = vpack.c.b16 %v2498, %v2496
    %v2539 = vpack.c.b16 %v2499, %v2497
    %v2540 = vpack.c.b16 %v2502, %v2500
    %v2541 = vpack.c.b16 %v2503, %v2501
    %v2542 = vpack.c.b16 %v2506, %v2504
    %v2543 = vpack.c.b16 %v2507, %v2505
    %v2544 = vpack.c.b16 %v2510, %v2508
    %v2545 = vpack.c.b16 %v2511, %v2509
    %v2546 = vpack.c.b16 %v2514, %v2512
    %v2547 = vpack.c.b16 %v2515, %v2513
    %2580 = vmatprep.subr.bf16.mxu0 %v2531
    %2581 = vmatpush1.bf16.msra.mxu0 %v2530
    %2582 = vmatprep.subr.bf16.mxu0 %v2529
    %2583 = vmatpush1.bf16.msra.mxu0 %v2528
    %2584 = vmatprep.subr.bf16.mxu0 %v2527
    %2585 = vmatpush1.bf16.msra.mxu0 %v2526
    %2586 = vmatprep.subr.bf16.mxu0 %v2525
    %2587 = vmatpush1.bf16.msra.mxu0 %v2524
    %2588 = vmatprep.subr.bf16.mxu0 %v2523
    %2589 = vmatpush1.bf16.msra.mxu0 %v2522
    %2590 = vmatprep.subr.bf16.mxu0 %v2521
    %2591 = vmatpush1.bf16.msra.mxu0 %v2520
    %2592 = vmatprep.subr.bf16.mxu0 %v2519
    %2593 = vmatpush1.bf16.msra.mxu0 %v2518
    %2594 = vmatprep.subr.bf16.mxu0 %v2517
    %2595 = vmatpush1.bf16.msra.mxu0 %v2516
    %2596 = vmatprep.subr.bf16.mxu0 %v2547
    %2597 = vmatpush2.bf16.msra.mxu0 %v2546
    %2598 = vmatprep.subr.bf16.mxu0 %v2545
    %2599 = vmatpush2.bf16.msra.mxu0 %v2544
    %2600 = vmatprep.subr.bf16.mxu0 %v2543
    %2601 = vmatpush2.bf16.msra.mxu0 %v2542
    %2602 = vmatprep.subr.bf16.mxu0 %v2541
    %2603 = vmatpush2.bf16.msra.mxu0 %v2540
    %2604 = vmatprep.subr.bf16.mxu0 %v2539
    %2605 = vmatpush2.bf16.msra.mxu0 %v2538
    %2606 = vmatprep.subr.bf16.mxu0 %v2537
    %2607 = vmatpush2.bf16.msra.mxu0 %v2536
    %2608 = vmatprep.subr.bf16.mxu0 %v2535
    %2609 = vmatpush2.bf16.msra.mxu0 %v2534
    %2610 = vmatprep.subr.bf16.mxu0 %v2533
    %2611 = vmatpush2.bf16.msra.mxu0 %v2532
    %2612 = vmatprep.mubr.bf16.mxu0 %v2387
    %2613 = vmatmul.mubr.bf16.gmra.mxu0 %v2386
    %v2614 = vpop.f32.mrf.mxu0
    %v2615 = vadd.f32 0.0, %v2614
    %v2616 = vpop.f32.mrf.mxu0
    %v2617 = vadd.f32 0.0, %v2616
    %v2618 = vpop.f32.mrf.mxu0
    %v2619 = vadd.f32 0.0, %v2618
    %v2620 = vpop.f32.mrf.mxu0
    %v2621 = vadd.f32 0.0, %v2620
    %2622 = vdwg.mxu0
    %v2623 = vld [vmem:[%s11] sm:$0xf]
    %v2624 = vld [vmem:[%s11 + $0x4] sm:$0xf]
    %v2625 = vld [vmem:[%s11 + $0x8] sm:$0xf]
    %v2626 = vld [vmem:[%s11 + $0xc] sm:$0xf]
    %v2627 = vpack.c.bf16 %v2619, %v2615
    %v2628 = vpack.c.bf16 %v2621, %v2617
    %s2629 = scalar_lea.vmem %s12, 256
    %v2630 = vld [vmem:[%s2629] sm:$0xff]
    %v2631 = vld [vmem:[%s2629 + $0x8] sm:$0xff]
    %v2632 = vld [vmem:[%s2629 + $0x10] sm:$0xff]
    %v2633 = vld [vmem:[%s2629 + $0x18] sm:$0xff]
    %v2634 = vld [vmem:[%s2629 + $0x20] sm:$0xff]
    %v2635 = vld [vmem:[%s2629 + $0x28] sm:$0xff]
    %v2636 = vld [vmem:[%s2629 + $0x30] sm:$0xff]
    %v2637 = vld [vmem:[%s2629 + $0x38] sm:$0xff]
    %v2638 = vld [vmem:[%s2629 + $0x40] sm:$0xff]
    %v2639 = vld [vmem:[%s2629 + $0x48] sm:$0xff]
    %v2640 = vld [vmem:[%s2629 + $0x50] sm:$0xff]
    %v2641 = vld [vmem:[%s2629 + $0x58] sm:$0xff]
    %v2642 = vld [vmem:[%s2629 + $0x60] sm:$0xff]
    %v2643 = vld [vmem:[%s2629 + $0x68] sm:$0xff]
    %v2644 = vld [vmem:[%s2629 + $0x70] sm:$0xff]
    %v2645 = vld [vmem:[%s2629 + $0x78] sm:$0xff]
    %v2646 = vld [vmem:[%s2629 + $0x80] sm:$0xff]
    %v2647 = vld [vmem:[%s2629 + $0x88] sm:$0xff]
    %v2648 = vld [vmem:[%s2629 + $0x90] sm:$0xff]
    %v2649 = vld [vmem:[%s2629 + $0x98] sm:$0xff]
    %v2650 = vld [vmem:[%s2629 + $0xa0] sm:$0xff]
    %v2651 = vld [vmem:[%s2629 + $0xa8] sm:$0xff]
    %v2652 = vld [vmem:[%s2629 + $0xb0] sm:$0xff]
    %v2653 = vld [vmem:[%s2629 + $0xb8] sm:$0xff]
    %v2654 = vld [vmem:[%s2629 + $0xc0] sm:$0xff]
    %v2655 = vld [vmem:[%s2629 + $0xc8] sm:$0xff]
    %v2656 = vld [vmem:[%s2629 + $0xd0] sm:$0xff]
    %v2657 = vld [vmem:[%s2629 + $0xd8] sm:$0xff]
    %v2658 = vld [vmem:[%s2629 + $0xe0] sm:$0xff]
    %v2659 = vld [vmem:[%s2629 + $0xe8] sm:$0xff]
    %v2660 = vld [vmem:[%s2629 + $0xf0] sm:$0xff]
    %v2661 = vld [vmem:[%s2629 + $0xf8] sm:$0xff]
    %v2694 = vunpack.c.l.b16 %v2630
    %v2695 = vunpack.c.h.b16 %v2630
    %v2696 = vunpack.c.l.b16 %v2631
    %v2697 = vunpack.c.h.b16 %v2631
    %v2698 = vunpack.c.l.b16 %v2632
    %v2699 = vunpack.c.h.b16 %v2632
    %v2700 = vunpack.c.l.b16 %v2633
    %v2701 = vunpack.c.h.b16 %v2633
    %v2702 = vunpack.c.l.b16 %v2634
    %v2703 = vunpack.c.h.b16 %v2634
    %v2704 = vunpack.c.l.b16 %v2635
    %v2705 = vunpack.c.h.b16 %v2635
    %v2706 = vunpack.c.l.b16 %v2636
    %v2707 = vunpack.c.h.b16 %v2636
    %v2708 = vunpack.c.l.b16 %v2637
    %v2709 = vunpack.c.h.b16 %v2637
    %v2710 = vunpack.c.l.b16 %v2638
    %v2711 = vunpack.c.h.b16 %v2638
    %v2712 = vunpack.c.l.b16 %v2639
    %v2713 = vunpack.c.h.b16 %v2639
    %v2714 = vunpack.c.l.b16 %v2640
    %v2715 = vunpack.c.h.b16 %v2640
    %v2716 = vunpack.c.l.b16 %v2641
    %v2717 = vunpack.c.h.b16 %v2641
    %v2718 = vunpack.c.l.b16 %v2642
    %v2719 = vunpack.c.h.b16 %v2642
    %v2720 = vunpack.c.l.b16 %v2643
    %v2721 = vunpack.c.h.b16 %v2643
    %v2722 = vunpack.c.l.b16 %v2644
    %v2723 = vunpack.c.h.b16 %v2644
    %v2724 = vunpack.c.l.b16 %v2645
    %v2725 = vunpack.c.h.b16 %v2645
    %v2726 = vunpack.c.l.b16 %v2646
    %v2727 = vunpack.c.h.b16 %v2646
    %v2728 = vunpack.c.l.b16 %v2647
    %v2729 = vunpack.c.h.b16 %v2647
    %v2730 = vunpack.c.l.b16 %v2648
    %v2731 = vunpack.c.h.b16 %v2648
    %v2732 = vunpack.c.l.b16 %v2649
    %v2733 = vunpack.c.h.b16 %v2649
    %v2734 = vunpack.c.l.b16 %v2650
    %v2735 = vunpack.c.h.b16 %v2650
    %v2736 = vunpack.c.l.b16 %v2651
    %v2737 = vunpack.c.h.b16 %v2651
    %v2738 = vunpack.c.l.b16 %v2652
    %v2739 = vunpack.c.h.b16 %v2652
    %v2740 = vunpack.c.l.b16 %v2653
    %v2741 = vunpack.c.h.b16 %v2653
    %v2742 = vunpack.c.l.b16 %v2654
    %v2743 = vunpack.c.h.b16 %v2654
    %v2744 = vunpack.c.l.b16 %v2655
    %v2745 = vunpack.c.h.b16 %v2655
    %v2746 = vunpack.c.l.b16 %v2656
    %v2747 = vunpack.c.h.b16 %v2656
    %v2748 = vunpack.c.l.b16 %v2657
    %v2749 = vunpack.c.h.b16 %v2657
    %v2750 = vunpack.c.l.b16 %v2658
    %v2751 = vunpack.c.h.b16 %v2658
    %v2752 = vunpack.c.l.b16 %v2659
    %v2753 = vunpack.c.h.b16 %v2659
    %v2754 = vunpack.c.l.b16 %v2660
    %v2755 = vunpack.c.h.b16 %v2660
    %v2756 = vunpack.c.l.b16 %v2661
    %v2757 = vunpack.c.h.b16 %v2661
    %v2758 = vpack.c.b16 %v2696, %v2694
    %v2759 = vpack.c.b16 %v2697, %v2695
    %v2760 = vpack.c.b16 %v2700, %v2698
    %v2761 = vpack.c.b16 %v2701, %v2699
    %v2762 = vpack.c.b16 %v2704, %v2702
    %v2763 = vpack.c.b16 %v2705, %v2703
    %v2764 = vpack.c.b16 %v2708, %v2706
    %v2765 = vpack.c.b16 %v2709, %v2707
    %v2766 = vpack.c.b16 %v2712, %v2710
    %v2767 = vpack.c.b16 %v2713, %v2711
    %v2768 = vpack.c.b16 %v2716, %v2714
    %v2769 = vpack.c.b16 %v2717, %v2715
    %v2770 = vpack.c.b16 %v2720, %v2718
    %v2771 = vpack.c.b16 %v2721, %v2719
    %v2772 = vpack.c.b16 %v2724, %v2722
    %v2773 = vpack.c.b16 %v2725, %v2723
    %v2774 = vpack.c.b16 %v2728, %v2726
    %v2775 = vpack.c.b16 %v2729, %v2727
    %v2776 = vpack.c.b16 %v2732, %v2730
    %v2777 = vpack.c.b16 %v2733, %v2731
    %v2778 = vpack.c.b16 %v2736, %v2734
    %v2779 = vpack.c.b16 %v2737, %v2735
    %v2780 = vpack.c.b16 %v2740, %v2738
    %v2781 = vpack.c.b16 %v2741, %v2739
    %v2782 = vpack.c.b16 %v2744, %v2742
    %v2783 = vpack.c.b16 %v2745, %v2743
    %v2784 = vpack.c.b16 %v2748, %v2746
    %v2785 = vpack.c.b16 %v2749, %v2747
    %v2786 = vpack.c.b16 %v2752, %v2750
    %v2787 = vpack.c.b16 %v2753, %v2751
    %v2788 = vpack.c.b16 %v2756, %v2754
    %v2789 = vpack.c.b16 %v2757, %v2755
    %2822 = vmatprep.subr.bf16.mxu0 %v2773
    %2823 = vmatpush1.bf16.msra.mxu0 %v2772
    %2824 = vmatprep.subr.bf16.mxu0 %v2771
    %2825 = vmatpush1.bf16.msra.mxu0 %v2770
    %2826 = vmatprep.subr.bf16.mxu0 %v2769
    %2827 = vmatpush1.bf16.msra.mxu0 %v2768
    %2828 = vmatprep.subr.bf16.mxu0 %v2767
    %2829 = vmatpush1.bf16.msra.mxu0 %v2766
    %2830 = vmatprep.subr.bf16.mxu0 %v2765
    %2831 = vmatpush1.bf16.msra.mxu0 %v2764
    %2832 = vmatprep.subr.bf16.mxu0 %v2763
    %2833 = vmatpush1.bf16.msra.mxu0 %v2762
    %2834 = vmatprep.subr.bf16.mxu0 %v2761
    %2835 = vmatpush1.bf16.msra.mxu0 %v2760
    %2836 = vmatprep.subr.bf16.mxu0 %v2759
    %2837 = vmatpush1.bf16.msra.mxu0 %v2758
    %2838 = vmatprep.subr.bf16.mxu0 %v2789
    %2839 = vmatpush2.bf16.msra.mxu0 %v2788
    %2840 = vmatprep.subr.bf16.mxu0 %v2787
    %2841 = vmatpush2.bf16.msra.mxu0 %v2786
    %2842 = vmatprep.subr.bf16.mxu0 %v2785
    %2843 = vmatpush2.bf16.msra.mxu0 %v2784
    %2844 = vmatprep.subr.bf16.mxu0 %v2783
    %2845 = vmatpush2.bf16.msra.mxu0 %v2782
    %2846 = vmatprep.subr.bf16.mxu0 %v2781
    %2847 = vmatpush2.bf16.msra.mxu0 %v2780
    %2848 = vmatprep.subr.bf16.mxu0 %v2779
    %2849 = vmatpush2.bf16.msra.mxu0 %v2778
    %2850 = vmatprep.subr.bf16.mxu0 %v2777
    %2851 = vmatpush2.bf16.msra.mxu0 %v2776
    %2852 = vmatprep.subr.bf16.mxu0 %v2775
    %2853 = vmatpush2.bf16.msra.mxu0 %v2774
    %2854 = vmatprep.mubr.bf16.mxu0 %v2387
    %2855 = vmatmul.mubr.bf16.gmra.mxu0 %v2386
    %v2856 = vpop.f32.mrf.mxu0
    %v2857 = vadd.f32 0.0, %v2856
    %v2858 = vpop.f32.mrf.mxu0
    %v2859 = vadd.f32 0.0, %v2858
    %v2860 = vpop.f32.mrf.mxu0
    %v2861 = vadd.f32 0.0, %v2860
    %v2862 = vpop.f32.mrf.mxu0
    %v2863 = vadd.f32 0.0, %v2862
    %2864 = vdwg.mxu0
    %s2865 = scalar_lea.vmem %s11, 16
    %v2866 = vld [vmem:[%s2865] sm:$0xf]
    %v2867 = vld [vmem:[%s2865 + $0x4] sm:$0xf]
    %v2868 = vld [vmem:[%s2865 + $0x8] sm:$0xf]
    %v2869 = vld [vmem:[%s2865 + $0xc] sm:$0xf]
    %v2870 = vpack.c.bf16 %v2861, %v2857
    %v2871 = vpack.c.bf16 %v2863, %v2859
    %v2876 = vunpack.c.l.b16 %v2866
    %v2877 = vunpack.c.l.b16 %v2867
    %v2878 = vunpack.c.l.b16 %v2868
    %v2879 = vunpack.c.l.b16 %v2869
    %v2880 = vpack.c.b16 %v2877, %v2876
    %v2881 = vpack.c.b16 %v2879, %v2878
    %vm2882 = vcmask 130048
    %v2884 = vsel %vm2882, %v2880, 0
    %v2887 = vsel %vm2882, %v2881, 0
    %2889 = vmatprep.subr.bf16.mxu0 0
    %2890 = vmatpush1.bf16.msra.mxu0 0
    %2891 = vmatprep.subr.bf16.mxu0 0
    %2892 = vmatpush1.bf16.msra.mxu0 0
    %2893 = vmatprep.subr.bf16.mxu0 0
    %2894 = vmatpush1.bf16.msra.mxu0 0
    %2895 = vmatprep.subr.bf16.mxu0 0
    %2896 = vmatpush1.bf16.msra.mxu0 0
    %2897 = vmatprep.subr.bf16.mxu0 0
    %2898 = vmatpush1.bf16.msra.mxu0 0
    %2899 = vmatprep.subr.bf16.mxu0 0
    %2900 = vmatpush1.bf16.msra.mxu0 0
    %2901 = vmatprep.subr.bf16.mxu0 0
    %2902 = vmatpush1.bf16.msra.mxu0 0
    %2903 = vmatprep.subr.bf16.mxu0 %v2871
    %2904 = vmatpush1.bf16.msra.mxu0 %v2870
    %2905 = vmatprep.subr.bf16.mxu0 0
    %2906 = vmatpush2.bf16.msra.mxu0 0
    %2907 = vmatprep.subr.bf16.mxu0 0
    %2908 = vmatpush2.bf16.msra.mxu0 0
    %2909 = vmatprep.subr.bf16.mxu0 0
    %2910 = vmatpush2.bf16.msra.mxu0 0
    %2911 = vmatprep.subr.bf16.mxu0 0
    %2912 = vmatpush2.bf16.msra.mxu0 0
    %2913 = vmatprep.subr.bf16.mxu0 0
    %2914 = vmatpush2.bf16.msra.mxu0 0
    %2915 = vmatprep.subr.bf16.mxu0 0
    %2916 = vmatpush2.bf16.msra.mxu0 0
    %2917 = vmatprep.subr.bf16.mxu0 0
    %2918 = vmatpush2.bf16.msra.mxu0 0
    %2919 = vmatprep.subr.bf16.mxu0 0
    %2920 = vmatpush2.bf16.msra.mxu0 0
    %2921 = vmatprep.mubr.bf16.mxu0 0
    %2922 = vmatmul.mubr.bf16.gmra.mxu0 %v2884
    %v2923 = vpop.f32.mrf.mxu0
    %v2924 = vadd.f32 0.0, %v2923
    %v2925 = vpop.f32.mrf.mxu0
    %v2926 = vadd.f32 0.0, %v2925
    %v2927 = vpop.f32.mrf.mxu0
    %v2928 = vadd.f32 0.0, %v2927
    %v2929 = vpop.f32.mrf.mxu0
    %v2930 = vadd.f32 0.0, %v2929
    %2931 = vmatprep.mubr.bf16.mxu0 0
    %2932 = vmatmul.mubr.bf16.gmra.mxu0 %v2887
    %v2933 = vpop.f32.mrf.mxu0
    %v2934 = vadd.f32 0.0, %v2933
    %v2935 = vpop.f32.mrf.mxu0
    %v2936 = vadd.f32 0.0, %v2935
    %v2937 = vpop.f32.mrf.mxu0
    %v2938 = vadd.f32 0.0, %v2937
    %v2939 = vpop.f32.mrf.mxu0
    %v2940 = vadd.f32 0.0, %v2939
    %2941 = vdwg.mxu0
    %v2946 = vunpack.c.l.b16 %v2623
    %v2947 = vunpack.c.l.b16 %v2624
    %v2948 = vunpack.c.l.b16 %v2625
    %v2949 = vunpack.c.l.b16 %v2626
    %v2950 = vpack.c.b16 %v2947, %v2946
    %v2951 = vpack.c.b16 %v2949, %v2948
    %v2953 = vsel %vm2882, %v2950, 0
    %v2956 = vsel %vm2882, %v2951, 0
    %2958 = vmatprep.subr.bf16.mxu0 0
    %2959 = vmatpush1.bf16.msra.mxu0 0
    %2960 = vmatprep.subr.bf16.mxu0 0
    %2961 = vmatpush1.bf16.msra.mxu0 0
    %2962 = vmatprep.subr.bf16.mxu0 0
    %2963 = vmatpush1.bf16.msra.mxu0 0
    %2964 = vmatprep.subr.bf16.mxu0 0
    %2965 = vmatpush1.bf16.msra.mxu0 0
    %2966 = vmatprep.subr.bf16.mxu0 0
    %2967 = vmatpush1.bf16.msra.mxu0 0
    %2968 = vmatprep.subr.bf16.mxu0 0
    %2969 = vmatpush1.bf16.msra.mxu0 0
    %2970 = vmatprep.subr.bf16.mxu0 0
    %2971 = vmatpush1.bf16.msra.mxu0 0
    %2972 = vmatprep.subr.bf16.mxu0 %v2628
    %2973 = vmatpush1.bf16.msra.mxu0 %v2627
    %2974 = vmatprep.subr.bf16.mxu0 0
    %2975 = vmatpush2.bf16.msra.mxu0 0
    %2976 = vmatprep.subr.bf16.mxu0 0
    %2977 = vmatpush2.bf16.msra.mxu0 0
    %2978 = vmatprep.subr.bf16.mxu0 0
    %2979 = vmatpush2.bf16.msra.mxu0 0
    %2980 = vmatprep.subr.bf16.mxu0 0
    %2981 = vmatpush2.bf16.msra.mxu0 0
    %2982 = vmatprep.subr.bf16.mxu0 0
    %2983 = vmatpush2.bf16.msra.mxu0 0
    %2984 = vmatprep.subr.bf16.mxu0 0
    %2985 = vmatpush2.bf16.msra.mxu0 0
    %2986 = vmatprep.subr.bf16.mxu0 0
    %2987 = vmatpush2.bf16.msra.mxu0 0
    %2988 = vmatprep.subr.bf16.mxu0 0
    %2989 = vmatpush2.bf16.msra.mxu0 0
    %2990 = vmatprep.mubr.bf16.mxu0 0
    %2991 = vmatmul.mubr.bf16.gmra.mxu0 %v2953
    %v2992 = vpop.f32.mrf.mxu0
    %v2993 = vadd.f32 %v2924, %v2992
    %v2994 = vpop.f32.mrf.mxu0
    %v2995 = vadd.f32 %v2926, %v2994
    %v2996 = vpop.f32.mrf.mxu0
    %v2997 = vadd.f32 %v2928, %v2996
    %v2998 = vpop.f32.mrf.mxu0
    %v2999 = vadd.f32 %v2930, %v2998
    %3000 = vmatprep.mubr.bf16.mxu0 0
    %3001 = vmatmul.mubr.bf16.gmra.mxu0 %v2956
    %v3002 = vpop.f32.mrf.mxu0
    %v3003 = vadd.f32 %v2934, %v3002
    %v3004 = vpop.f32.mrf.mxu0
    %v3005 = vadd.f32 %v2936, %v3004
    %v3006 = vpop.f32.mrf.mxu0
    %v3007 = vadd.f32 %v2938, %v3006
    %v3008 = vpop.f32.mrf.mxu0
    %v3009 = vadd.f32 %v2940, %v3008
    %3010 = vdwg.mxu0
    %s3011 = scalar_lea.vmem %s12, 512
    %v3012 = vld [vmem:[%s3011] sm:$0xff]
    %v3013 = vld [vmem:[%s3011 + $0x8] sm:$0xff]
    %v3014 = vld [vmem:[%s3011 + $0x10] sm:$0xff]
    %v3015 = vld [vmem:[%s3011 + $0x18] sm:$0xff]
    %v3016 = vld [vmem:[%s3011 + $0x20] sm:$0xff]
    %v3017 = vld [vmem:[%s3011 + $0x28] sm:$0xff]
    %v3018 = vld [vmem:[%s3011 + $0x30] sm:$0xff]
    %v3019 = vld [vmem:[%s3011 + $0x38] sm:$0xff]
    %v3020 = vld [vmem:[%s3011 + $0x40] sm:$0xff]
    %v3021 = vld [vmem:[%s3011 + $0x48] sm:$0xff]
    %v3022 = vld [vmem:[%s3011 + $0x50] sm:$0xff]
    %v3023 = vld [vmem:[%s3011 + $0x58] sm:$0xff]
    %v3024 = vld [vmem:[%s3011 + $0x60] sm:$0xff]
    %v3025 = vld [vmem:[%s3011 + $0x68] sm:$0xff]
    %v3026 = vld [vmem:[%s3011 + $0x70] sm:$0xff]
    %v3027 = vld [vmem:[%s3011 + $0x78] sm:$0xff]
    %v3028 = vld [vmem:[%s3011 + $0x80] sm:$0xff]
    %v3029 = vld [vmem:[%s3011 + $0x88] sm:$0xff]
    %v3030 = vld [vmem:[%s3011 + $0x90] sm:$0xff]
    %v3031 = vld [vmem:[%s3011 + $0x98] sm:$0xff]
    %v3032 = vld [vmem:[%s3011 + $0xa0] sm:$0xff]
    %v3033 = vld [vmem:[%s3011 + $0xa8] sm:$0xff]
    %v3034 = vld [vmem:[%s3011 + $0xb0] sm:$0xff]
    %v3035 = vld [vmem:[%s3011 + $0xb8] sm:$0xff]
    %v3036 = vld [vmem:[%s3011 + $0xc0] sm:$0xff]
    %v3037 = vld [vmem:[%s3011 + $0xc8] sm:$0xff]
    %v3038 = vld [vmem:[%s3011 + $0xd0] sm:$0xff]
    %v3039 = vld [vmem:[%s3011 + $0xd8] sm:$0xff]
    %v3040 = vld [vmem:[%s3011 + $0xe0] sm:$0xff]
    %v3041 = vld [vmem:[%s3011 + $0xe8] sm:$0xff]
    %v3042 = vld [vmem:[%s3011 + $0xf0] sm:$0xff]
    %v3043 = vld [vmem:[%s3011 + $0xf8] sm:$0xff]
    %v3076 = vunpack.c.l.b16 %v3012
    %v3077 = vunpack.c.h.b16 %v3012
    %v3078 = vunpack.c.l.b16 %v3013
    %v3079 = vunpack.c.h.b16 %v3013
    %v3080 = vunpack.c.l.b16 %v3014
    %v3081 = vunpack.c.h.b16 %v3014
    %v3082 = vunpack.c.l.b16 %v3015
    %v3083 = vunpack.c.h.b16 %v3015
    %v3084 = vunpack.c.l.b16 %v3016
    %v3085 = vunpack.c.h.b16 %v3016
    %v3086 = vunpack.c.l.b16 %v3017
    %v3087 = vunpack.c.h.b16 %v3017
    %v3088 = vunpack.c.l.b16 %v3018
    %v3089 = vunpack.c.h.b16 %v3018
    %v3090 = vunpack.c.l.b16 %v3019
    %v3091 = vunpack.c.h.b16 %v3019
    %v3092 = vunpack.c.l.b16 %v3020
    %v3093 = vunpack.c.h.b16 %v3020
    %v3094 = vunpack.c.l.b16 %v3021
    %v3095 = vunpack.c.h.b16 %v3021
    %v3096 = vunpack.c.l.b16 %v3022
    %v3097 = vunpack.c.h.b16 %v3022
    %v3098 = vunpack.c.l.b16 %v3023
    %v3099 = vunpack.c.h.b16 %v3023
    %v3100 = vunpack.c.l.b16 %v3024
    %v3101 = vunpack.c.h.b16 %v3024
    %v3102 = vunpack.c.l.b16 %v3025
    %v3103 = vunpack.c.h.b16 %v3025
    %v3104 = vunpack.c.l.b16 %v3026
    %v3105 = vunpack.c.h.b16 %v3026
    %v3106 = vunpack.c.l.b16 %v3027
    %v3107 = vunpack.c.h.b16 %v3027
    %v3108 = vunpack.c.l.b16 %v3028
    %v3109 = vunpack.c.h.b16 %v3028
    %v3110 = vunpack.c.l.b16 %v3029
    %v3111 = vunpack.c.h.b16 %v3029
    %v3112 = vunpack.c.l.b16 %v3030
    %v3113 = vunpack.c.h.b16 %v3030
    %v3114 = vunpack.c.l.b16 %v3031
    %v3115 = vunpack.c.h.b16 %v3031
    %v3116 = vunpack.c.l.b16 %v3032
    %v3117 = vunpack.c.h.b16 %v3032
    %v3118 = vunpack.c.l.b16 %v3033
    %v3119 = vunpack.c.h.b16 %v3033
    %v3120 = vunpack.c.l.b16 %v3034
    %v3121 = vunpack.c.h.b16 %v3034
    %v3122 = vunpack.c.l.b16 %v3035
    %v3123 = vunpack.c.h.b16 %v3035
    %v3124 = vunpack.c.l.b16 %v3036
    %v3125 = vunpack.c.h.b16 %v3036
    %v3126 = vunpack.c.l.b16 %v3037
    %v3127 = vunpack.c.h.b16 %v3037
    %v3128 = vunpack.c.l.b16 %v3038
    %v3129 = vunpack.c.h.b16 %v3038
    %v3130 = vunpack.c.l.b16 %v3039
    %v3131 = vunpack.c.h.b16 %v3039
    %v3132 = vunpack.c.l.b16 %v3040
    %v3133 = vunpack.c.h.b16 %v3040
    %v3134 = vunpack.c.l.b16 %v3041
    %v3135 = vunpack.c.h.b16 %v3041
    %v3136 = vunpack.c.l.b16 %v3042
    %v3137 = vunpack.c.h.b16 %v3042
    %v3138 = vunpack.c.l.b16 %v3043
    %v3139 = vunpack.c.h.b16 %v3043
    %v3140 = vpack.c.b16 %v3078, %v3076
    %v3141 = vpack.c.b16 %v3079, %v3077
    %v3142 = vpack.c.b16 %v3082, %v3080
    %v3143 = vpack.c.b16 %v3083, %v3081
    %v3144 = vpack.c.b16 %v3086, %v3084
    %v3145 = vpack.c.b16 %v3087, %v3085
    %v3146 = vpack.c.b16 %v3090, %v3088
    %v3147 = vpack.c.b16 %v3091, %v3089
    %v3148 = vpack.c.b16 %v3094, %v3092
    %v3149 = vpack.c.b16 %v3095, %v3093
    %v3150 = vpack.c.b16 %v3098, %v3096
    %v3151 = vpack.c.b16 %v3099, %v3097
    %v3152 = vpack.c.b16 %v3102, %v3100
    %v3153 = vpack.c.b16 %v3103, %v3101
    %v3154 = vpack.c.b16 %v3106, %v3104
    %v3155 = vpack.c.b16 %v3107, %v3105
    %v3156 = vpack.c.b16 %v3110, %v3108
    %v3157 = vpack.c.b16 %v3111, %v3109
    %v3158 = vpack.c.b16 %v3114, %v3112
    %v3159 = vpack.c.b16 %v3115, %v3113
    %v3160 = vpack.c.b16 %v3118, %v3116
    %v3161 = vpack.c.b16 %v3119, %v3117
    %v3162 = vpack.c.b16 %v3122, %v3120
    %v3163 = vpack.c.b16 %v3123, %v3121
    %v3164 = vpack.c.b16 %v3126, %v3124
    %v3165 = vpack.c.b16 %v3127, %v3125
    %v3166 = vpack.c.b16 %v3130, %v3128
    %v3167 = vpack.c.b16 %v3131, %v3129
    %v3168 = vpack.c.b16 %v3134, %v3132
    %v3169 = vpack.c.b16 %v3135, %v3133
    %v3170 = vpack.c.b16 %v3138, %v3136
    %v3171 = vpack.c.b16 %v3139, %v3137
    %3204 = vmatprep.subr.bf16.mxu0 %v3155
    %3205 = vmatpush1.bf16.msra.mxu0 %v3154
    %3206 = vmatprep.subr.bf16.mxu0 %v3153
    %3207 = vmatpush1.bf16.msra.mxu0 %v3152
    %3208 = vmatprep.subr.bf16.mxu0 %v3151
    %3209 = vmatpush1.bf16.msra.mxu0 %v3150
    %3210 = vmatprep.subr.bf16.mxu0 %v3149
    %3211 = vmatpush1.bf16.msra.mxu0 %v3148
    %3212 = vmatprep.subr.bf16.mxu0 %v3147
    %3213 = vmatpush1.bf16.msra.mxu0 %v3146
    %3214 = vmatprep.subr.bf16.mxu0 %v3145
    %3215 = vmatpush1.bf16.msra.mxu0 %v3144
    %3216 = vmatprep.subr.bf16.mxu0 %v3143
    %3217 = vmatpush1.bf16.msra.mxu0 %v3142
    %3218 = vmatprep.subr.bf16.mxu0 %v3141
    %3219 = vmatpush1.bf16.msra.mxu0 %v3140
    %3220 = vmatprep.subr.bf16.mxu0 %v3171
    %3221 = vmatpush2.bf16.msra.mxu0 %v3170
    %3222 = vmatprep.subr.bf16.mxu0 %v3169
    %3223 = vmatpush2.bf16.msra.mxu0 %v3168
    %3224 = vmatprep.subr.bf16.mxu0 %v3167
    %3225 = vmatpush2.bf16.msra.mxu0 %v3166
    %3226 = vmatprep.subr.bf16.mxu0 %v3165
    %3227 = vmatpush2.bf16.msra.mxu0 %v3164
    %3228 = vmatprep.subr.bf16.mxu0 %v3163
    %3229 = vmatpush2.bf16.msra.mxu0 %v3162
    %3230 = vmatprep.subr.bf16.mxu0 %v3161
    %3231 = vmatpush2.bf16.msra.mxu0 %v3160
    %3232 = vmatprep.subr.bf16.mxu0 %v3159
    %3233 = vmatpush2.bf16.msra.mxu0 %v3158
    %3234 = vmatprep.subr.bf16.mxu0 %v3157
    %3235 = vmatpush2.bf16.msra.mxu0 %v3156
    %3236 = vmatprep.mubr.bf16.mxu0 %v2387
    %3237 = vmatmul.mubr.bf16.gmra.mxu0 %v2386
    %v3238 = vpop.f32.mrf.mxu0
    %v3239 = vadd.f32 0.0, %v3238
    %v3240 = vpop.f32.mrf.mxu0
    %v3241 = vadd.f32 0.0, %v3240
    %v3242 = vpop.f32.mrf.mxu0
    %v3243 = vadd.f32 0.0, %v3242
    %v3244 = vpop.f32.mrf.mxu0
    %v3245 = vadd.f32 0.0, %v3244
    %3246 = vdwg.mxu0
    %s3247 = scalar_lea.vmem %s11, 32
    %v3248 = vld [vmem:[%s3247] sm:$0xf]
    %v3249 = vld [vmem:[%s3247 + $0x4] sm:$0xf]
    %v3250 = vld [vmem:[%s3247 + $0x8] sm:$0xf]
    %v3251 = vld [vmem:[%s3247 + $0xc] sm:$0xf]
    %v3252 = vpack.c.bf16 %v3243, %v3239
    %v3253 = vpack.c.bf16 %v3245, %v3241
    %v3258 = vunpack.c.l.b16 %v3248
    %v3259 = vunpack.c.l.b16 %v3249
    %v3260 = vunpack.c.l.b16 %v3250
    %v3261 = vunpack.c.l.b16 %v3251
    %v3262 = vpack.c.b16 %v3259, %v3258
    %v3263 = vpack.c.b16 %v3261, %v3260
    %v3265 = vsel %vm2882, %v3262, 0
    %v3268 = vsel %vm2882, %v3263, 0
    %3270 = vmatprep.subr.bf16.mxu0 0
    %3271 = vmatpush1.bf16.msra.mxu0 0
    %3272 = vmatprep.subr.bf16.mxu0 0
    %3273 = vmatpush1.bf16.msra.mxu0 0
    %3274 = vmatprep.subr.bf16.mxu0 0
    %3275 = vmatpush1.bf16.msra.mxu0 0
    %3276 = vmatprep.subr.bf16.mxu0 0
    %3277 = vmatpush1.bf16.msra.mxu0 0
    %3278 = vmatprep.subr.bf16.mxu0 0
    %3279 = vmatpush1.bf16.msra.mxu0 0
    %3280 = vmatprep.subr.bf16.mxu0 0
    %3281 = vmatpush1.bf16.msra.mxu0 0
    %3282 = vmatprep.subr.bf16.mxu0 0
    %3283 = vmatpush1.bf16.msra.mxu0 0
    %3284 = vmatprep.subr.bf16.mxu0 %v3253
    %3285 = vmatpush1.bf16.msra.mxu0 %v3252
    %3286 = vmatprep.subr.bf16.mxu0 0
    %3287 = vmatpush2.bf16.msra.mxu0 0
    %3288 = vmatprep.subr.bf16.mxu0 0
    %3289 = vmatpush2.bf16.msra.mxu0 0
    %3290 = vmatprep.subr.bf16.mxu0 0
    %3291 = vmatpush2.bf16.msra.mxu0 0
    %3292 = vmatprep.subr.bf16.mxu0 0
    %3293 = vmatpush2.bf16.msra.mxu0 0
    %3294 = vmatprep.subr.bf16.mxu0 0
    %3295 = vmatpush2.bf16.msra.mxu0 0
    %3296 = vmatprep.subr.bf16.mxu0 0
    %3297 = vmatpush2.bf16.msra.mxu0 0
    %3298 = vmatprep.subr.bf16.mxu0 0
    %3299 = vmatpush2.bf16.msra.mxu0 0
    %3300 = vmatprep.subr.bf16.mxu0 0
    %3301 = vmatpush2.bf16.msra.mxu0 0
    %3302 = vmatprep.mubr.bf16.mxu0 0
    %3303 = vmatmul.mubr.bf16.gmra.mxu0 %v3265
    %v3304 = vpop.f32.mrf.mxu0
    %v3305 = vadd.f32 0.0, %v3304
    %v3306 = vpop.f32.mrf.mxu0
    %v3307 = vadd.f32 0.0, %v3306
    %v3308 = vpop.f32.mrf.mxu0
    %v3309 = vadd.f32 0.0, %v3308
    %v3310 = vpop.f32.mrf.mxu0
    %v3311 = vadd.f32 0.0, %v3310
    %3312 = vmatprep.mubr.bf16.mxu0 0
    %3313 = vmatmul.mubr.bf16.gmra.mxu0 %v3268
    %v3314 = vpop.f32.mrf.mxu0
    %v3315 = vadd.f32 0.0, %v3314
    %v3316 = vpop.f32.mrf.mxu0
    %v3317 = vadd.f32 0.0, %v3316
    %v3318 = vpop.f32.mrf.mxu0
    %v3319 = vadd.f32 0.0, %v3318
    %v3320 = vpop.f32.mrf.mxu0
    %v3321 = vadd.f32 0.0, %v3320
    %3322 = vdwg.mxu0
    %v3323 = vadd.f32 %v2993, %v3305
    %v3324 = vadd.f32 %v2995, %v3307
    %v3325 = vadd.f32 %v2997, %v3309
    %v3326 = vadd.f32 %v2999, %v3311
    %v3327 = vadd.f32 %v3003, %v3315
    %v3328 = vadd.f32 %v3005, %v3317
    %v3329 = vadd.f32 %v3007, %v3319
    %v3330 = vadd.f32 %v3009, %v3321
    %s3331 = scalar_lea.vmem %s12, 768
    %v3332 = vld [vmem:[%s3331] sm:$0xff]
    %v3333 = vld [vmem:[%s3331 + $0x8] sm:$0xff]
    %v3334 = vld [vmem:[%s3331 + $0x10] sm:$0xff]
    %v3335 = vld [vmem:[%s3331 + $0x18] sm:$0xff]
    %v3336 = vld [vmem:[%s3331 + $0x20] sm:$0xff]
    %v3337 = vld [vmem:[%s3331 + $0x28] sm:$0xff]
    %v3338 = vld [vmem:[%s3331 + $0x30] sm:$0xff]
    %v3339 = vld [vmem:[%s3331 + $0x38] sm:$0xff]
    %v3340 = vld [vmem:[%s3331 + $0x40] sm:$0xff]
    %v3341 = vld [vmem:[%s3331 + $0x48] sm:$0xff]
    %v3342 = vld [vmem:[%s3331 + $0x50] sm:$0xff]
    %v3343 = vld [vmem:[%s3331 + $0x58] sm:$0xff]
    %v3344 = vld [vmem:[%s3331 + $0x60] sm:$0xff]
    %v3345 = vld [vmem:[%s3331 + $0x68] sm:$0xff]
    %v3346 = vld [vmem:[%s3331 + $0x70] sm:$0xff]
    %v3347 = vld [vmem:[%s3331 + $0x78] sm:$0xff]
    %v3348 = vld [vmem:[%s3331 + $0x80] sm:$0xff]
    %v3349 = vld [vmem:[%s3331 + $0x88] sm:$0xff]
    %v3350 = vld [vmem:[%s3331 + $0x90] sm:$0xff]
    %v3351 = vld [vmem:[%s3331 + $0x98] sm:$0xff]
    %v3352 = vld [vmem:[%s3331 + $0xa0] sm:$0xff]
    %v3353 = vld [vmem:[%s3331 + $0xa8] sm:$0xff]
    %v3354 = vld [vmem:[%s3331 + $0xb0] sm:$0xff]
    %v3355 = vld [vmem:[%s3331 + $0xb8] sm:$0xff]
    %v3356 = vld [vmem:[%s3331 + $0xc0] sm:$0xff]
    %v3357 = vld [vmem:[%s3331 + $0xc8] sm:$0xff]
    %v3358 = vld [vmem:[%s3331 + $0xd0] sm:$0xff]
    %v3359 = vld [vmem:[%s3331 + $0xd8] sm:$0xff]
    %v3360 = vld [vmem:[%s3331 + $0xe0] sm:$0xff]
    %v3361 = vld [vmem:[%s3331 + $0xe8] sm:$0xff]
    %v3362 = vld [vmem:[%s3331 + $0xf0] sm:$0xff]
    %v3363 = vld [vmem:[%s3331 + $0xf8] sm:$0xff]
    %v3396 = vunpack.c.l.b16 %v3332
    %v3397 = vunpack.c.h.b16 %v3332
    %v3398 = vunpack.c.l.b16 %v3333
    %v3399 = vunpack.c.h.b16 %v3333
    %v3400 = vunpack.c.l.b16 %v3334
    %v3401 = vunpack.c.h.b16 %v3334
    %v3402 = vunpack.c.l.b16 %v3335
    %v3403 = vunpack.c.h.b16 %v3335
    %v3404 = vunpack.c.l.b16 %v3336
    %v3405 = vunpack.c.h.b16 %v3336
    %v3406 = vunpack.c.l.b16 %v3337
    %v3407 = vunpack.c.h.b16 %v3337
    %v3408 = vunpack.c.l.b16 %v3338
    %v3409 = vunpack.c.h.b16 %v3338
    %v3410 = vunpack.c.l.b16 %v3339
    %v3411 = vunpack.c.h.b16 %v3339
    %v3412 = vunpack.c.l.b16 %v3340
    %v3413 = vunpack.c.h.b16 %v3340
    %v3414 = vunpack.c.l.b16 %v3341
    %v3415 = vunpack.c.h.b16 %v3341
    %v3416 = vunpack.c.l.b16 %v3342
    %v3417 = vunpack.c.h.b16 %v3342
    %v3418 = vunpack.c.l.b16 %v3343
    %v3419 = vunpack.c.h.b16 %v3343
    %v3420 = vunpack.c.l.b16 %v3344
    %v3421 = vunpack.c.h.b16 %v3344
    %v3422 = vunpack.c.l.b16 %v3345
    %v3423 = vunpack.c.h.b16 %v3345
    %v3424 = vunpack.c.l.b16 %v3346
    %v3425 = vunpack.c.h.b16 %v3346
    %v3426 = vunpack.c.l.b16 %v3347
    %v3427 = vunpack.c.h.b16 %v3347
    %v3428 = vunpack.c.l.b16 %v3348
    %v3429 = vunpack.c.h.b16 %v3348
    %v3430 = vunpack.c.l.b16 %v3349
    %v3431 = vunpack.c.h.b16 %v3349
    %v3432 = vunpack.c.l.b16 %v3350
    %v3433 = vunpack.c.h.b16 %v3350
    %v3434 = vunpack.c.l.b16 %v3351
    %v3435 = vunpack.c.h.b16 %v3351
    %v3436 = vunpack.c.l.b16 %v3352
    %v3437 = vunpack.c.h.b16 %v3352
    %v3438 = vunpack.c.l.b16 %v3353
    %v3439 = vunpack.c.h.b16 %v3353
    %v3440 = vunpack.c.l.b16 %v3354
    %v3441 = vunpack.c.h.b16 %v3354
    %v3442 = vunpack.c.l.b16 %v3355
    %v3443 = vunpack.c.h.b16 %v3355
    %v3444 = vunpack.c.l.b16 %v3356
    %v3445 = vunpack.c.h.b16 %v3356
    %v3446 = vunpack.c.l.b16 %v3357
    %v3447 = vunpack.c.h.b16 %v3357
    %v3448 = vunpack.c.l.b16 %v3358
    %v3449 = vunpack.c.h.b16 %v3358
    %v3450 = vunpack.c.l.b16 %v3359
    %v3451 = vunpack.c.h.b16 %v3359
    %v3452 = vunpack.c.l.b16 %v3360
    %v3453 = vunpack.c.h.b16 %v3360
    %v3454 = vunpack.c.l.b16 %v3361
    %v3455 = vunpack.c.h.b16 %v3361
    %v3456 = vunpack.c.l.b16 %v3362
    %v3457 = vunpack.c.h.b16 %v3362
    %v3458 = vunpack.c.l.b16 %v3363
    %v3459 = vunpack.c.h.b16 %v3363
    %v3460 = vpack.c.b16 %v3398, %v3396
    %v3461 = vpack.c.b16 %v3399, %v3397
    %v3462 = vpack.c.b16 %v3402, %v3400
    %v3463 = vpack.c.b16 %v3403, %v3401
    %v3464 = vpack.c.b16 %v3406, %v3404
    %v3465 = vpack.c.b16 %v3407, %v3405
    %v3466 = vpack.c.b16 %v3410, %v3408
    %v3467 = vpack.c.b16 %v3411, %v3409
    %v3468 = vpack.c.b16 %v3414, %v3412
    %v3469 = vpack.c.b16 %v3415, %v3413
    %v3470 = vpack.c.b16 %v3418, %v3416
    %v3471 = vpack.c.b16 %v3419, %v3417
    %v3472 = vpack.c.b16 %v3422, %v3420
    %v3473 = vpack.c.b16 %v3423, %v3421
    %v3474 = vpack.c.b16 %v3426, %v3424
    %v3475 = vpack.c.b16 %v3427, %v3425
    %v3476 = vpack.c.b16 %v3430, %v3428
    %v3477 = vpack.c.b16 %v3431, %v3429
    %v3478 = vpack.c.b16 %v3434, %v3432
    %v3479 = vpack.c.b16 %v3435, %v3433
    %v3480 = vpack.c.b16 %v3438, %v3436
    %v3481 = vpack.c.b16 %v3439, %v3437
    %v3482 = vpack.c.b16 %v3442, %v3440
    %v3483 = vpack.c.b16 %v3443, %v3441
    %v3484 = vpack.c.b16 %v3446, %v3444
    %v3485 = vpack.c.b16 %v3447, %v3445
    %v3486 = vpack.c.b16 %v3450, %v3448
    %v3487 = vpack.c.b16 %v3451, %v3449
    %v3488 = vpack.c.b16 %v3454, %v3452
    %v3489 = vpack.c.b16 %v3455, %v3453
    %v3490 = vpack.c.b16 %v3458, %v3456
    %v3491 = vpack.c.b16 %v3459, %v3457
    %3524 = vmatprep.subr.bf16.mxu0 %v3475
    %3525 = vmatpush1.bf16.msra.mxu0 %v3474
    %3526 = vmatprep.subr.bf16.mxu0 %v3473
    %3527 = vmatpush1.bf16.msra.mxu0 %v3472
    %3528 = vmatprep.subr.bf16.mxu0 %v3471
    %3529 = vmatpush1.bf16.msra.mxu0 %v3470
    %3530 = vmatprep.subr.bf16.mxu0 %v3469
    %3531 = vmatpush1.bf16.msra.mxu0 %v3468
    %3532 = vmatprep.subr.bf16.mxu0 %v3467
    %3533 = vmatpush1.bf16.msra.mxu0 %v3466
    %3534 = vmatprep.subr.bf16.mxu0 %v3465
    %3535 = vmatpush1.bf16.msra.mxu0 %v3464
    %3536 = vmatprep.subr.bf16.mxu0 %v3463
    %3537 = vmatpush1.bf16.msra.mxu0 %v3462
    %3538 = vmatprep.subr.bf16.mxu0 %v3461
    %3539 = vmatpush1.bf16.msra.mxu0 %v3460
    %3540 = vmatprep.subr.bf16.mxu0 %v3491
    %3541 = vmatpush2.bf16.msra.mxu0 %v3490
    %3542 = vmatprep.subr.bf16.mxu0 %v3489
    %3543 = vmatpush2.bf16.msra.mxu0 %v3488
    %3544 = vmatprep.subr.bf16.mxu0 %v3487
    %3545 = vmatpush2.bf16.msra.mxu0 %v3486
    %3546 = vmatprep.subr.bf16.mxu0 %v3485
    %3547 = vmatpush2.bf16.msra.mxu0 %v3484
    %3548 = vmatprep.subr.bf16.mxu0 %v3483
    %3549 = vmatpush2.bf16.msra.mxu0 %v3482
    %3550 = vmatprep.subr.bf16.mxu0 %v3481
    %3551 = vmatpush2.bf16.msra.mxu0 %v3480
    %3552 = vmatprep.subr.bf16.mxu0 %v3479
    %3553 = vmatpush2.bf16.msra.mxu0 %v3478
    %3554 = vmatprep.subr.bf16.mxu0 %v3477
    %3555 = vmatpush2.bf16.msra.mxu0 %v3476
    %3556 = vmatprep.mubr.bf16.mxu0 %v2387
    %3557 = vmatmul.mubr.bf16.gmra.mxu0 %v2386
    %v3558 = vpop.f32.mrf.mxu0
    %v3559 = vadd.f32 0.0, %v3558
    %v3560 = vpop.f32.mrf.mxu0
    %v3561 = vadd.f32 0.0, %v3560
    %v3562 = vpop.f32.mrf.mxu0
    %v3563 = vadd.f32 0.0, %v3562
    %v3564 = vpop.f32.mrf.mxu0
    %v3565 = vadd.f32 0.0, %v3564
    %3566 = vdwg.mxu0
    %s3567 = scalar_lea.vmem %s11, 48
    %v3568 = vld [vmem:[%s3567] sm:$0xf]
    %v3569 = vld [vmem:[%s3567 + $0x4] sm:$0xf]
    %v3570 = vld [vmem:[%s3567 + $0x8] sm:$0xf]
    %v3571 = vld [vmem:[%s3567 + $0xc] sm:$0xf]
    %v3572 = vpack.c.bf16 %v3563, %v3559
    %v3573 = vpack.c.bf16 %v3565, %v3561
    %v3578 = vunpack.c.l.b16 %v3568
    %v3579 = vunpack.c.l.b16 %v3569
    %v3580 = vunpack.c.l.b16 %v3570
    %v3581 = vunpack.c.l.b16 %v3571
    %v3582 = vpack.c.b16 %v3579, %v3578
    %v3583 = vpack.c.b16 %v3581, %v3580
    %v3585 = vsel %vm2882, %v3582, 0
    %v3588 = vsel %vm2882, %v3583, 0
    %3590 = vmatprep.subr.bf16.mxu0 0
    %3591 = vmatpush1.bf16.msra.mxu0 0
    %3592 = vmatprep.subr.bf16.mxu0 0
    %3593 = vmatpush1.bf16.msra.mxu0 0
    %3594 = vmatprep.subr.bf16.mxu0 0
    %3595 = vmatpush1.bf16.msra.mxu0 0
    %3596 = vmatprep.subr.bf16.mxu0 0
    %3597 = vmatpush1.bf16.msra.mxu0 0
    %3598 = vmatprep.subr.bf16.mxu0 0
    %3599 = vmatpush1.bf16.msra.mxu0 0
    %3600 = vmatprep.subr.bf16.mxu0 0
    %3601 = vmatpush1.bf16.msra.mxu0 0
    %3602 = vmatprep.subr.bf16.mxu0 0
    %3603 = vmatpush1.bf16.msra.mxu0 0
    %3604 = vmatprep.subr.bf16.mxu0 %v3573
    %3605 = vmatpush1.bf16.msra.mxu0 %v3572
    %3606 = vmatprep.subr.bf16.mxu0 0
    %3607 = vmatpush2.bf16.msra.mxu0 0
    %3608 = vmatprep.subr.bf16.mxu0 0
    %3609 = vmatpush2.bf16.msra.mxu0 0
    %3610 = vmatprep.subr.bf16.mxu0 0
    %3611 = vmatpush2.bf16.msra.mxu0 0
    %3612 = vmatprep.subr.bf16.mxu0 0
    %3613 = vmatpush2.bf16.msra.mxu0 0
    %3614 = vmatprep.subr.bf16.mxu0 0
    %3615 = vmatpush2.bf16.msra.mxu0 0
    %3616 = vmatprep.subr.bf16.mxu0 0
    %3617 = vmatpush2.bf16.msra.mxu0 0
    %3618 = vmatprep.subr.bf16.mxu0 0
    %3619 = vmatpush2.bf16.msra.mxu0 0
    %3620 = vmatprep.subr.bf16.mxu0 0
    %3621 = vmatpush2.bf16.msra.mxu0 0
    %3622 = vmatprep.mubr.bf16.mxu0 0
    %3623 = vmatmul.mubr.bf16.gmra.mxu0 %v3585
    %v3624 = vpop.f32.mrf.mxu0
    %v3625 = vadd.f32 0.0, %v3624
    %v3626 = vpop.f32.mrf.mxu0
    %v3627 = vadd.f32 0.0, %v3626
    %v3628 = vpop.f32.mrf.mxu0
    %v3629 = vadd.f32 0.0, %v3628
    %v3630 = vpop.f32.mrf.mxu0
    %v3631 = vadd.f32 0.0, %v3630
    %3632 = vmatprep.mubr.bf16.mxu0 0
    %3633 = vmatmul.mubr.bf16.gmra.mxu0 %v3588
    %v3634 = vpop.f32.mrf.mxu0
    %v3635 = vadd.f32 0.0, %v3634
    %v3636 = vpop.f32.mrf.mxu0
    %v3637 = vadd.f32 0.0, %v3636
    %v3638 = vpop.f32.mrf.mxu0
    %v3639 = vadd.f32 0.0, %v3638
    %v3640 = vpop.f32.mrf.mxu0
    %v3641 = vadd.f32 0.0, %v3640
    %3642 = vdwg.mxu0
    %v3643 = vadd.f32 %v3323, %v3625
    %v3644 = vadd.f32 %v3324, %v3627
    %v3645 = vadd.f32 %v3325, %v3629
    %v3646 = vadd.f32 %v3326, %v3631
    %v3647 = vadd.f32 %v3327, %v3635
    %v3648 = vadd.f32 %v3328, %v3637
    %v3649 = vadd.f32 %v3329, %v3639
    %v3650 = vadd.f32 %v3330, %v3641
    %v3651 = vadd.f32 %v3643, %v3645
    %v3652 = vadd.f32 %v3651, %v3647
    %v3653 = vadd.f32 %v3652, %v3649
    %v3654 = vrot.slane %v3653, 4
    %v3655 = vadd.f32 %v3653, %v3654
    %v3656 = vrot.slane %v3655, 2
    %v3657 = vadd.f32 %v3655, %v3656
    %v3658 = vrot.slane %v3657, 1
    %v3659 = vadd.f32 %v3657, %v3658
    %v3660 = vadd.f32 %v3644, %v3646
    %v3661 = vadd.f32 %v3660, %v3648
    %v3662 = vadd.f32 %v3661, %v3650
    %v3663 = vrot.slane %v3662, 4
    %v3664 = vadd.f32 %v3662, %v3663
    %v3665 = vrot.slane %v3664, 2
    %v3666 = vadd.f32 %v3664, %v3665
    %v3667 = vrot.slane %v3666, 1
    %v3668 = vadd.f32 %v3666, %v3667
    %v3669 = vrcp.pop 32.0
    %v3670 = vmul.f32 %v3659, %v3669
    %v3671 = vmul.f32 %v3668, %v3669
    %v3672 = vld [vmem:[#allocation6] sm:$0xff]
    %v3673 = vld [vmem:[#allocation6 + $0x8] sm:$0xff]
    %v3674 = vld [vmem:[#allocation6 + $0x10] sm:$0xff]
    %v3675 = vld [vmem:[#allocation6 + $0x18] sm:$0xff]
    %v3676 = vld [vmem:[#allocation6 + $0x20] sm:$0xff]
    %v3677 = vld [vmem:[#allocation6 + $0x28] sm:$0xff]
    %v3678 = vld [vmem:[#allocation6 + $0x30] sm:$0xff]
    %v3679 = vld [vmem:[#allocation6 + $0x38] sm:$0xff]
    %v3680 = vld [vmem:[#allocation6 + $0x40] sm:$0xff]
    %v3681 = vld [vmem:[#allocation6 + $0x48] sm:$0xff]
    %v3682 = vld [vmem:[#allocation6 + $0x50] sm:$0xff]
    %v3683 = vld [vmem:[#allocation6 + $0x58] sm:$0xff]
    %v3684 = vld [vmem:[#allocation6 + $0x60] sm:$0xff]
    %v3685 = vld [vmem:[#allocation6 + $0x68] sm:$0xff]
    %v3686 = vld [vmem:[#allocation6 + $0x70] sm:$0xff]
    %v3687 = vld [vmem:[#allocation6 + $0x78] sm:$0xff]
    %v3688 = vld [vmem:[#allocation6 + $0x80] sm:$0xff]
    %v3689 = vld [vmem:[#allocation6 + $0x88] sm:$0xff]
    %v3690 = vld [vmem:[#allocation6 + $0x90] sm:$0xff]
    %v3691 = vld [vmem:[#allocation6 + $0x98] sm:$0xff]
    %v3692 = vld [vmem:[#allocation6 + $0xa0] sm:$0xff]
    %v3693 = vld [vmem:[#allocation6 + $0xa8] sm:$0xff]
    %v3694 = vld [vmem:[#allocation6 + $0xb0] sm:$0xff]
    %v3695 = vld [vmem:[#allocation6 + $0xb8] sm:$0xff]
    %v3696 = vld [vmem:[#allocation6 + $0xc0] sm:$0xff]
    %v3697 = vld [vmem:[#allocation6 + $0xc8] sm:$0xff]
    %v3698 = vld [vmem:[#allocation6 + $0xd0] sm:$0xff]
    %v3699 = vld [vmem:[#allocation6 + $0xd8] sm:$0xff]
    %v3700 = vld [vmem:[#allocation6 + $0xe0] sm:$0xff]
    %v3701 = vld [vmem:[#allocation6 + $0xe8] sm:$0xff]
    %v3702 = vld [vmem:[#allocation6 + $0xf0] sm:$0xff]
    %v3703 = vld [vmem:[#allocation6 + $0xf8] sm:$0xff]
    %v3704 = vld [vmem:[#allocation6 + $0x100] sm:$0xff]
    %v3705 = vld [vmem:[#allocation6 + $0x108] sm:$0xff]
    %v3706 = vld [vmem:[#allocation6 + $0x110] sm:$0xff]
    %v3707 = vld [vmem:[#allocation6 + $0x118] sm:$0xff]
    %v3708 = vld [vmem:[#allocation6 + $0x120] sm:$0xff]
    %v3709 = vld [vmem:[#allocation6 + $0x128] sm:$0xff]
    %v3710 = vld [vmem:[#allocation6 + $0x130] sm:$0xff]
    %v3711 = vld [vmem:[#allocation6 + $0x138] sm:$0xff]
    %v3712 = vld [vmem:[#allocation6 + $0x140] sm:$0xff]
    %v3713 = vld [vmem:[#allocation6 + $0x148] sm:$0xff]
    %v3714 = vld [vmem:[#allocation6 + $0x150] sm:$0xff]
    %v3715 = vld [vmem:[#allocation6 + $0x158] sm:$0xff]
    %v3716 = vld [vmem:[#allocation6 + $0x160] sm:$0xff]
    %v3717 = vld [vmem:[#allocation6 + $0x168] sm:$0xff]
    %v3718 = vld [vmem:[#allocation6 + $0x170] sm:$0xff]
    %v3719 = vld [vmem:[#allocation6 + $0x178] sm:$0xff]
    %v3720 = vld [vmem:[#allocation6 + $0x180] sm:$0xff]
    %v3721 = vld [vmem:[#allocation6 + $0x188] sm:$0xff]
    %v3722 = vld [vmem:[#allocation6 + $0x190] sm:$0xff]
    %v3723 = vld [vmem:[#allocation6 + $0x198] sm:$0xff]
    %v3724 = vld [vmem:[#allocation6 + $0x1a0] sm:$0xff]
    %v3725 = vld [vmem:[#allocation6 + $0x1a8] sm:$0xff]
    %v3726 = vld [vmem:[#allocation6 + $0x1b0] sm:$0xff]
    %v3727 = vld [vmem:[#allocation6 + $0x1b8] sm:$0xff]
    %v3728 = vld [vmem:[#allocation6 + $0x1c0] sm:$0xff]
    %v3729 = vld [vmem:[#allocation6 + $0x1c8] sm:$0xff]
    %v3730 = vld [vmem:[#allocation6 + $0x1d0] sm:$0xff]
    %v3731 = vld [vmem:[#allocation6 + $0x1d8] sm:$0xff]
    %v3732 = vld [vmem:[#allocation6 + $0x1e0] sm:$0xff]
    %v3733 = vld [vmem:[#allocation6 + $0x1e8] sm:$0xff]
    %v3734 = vld [vmem:[#allocation6 + $0x1f0] sm:$0xff]
    %v3735 = vld [vmem:[#allocation6 + $0x1f8] sm:$0xff]
    %3736 = vmatprep.subr.mxu0 %v3703
    %3737 = vmatpush1.msra.mxu0 %v3702
    %3738 = vmatprep.subr.mxu0 %v3701
    %3739 = vmatpush1.msra.mxu0 %v3700
    %3740 = vmatprep.subr.mxu0 %v3699
    %3741 = vmatpush1.msra.mxu0 %v3698
    %3742 = vmatprep.subr.mxu0 %v3697
    %3743 = vmatpush1.msra.mxu0 %v3696
    %3744 = vmatprep.subr.mxu0 %v3695
    %3745 = vmatpush1.msra.mxu0 %v3694
    %3746 = vmatprep.subr.mxu0 %v3693
    %3747 = vmatpush1.msra.mxu0 %v3692
    %3748 = vmatprep.subr.mxu0 %v3691
    %3749 = vmatpush1.msra.mxu0 %v3690
    %3750 = vmatprep.subr.mxu0 %v3689
    %3751 = vmatpush1.msra.mxu0 %v3688
    %3752 = vmatprep.subr.mxu0 %v3687
    %3753 = vmatpush1.msra.mxu0 %v3686
    %3754 = vmatprep.subr.mxu0 %v3685
    %3755 = vmatpush1.msra.mxu0 %v3684
    %3756 = vmatprep.subr.mxu0 %v3683
    %3757 = vmatpush1.msra.mxu0 %v3682
    %3758 = vmatprep.subr.mxu0 %v3681
    %3759 = vmatpush1.msra.mxu0 %v3680
    %3760 = vmatprep.subr.mxu0 %v3679
    %3761 = vmatpush1.msra.mxu0 %v3678
    %3762 = vmatprep.subr.mxu0 %v3677
    %3763 = vmatpush1.msra.mxu0 %v3676
    %3764 = vmatprep.subr.mxu0 %v3675
    %3765 = vmatpush1.msra.mxu0 %v3674
    %3766 = vmatprep.subr.mxu0 %v3673
    %3767 = vmatpush1.msra.mxu0 %v3672
    %3768 = vmatprep.subr.mxu0 %v3735
    %3769 = vmatpush2.msra.mxu0 %v3734
    %3770 = vmatprep.subr.mxu0 %v3733
    %3771 = vmatpush2.msra.mxu0 %v3732
    %3772 = vmatprep.subr.mxu0 %v3731
    %3773 = vmatpush2.msra.mxu0 %v3730
    %3774 = vmatprep.subr.mxu0 %v3729
    %3775 = vmatpush2.msra.mxu0 %v3728
    %3776 = vmatprep.subr.mxu0 %v3727
    %3777 = vmatpush2.msra.mxu0 %v3726
    %3778 = vmatprep.subr.mxu0 %v3725
    %3779 = vmatpush2.msra.mxu0 %v3724
    %3780 = vmatprep.subr.mxu0 %v3723
    %3781 = vmatpush2.msra.mxu0 %v3722
    %3782 = vmatprep.subr.mxu0 %v3721
    %3783 = vmatpush2.msra.mxu0 %v3720
    %3784 = vmatprep.subr.mxu0 %v3719
    %3785 = vmatpush2.msra.mxu0 %v3718
    %3786 = vmatprep.subr.mxu0 %v3717
    %3787 = vmatpush2.msra.mxu0 %v3716
    %3788 = vmatprep.subr.mxu0 %v3715
    %3789 = vmatpush2.msra.mxu0 %v3714
    %3790 = vmatprep.subr.mxu0 %v3713
    %3791 = vmatpush2.msra.mxu0 %v3712
    %3792 = vmatprep.subr.mxu0 %v3711
    %3793 = vmatpush2.msra.mxu0 %v3710
    %3794 = vmatprep.subr.mxu0 %v3709
    %3795 = vmatpush2.msra.mxu0 %v3708
    %3796 = vmatprep.subr.mxu0 %v3707
    %3797 = vmatpush2.msra.mxu0 %v3706
    %3798 = vmatprep.subr.mxu0 %v3705
    %3799 = vmatpush2.msra.mxu0 %v3704
    %3800 = vmatprep.mubr.f32.mxu0 %v3671
    %3801 = vmatmul.mubr.f32.gmra.mxu0 %v3670
    %v3802 = vpop.f32.mrf.mxu0
    %v3803 = vadd.f32 0.0, %v3802
    %v3804 = vpop.f32.mrf.mxu0
    %v3805 = vadd.f32 0.0, %v3804
    %3806 = vdwg.mxu0
    %v3807 = vlaneseq
    %v3808 = vshrl.u32 %v3807, 7
    %v3809 = vsub.s32 0, %v3808
    %v3810 = vrot.slane %v3803, %v3809
    %v3811 = vlaneseq
    %v3812 = vshrl.u32 %v3811, 7
    %v3813 = vsub.s32 0, %v3812
    %v3814 = vrot.slane %v3805, %v3813
    %v3815 = vsub.f32 %v3643, %v3810
    %v3816 = vsub.f32 %v3644, %v3814
    %v3817 = vsub.f32 %v3645, %v3810
    %v3818 = vsub.f32 %v3646, %v3814
    %v3819 = vsub.f32 %v3647, %v3810
    %v3820 = vsub.f32 %v3648, %v3814
    %v3821 = vsub.f32 %v3649, %v3810
    %v3822 = vsub.f32 %v3650, %v3814
    %v3823 = vmul.f32 %v3815, %v3815
    %v3824 = vmul.f32 %v3816, %v3816
    %v3825 = vmul.f32 %v3817, %v3817
    %v3826 = vmul.f32 %v3818, %v3818
    %v3827 = vmul.f32 %v3819, %v3819
    %v3828 = vmul.f32 %v3820, %v3820
    %v3829 = vmul.f32 %v3821, %v3821
    %v3830 = vmul.f32 %v3822, %v3822
    %v3831 = vadd.f32 %v3823, %v3825
    %v3832 = vadd.f32 %v3831, %v3827
    %v3833 = vadd.f32 %v3832, %v3829
    %v3834 = vrot.slane %v3833, 4
    %v3835 = vadd.f32 %v3833, %v3834
    %v3836 = vrot.slane %v3835, 2
    %v3837 = vadd.f32 %v3835, %v3836
    %v3838 = vrot.slane %v3837, 1
    %v3839 = vadd.f32 %v3837, %v3838
    %v3840 = vadd.f32 %v3824, %v3826
    %v3841 = vadd.f32 %v3840, %v3828
    %v3842 = vadd.f32 %v3841, %v3830
    %v3843 = vrot.slane %v3842, 4
    %v3844 = vadd.f32 %v3842, %v3843
    %v3845 = vrot.slane %v3844, 2
    %v3846 = vadd.f32 %v3844, %v3845
    %v3847 = vrot.slane %v3846, 1
    %v3848 = vadd.f32 %v3846, %v3847
    %v3849 = vmul.f32 %v3839, %v3669
    %v3850 = vmul.f32 %v3848, %v3669
    %v3851 = vld [vmem:[%s14] sm:$0x3]
    %3852 = vmatprep.subr.mxu0 %v3703
    %3853 = vmatpush1.msra.mxu0 %v3702
    %3854 = vmatprep.subr.mxu0 %v3701
    %3855 = vmatpush1.msra.mxu0 %v3700
    %3856 = vmatprep.subr.mxu0 %v3699
    %3857 = vmatpush1.msra.mxu0 %v3698
    %3858 = vmatprep.subr.mxu0 %v3697
    %3859 = vmatpush1.msra.mxu0 %v3696
    %3860 = vmatprep.subr.mxu0 %v3695
    %3861 = vmatpush1.msra.mxu0 %v3694
    %3862 = vmatprep.subr.mxu0 %v3693
    %3863 = vmatpush1.msra.mxu0 %v3692
    %3864 = vmatprep.subr.mxu0 %v3691
    %3865 = vmatpush1.msra.mxu0 %v3690
    %3866 = vmatprep.subr.mxu0 %v3689
    %3867 = vmatpush1.msra.mxu0 %v3688
    %3868 = vmatprep.subr.mxu0 %v3687
    %3869 = vmatpush1.msra.mxu0 %v3686
    %3870 = vmatprep.subr.mxu0 %v3685
    %3871 = vmatpush1.msra.mxu0 %v3684
    %3872 = vmatprep.subr.mxu0 %v3683
    %3873 = vmatpush1.msra.mxu0 %v3682
    %3874 = vmatprep.subr.mxu0 %v3681
    %3875 = vmatpush1.msra.mxu0 %v3680
    %3876 = vmatprep.subr.mxu0 %v3679
    %3877 = vmatpush1.msra.mxu0 %v3678
    %3878 = vmatprep.subr.mxu0 %v3677
    %3879 = vmatpush1.msra.mxu0 %v3676
    %3880 = vmatprep.subr.mxu0 %v3675
    %3881 = vmatpush1.msra.mxu0 %v3674
    %3882 = vmatprep.subr.mxu0 %v3673
    %3883 = vmatpush1.msra.mxu0 %v3672
    %3884 = vmatprep.subr.mxu0 %v3735
    %3885 = vmatpush2.msra.mxu0 %v3734
    %3886 = vmatprep.subr.mxu0 %v3733
    %3887 = vmatpush2.msra.mxu0 %v3732
    %3888 = vmatprep.subr.mxu0 %v3731
    %3889 = vmatpush2.msra.mxu0 %v3730
    %3890 = vmatprep.subr.mxu0 %v3729
    %3891 = vmatpush2.msra.mxu0 %v3728
    %3892 = vmatprep.subr.mxu0 %v3727
    %3893 = vmatpush2.msra.mxu0 %v3726
    %3894 = vmatprep.subr.mxu0 %v3725
    %3895 = vmatpush2.msra.mxu0 %v3724
    %3896 = vmatprep.subr.mxu0 %v3723
    %3897 = vmatpush2.msra.mxu0 %v3722
    %3898 = vmatprep.subr.mxu0 %v3721
    %3899 = vmatpush2.msra.mxu0 %v3720
    %3900 = vmatprep.subr.mxu0 %v3719
    %3901 = vmatpush2.msra.mxu0 %v3718
    %3902 = vmatprep.subr.mxu0 %v3717
    %3903 = vmatpush2.msra.mxu0 %v3716
    %3904 = vmatprep.subr.mxu0 %v3715
    %3905 = vmatpush2.msra.mxu0 %v3714
    %3906 = vmatprep.subr.mxu0 %v3713
    %3907 = vmatpush2.msra.mxu0 %v3712
    %3908 = vmatprep.subr.mxu0 %v3711
    %3909 = vmatpush2.msra.mxu0 %v3710
    %3910 = vmatprep.subr.mxu0 %v3709
    %3911 = vmatpush2.msra.mxu0 %v3708
    %3912 = vmatprep.subr.mxu0 %v3707
    %3913 = vmatpush2.msra.mxu0 %v3706
    %3914 = vmatprep.subr.mxu0 %v3705
    %3915 = vmatpush2.msra.mxu0 %v3704
    %3916 = vmatprep.mubr.f32.mxu0 %v3850
    %3917 = vmatmul.mubr.f32.gmra.mxu0 %v3849
    %v3918 = vpop.f32.mrf.mxu0
    %v3919 = vadd.f32 1e-05, %v3918
    %v3920 = vpop.f32.mrf.mxu0
    %v3921 = vadd.f32 1e-05, %v3920
    %3922 = vdwg.mxu0
    %v3923 = vrsqrt.pop %v3919
    %v3924 = vrsqrt.pop %v3921
    %v3927 = vcombine.low %v3923, %v3924
    %v3929 = vunpack.c.l.s4 1966171168
    %v3930 = vunpack.c.0.s8 %v3929
    %v3931 = vlaneseq
    %v3932 = vshrl.u32 %v3931, 7
    %v3933 = vsub.s32 %v3930, %v3932
    %v3934 = vrot.slane %v3927, %v3933
    %v3936 = vunpack.c.l.s4 1966171168
    %v3937 = vunpack.c.0.s8 %v3936
    %v3938 = vlaneseq
    %v3939 = vshrl.u32 %v3938, 7
    %v3940 = vsub.s32 %v3937, %v3939
    %v3941 = vrot.slane %v3934, %v3940
    %v3943 = vmul.f32 %v3851, %v3941
    %v3945 = vlaneseq
    %v3946 = vshrl.u32 %v3945, 7
    %v3947 = vsub.s32 0, %v3946
    %v3948 = vrot.slane %v3943, %v3947
    %v3949 = vlaneseq
    %v3950 = vshrl.u32 %v3949, 7
    %v3951 = vsub.s32 1, %v3950
    %v3952 = vrot.slane %v3943, %v3951
    %v3955 = vmul.f32 %v3815, %v3948
    %v3956 = vmul.f32 %v3816, %v3952
    %v3957 = vmul.f32 %v3817, %v3948
    %v3958 = vmul.f32 %v3818, %v3952
    %v3959 = vmul.f32 %v3819, %v3948
    %v3960 = vmul.f32 %v3820, %v3952
    %v3961 = vmul.f32 %v3821, %v3948
    %v3962 = vmul.f32 %v3822, %v3952
    %v3963 = vld [vmem:[%s15] sm:$0x3]
    %v3965 = vlaneseq
    %v3966 = vshrl.u32 %v3965, 7
    %v3967 = vsub.s32 0, %v3966
    %v3968 = vrot.slane %v3963, %v3967
    %v3969 = vlaneseq
    %v3970 = vshrl.u32 %v3969, 7
    %v3971 = vsub.s32 1, %v3970
    %v3972 = vrot.slane %v3963, %v3971
    %v3975 = vadd.f32 %v3955, %v3968
    %v3976 = vadd.f32 %v3956, %v3972
    %v3977 = vadd.f32 %v3957, %v3968
    %v3978 = vadd.f32 %v3958, %v3972
    %v3979 = vadd.f32 %v3959, %v3968
    %v3980 = vadd.f32 %v3960, %v3972
    %v3981 = vadd.f32 %v3961, %v3968
    %v3982 = vadd.f32 %v3962, %v3972
    %v3983 = vmax.f32 %v3975, 0.0
    %v3984 = vmax.f32 %v3976, 0.0
    %v3985 = vmax.f32 %v3977, 0.0
    %v3986 = vmax.f32 %v3978, 0.0
    %v3987 = vmax.f32 %v3979, 0.0
    %v3988 = vmax.f32 %v3980, 0.0
    %v3989 = vmax.f32 %v3981, 0.0
    %v3990 = vmax.f32 %v3982, 0.0
    %v3991 = vpack.c.bf16 %v3985, %v3983
    %v3992 = vpack.c.bf16 %v3986, %v3984
    %v3993 = vpack.c.bf16 %v3989, %v3987
    %v3994 = vpack.c.bf16 %v3990, %v3988
    %v3995 = vld [vmem:[#allocation7] sm:$0xff]
    %v3996 = vld [vmem:[#allocation7 + $0x8] sm:$0xff]
    %v3997 = vld [vmem:[#allocation7 + $0x10] sm:$0xff]
    %v3998 = vld [vmem:[#allocation7 + $0x18] sm:$0xff]
    %v3999 = vld [vmem:[#allocation7 + $0x20] sm:$0xff]
    %v4000 = vld [vmem:[#allocation7 + $0x28] sm:$0xff]
    %v4001 = vld [vmem:[#allocation7 + $0x30] sm:$0xff]
    %v4002 = vld [vmem:[#allocation7 + $0x38] sm:$0xff]
    %v4003 = vld [vmem:[#allocation7 + $0x40] sm:$0xff]
    %v4004 = vld [vmem:[#allocation7 + $0x48] sm:$0xff]
    %v4005 = vld [vmem:[#allocation7 + $0x50] sm:$0xff]
    %v4006 = vld [vmem:[#allocation7 + $0x58] sm:$0xff]
    %v4007 = vld [vmem:[#allocation7 + $0x60] sm:$0xff]
    %v4008 = vld [vmem:[#allocation7 + $0x68] sm:$0xff]
    %v4009 = vld [vmem:[#allocation7 + $0x70] sm:$0xff]
    %v4010 = vld [vmem:[#allocation7 + $0x78] sm:$0xff]
    %v4011 = vld [vmem:[#allocation7 + $0x80] sm:$0xff]
    %v4012 = vld [vmem:[#allocation7 + $0x88] sm:$0xff]
    %v4013 = vld [vmem:[#allocation7 + $0x90] sm:$0xff]
    %v4014 = vld [vmem:[#allocation7 + $0x98] sm:$0xff]
    %v4015 = vld [vmem:[#allocation7 + $0xa0] sm:$0xff]
    %v4016 = vld [vmem:[#allocation7 + $0xa8] sm:$0xff]
    %v4017 = vld [vmem:[#allocation7 + $0xb0] sm:$0xff]
    %v4018 = vld [vmem:[#allocation7 + $0xb8] sm:$0xff]
    %v4019 = vld [vmem:[#allocation7 + $0xc0] sm:$0xff]
    %v4020 = vld [vmem:[#allocation7 + $0xc8] sm:$0xff]
    %v4021 = vld [vmem:[#allocation7 + $0xd0] sm:$0xff]
    %v4022 = vld [vmem:[#allocation7 + $0xd8] sm:$0xff]
    %v4023 = vld [vmem:[#allocation7 + $0xe0] sm:$0xff]
    %v4024 = vld [vmem:[#allocation7 + $0xe8] sm:$0xff]
    %v4025 = vld [vmem:[#allocation7 + $0xf0] sm:$0xff]
    %v4026 = vld [vmem:[#allocation7 + $0xf8] sm:$0xff]
    %v4059 = vunpack.c.l.b16 %v3995
    %v4060 = vunpack.c.h.b16 %v3995
    %v4061 = vunpack.c.l.b16 %v3996
    %v4062 = vunpack.c.h.b16 %v3996
    %v4063 = vunpack.c.l.b16 %v3997
    %v4064 = vunpack.c.h.b16 %v3997
    %v4065 = vunpack.c.l.b16 %v3998
    %v4066 = vunpack.c.h.b16 %v3998
    %v4067 = vunpack.c.l.b16 %v3999
    %v4068 = vunpack.c.h.b16 %v3999
    %v4069 = vunpack.c.l.b16 %v4000
    %v4070 = vunpack.c.h.b16 %v4000
    %v4071 = vunpack.c.l.b16 %v4001
    %v4072 = vunpack.c.h.b16 %v4001
    %v4073 = vunpack.c.l.b16 %v4002
    %v4074 = vunpack.c.h.b16 %v4002
    %v4075 = vunpack.c.l.b16 %v4003
    %v4076 = vunpack.c.h.b16 %v4003
    %v4077 = vunpack.c.l.b16 %v4004
    %v4078 = vunpack.c.h.b16 %v4004
    %v4079 = vunpack.c.l.b16 %v4005
    %v4080 = vunpack.c.h.b16 %v4005
    %v4081 = vunpack.c.l.b16 %v4006
    %v4082 = vunpack.c.h.b16 %v4006
    %v4083 = vunpack.c.l.b16 %v4007
    %v4084 = vunpack.c.h.b16 %v4007
    %v4085 = vunpack.c.l.b16 %v4008
    %v4086 = vunpack.c.h.b16 %v4008
    %v4087 = vunpack.c.l.b16 %v4009
    %v4088 = vunpack.c.h.b16 %v4009
    %v4089 = vunpack.c.l.b16 %v4010
    %v4090 = vunpack.c.h.b16 %v4010
    %v4091 = vunpack.c.l.b16 %v4011
    %v4092 = vunpack.c.h.b16 %v4011
    %v4093 = vunpack.c.l.b16 %v4012
    %v4094 = vunpack.c.h.b16 %v4012
    %v4095 = vunpack.c.l.b16 %v4013
    %v4096 = vunpack.c.h.b16 %v4013
    %v4097 = vunpack.c.l.b16 %v4014
    %v4098 = vunpack.c.h.b16 %v4014
    %v4099 = vunpack.c.l.b16 %v4015
    %v4100 = vunpack.c.h.b16 %v4015
    %v4101 = vunpack.c.l.b16 %v4016
    %v4102 = vunpack.c.h.b16 %v4016
    %v4103 = vunpack.c.l.b16 %v4017
    %v4104 = vunpack.c.h.b16 %v4017
    %v4105 = vunpack.c.l.b16 %v4018
    %v4106 = vunpack.c.h.b16 %v4018
    %v4107 = vunpack.c.l.b16 %v4019
    %v4108 = vunpack.c.h.b16 %v4019
    %v4109 = vunpack.c.l.b16 %v4020
    %v4110 = vunpack.c.h.b16 %v4020
    %v4111 = vunpack.c.l.b16 %v4021
    %v4112 = vunpack.c.h.b16 %v4021
    %v4113 = vunpack.c.l.b16 %v4022
    %v4114 = vunpack.c.h.b16 %v4022
    %v4115 = vunpack.c.l.b16 %v4023
    %v4116 = vunpack.c.h.b16 %v4023
    %v4117 = vunpack.c.l.b16 %v4024
    %v4118 = vunpack.c.h.b16 %v4024
    %v4119 = vunpack.c.l.b16 %v4025
    %v4120 = vunpack.c.h.b16 %v4025
    %v4121 = vunpack.c.l.b16 %v4026
    %v4122 = vunpack.c.h.b16 %v4026
    %v4123 = vpack.c.b16 %v4061, %v4059
    %v4124 = vpack.c.b16 %v4062, %v4060
    %v4125 = vpack.c.b16 %v4065, %v4063
    %v4126 = vpack.c.b16 %v4066, %v4064
    %v4127 = vpack.c.b16 %v4069, %v4067
    %v4128 = vpack.c.b16 %v4070, %v4068
    %v4129 = vpack.c.b16 %v4073, %v4071
    %v4130 = vpack.c.b16 %v4074, %v4072
    %v4131 = vpack.c.b16 %v4077, %v4075
    %v4132 = vpack.c.b16 %v4078, %v4076
    %v4133 = vpack.c.b16 %v4081, %v4079
    %v4134 = vpack.c.b16 %v4082, %v4080
    %v4135 = vpack.c.b16 %v4085, %v4083
    %v4136 = vpack.c.b16 %v4086, %v4084
    %v4137 = vpack.c.b16 %v4089, %v4087
    %v4138 = vpack.c.b16 %v4090, %v4088
    %v4139 = vpack.c.b16 %v4093, %v4091
    %v4140 = vpack.c.b16 %v4094, %v4092
    %v4141 = vpack.c.b16 %v4097, %v4095
    %v4142 = vpack.c.b16 %v4098, %v4096
    %v4143 = vpack.c.b16 %v4101, %v4099
    %v4144 = vpack.c.b16 %v4102, %v4100
    %v4145 = vpack.c.b16 %v4105, %v4103
    %v4146 = vpack.c.b16 %v4106, %v4104
    %v4147 = vpack.c.b16 %v4109, %v4107
    %v4148 = vpack.c.b16 %v4110, %v4108
    %v4149 = vpack.c.b16 %v4113, %v4111
    %v4150 = vpack.c.b16 %v4114, %v4112
    %v4151 = vpack.c.b16 %v4117, %v4115
    %v4152 = vpack.c.b16 %v4118, %v4116
    %v4153 = vpack.c.b16 %v4121, %v4119
    %v4154 = vpack.c.b16 %v4122, %v4120
    %4187 = vmatprep.subr.bf16.mxu0 %v4138
    %4188 = vmatpush1.bf16.msra.mxu0 %v4137
    %4189 = vmatprep.subr.bf16.mxu0 %v4136
    %4190 = vmatpush1.bf16.msra.mxu0 %v4135
    %4191 = vmatprep.subr.bf16.mxu0 %v4134
    %4192 = vmatpush1.bf16.msra.mxu0 %v4133
    %4193 = vmatprep.subr.bf16.mxu0 %v4132
    %4194 = vmatpush1.bf16.msra.mxu0 %v4131
    %4195 = vmatprep.subr.bf16.mxu0 %v4130
    %4196 = vmatpush1.bf16.msra.mxu0 %v4129
    %4197 = vmatprep.subr.bf16.mxu0 %v4128
    %4198 = vmatpush1.bf16.msra.mxu0 %v4127
    %4199 = vmatprep.subr.bf16.mxu0 %v4126
    %4200 = vmatpush1.bf16.msra.mxu0 %v4125
    %4201 = vmatprep.subr.bf16.mxu0 %v4124
    %4202 = vmatpush1.bf16.msra.mxu0 %v4123
    %4203 = vmatprep.subr.bf16.mxu0 %v4154
    %4204 = vmatpush2.bf16.msra.mxu0 %v4153
    %4205 = vmatprep.subr.bf16.mxu0 %v4152
    %4206 = vmatpush2.bf16.msra.mxu0 %v4151
    %4207 = vmatprep.subr.bf16.mxu0 %v4150
    %4208 = vmatpush2.bf16.msra.mxu0 %v4149
    %4209 = vmatprep.subr.bf16.mxu0 %v4148
    %4210 = vmatpush2.bf16.msra.mxu0 %v4147
    %4211 = vmatprep.subr.bf16.mxu0 %v4146
    %4212 = vmatpush2.bf16.msra.mxu0 %v4145
    %4213 = vmatprep.subr.bf16.mxu0 %v4144
    %4214 = vmatpush2.bf16.msra.mxu0 %v4143
    %4215 = vmatprep.subr.bf16.mxu0 %v4142
    %4216 = vmatpush2.bf16.msra.mxu0 %v4141
    %4217 = vmatprep.subr.bf16.mxu0 %v4140
    %4218 = vmatpush2.bf16.msra.mxu0 %v4139
    %4219 = vmatprep.mubr.bf16.mxu0 %v3992
    %4220 = vmatmul.mubr.bf16.gmra.mxu0 %v3991
    %v4221 = vpop.f32.mrf.mxu0
    %v4222 = vadd.f32 0.0, %v4221
    %v4223 = vpop.f32.mrf.mxu0
    %v4224 = vadd.f32 0.0, %v4223
    %v4225 = vpop.f32.mrf.mxu0
    %v4226 = vadd.f32 0.0, %v4225
    %v4227 = vpop.f32.mrf.mxu0
    %v4228 = vadd.f32 0.0, %v4227
    %4229 = vmatprep.mubr.bf16.mxu0 %v3994
    %4230 = vmatmul.mubr.bf16.gmra.mxu0 %v3993
    %v4231 = vpop.f32.mrf.mxu0
    %v4232 = vadd.f32 0.0, %v4231
    %v4233 = vpop.f32.mrf.mxu0
    %v4234 = vadd.f32 0.0, %v4233
    %v4235 = vpop.f32.mrf.mxu0
    %v4236 = vadd.f32 0.0, %v4235
    %v4237 = vpop.f32.mrf.mxu0
    %v4238 = vadd.f32 0.0, %v4237
    %4239 = vdwg.mxu0
    %v4240 = vld [vmem:[%s16] sm:$0xf]
    %v4241 = vld [vmem:[%s16 + $0x4] sm:$0xf]
    %v4242 = vld [vmem:[%s16 + $0x8] sm:$0xf]
    %v4243 = vld [vmem:[%s16 + $0xc] sm:$0xf]
    %v4244 = vld [vmem:[%s16 + $0x10] sm:$0xf]
    %v4245 = vld [vmem:[%s16 + $0x14] sm:$0xf]
    %v4246 = vld [vmem:[%s16 + $0x18] sm:$0xf]
    %v4247 = vld [vmem:[%s16 + $0x1c] sm:$0xf]
    %v4248 = vpack.c.bf16 %v4226, %v4222
    %v4249 = vpack.c.bf16 %v4228, %v4224
    %v4250 = vpack.c.bf16 %v4236, %v4232
    %v4251 = vpack.c.bf16 %v4238, %v4234
    %s4252 = scalar_lea.vmem [#allocation7], 256
    %v4253 = vld [vmem:[%s4252] sm:$0xff]
    %v4254 = vld [vmem:[%s4252 + $0x8] sm:$0xff]
    %v4255 = vld [vmem:[%s4252 + $0x10] sm:$0xff]
    %v4256 = vld [vmem:[%s4252 + $0x18] sm:$0xff]
    %v4257 = vld [vmem:[%s4252 + $0x20] sm:$0xff]
    %v4258 = vld [vmem:[%s4252 + $0x28] sm:$0xff]
    %v4259 = vld [vmem:[%s4252 + $0x30] sm:$0xff]
    %v4260 = vld [vmem:[%s4252 + $0x38] sm:$0xff]
    %v4261 = vld [vmem:[%s4252 + $0x40] sm:$0xff]
    %v4262 = vld [vmem:[%s4252 + $0x48] sm:$0xff]
    %v4263 = vld [vmem:[%s4252 + $0x50] sm:$0xff]
    %v4264 = vld [vmem:[%s4252 + $0x58] sm:$0xff]
    %v4265 = vld [vmem:[%s4252 + $0x60] sm:$0xff]
    %v4266 = vld [vmem:[%s4252 + $0x68] sm:$0xff]
    %v4267 = vld [vmem:[%s4252 + $0x70] sm:$0xff]
    %v4268 = vld [vmem:[%s4252 + $0x78] sm:$0xff]
    %v4269 = vld [vmem:[%s4252 + $0x80] sm:$0xff]
    %v4270 = vld [vmem:[%s4252 + $0x88] sm:$0xff]
    %v4271 = vld [vmem:[%s4252 + $0x90] sm:$0xff]
    %v4272 = vld [vmem:[%s4252 + $0x98] sm:$0xff]
    %v4273 = vld [vmem:[%s4252 + $0xa0] sm:$0xff]
    %v4274 = vld [vmem:[%s4252 + $0xa8] sm:$0xff]
    %v4275 = vld [vmem:[%s4252 + $0xb0] sm:$0xff]
    %v4276 = vld [vmem:[%s4252 + $0xb8] sm:$0xff]
    %v4277 = vld [vmem:[%s4252 + $0xc0] sm:$0xff]
    %v4278 = vld [vmem:[%s4252 + $0xc8] sm:$0xff]
    %v4279 = vld [vmem:[%s4252 + $0xd0] sm:$0xff]
    %v4280 = vld [vmem:[%s4252 + $0xd8] sm:$0xff]
    %v4281 = vld [vmem:[%s4252 + $0xe0] sm:$0xff]
    %v4282 = vld [vmem:[%s4252 + $0xe8] sm:$0xff]
    %v4283 = vld [vmem:[%s4252 + $0xf0] sm:$0xff]
    %v4284 = vld [vmem:[%s4252 + $0xf8] sm:$0xff]
    %v4317 = vunpack.c.l.b16 %v4253
    %v4318 = vunpack.c.h.b16 %v4253
    %v4319 = vunpack.c.l.b16 %v4254
    %v4320 = vunpack.c.h.b16 %v4254
    %v4321 = vunpack.c.l.b16 %v4255
    %v4322 = vunpack.c.h.b16 %v4255
    %v4323 = vunpack.c.l.b16 %v4256
    %v4324 = vunpack.c.h.b16 %v4256
    %v4325 = vunpack.c.l.b16 %v4257
    %v4326 = vunpack.c.h.b16 %v4257
    %v4327 = vunpack.c.l.b16 %v4258
    %v4328 = vunpack.c.h.b16 %v4258
    %v4329 = vunpack.c.l.b16 %v4259
    %v4330 = vunpack.c.h.b16 %v4259
    %v4331 = vunpack.c.l.b16 %v4260
    %v4332 = vunpack.c.h.b16 %v4260
    %v4333 = vunpack.c.l.b16 %v4261
    %v4334 = vunpack.c.h.b16 %v4261
    %v4335 = vunpack.c.l.b16 %v4262
    %v4336 = vunpack.c.h.b16 %v4262
    %v4337 = vunpack.c.l.b16 %v4263
    %v4338 = vunpack.c.h.b16 %v4263
    %v4339 = vunpack.c.l.b16 %v4264
    %v4340 = vunpack.c.h.b16 %v4264
    %v4341 = vunpack.c.l.b16 %v4265
    %v4342 = vunpack.c.h.b16 %v4265
    %v4343 = vunpack.c.l.b16 %v4266
    %v4344 = vunpack.c.h.b16 %v4266
    %v4345 = vunpack.c.l.b16 %v4267
    %v4346 = vunpack.c.h.b16 %v4267
    %v4347 = vunpack.c.l.b16 %v4268
    %v4348 = vunpack.c.h.b16 %v4268
    %v4349 = vunpack.c.l.b16 %v4269
    %v4350 = vunpack.c.h.b16 %v4269
    %v4351 = vunpack.c.l.b16 %v4270
    %v4352 = vunpack.c.h.b16 %v4270
    %v4353 = vunpack.c.l.b16 %v4271
    %v4354 = vunpack.c.h.b16 %v4271
    %v4355 = vunpack.c.l.b16 %v4272
    %v4356 = vunpack.c.h.b16 %v4272
    %v4357 = vunpack.c.l.b16 %v4273
    %v4358 = vunpack.c.h.b16 %v4273
    %v4359 = vunpack.c.l.b16 %v4274
    %v4360 = vunpack.c.h.b16 %v4274
    %v4361 = vunpack.c.l.b16 %v4275
    %v4362 = vunpack.c.h.b16 %v4275
    %v4363 = vunpack.c.l.b16 %v4276
    %v4364 = vunpack.c.h.b16 %v4276
    %v4365 = vunpack.c.l.b16 %v4277
    %v4366 = vunpack.c.h.b16 %v4277
    %v4367 = vunpack.c.l.b16 %v4278
    %v4368 = vunpack.c.h.b16 %v4278
    %v4369 = vunpack.c.l.b16 %v4279
    %v4370 = vunpack.c.h.b16 %v4279
    %v4371 = vunpack.c.l.b16 %v4280
    %v4372 = vunpack.c.h.b16 %v4280
    %v4373 = vunpack.c.l.b16 %v4281
    %v4374 = vunpack.c.h.b16 %v4281
    %v4375 = vunpack.c.l.b16 %v4282
    %v4376 = vunpack.c.h.b16 %v4282
    %v4377 = vunpack.c.l.b16 %v4283
    %v4378 = vunpack.c.h.b16 %v4283
    %v4379 = vunpack.c.l.b16 %v4284
    %v4380 = vunpack.c.h.b16 %v4284
    %v4381 = vpack.c.b16 %v4319, %v4317
    %v4382 = vpack.c.b16 %v4320, %v4318
    %v4383 = vpack.c.b16 %v4323, %v4321
    %v4384 = vpack.c.b16 %v4324, %v4322
    %v4385 = vpack.c.b16 %v4327, %v4325
    %v4386 = vpack.c.b16 %v4328, %v4326
    %v4387 = vpack.c.b16 %v4331, %v4329
    %v4388 = vpack.c.b16 %v4332, %v4330
    %v4389 = vpack.c.b16 %v4335, %v4333
    %v4390 = vpack.c.b16 %v4336, %v4334
    %v4391 = vpack.c.b16 %v4339, %v4337
    %v4392 = vpack.c.b16 %v4340, %v4338
    %v4393 = vpack.c.b16 %v4343, %v4341
    %v4394 = vpack.c.b16 %v4344, %v4342
    %v4395 = vpack.c.b16 %v4347, %v4345
    %v4396 = vpack.c.b16 %v4348, %v4346
    %v4397 = vpack.c.b16 %v4351, %v4349
    %v4398 = vpack.c.b16 %v4352, %v4350
    %v4399 = vpack.c.b16 %v4355, %v4353
    %v4400 = vpack.c.b16 %v4356, %v4354
    %v4401 = vpack.c.b16 %v4359, %v4357
    %v4402 = vpack.c.b16 %v4360, %v4358
    %v4403 = vpack.c.b16 %v4363, %v4361
    %v4404 = vpack.c.b16 %v4364, %v4362
    %v4405 = vpack.c.b16 %v4367, %v4365
    %v4406 = vpack.c.b16 %v4368, %v4366
    %v4407 = vpack.c.b16 %v4371, %v4369
    %v4408 = vpack.c.b16 %v4372, %v4370
    %v4409 = vpack.c.b16 %v4375, %v4373
    %v4410 = vpack.c.b16 %v4376, %v4374
    %v4411 = vpack.c.b16 %v4379, %v4377
    %v4412 = vpack.c.b16 %v4380, %v4378
    %4445 = vmatprep.subr.bf16.mxu0 %v4396
    %4446 = vmatpush1.bf16.msra.mxu0 %v4395
    %4447 = vmatprep.subr.bf16.mxu0 %v4394
    %4448 = vmatpush1.bf16.msra.mxu0 %v4393
    %4449 = vmatprep.subr.bf16.mxu0 %v4392
    %4450 = vmatpush1.bf16.msra.mxu0 %v4391
    %4451 = vmatprep.subr.bf16.mxu0 %v4390
    %4452 = vmatpush1.bf16.msra.mxu0 %v4389
    %4453 = vmatprep.subr.bf16.mxu0 %v4388
    %4454 = vmatpush1.bf16.msra.mxu0 %v4387
    %4455 = vmatprep.subr.bf16.mxu0 %v4386
    %4456 = vmatpush1.bf16.msra.mxu0 %v4385
    %4457 = vmatprep.subr.bf16.mxu0 %v4384
    %4458 = vmatpush1.bf16.msra.mxu0 %v4383
    %4459 = vmatprep.subr.bf16.mxu0 %v4382
    %4460 = vmatpush1.bf16.msra.mxu0 %v4381
    %4461 = vmatprep.subr.bf16.mxu0 %v4412
    %4462 = vmatpush2.bf16.msra.mxu0 %v4411
    %4463 = vmatprep.subr.bf16.mxu0 %v4410
    %4464 = vmatpush2.bf16.msra.mxu0 %v4409
    %4465 = vmatprep.subr.bf16.mxu0 %v4408
    %4466 = vmatpush2.bf16.msra.mxu0 %v4407
    %4467 = vmatprep.subr.bf16.mxu0 %v4406
    %4468 = vmatpush2.bf16.msra.mxu0 %v4405
    %4469 = vmatprep.subr.bf16.mxu0 %v4404
    %4470 = vmatpush2.bf16.msra.mxu0 %v4403
    %4471 = vmatprep.subr.bf16.mxu0 %v4402
    %4472 = vmatpush2.bf16.msra.mxu0 %v4401
    %4473 = vmatprep.subr.bf16.mxu0 %v4400
    %4474 = vmatpush2.bf16.msra.mxu0 %v4399
    %4475 = vmatprep.subr.bf16.mxu0 %v4398
    %4476 = vmatpush2.bf16.msra.mxu0 %v4397
    %4477 = vmatprep.mubr.bf16.mxu0 %v3992
    %4478 = vmatmul.mubr.bf16.gmra.mxu0 %v3991
    %v4479 = vpop.f32.mrf.mxu0
    %v4480 = vadd.f32 0.0, %v4479
    %v4481 = vpop.f32.mrf.mxu0
    %v4482 = vadd.f32 0.0, %v4481
    %v4483 = vpop.f32.mrf.mxu0
    %v4484 = vadd.f32 0.0, %v4483
    %v4485 = vpop.f32.mrf.mxu0
    %v4486 = vadd.f32 0.0, %v4485
    %4487 = vmatprep.mubr.bf16.mxu0 %v3994
    %4488 = vmatmul.mubr.bf16.gmra.mxu0 %v3993
    %v4489 = vpop.f32.mrf.mxu0
    %v4490 = vadd.f32 0.0, %v4489
    %v4491 = vpop.f32.mrf.mxu0
    %v4492 = vadd.f32 0.0, %v4491
    %v4493 = vpop.f32.mrf.mxu0
    %v4494 = vadd.f32 0.0, %v4493
    %v4495 = vpop.f32.mrf.mxu0
    %v4496 = vadd.f32 0.0, %v4495
    %4497 = vdwg.mxu0
    %s4498 = scalar_lea.vmem %s16, 32
    %v4499 = vld [vmem:[%s4498] sm:$0xf]
    %v4500 = vld [vmem:[%s4498 + $0x4] sm:$0xf]
    %v4501 = vld [vmem:[%s4498 + $0x8] sm:$0xf]
    %v4502 = vld [vmem:[%s4498 + $0xc] sm:$0xf]
    %v4503 = vld [vmem:[%s4498 + $0x10] sm:$0xf]
    %v4504 = vld [vmem:[%s4498 + $0x14] sm:$0xf]
    %v4505 = vld [vmem:[%s4498 + $0x18] sm:$0xf]
    %v4506 = vld [vmem:[%s4498 + $0x1c] sm:$0xf]
    %v4507 = vpack.c.bf16 %v4484, %v4480
    %v4508 = vpack.c.bf16 %v4486, %v4482
    %v4509 = vpack.c.bf16 %v4494, %v4490
    %v4510 = vpack.c.bf16 %v4496, %v4492
    %v4519 = vunpack.c.l.b16 %v4499
    %v4520 = vunpack.c.l.b16 %v4500
    %v4521 = vunpack.c.l.b16 %v4501
    %v4522 = vunpack.c.l.b16 %v4502
    %v4523 = vunpack.c.l.b16 %v4503
    %v4524 = vunpack.c.l.b16 %v4504
    %v4525 = vunpack.c.l.b16 %v4505
    %v4526 = vunpack.c.l.b16 %v4506
    %v4527 = vpack.c.b16 %v4520, %v4519
    %v4528 = vpack.c.b16 %v4522, %v4521
    %v4529 = vpack.c.b16 %v4524, %v4523
    %v4530 = vpack.c.b16 %v4526, %v4525
    %vm4531 = vcmask 261120
    %v4533 = vsel %vm4531, %v4527, 0
    %v4536 = vsel %vm4531, %v4528, 0
    %v4539 = vsel %vm4531, %v4529, 0
    %v4542 = vsel %vm4531, %v4530, 0
    %4544 = vmatprep.subr.bf16.mxu0 0
    %4545 = vmatpush1.bf16.msra.mxu0 0
    %4546 = vmatprep.subr.bf16.mxu0 0
    %4547 = vmatpush1.bf16.msra.mxu0 0
    %4548 = vmatprep.subr.bf16.mxu0 0
    %4549 = vmatpush1.bf16.msra.mxu0 0
    %4550 = vmatprep.subr.bf16.mxu0 0
    %4551 = vmatpush1.bf16.msra.mxu0 0
    %4552 = vmatprep.subr.bf16.mxu0 0
    %4553 = vmatpush1.bf16.msra.mxu0 0
    %4554 = vmatprep.subr.bf16.mxu0 0
    %4555 = vmatpush1.bf16.msra.mxu0 0
    %4556 = vmatprep.subr.bf16.mxu0 %v4510
    %4557 = vmatpush1.bf16.msra.mxu0 %v4509
    %4558 = vmatprep.subr.bf16.mxu0 %v4508
    %4559 = vmatpush1.bf16.msra.mxu0 %v4507
    %4560 = vmatprep.subr.bf16.mxu0 0
    %4561 = vmatpush2.bf16.msra.mxu0 0
    %4562 = vmatprep.subr.bf16.mxu0 0
    %4563 = vmatpush2.bf16.msra.mxu0 0
    %4564 = vmatprep.subr.bf16.mxu0 0
    %4565 = vmatpush2.bf16.msra.mxu0 0
    %4566 = vmatprep.subr.bf16.mxu0 0
    %4567 = vmatpush2.bf16.msra.mxu0 0
    %4568 = vmatprep.subr.bf16.mxu0 0
    %4569 = vmatpush2.bf16.msra.mxu0 0
    %4570 = vmatprep.subr.bf16.mxu0 0
    %4571 = vmatpush2.bf16.msra.mxu0 0
    %4572 = vmatprep.subr.bf16.mxu0 0
    %4573 = vmatpush2.bf16.msra.mxu0 0
    %4574 = vmatprep.subr.bf16.mxu0 0
    %4575 = vmatpush2.bf16.msra.mxu0 0
    %4576 = vmatprep.mubr.bf16.mxu0 0
    %4577 = vmatmul.mubr.bf16.gmra.mxu0 %v4533
    %v4578 = vpop.f32.mrf.mxu0
    %v4579 = vadd.f32 0.0, %v4578
    %v4580 = vpop.f32.mrf.mxu0
    %v4581 = vadd.f32 0.0, %v4580
    %v4582 = vpop.f32.mrf.mxu0
    %v4583 = vadd.f32 0.0, %v4582
    %v4584 = vpop.f32.mrf.mxu0
    %v4585 = vadd.f32 0.0, %v4584
    %4586 = vmatprep.mubr.bf16.mxu0 0
    %4587 = vmatmul.mubr.bf16.gmra.mxu0 %v4536
    %v4588 = vpop.f32.mrf.mxu0
    %v4589 = vadd.f32 0.0, %v4588
    %v4590 = vpop.f32.mrf.mxu0
    %v4591 = vadd.f32 0.0, %v4590
    %v4592 = vpop.f32.mrf.mxu0
    %v4593 = vadd.f32 0.0, %v4592
    %v4594 = vpop.f32.mrf.mxu0
    %v4595 = vadd.f32 0.0, %v4594
    %4596 = vmatprep.mubr.bf16.mxu0 0
    %4597 = vmatmul.mubr.bf16.gmra.mxu0 %v4539
    %v4598 = vpop.f32.mrf.mxu0
    %v4599 = vadd.f32 0.0, %v4598
    %v4600 = vpop.f32.mrf.mxu0
    %v4601 = vadd.f32 0.0, %v4600
    %v4602 = vpop.f32.mrf.mxu0
    %v4603 = vadd.f32 0.0, %v4602
    %v4604 = vpop.f32.mrf.mxu0
    %v4605 = vadd.f32 0.0, %v4604
    %4606 = vmatprep.mubr.bf16.mxu0 0
    %4607 = vmatmul.mubr.bf16.gmra.mxu0 %v4542
    %v4608 = vpop.f32.mrf.mxu0
    %v4609 = vadd.f32 0.0, %v4608
    %v4610 = vpop.f32.mrf.mxu0
    %v4611 = vadd.f32 0.0, %v4610
    %v4612 = vpop.f32.mrf.mxu0
    %v4613 = vadd.f32 0.0, %v4612
    %v4614 = vpop.f32.mrf.mxu0
    %v4615 = vadd.f32 0.0, %v4614
    %4616 = vdwg.mxu0
    %v4625 = vunpack.c.l.b16 %v4240
    %v4626 = vunpack.c.l.b16 %v4241
    %v4627 = vunpack.c.l.b16 %v4242
    %v4628 = vunpack.c.l.b16 %v4243
    %v4629 = vunpack.c.l.b16 %v4244
    %v4630 = vunpack.c.l.b16 %v4245
    %v4631 = vunpack.c.l.b16 %v4246
    %v4632 = vunpack.c.l.b16 %v4247
    %v4633 = vpack.c.b16 %v4626, %v4625
    %v4634 = vpack.c.b16 %v4628, %v4627
    %v4635 = vpack.c.b16 %v4630, %v4629
    %v4636 = vpack.c.b16 %v4632, %v4631
    %v4638 = vsel %vm4531, %v4633, 0
    %v4641 = vsel %vm4531, %v4634, 0
    %v4644 = vsel %vm4531, %v4635, 0
    %v4647 = vsel %vm4531, %v4636, 0
    %4649 = vmatprep.subr.bf16.mxu0 0
    %4650 = vmatpush1.bf16.msra.mxu0 0
    %4651 = vmatprep.subr.bf16.mxu0 0
    %4652 = vmatpush1.bf16.msra.mxu0 0
    %4653 = vmatprep.subr.bf16.mxu0 0
    %4654 = vmatpush1.bf16.msra.mxu0 0
    %4655 = vmatprep.subr.bf16.mxu0 0
    %4656 = vmatpush1.bf16.msra.mxu0 0
    %4657 = vmatprep.subr.bf16.mxu0 0
    %4658 = vmatpush1.bf16.msra.mxu0 0
    %4659 = vmatprep.subr.bf16.mxu0 0
    %4660 = vmatpush1.bf16.msra.mxu0 0
    %4661 = vmatprep.subr.bf16.mxu0 %v4251
    %4662 = vmatpush1.bf16.msra.mxu0 %v4250
    %4663 = vmatprep.subr.bf16.mxu0 %v4249
    %4664 = vmatpush1.bf16.msra.mxu0 %v4248
    %4665 = vmatprep.subr.bf16.mxu0 0
    %4666 = vmatpush2.bf16.msra.mxu0 0
    %4667 = vmatprep.subr.bf16.mxu0 0
    %4668 = vmatpush2.bf16.msra.mxu0 0
    %4669 = vmatprep.subr.bf16.mxu0 0
    %4670 = vmatpush2.bf16.msra.mxu0 0
    %4671 = vmatprep.subr.bf16.mxu0 0
    %4672 = vmatpush2.bf16.msra.mxu0 0
    %4673 = vmatprep.subr.bf16.mxu0 0
    %4674 = vmatpush2.bf16.msra.mxu0 0
    %4675 = vmatprep.subr.bf16.mxu0 0
    %4676 = vmatpush2.bf16.msra.mxu0 0
    %4677 = vmatprep.subr.bf16.mxu0 0
    %4678 = vmatpush2.bf16.msra.mxu0 0
    %4679 = vmatprep.subr.bf16.mxu0 0
    %4680 = vmatpush2.bf16.msra.mxu0 0
    %4681 = vmatprep.mubr.bf16.mxu0 0
    %4682 = vmatmul.mubr.bf16.gmra.mxu0 %v4638
    %v4683 = vpop.f32.mrf.mxu0
    %v4684 = vadd.f32 %v4579, %v4683
    %v4685 = vpop.f32.mrf.mxu0
    %v4686 = vadd.f32 %v4581, %v4685
    %v4687 = vpop.f32.mrf.mxu0
    %v4688 = vadd.f32 %v4583, %v4687
    %v4689 = vpop.f32.mrf.mxu0
    %v4690 = vadd.f32 %v4585, %v4689
    %4691 = vmatprep.mubr.bf16.mxu0 0
    %4692 = vmatmul.mubr.bf16.gmra.mxu0 %v4641
    %v4693 = vpop.f32.mrf.mxu0
    %v4694 = vadd.f32 %v4589, %v4693
    %v4695 = vpop.f32.mrf.mxu0
    %v4696 = vadd.f32 %v4591, %v4695
    %v4697 = vpop.f32.mrf.mxu0
    %v4698 = vadd.f32 %v4593, %v4697
    %v4699 = vpop.f32.mrf.mxu0
    %v4700 = vadd.f32 %v4595, %v4699
    %4701 = vmatprep.mubr.bf16.mxu0 0
    %4702 = vmatmul.mubr.bf16.gmra.mxu0 %v4644
    %v4703 = vpop.f32.mrf.mxu0
    %v4704 = vadd.f32 %v4599, %v4703
    %v4705 = vpop.f32.mrf.mxu0
    %v4706 = vadd.f32 %v4601, %v4705
    %v4707 = vpop.f32.mrf.mxu0
    %v4708 = vadd.f32 %v4603, %v4707
    %v4709 = vpop.f32.mrf.mxu0
    %v4710 = vadd.f32 %v4605, %v4709
    %4711 = vmatprep.mubr.bf16.mxu0 0
    %4712 = vmatmul.mubr.bf16.gmra.mxu0 %v4647
    %v4713 = vpop.f32.mrf.mxu0
    %v4714 = vadd.f32 %v4609, %v4713
    %v4715 = vpop.f32.mrf.mxu0
    %v4716 = vadd.f32 %v4611, %v4715
    %v4717 = vpop.f32.mrf.mxu0
    %v4718 = vadd.f32 %v4613, %v4717
    %v4719 = vpop.f32.mrf.mxu0
    %v4720 = vadd.f32 %v4615, %v4719
    %4721 = vdwg.mxu0
    %s4722 = scalar_lea.vmem [#allocation7], 512
    %v4723 = vld [vmem:[%s4722] sm:$0xff]
    %v4724 = vld [vmem:[%s4722 + $0x8] sm:$0xff]
    %v4725 = vld [vmem:[%s4722 + $0x10] sm:$0xff]
    %v4726 = vld [vmem:[%s4722 + $0x18] sm:$0xff]
    %v4727 = vld [vmem:[%s4722 + $0x20] sm:$0xff]
    %v4728 = vld [vmem:[%s4722 + $0x28] sm:$0xff]
    %v4729 = vld [vmem:[%s4722 + $0x30] sm:$0xff]
    %v4730 = vld [vmem:[%s4722 + $0x38] sm:$0xff]
    %v4731 = vld [vmem:[%s4722 + $0x40] sm:$0xff]
    %v4732 = vld [vmem:[%s4722 + $0x48] sm:$0xff]
    %v4733 = vld [vmem:[%s4722 + $0x50] sm:$0xff]
    %v4734 = vld [vmem:[%s4722 + $0x58] sm:$0xff]
    %v4735 = vld [vmem:[%s4722 + $0x60] sm:$0xff]
    %v4736 = vld [vmem:[%s4722 + $0x68] sm:$0xff]
    %v4737 = vld [vmem:[%s4722 + $0x70] sm:$0xff]
    %v4738 = vld [vmem:[%s4722 + $0x78] sm:$0xff]
    %v4739 = vld [vmem:[%s4722 + $0x80] sm:$0xff]
    %v4740 = vld [vmem:[%s4722 + $0x88] sm:$0xff]
    %v4741 = vld [vmem:[%s4722 + $0x90] sm:$0xff]
    %v4742 = vld [vmem:[%s4722 + $0x98] sm:$0xff]
    %v4743 = vld [vmem:[%s4722 + $0xa0] sm:$0xff]
    %v4744 = vld [vmem:[%s4722 + $0xa8] sm:$0xff]
    %v4745 = vld [vmem:[%s4722 + $0xb0] sm:$0xff]
    %v4746 = vld [vmem:[%s4722 + $0xb8] sm:$0xff]
    %v4747 = vld [vmem:[%s4722 + $0xc0] sm:$0xff]
    %v4748 = vld [vmem:[%s4722 + $0xc8] sm:$0xff]
    %v4749 = vld [vmem:[%s4722 + $0xd0] sm:$0xff]
    %v4750 = vld [vmem:[%s4722 + $0xd8] sm:$0xff]
    %v4751 = vld [vmem:[%s4722 + $0xe0] sm:$0xff]
    %v4752 = vld [vmem:[%s4722 + $0xe8] sm:$0xff]
    %v4753 = vld [vmem:[%s4722 + $0xf0] sm:$0xff]
    %v4754 = vld [vmem:[%s4722 + $0xf8] sm:$0xff]
    %v4787 = vunpack.c.l.b16 %v4723
    %v4788 = vunpack.c.h.b16 %v4723
    %v4789 = vunpack.c.l.b16 %v4724
    %v4790 = vunpack.c.h.b16 %v4724
    %v4791 = vunpack.c.l.b16 %v4725
    %v4792 = vunpack.c.h.b16 %v4725
    %v4793 = vunpack.c.l.b16 %v4726
    %v4794 = vunpack.c.h.b16 %v4726
    %v4795 = vunpack.c.l.b16 %v4727
    %v4796 = vunpack.c.h.b16 %v4727
    %v4797 = vunpack.c.l.b16 %v4728
    %v4798 = vunpack.c.h.b16 %v4728
    %v4799 = vunpack.c.l.b16 %v4729
    %v4800 = vunpack.c.h.b16 %v4729
    %v4801 = vunpack.c.l.b16 %v4730
    %v4802 = vunpack.c.h.b16 %v4730
    %v4803 = vunpack.c.l.b16 %v4731
    %v4804 = vunpack.c.h.b16 %v4731
    %v4805 = vunpack.c.l.b16 %v4732
    %v4806 = vunpack.c.h.b16 %v4732
    %v4807 = vunpack.c.l.b16 %v4733
    %v4808 = vunpack.c.h.b16 %v4733
    %v4809 = vunpack.c.l.b16 %v4734
    %v4810 = vunpack.c.h.b16 %v4734
    %v4811 = vunpack.c.l.b16 %v4735
    %v4812 = vunpack.c.h.b16 %v4735
    %v4813 = vunpack.c.l.b16 %v4736
    %v4814 = vunpack.c.h.b16 %v4736
    %v4815 = vunpack.c.l.b16 %v4737
    %v4816 = vunpack.c.h.b16 %v4737
    %v4817 = vunpack.c.l.b16 %v4738
    %v4818 = vunpack.c.h.b16 %v4738
    %v4819 = vunpack.c.l.b16 %v4739
    %v4820 = vunpack.c.h.b16 %v4739
    %v4821 = vunpack.c.l.b16 %v4740
    %v4822 = vunpack.c.h.b16 %v4740
    %v4823 = vunpack.c.l.b16 %v4741
    %v4824 = vunpack.c.h.b16 %v4741
    %v4825 = vunpack.c.l.b16 %v4742
    %v4826 = vunpack.c.h.b16 %v4742
    %v4827 = vunpack.c.l.b16 %v4743
    %v4828 = vunpack.c.h.b16 %v4743
    %v4829 = vunpack.c.l.b16 %v4744
    %v4830 = vunpack.c.h.b16 %v4744
    %v4831 = vunpack.c.l.b16 %v4745
    %v4832 = vunpack.c.h.b16 %v4745
    %v4833 = vunpack.c.l.b16 %v4746
    %v4834 = vunpack.c.h.b16 %v4746
    %v4835 = vunpack.c.l.b16 %v4747
    %v4836 = vunpack.c.h.b16 %v4747
    %v4837 = vunpack.c.l.b16 %v4748
    %v4838 = vunpack.c.h.b16 %v4748
    %v4839 = vunpack.c.l.b16 %v4749
    %v4840 = vunpack.c.h.b16 %v4749
    %v4841 = vunpack.c.l.b16 %v4750
    %v4842 = vunpack.c.h.b16 %v4750
    %v4843 = vunpack.c.l.b16 %v4751
    %v4844 = vunpack.c.h.b16 %v4751
    %v4845 = vunpack.c.l.b16 %v4752
    %v4846 = vunpack.c.h.b16 %v4752
    %v4847 = vunpack.c.l.b16 %v4753
    %v4848 = vunpack.c.h.b16 %v4753
    %v4849 = vunpack.c.l.b16 %v4754
    %v4850 = vunpack.c.h.b16 %v4754
    %v4851 = vpack.c.b16 %v4789, %v4787
    %v4852 = vpack.c.b16 %v4790, %v4788
    %v4853 = vpack.c.b16 %v4793, %v4791
    %v4854 = vpack.c.b16 %v4794, %v4792
    %v4855 = vpack.c.b16 %v4797, %v4795
    %v4856 = vpack.c.b16 %v4798, %v4796
    %v4857 = vpack.c.b16 %v4801, %v4799
    %v4858 = vpack.c.b16 %v4802, %v4800
    %v4859 = vpack.c.b16 %v4805, %v4803
    %v4860 = vpack.c.b16 %v4806, %v4804
    %v4861 = vpack.c.b16 %v4809, %v4807
    %v4862 = vpack.c.b16 %v4810, %v4808
    %v4863 = vpack.c.b16 %v4813, %v4811
    %v4864 = vpack.c.b16 %v4814, %v4812
    %v4865 = vpack.c.b16 %v4817, %v4815
    %v4866 = vpack.c.b16 %v4818, %v4816
    %v4867 = vpack.c.b16 %v4821, %v4819
    %v4868 = vpack.c.b16 %v4822, %v4820
    %v4869 = vpack.c.b16 %v4825, %v4823
    %v4870 = vpack.c.b16 %v4826, %v4824
    %v4871 = vpack.c.b16 %v4829, %v4827
    %v4872 = vpack.c.b16 %v4830, %v4828
    %v4873 = vpack.c.b16 %v4833, %v4831
    %v4874 = vpack.c.b16 %v4834, %v4832
    %v4875 = vpack.c.b16 %v4837, %v4835
    %v4876 = vpack.c.b16 %v4838, %v4836
    %v4877 = vpack.c.b16 %v4841, %v4839
    %v4878 = vpack.c.b16 %v4842, %v4840
    %v4879 = vpack.c.b16 %v4845, %v4843
    %v4880 = vpack.c.b16 %v4846, %v4844
    %v4881 = vpack.c.b16 %v4849, %v4847
    %v4882 = vpack.c.b16 %v4850, %v4848
    %4915 = vmatprep.subr.bf16.mxu0 %v4866
    %4916 = vmatpush1.bf16.msra.mxu0 %v4865
    %4917 = vmatprep.subr.bf16.mxu0 %v4864
    %4918 = vmatpush1.bf16.msra.mxu0 %v4863
    %4919 = vmatprep.subr.bf16.mxu0 %v4862
    %4920 = vmatpush1.bf16.msra.mxu0 %v4861
    %4921 = vmatprep.subr.bf16.mxu0 %v4860
    %4922 = vmatpush1.bf16.msra.mxu0 %v4859
    %4923 = vmatprep.subr.bf16.mxu0 %v4858
    %4924 = vmatpush1.bf16.msra.mxu0 %v4857
    %4925 = vmatprep.subr.bf16.mxu0 %v4856
    %4926 = vmatpush1.bf16.msra.mxu0 %v4855
    %4927 = vmatprep.subr.bf16.mxu0 %v4854
    %4928 = vmatpush1.bf16.msra.mxu0 %v4853
    %4929 = vmatprep.subr.bf16.mxu0 %v4852
    %4930 = vmatpush1.bf16.msra.mxu0 %v4851
    %4931 = vmatprep.subr.bf16.mxu0 %v4882
    %4932 = vmatpush2.bf16.msra.mxu0 %v4881
    %4933 = vmatprep.subr.bf16.mxu0 %v4880
    %4934 = vmatpush2.bf16.msra.mxu0 %v4879
    %4935 = vmatprep.subr.bf16.mxu0 %v4878
    %4936 = vmatpush2.bf16.msra.mxu0 %v4877
    %4937 = vmatprep.subr.bf16.mxu0 %v4876
    %4938 = vmatpush2.bf16.msra.mxu0 %v4875
    %4939 = vmatprep.subr.bf16.mxu0 %v4874
    %4940 = vmatpush2.bf16.msra.mxu0 %v4873
    %4941 = vmatprep.subr.bf16.mxu0 %v4872
    %4942 = vmatpush2.bf16.msra.mxu0 %v4871
    %4943 = vmatprep.subr.bf16.mxu0 %v4870
    %4944 = vmatpush2.bf16.msra.mxu0 %v4869
    %4945 = vmatprep.subr.bf16.mxu0 %v4868
    %4946 = vmatpush2.bf16.msra.mxu0 %v4867
    %4947 = vmatprep.mubr.bf16.mxu0 %v3992
    %4948 = vmatmul.mubr.bf16.gmra.mxu0 %v3991
    %v4949 = vpop.f32.mrf.mxu0
    %v4950 = vadd.f32 0.0, %v4949
    %v4951 = vpop.f32.mrf.mxu0
    %v4952 = vadd.f32 0.0, %v4951
    %v4953 = vpop.f32.mrf.mxu0
    %v4954 = vadd.f32 0.0, %v4953
    %v4955 = vpop.f32.mrf.mxu0
    %v4956 = vadd.f32 0.0, %v4955
    %4957 = vmatprep.mubr.bf16.mxu0 %v3994
    %4958 = vmatmul.mubr.bf16.gmra.mxu0 %v3993
    %v4959 = vpop.f32.mrf.mxu0
    %v4960 = vadd.f32 0.0, %v4959
    %v4961 = vpop.f32.mrf.mxu0
    %v4962 = vadd.f32 0.0, %v4961
    %v4963 = vpop.f32.mrf.mxu0
    %v4964 = vadd.f32 0.0, %v4963
    %v4965 = vpop.f32.mrf.mxu0
    %v4966 = vadd.f32 0.0, %v4965
    %4967 = vdwg.mxu0
    %s4968 = scalar_lea.vmem %s16, 64
    %v4969 = vld [vmem:[%s4968] sm:$0xf]
    %v4970 = vld [vmem:[%s4968 + $0x4] sm:$0xf]
    %v4971 = vld [vmem:[%s4968 + $0x8] sm:$0xf]
    %v4972 = vld [vmem:[%s4968 + $0xc] sm:$0xf]
    %v4973 = vld [vmem:[%s4968 + $0x10] sm:$0xf]
    %v4974 = vld [vmem:[%s4968 + $0x14] sm:$0xf]
    %v4975 = vld [vmem:[%s4968 + $0x18] sm:$0xf]
    %v4976 = vld [vmem:[%s4968 + $0x1c] sm:$0xf]
    %v4977 = vpack.c.bf16 %v4954, %v4950
    %v4978 = vpack.c.bf16 %v4956, %v4952
    %v4979 = vpack.c.bf16 %v4964, %v4960
    %v4980 = vpack.c.bf16 %v4966, %v4962
    %v4989 = vunpack.c.l.b16 %v4969
    %v4990 = vunpack.c.l.b16 %v4970
    %v4991 = vunpack.c.l.b16 %v4971
    %v4992 = vunpack.c.l.b16 %v4972
    %v4993 = vunpack.c.l.b16 %v4973
    %v4994 = vunpack.c.l.b16 %v4974
    %v4995 = vunpack.c.l.b16 %v4975
    %v4996 = vunpack.c.l.b16 %v4976
    %v4997 = vpack.c.b16 %v4990, %v4989
    %v4998 = vpack.c.b16 %v4992, %v4991
    %v4999 = vpack.c.b16 %v4994, %v4993
    %v5000 = vpack.c.b16 %v4996, %v4995
    %v5002 = vsel %vm4531, %v4997, 0
    %v5005 = vsel %vm4531, %v4998, 0
    %v5008 = vsel %vm4531, %v4999, 0
    %v5011 = vsel %vm4531, %v5000, 0
    %5013 = vmatprep.subr.bf16.mxu0 0
    %5014 = vmatpush1.bf16.msra.mxu0 0
    %5015 = vmatprep.subr.bf16.mxu0 0
    %5016 = vmatpush1.bf16.msra.mxu0 0
    %5017 = vmatprep.subr.bf16.mxu0 0
    %5018 = vmatpush1.bf16.msra.mxu0 0
    %5019 = vmatprep.subr.bf16.mxu0 0
    %5020 = vmatpush1.bf16.msra.mxu0 0
    %5021 = vmatprep.subr.bf16.mxu0 0
    %5022 = vmatpush1.bf16.msra.mxu0 0
    %5023 = vmatprep.subr.bf16.mxu0 0
    %5024 = vmatpush1.bf16.msra.mxu0 0
    %5025 = vmatprep.subr.bf16.mxu0 %v4980
    %5026 = vmatpush1.bf16.msra.mxu0 %v4979
    %5027 = vmatprep.subr.bf16.mxu0 %v4978
    %5028 = vmatpush1.bf16.msra.mxu0 %v4977
    %5029 = vmatprep.subr.bf16.mxu0 0
    %5030 = vmatpush2.bf16.msra.mxu0 0
    %5031 = vmatprep.subr.bf16.mxu0 0
    %5032 = vmatpush2.bf16.msra.mxu0 0
    %5033 = vmatprep.subr.bf16.mxu0 0
    %5034 = vmatpush2.bf16.msra.mxu0 0
    %5035 = vmatprep.subr.bf16.mxu0 0
    %5036 = vmatpush2.bf16.msra.mxu0 0
    %5037 = vmatprep.subr.bf16.mxu0 0
    %5038 = vmatpush2.bf16.msra.mxu0 0
    %5039 = vmatprep.subr.bf16.mxu0 0
    %5040 = vmatpush2.bf16.msra.mxu0 0
    %5041 = vmatprep.subr.bf16.mxu0 0
    %5042 = vmatpush2.bf16.msra.mxu0 0
    %5043 = vmatprep.subr.bf16.mxu0 0
    %5044 = vmatpush2.bf16.msra.mxu0 0
    %5045 = vmatprep.mubr.bf16.mxu0 0
    %5046 = vmatmul.mubr.bf16.gmra.mxu0 %v5002
    %v5047 = vpop.f32.mrf.mxu0
    %v5048 = vadd.f32 0.0, %v5047
    %v5049 = vpop.f32.mrf.mxu0
    %v5050 = vadd.f32 0.0, %v5049
    %v5051 = vpop.f32.mrf.mxu0
    %v5052 = vadd.f32 0.0, %v5051
    %v5053 = vpop.f32.mrf.mxu0
    %v5054 = vadd.f32 0.0, %v5053
    %5055 = vmatprep.mubr.bf16.mxu0 0
    %5056 = vmatmul.mubr.bf16.gmra.mxu0 %v5005
    %v5057 = vpop.f32.mrf.mxu0
    %v5058 = vadd.f32 0.0, %v5057
    %v5059 = vpop.f32.mrf.mxu0
    %v5060 = vadd.f32 0.0, %v5059
    %v5061 = vpop.f32.mrf.mxu0
    %v5062 = vadd.f32 0.0, %v5061
    %v5063 = vpop.f32.mrf.mxu0
    %v5064 = vadd.f32 0.0, %v5063
    %5065 = vmatprep.mubr.bf16.mxu0 0
    %5066 = vmatmul.mubr.bf16.gmra.mxu0 %v5008
    %v5067 = vpop.f32.mrf.mxu0
    %v5068 = vadd.f32 0.0, %v5067
    %v5069 = vpop.f32.mrf.mxu0
    %v5070 = vadd.f32 0.0, %v5069
    %v5071 = vpop.f32.mrf.mxu0
    %v5072 = vadd.f32 0.0, %v5071
    %v5073 = vpop.f32.mrf.mxu0
    %v5074 = vadd.f32 0.0, %v5073
    %5075 = vmatprep.mubr.bf16.mxu0 0
    %5076 = vmatmul.mubr.bf16.gmra.mxu0 %v5011
    %v5077 = vpop.f32.mrf.mxu0
    %v5078 = vadd.f32 0.0, %v5077
    %v5079 = vpop.f32.mrf.mxu0
    %v5080 = vadd.f32 0.0, %v5079
    %v5081 = vpop.f32.mrf.mxu0
    %v5082 = vadd.f32 0.0, %v5081
    %v5083 = vpop.f32.mrf.mxu0
    %v5084 = vadd.f32 0.0, %v5083
    %5085 = vdwg.mxu0
    %v5086 = vadd.f32 %v4684, %v5048
    %v5087 = vadd.f32 %v4686, %v5050
    %v5088 = vadd.f32 %v4688, %v5052
    %v5089 = vadd.f32 %v4690, %v5054
    %v5090 = vadd.f32 %v4694, %v5058
    %v5091 = vadd.f32 %v4696, %v5060
    %v5092 = vadd.f32 %v4698, %v5062
    %v5093 = vadd.f32 %v4700, %v5064
    %v5094 = vadd.f32 %v4704, %v5068
    %v5095 = vadd.f32 %v4706, %v5070
    %v5096 = vadd.f32 %v4708, %v5072
    %v5097 = vadd.f32 %v4710, %v5074
    %v5098 = vadd.f32 %v4714, %v5078
    %v5099 = vadd.f32 %v4716, %v5080
    %v5100 = vadd.f32 %v4718, %v5082
    %v5101 = vadd.f32 %v4720, %v5084
    %s5102 = scalar_lea.vmem [#allocation7], 768
    %v5103 = vld [vmem:[%s5102] sm:$0xff]
    %v5104 = vld [vmem:[%s5102 + $0x8] sm:$0xff]
    %v5105 = vld [vmem:[%s5102 + $0x10] sm:$0xff]
    %v5106 = vld [vmem:[%s5102 + $0x18] sm:$0xff]
    %v5107 = vld [vmem:[%s5102 + $0x20] sm:$0xff]
    %v5108 = vld [vmem:[%s5102 + $0x28] sm:$0xff]
    %v5109 = vld [vmem:[%s5102 + $0x30] sm:$0xff]
    %v5110 = vld [vmem:[%s5102 + $0x38] sm:$0xff]
    %v5111 = vld [vmem:[%s5102 + $0x40] sm:$0xff]
    %v5112 = vld [vmem:[%s5102 + $0x48] sm:$0xff]
    %v5113 = vld [vmem:[%s5102 + $0x50] sm:$0xff]
    %v5114 = vld [vmem:[%s5102 + $0x58] sm:$0xff]
    %v5115 = vld [vmem:[%s5102 + $0x60] sm:$0xff]
    %v5116 = vld [vmem:[%s5102 + $0x68] sm:$0xff]
    %v5117 = vld [vmem:[%s5102 + $0x70] sm:$0xff]
    %v5118 = vld [vmem:[%s5102 + $0x78] sm:$0xff]
    %v5119 = vld [vmem:[%s5102 + $0x80] sm:$0xff]
    %v5120 = vld [vmem:[%s5102 + $0x88] sm:$0xff]
    %v5121 = vld [vmem:[%s5102 + $0x90] sm:$0xff]
    %v5122 = vld [vmem:[%s5102 + $0x98] sm:$0xff]
    %v5123 = vld [vmem:[%s5102 + $0xa0] sm:$0xff]
    %v5124 = vld [vmem:[%s5102 + $0xa8] sm:$0xff]
    %v5125 = vld [vmem:[%s5102 + $0xb0] sm:$0xff]
    %v5126 = vld [vmem:[%s5102 + $0xb8] sm:$0xff]
    %v5127 = vld [vmem:[%s5102 + $0xc0] sm:$0xff]
    %v5128 = vld [vmem:[%s5102 + $0xc8] sm:$0xff]
    %v5129 = vld [vmem:[%s5102 + $0xd0] sm:$0xff]
    %v5130 = vld [vmem:[%s5102 + $0xd8] sm:$0xff]
    %v5131 = vld [vmem:[%s5102 + $0xe0] sm:$0xff]
    %v5132 = vld [vmem:[%s5102 + $0xe8] sm:$0xff]
    %v5133 = vld [vmem:[%s5102 + $0xf0] sm:$0xff]
    %v5134 = vld [vmem:[%s5102 + $0xf8] sm:$0xff]
    %v5167 = vunpack.c.l.b16 %v5103
    %v5168 = vunpack.c.h.b16 %v5103
    %v5169 = vunpack.c.l.b16 %v5104
    %v5170 = vunpack.c.h.b16 %v5104
    %v5171 = vunpack.c.l.b16 %v5105
    %v5172 = vunpack.c.h.b16 %v5105
    %v5173 = vunpack.c.l.b16 %v5106
    %v5174 = vunpack.c.h.b16 %v5106
    %v5175 = vunpack.c.l.b16 %v5107
    %v5176 = vunpack.c.h.b16 %v5107
    %v5177 = vunpack.c.l.b16 %v5108
    %v5178 = vunpack.c.h.b16 %v5108
    %v5179 = vunpack.c.l.b16 %v5109
    %v5180 = vunpack.c.h.b16 %v5109
    %v5181 = vunpack.c.l.b16 %v5110
    %v5182 = vunpack.c.h.b16 %v5110
    %v5183 = vunpack.c.l.b16 %v5111
    %v5184 = vunpack.c.h.b16 %v5111
    %v5185 = vunpack.c.l.b16 %v5112
    %v5186 = vunpack.c.h.b16 %v5112
    %v5187 = vunpack.c.l.b16 %v5113
    %v5188 = vunpack.c.h.b16 %v5113
    %v5189 = vunpack.c.l.b16 %v5114
    %v5190 = vunpack.c.h.b16 %v5114
    %v5191 = vunpack.c.l.b16 %v5115
    %v5192 = vunpack.c.h.b16 %v5115
    %v5193 = vunpack.c.l.b16 %v5116
    %v5194 = vunpack.c.h.b16 %v5116
    %v5195 = vunpack.c.l.b16 %v5117
    %v5196 = vunpack.c.h.b16 %v5117
    %v5197 = vunpack.c.l.b16 %v5118
    %v5198 = vunpack.c.h.b16 %v5118
    %v5199 = vunpack.c.l.b16 %v5119
    %v5200 = vunpack.c.h.b16 %v5119
    %v5201 = vunpack.c.l.b16 %v5120
    %v5202 = vunpack.c.h.b16 %v5120
    %v5203 = vunpack.c.l.b16 %v5121
    %v5204 = vunpack.c.h.b16 %v5121
    %v5205 = vunpack.c.l.b16 %v5122
    %v5206 = vunpack.c.h.b16 %v5122
    %v5207 = vunpack.c.l.b16 %v5123
    %v5208 = vunpack.c.h.b16 %v5123
    %v5209 = vunpack.c.l.b16 %v5124
    %v5210 = vunpack.c.h.b16 %v5124
    %v5211 = vunpack.c.l.b16 %v5125
    %v5212 = vunpack.c.h.b16 %v5125
    %v5213 = vunpack.c.l.b16 %v5126
    %v5214 = vunpack.c.h.b16 %v5126
    %v5215 = vunpack.c.l.b16 %v5127
    %v5216 = vunpack.c.h.b16 %v5127
    %v5217 = vunpack.c.l.b16 %v5128
    %v5218 = vunpack.c.h.b16 %v5128
    %v5219 = vunpack.c.l.b16 %v5129
    %v5220 = vunpack.c.h.b16 %v5129
    %v5221 = vunpack.c.l.b16 %v5130
    %v5222 = vunpack.c.h.b16 %v5130
    %v5223 = vunpack.c.l.b16 %v5131
    %v5224 = vunpack.c.h.b16 %v5131
    %v5225 = vunpack.c.l.b16 %v5132
    %v5226 = vunpack.c.h.b16 %v5132
    %v5227 = vunpack.c.l.b16 %v5133
    %v5228 = vunpack.c.h.b16 %v5133
    %v5229 = vunpack.c.l.b16 %v5134
    %v5230 = vunpack.c.h.b16 %v5134
    %v5231 = vpack.c.b16 %v5169, %v5167
    %v5232 = vpack.c.b16 %v5170, %v5168
    %v5233 = vpack.c.b16 %v5173, %v5171
    %v5234 = vpack.c.b16 %v5174, %v5172
    %v5235 = vpack.c.b16 %v5177, %v5175
    %v5236 = vpack.c.b16 %v5178, %v5176
    %v5237 = vpack.c.b16 %v5181, %v5179
    %v5238 = vpack.c.b16 %v5182, %v5180
    %v5239 = vpack.c.b16 %v5185, %v5183
    %v5240 = vpack.c.b16 %v5186, %v5184
    %v5241 = vpack.c.b16 %v5189, %v5187
    %v5242 = vpack.c.b16 %v5190, %v5188
    %v5243 = vpack.c.b16 %v5193, %v5191
    %v5244 = vpack.c.b16 %v5194, %v5192
    %v5245 = vpack.c.b16 %v5197, %v5195
    %v5246 = vpack.c.b16 %v5198, %v5196
    %v5247 = vpack.c.b16 %v5201, %v5199
    %v5248 = vpack.c.b16 %v5202, %v5200
    %v5249 = vpack.c.b16 %v5205, %v5203
    %v5250 = vpack.c.b16 %v5206, %v5204
    %v5251 = vpack.c.b16 %v5209, %v5207
    %v5252 = vpack.c.b16 %v5210, %v5208
    %v5253 = vpack.c.b16 %v5213, %v5211
    %v5254 = vpack.c.b16 %v5214, %v5212
    %v5255 = vpack.c.b16 %v5217, %v5215
    %v5256 = vpack.c.b16 %v5218, %v5216
    %v5257 = vpack.c.b16 %v5221, %v5219
    %v5258 = vpack.c.b16 %v5222, %v5220
    %v5259 = vpack.c.b16 %v5225, %v5223
    %v5260 = vpack.c.b16 %v5226, %v5224
    %v5261 = vpack.c.b16 %v5229, %v5227
    %v5262 = vpack.c.b16 %v5230, %v5228
    %5295 = vmatprep.subr.bf16.mxu0 %v5246
    %5296 = vmatpush1.bf16.msra.mxu0 %v5245
    %5297 = vmatprep.subr.bf16.mxu0 %v5244
    %5298 = vmatpush1.bf16.msra.mxu0 %v5243
    %5299 = vmatprep.subr.bf16.mxu0 %v5242
    %5300 = vmatpush1.bf16.msra.mxu0 %v5241
    %5301 = vmatprep.subr.bf16.mxu0 %v5240
    %5302 = vmatpush1.bf16.msra.mxu0 %v5239
    %5303 = vmatprep.subr.bf16.mxu0 %v5238
    %5304 = vmatpush1.bf16.msra.mxu0 %v5237
    %5305 = vmatprep.subr.bf16.mxu0 %v5236
    %5306 = vmatpush1.bf16.msra.mxu0 %v5235
    %5307 = vmatprep.subr.bf16.mxu0 %v5234
    %5308 = vmatpush1.bf16.msra.mxu0 %v5233
    %5309 = vmatprep.subr.bf16.mxu0 %v5232
    %5310 = vmatpush1.bf16.msra.mxu0 %v5231
    %5311 = vmatprep.subr.bf16.mxu0 %v5262
    %5312 = vmatpush2.bf16.msra.mxu0 %v5261
    %5313 = vmatprep.subr.bf16.mxu0 %v5260
    %5314 = vmatpush2.bf16.msra.mxu0 %v5259
    %5315 = vmatprep.subr.bf16.mxu0 %v5258
    %5316 = vmatpush2.bf16.msra.mxu0 %v5257
    %5317 = vmatprep.subr.bf16.mxu0 %v5256
    %5318 = vmatpush2.bf16.msra.mxu0 %v5255
    %5319 = vmatprep.subr.bf16.mxu0 %v5254
    %5320 = vmatpush2.bf16.msra.mxu0 %v5253
    %5321 = vmatprep.subr.bf16.mxu0 %v5252
    %5322 = vmatpush2.bf16.msra.mxu0 %v5251
    %5323 = vmatprep.subr.bf16.mxu0 %v5250
    %5324 = vmatpush2.bf16.msra.mxu0 %v5249
    %5325 = vmatprep.subr.bf16.mxu0 %v5248
    %5326 = vmatpush2.bf16.msra.mxu0 %v5247
    %5327 = vmatprep.mubr.bf16.mxu0 %v3992
    %5328 = vmatmul.mubr.bf16.gmra.mxu0 %v3991
    %v5329 = vpop.f32.mrf.mxu0
    %v5330 = vadd.f32 0.0, %v5329
    %v5331 = vpop.f32.mrf.mxu0
    %v5332 = vadd.f32 0.0, %v5331
    %v5333 = vpop.f32.mrf.mxu0
    %v5334 = vadd.f32 0.0, %v5333
    %v5335 = vpop.f32.mrf.mxu0
    %v5336 = vadd.f32 0.0, %v5335
    %5337 = vmatprep.mubr.bf16.mxu0 %v3994
    %5338 = vmatmul.mubr.bf16.gmra.mxu0 %v3993
    %v5339 = vpop.f32.mrf.mxu0
    %v5340 = vadd.f32 0.0, %v5339
    %v5341 = vpop.f32.mrf.mxu0
    %v5342 = vadd.f32 0.0, %v5341
    %v5343 = vpop.f32.mrf.mxu0
    %v5344 = vadd.f32 0.0, %v5343
    %v5345 = vpop.f32.mrf.mxu0
    %v5346 = vadd.f32 0.0, %v5345
    %5347 = vdwg.mxu0
    %s5348 = scalar_lea.vmem %s16, 96
    %v5349 = vld [vmem:[%s5348] sm:$0xf]
    %v5350 = vld [vmem:[%s5348 + $0x4] sm:$0xf]
    %v5351 = vld [vmem:[%s5348 + $0x8] sm:$0xf]
    %v5352 = vld [vmem:[%s5348 + $0xc] sm:$0xf]
    %v5353 = vld [vmem:[%s5348 + $0x10] sm:$0xf]
    %v5354 = vld [vmem:[%s5348 + $0x14] sm:$0xf]
    %v5355 = vld [vmem:[%s5348 + $0x18] sm:$0xf]
    %v5356 = vld [vmem:[%s5348 + $0x1c] sm:$0xf]
    %v5357 = vpack.c.bf16 %v5334, %v5330
    %v5358 = vpack.c.bf16 %v5336, %v5332
    %v5359 = vpack.c.bf16 %v5344, %v5340
    %v5360 = vpack.c.bf16 %v5346, %v5342
    %v5369 = vunpack.c.l.b16 %v5349
    %v5370 = vunpack.c.l.b16 %v5350
    %v5371 = vunpack.c.l.b16 %v5351
    %v5372 = vunpack.c.l.b16 %v5352
    %v5373 = vunpack.c.l.b16 %v5353
    %v5374 = vunpack.c.l.b16 %v5354
    %v5375 = vunpack.c.l.b16 %v5355
    %v5376 = vunpack.c.l.b16 %v5356
    %v5377 = vpack.c.b16 %v5370, %v5369
    %v5378 = vpack.c.b16 %v5372, %v5371
    %v5379 = vpack.c.b16 %v5374, %v5373
    %v5380 = vpack.c.b16 %v5376, %v5375
    %v5382 = vsel %vm4531, %v5377, 0
    %v5385 = vsel %vm4531, %v5378, 0
    %v5388 = vsel %vm4531, %v5379, 0
    %v5391 = vsel %vm4531, %v5380, 0
    %5393 = vmatprep.subr.bf16.mxu0 0
    %5394 = vmatpush1.bf16.msra.mxu0 0
    %5395 = vmatprep.subr.bf16.mxu0 0
    %5396 = vmatpush1.bf16.msra.mxu0 0
    %5397 = vmatprep.subr.bf16.mxu0 0
    %5398 = vmatpush1.bf16.msra.mxu0 0
    %5399 = vmatprep.subr.bf16.mxu0 0
    %5400 = vmatpush1.bf16.msra.mxu0 0
    %5401 = vmatprep.subr.bf16.mxu0 0
    %5402 = vmatpush1.bf16.msra.mxu0 0
    %5403 = vmatprep.subr.bf16.mxu0 0
    %5404 = vmatpush1.bf16.msra.mxu0 0
    %5405 = vmatprep.subr.bf16.mxu0 %v5360
    %5406 = vmatpush1.bf16.msra.mxu0 %v5359
    %5407 = vmatprep.subr.bf16.mxu0 %v5358
    %5408 = vmatpush1.bf16.msra.mxu0 %v5357
    %5409 = vmatprep.subr.bf16.mxu0 0
    %5410 = vmatpush2.bf16.msra.mxu0 0
    %5411 = vmatprep.subr.bf16.mxu0 0
    %5412 = vmatpush2.bf16.msra.mxu0 0
    %5413 = vmatprep.subr.bf16.mxu0 0
    %5414 = vmatpush2.bf16.msra.mxu0 0
    %5415 = vmatprep.subr.bf16.mxu0 0
    %5416 = vmatpush2.bf16.msra.mxu0 0
    %5417 = vmatprep.subr.bf16.mxu0 0
    %5418 = vmatpush2.bf16.msra.mxu0 0
    %5419 = vmatprep.subr.bf16.mxu0 0
    %5420 = vmatpush2.bf16.msra.mxu0 0
    %5421 = vmatprep.subr.bf16.mxu0 0
    %5422 = vmatpush2.bf16.msra.mxu0 0
    %5423 = vmatprep.subr.bf16.mxu0 0
    %5424 = vmatpush2.bf16.msra.mxu0 0
    %5425 = vmatprep.mubr.bf16.mxu0 0
    %5426 = vmatmul.mubr.bf16.gmra.mxu0 %v5382
    %v5427 = vpop.f32.mrf.mxu0
    %v5428 = vadd.f32 0.0, %v5427
    %v5429 = vpop.f32.mrf.mxu0
    %v5430 = vadd.f32 0.0, %v5429
    %v5431 = vpop.f32.mrf.mxu0
    %v5432 = vadd.f32 0.0, %v5431
    %v5433 = vpop.f32.mrf.mxu0
    %v5434 = vadd.f32 0.0, %v5433
    %5435 = vmatprep.mubr.bf16.mxu0 0
    %5436 = vmatmul.mubr.bf16.gmra.mxu0 %v5385
    %v5437 = vpop.f32.mrf.mxu0
    %v5438 = vadd.f32 0.0, %v5437
    %v5439 = vpop.f32.mrf.mxu0
    %v5440 = vadd.f32 0.0, %v5439
    %v5441 = vpop.f32.mrf.mxu0
    %v5442 = vadd.f32 0.0, %v5441
    %v5443 = vpop.f32.mrf.mxu0
    %v5444 = vadd.f32 0.0, %v5443
    %5445 = vmatprep.mubr.bf16.mxu0 0
    %5446 = vmatmul.mubr.bf16.gmra.mxu0 %v5388
    %v5447 = vpop.f32.mrf.mxu0
    %v5448 = vadd.f32 0.0, %v5447
    %v5449 = vpop.f32.mrf.mxu0
    %v5450 = vadd.f32 0.0, %v5449
    %v5451 = vpop.f32.mrf.mxu0
    %v5452 = vadd.f32 0.0, %v5451
    %v5453 = vpop.f32.mrf.mxu0
    %v5454 = vadd.f32 0.0, %v5453
    %5455 = vmatprep.mubr.bf16.mxu0 0
    %5456 = vmatmul.mubr.bf16.gmra.mxu0 %v5391
    %v5457 = vpop.f32.mrf.mxu0
    %v5458 = vadd.f32 0.0, %v5457
    %v5459 = vpop.f32.mrf.mxu0
    %v5460 = vadd.f32 0.0, %v5459
    %v5461 = vpop.f32.mrf.mxu0
    %v5462 = vadd.f32 0.0, %v5461
    %v5463 = vpop.f32.mrf.mxu0
    %v5464 = vadd.f32 0.0, %v5463
    %5465 = vdwg.mxu0
    %v5466 = vadd.f32 %v5086, %v5428
    %v5467 = vadd.f32 %v5087, %v5430
    %v5468 = vadd.f32 %v5088, %v5432
    %v5469 = vadd.f32 %v5089, %v5434
    %v5470 = vadd.f32 %v5090, %v5438
    %v5471 = vadd.f32 %v5091, %v5440
    %v5472 = vadd.f32 %v5092, %v5442
    %v5473 = vadd.f32 %v5093, %v5444
    %v5474 = vadd.f32 %v5094, %v5448
    %v5475 = vadd.f32 %v5095, %v5450
    %v5476 = vadd.f32 %v5096, %v5452
    %v5477 = vadd.f32 %v5097, %v5454
    %v5478 = vadd.f32 %v5098, %v5458
    %v5479 = vadd.f32 %v5099, %v5460
    %v5480 = vadd.f32 %v5100, %v5462
    %v5481 = vadd.f32 %v5101, %v5464
    %v5482 = vadd.f32 %v5466, %v5468
    %v5483 = vadd.f32 %v5482, %v5470
    %v5484 = vadd.f32 %v5483, %v5472
    %v5485 = vadd.f32 %v5484, %v5474
    %v5486 = vadd.f32 %v5485, %v5476
    %v5487 = vadd.f32 %v5486, %v5478
    %v5488 = vadd.f32 %v5487, %v5480
    %v5489 = vrot.slane %v5488, 4
    %v5490 = vadd.f32 %v5488, %v5489
    %v5491 = vrot.slane %v5490, 2
    %v5492 = vadd.f32 %v5490, %v5491
    %v5493 = vrot.slane %v5492, 1
    %v5494 = vadd.f32 %v5492, %v5493
    %v5495 = vadd.f32 %v5467, %v5469
    %v5496 = vadd.f32 %v5495, %v5471
    %v5497 = vadd.f32 %v5496, %v5473
    %v5498 = vadd.f32 %v5497, %v5475
    %v5499 = vadd.f32 %v5498, %v5477
    %v5500 = vadd.f32 %v5499, %v5479
    %v5501 = vadd.f32 %v5500, %v5481
    %v5502 = vrot.slane %v5501, 4
    %v5503 = vadd.f32 %v5501, %v5502
    %v5504 = vrot.slane %v5503, 2
    %v5505 = vadd.f32 %v5503, %v5504
    %v5506 = vrot.slane %v5505, 1
    %v5507 = vadd.f32 %v5505, %v5506
    %v5508 = vrcp.pop 64.0
    %v5509 = vmul.f32 %v5494, %v5508
    %v5510 = vmul.f32 %v5507, %v5508
    %v5511 = vld [vmem:[#allocation9] sm:$0xff]
    %v5512 = vld [vmem:[#allocation9 + $0x8] sm:$0xff]
    %v5513 = vld [vmem:[#allocation9 + $0x10] sm:$0xff]
    %v5514 = vld [vmem:[#allocation9 + $0x18] sm:$0xff]
    %v5515 = vld [vmem:[#allocation9 + $0x20] sm:$0xff]
    %v5516 = vld [vmem:[#allocation9 + $0x28] sm:$0xff]
    %v5517 = vld [vmem:[#allocation9 + $0x30] sm:$0xff]
    %v5518 = vld [vmem:[#allocation9 + $0x38] sm:$0xff]
    %v5519 = vld [vmem:[#allocation9 + $0x40] sm:$0xff]
    %v5520 = vld [vmem:[#allocation9 + $0x48] sm:$0xff]
    %v5521 = vld [vmem:[#allocation9 + $0x50] sm:$0xff]
    %v5522 = vld [vmem:[#allocation9 + $0x58] sm:$0xff]
    %v5523 = vld [vmem:[#allocation9 + $0x60] sm:$0xff]
    %v5524 = vld [vmem:[#allocation9 + $0x68] sm:$0xff]
    %v5525 = vld [vmem:[#allocation9 + $0x70] sm:$0xff]
    %v5526 = vld [vmem:[#allocation9 + $0x78] sm:$0xff]
    %v5527 = vld [vmem:[#allocation9 + $0x80] sm:$0xff]
    %v5528 = vld [vmem:[#allocation9 + $0x88] sm:$0xff]
    %v5529 = vld [vmem:[#allocation9 + $0x90] sm:$0xff]
    %v5530 = vld [vmem:[#allocation9 + $0x98] sm:$0xff]
    %v5531 = vld [vmem:[#allocation9 + $0xa0] sm:$0xff]
    %v5532 = vld [vmem:[#allocation9 + $0xa8] sm:$0xff]
    %v5533 = vld [vmem:[#allocation9 + $0xb0] sm:$0xff]
    %v5534 = vld [vmem:[#allocation9 + $0xb8] sm:$0xff]
    %v5535 = vld [vmem:[#allocation9 + $0xc0] sm:$0xff]
    %v5536 = vld [vmem:[#allocation9 + $0xc8] sm:$0xff]
    %v5537 = vld [vmem:[#allocation9 + $0xd0] sm:$0xff]
    %v5538 = vld [vmem:[#allocation9 + $0xd8] sm:$0xff]
    %v5539 = vld [vmem:[#allocation9 + $0xe0] sm:$0xff]
    %v5540 = vld [vmem:[#allocation9 + $0xe8] sm:$0xff]
    %v5541 = vld [vmem:[#allocation9 + $0xf0] sm:$0xff]
    %v5542 = vld [vmem:[#allocation9 + $0xf8] sm:$0xff]
    %v5543 = vld [vmem:[#allocation9 + $0x100] sm:$0xff]
    %v5544 = vld [vmem:[#allocation9 + $0x108] sm:$0xff]
    %v5545 = vld [vmem:[#allocation9 + $0x110] sm:$0xff]
    %v5546 = vld [vmem:[#allocation9 + $0x118] sm:$0xff]
    %v5547 = vld [vmem:[#allocation9 + $0x120] sm:$0xff]
    %v5548 = vld [vmem:[#allocation9 + $0x128] sm:$0xff]
    %v5549 = vld [vmem:[#allocation9 + $0x130] sm:$0xff]
    %v5550 = vld [vmem:[#allocation9 + $0x138] sm:$0xff]
    %v5551 = vld [vmem:[#allocation9 + $0x140] sm:$0xff]
    %v5552 = vld [vmem:[#allocation9 + $0x148] sm:$0xff]
    %v5553 = vld [vmem:[#allocation9 + $0x150] sm:$0xff]
    %v5554 = vld [vmem:[#allocation9 + $0x158] sm:$0xff]
    %v5555 = vld [vmem:[#allocation9 + $0x160] sm:$0xff]
    %v5556 = vld [vmem:[#allocation9 + $0x168] sm:$0xff]
    %v5557 = vld [vmem:[#allocation9 + $0x170] sm:$0xff]
    %v5558 = vld [vmem:[#allocation9 + $0x178] sm:$0xff]
    %v5559 = vld [vmem:[#allocation9 + $0x180] sm:$0xff]
    %v5560 = vld [vmem:[#allocation9 + $0x188] sm:$0xff]
    %v5561 = vld [vmem:[#allocation9 + $0x190] sm:$0xff]
    %v5562 = vld [vmem:[#allocation9 + $0x198] sm:$0xff]
    %v5563 = vld [vmem:[#allocation9 + $0x1a0] sm:$0xff]
    %v5564 = vld [vmem:[#allocation9 + $0x1a8] sm:$0xff]
    %v5565 = vld [vmem:[#allocation9 + $0x1b0] sm:$0xff]
    %v5566 = vld [vmem:[#allocation9 + $0x1b8] sm:$0xff]
    %v5567 = vld [vmem:[#allocation9 + $0x1c0] sm:$0xff]
    %v5568 = vld [vmem:[#allocation9 + $0x1c8] sm:$0xff]
    %v5569 = vld [vmem:[#allocation9 + $0x1d0] sm:$0xff]
    %v5570 = vld [vmem:[#allocation9 + $0x1d8] sm:$0xff]
    %v5571 = vld [vmem:[#allocation9 + $0x1e0] sm:$0xff]
    %v5572 = vld [vmem:[#allocation9 + $0x1e8] sm:$0xff]
    %v5573 = vld [vmem:[#allocation9 + $0x1f0] sm:$0xff]
    %v5574 = vld [vmem:[#allocation9 + $0x1f8] sm:$0xff]
    %5575 = vmatprep.subr.mxu0 %v5542
    %5576 = vmatpush1.msra.mxu0 %v5541
    %5577 = vmatprep.subr.mxu0 %v5540
    %5578 = vmatpush1.msra.mxu0 %v5539
    %5579 = vmatprep.subr.mxu0 %v5538
    %5580 = vmatpush1.msra.mxu0 %v5537
    %5581 = vmatprep.subr.mxu0 %v5536
    %5582 = vmatpush1.msra.mxu0 %v5535
    %5583 = vmatprep.subr.mxu0 %v5534
    %5584 = vmatpush1.msra.mxu0 %v5533
    %5585 = vmatprep.subr.mxu0 %v5532
    %5586 = vmatpush1.msra.mxu0 %v5531
    %5587 = vmatprep.subr.mxu0 %v5530
    %5588 = vmatpush1.msra.mxu0 %v5529
    %5589 = vmatprep.subr.mxu0 %v5528
    %5590 = vmatpush1.msra.mxu0 %v5527
    %5591 = vmatprep.subr.mxu0 %v5526
    %5592 = vmatpush1.msra.mxu0 %v5525
    %5593 = vmatprep.subr.mxu0 %v5524
    %5594 = vmatpush1.msra.mxu0 %v5523
    %5595 = vmatprep.subr.mxu0 %v5522
    %5596 = vmatpush1.msra.mxu0 %v5521
    %5597 = vmatprep.subr.mxu0 %v5520
    %5598 = vmatpush1.msra.mxu0 %v5519
    %5599 = vmatprep.subr.mxu0 %v5518
    %5600 = vmatpush1.msra.mxu0 %v5517
    %5601 = vmatprep.subr.mxu0 %v5516
    %5602 = vmatpush1.msra.mxu0 %v5515
    %5603 = vmatprep.subr.mxu0 %v5514
    %5604 = vmatpush1.msra.mxu0 %v5513
    %5605 = vmatprep.subr.mxu0 %v5512
    %5606 = vmatpush1.msra.mxu0 %v5511
    %5607 = vmatprep.subr.mxu0 %v5574
    %5608 = vmatpush2.msra.mxu0 %v5573
    %5609 = vmatprep.subr.mxu0 %v5572
    %5610 = vmatpush2.msra.mxu0 %v5571
    %5611 = vmatprep.subr.mxu0 %v5570
    %5612 = vmatpush2.msra.mxu0 %v5569
    %5613 = vmatprep.subr.mxu0 %v5568
    %5614 = vmatpush2.msra.mxu0 %v5567
    %5615 = vmatprep.subr.mxu0 %v5566
    %5616 = vmatpush2.msra.mxu0 %v5565
    %5617 = vmatprep.subr.mxu0 %v5564
    %5618 = vmatpush2.msra.mxu0 %v5563
    %5619 = vmatprep.subr.mxu0 %v5562
    %5620 = vmatpush2.msra.mxu0 %v5561
    %5621 = vmatprep.subr.mxu0 %v5560
    %5622 = vmatpush2.msra.mxu0 %v5559
    %5623 = vmatprep.subr.mxu0 %v5558
    %5624 = vmatpush2.msra.mxu0 %v5557
    %5625 = vmatprep.subr.mxu0 %v5556
    %5626 = vmatpush2.msra.mxu0 %v5555
    %5627 = vmatprep.subr.mxu0 %v5554
    %5628 = vmatpush2.msra.mxu0 %v5553
    %5629 = vmatprep.subr.mxu0 %v5552
    %5630 = vmatpush2.msra.mxu0 %v5551
    %5631 = vmatprep.subr.mxu0 %v5550
    %5632 = vmatpush2.msra.mxu0 %v5549
    %5633 = vmatprep.subr.mxu0 %v5548
    %5634 = vmatpush2.msra.mxu0 %v5547
    %5635 = vmatprep.subr.mxu0 %v5546
    %5636 = vmatpush2.msra.mxu0 %v5545
    %5637 = vmatprep.subr.mxu0 %v5544
    %5638 = vmatpush2.msra.mxu0 %v5543
    %5639 = vmatprep.mubr.f32.mxu0 %v5510
    %5640 = vmatmul.mubr.f32.gmra.mxu0 %v5509
    %v5641 = vpop.f32.mrf.mxu0
    %v5642 = vadd.f32 0.0, %v5641
    %v5643 = vpop.f32.mrf.mxu0
    %v5644 = vadd.f32 0.0, %v5643
    %5645 = vdwg.mxu0
    %v5646 = vlaneseq
    %v5647 = vshrl.u32 %v5646, 7
    %v5648 = vsub.s32 0, %v5647
    %v5649 = vrot.slane %v5642, %v5648
    %v5650 = vlaneseq
    %v5651 = vshrl.u32 %v5650, 7
    %v5652 = vsub.s32 0, %v5651
    %v5653 = vrot.slane %v5644, %v5652
    %v5654 = vsub.f32 %v5466, %v5649
    %v5655 = vsub.f32 %v5467, %v5653
    %v5656 = vsub.f32 %v5468, %v5649
    %v5657 = vsub.f32 %v5469, %v5653
    %v5658 = vsub.f32 %v5470, %v5649
    %v5659 = vsub.f32 %v5471, %v5653
    %v5660 = vsub.f32 %v5472, %v5649
    %v5661 = vsub.f32 %v5473, %v5653
    %v5662 = vsub.f32 %v5474, %v5649
    %v5663 = vsub.f32 %v5475, %v5653
    %v5664 = vsub.f32 %v5476, %v5649
    %v5665 = vsub.f32 %v5477, %v5653
    %v5666 = vsub.f32 %v5478, %v5649
    %v5667 = vsub.f32 %v5479, %v5653
    %v5668 = vsub.f32 %v5480, %v5649
    %v5669 = vsub.f32 %v5481, %v5653
    %v5670 = vmul.f32 %v5654, %v5654
    %v5671 = vmul.f32 %v5655, %v5655
    %v5672 = vmul.f32 %v5656, %v5656
    %v5673 = vmul.f32 %v5657, %v5657
    %v5674 = vmul.f32 %v5658, %v5658
    %v5675 = vmul.f32 %v5659, %v5659
    %v5676 = vmul.f32 %v5660, %v5660
    %v5677 = vmul.f32 %v5661, %v5661
    %v5678 = vmul.f32 %v5662, %v5662
    %v5679 = vmul.f32 %v5663, %v5663
    %v5680 = vmul.f32 %v5664, %v5664
    %v5681 = vmul.f32 %v5665, %v5665
    %v5682 = vmul.f32 %v5666, %v5666
    %v5683 = vmul.f32 %v5667, %v5667
    %v5684 = vmul.f32 %v5668, %v5668
    %v5685 = vmul.f32 %v5669, %v5669
    %v5686 = vadd.f32 %v5670, %v5672
    %v5687 = vadd.f32 %v5686, %v5674
    %v5688 = vadd.f32 %v5687, %v5676
    %v5689 = vadd.f32 %v5688, %v5678
    %v5690 = vadd.f32 %v5689, %v5680
    %v5691 = vadd.f32 %v5690, %v5682
    %v5692 = vadd.f32 %v5691, %v5684
    %v5693 = vrot.slane %v5692, 4
    %v5694 = vadd.f32 %v5692, %v5693
    %v5695 = vrot.slane %v5694, 2
    %v5696 = vadd.f32 %v5694, %v5695
    %v5697 = vrot.slane %v5696, 1
    %v5698 = vadd.f32 %v5696, %v5697
    %v5699 = vadd.f32 %v5671, %v5673
    %v5700 = vadd.f32 %v5699, %v5675
    %v5701 = vadd.f32 %v5700, %v5677
    %v5702 = vadd.f32 %v5701, %v5679
    %v5703 = vadd.f32 %v5702, %v5681
    %v5704 = vadd.f32 %v5703, %v5683
    %v5705 = vadd.f32 %v5704, %v5685
    %v5706 = vrot.slane %v5705, 4
    %v5707 = vadd.f32 %v5705, %v5706
    %v5708 = vrot.slane %v5707, 2
    %v5709 = vadd.f32 %v5707, %v5708
    %v5710 = vrot.slane %v5709, 1
    %v5711 = vadd.f32 %v5709, %v5710
    %v5712 = vmul.f32 %v5698, %v5508
    %v5713 = vmul.f32 %v5711, %v5508
    %v5714 = vld [vmem:[%s19] sm:$0x3]
    %5715 = vmatprep.subr.mxu0 %v5542
    %5716 = vmatpush1.msra.mxu0 %v5541
    %5717 = vmatprep.subr.mxu0 %v5540
    %5718 = vmatpush1.msra.mxu0 %v5539
    %5719 = vmatprep.subr.mxu0 %v5538
    %5720 = vmatpush1.msra.mxu0 %v5537
    %5721 = vmatprep.subr.mxu0 %v5536
    %5722 = vmatpush1.msra.mxu0 %v5535
    %5723 = vmatprep.subr.mxu0 %v5534
    %5724 = vmatpush1.msra.mxu0 %v5533
    %5725 = vmatprep.subr.mxu0 %v5532
    %5726 = vmatpush1.msra.mxu0 %v5531
    %5727 = vmatprep.subr.mxu0 %v5530
    %5728 = vmatpush1.msra.mxu0 %v5529
    %5729 = vmatprep.subr.mxu0 %v5528
    %5730 = vmatpush1.msra.mxu0 %v5527
    %5731 = vmatprep.subr.mxu0 %v5526
    %5732 = vmatpush1.msra.mxu0 %v5525
    %5733 = vmatprep.subr.mxu0 %v5524
    %5734 = vmatpush1.msra.mxu0 %v5523
    %5735 = vmatprep.subr.mxu0 %v5522
    %5736 = vmatpush1.msra.mxu0 %v5521
    %5737 = vmatprep.subr.mxu0 %v5520
    %5738 = vmatpush1.msra.mxu0 %v5519
    %5739 = vmatprep.subr.mxu0 %v5518
    %5740 = vmatpush1.msra.mxu0 %v5517
    %5741 = vmatprep.subr.mxu0 %v5516
    %5742 = vmatpush1.msra.mxu0 %v5515
    %5743 = vmatprep.subr.mxu0 %v5514
    %5744 = vmatpush1.msra.mxu0 %v5513
    %5745 = vmatprep.subr.mxu0 %v5512
    %5746 = vmatpush1.msra.mxu0 %v5511
    %5747 = vmatprep.subr.mxu0 %v5574
    %5748 = vmatpush2.msra.mxu0 %v5573
    %5749 = vmatprep.subr.mxu0 %v5572
    %5750 = vmatpush2.msra.mxu0 %v5571
    %5751 = vmatprep.subr.mxu0 %v5570
    %5752 = vmatpush2.msra.mxu0 %v5569
    %5753 = vmatprep.subr.mxu0 %v5568
    %5754 = vmatpush2.msra.mxu0 %v5567
    %5755 = vmatprep.subr.mxu0 %v5566
    %5756 = vmatpush2.msra.mxu0 %v5565
    %5757 = vmatprep.subr.mxu0 %v5564
    %5758 = vmatpush2.msra.mxu0 %v5563
    %5759 = vmatprep.subr.mxu0 %v5562
    %5760 = vmatpush2.msra.mxu0 %v5561
    %5761 = vmatprep.subr.mxu0 %v5560
    %5762 = vmatpush2.msra.mxu0 %v5559
    %5763 = vmatprep.subr.mxu0 %v5558
    %5764 = vmatpush2.msra.mxu0 %v5557
    %5765 = vmatprep.subr.mxu0 %v5556
    %5766 = vmatpush2.msra.mxu0 %v5555
    %5767 = vmatprep.subr.mxu0 %v5554
    %5768 = vmatpush2.msra.mxu0 %v5553
    %5769 = vmatprep.subr.mxu0 %v5552
    %5770 = vmatpush2.msra.mxu0 %v5551
    %5771 = vmatprep.subr.mxu0 %v5550
    %5772 = vmatpush2.msra.mxu0 %v5549
    %5773 = vmatprep.subr.mxu0 %v5548
    %5774 = vmatpush2.msra.mxu0 %v5547
    %5775 = vmatprep.subr.mxu0 %v5546
    %5776 = vmatpush2.msra.mxu0 %v5545
    %5777 = vmatprep.subr.mxu0 %v5544
    %5778 = vmatpush2.msra.mxu0 %v5543
    %5779 = vmatprep.mubr.f32.mxu0 %v5713
    %5780 = vmatmul.mubr.f32.gmra.mxu0 %v5712
    %v5781 = vpop.f32.mrf.mxu0
    %v5782 = vadd.f32 1e-05, %v5781
    %v5783 = vpop.f32.mrf.mxu0
    %v5784 = vadd.f32 1e-05, %v5783
    %5785 = vdwg.mxu0
    %v5786 = vrsqrt.pop %v5782
    %v5787 = vrsqrt.pop %v5784
    %v5790 = vcombine.low %v5786, %v5787
    %v5792 = vunpack.c.l.s4 1966171168
    %v5793 = vunpack.c.0.s8 %v5792
    %v5794 = vlaneseq
    %v5795 = vshrl.u32 %v5794, 7
    %v5796 = vsub.s32 %v5793, %v5795
    %v5797 = vrot.slane %v5790, %v5796
    %v5799 = vunpack.c.l.s4 1966171168
    %v5800 = vunpack.c.0.s8 %v5799
    %v5801 = vlaneseq
    %v5802 = vshrl.u32 %v5801, 7
    %v5803 = vsub.s32 %v5800, %v5802
    %v5804 = vrot.slane %v5797, %v5803
    %v5806 = vmul.f32 %v5714, %v5804
    %v5808 = vlaneseq
    %v5809 = vshrl.u32 %v5808, 7
    %v5810 = vsub.s32 0, %v5809
    %v5811 = vrot.slane %v5806, %v5810
    %v5812 = vlaneseq
    %v5813 = vshrl.u32 %v5812, 7
    %v5814 = vsub.s32 1, %v5813
    %v5815 = vrot.slane %v5806, %v5814
    %v5818 = vmul.f32 %v5654, %v5811
    %v5819 = vmul.f32 %v5655, %v5815
    %v5820 = vmul.f32 %v5656, %v5811
    %v5821 = vmul.f32 %v5657, %v5815
    %v5822 = vmul.f32 %v5658, %v5811
    %v5823 = vmul.f32 %v5659, %v5815
    %v5824 = vmul.f32 %v5660, %v5811
    %v5825 = vmul.f32 %v5661, %v5815
    %v5826 = vmul.f32 %v5662, %v5811
    %v5827 = vmul.f32 %v5663, %v5815
    %v5828 = vmul.f32 %v5664, %v5811
    %v5829 = vmul.f32 %v5665, %v5815
    %v5830 = vmul.f32 %v5666, %v5811
    %v5831 = vmul.f32 %v5667, %v5815
    %v5832 = vmul.f32 %v5668, %v5811
    %v5833 = vmul.f32 %v5669, %v5815
    %v5834 = vld [vmem:[%s20] sm:$0x3]
    %v5836 = vlaneseq
    %v5837 = vshrl.u32 %v5836, 7
    %v5838 = vsub.s32 0, %v5837
    %v5839 = vrot.slane %v5834, %v5838
    %v5840 = vlaneseq
    %v5841 = vshrl.u32 %v5840, 7
    %v5842 = vsub.s32 1, %v5841
    %v5843 = vrot.slane %v5834, %v5842
    %v5846 = vadd.f32 %v5818, %v5839
    %v5847 = vadd.f32 %v5819, %v5843
    %v5848 = vadd.f32 %v5820, %v5839
    %v5849 = vadd.f32 %v5821, %v5843
    %v5850 = vadd.f32 %v5822, %v5839
    %v5851 = vadd.f32 %v5823, %v5843
    %v5852 = vadd.f32 %v5824, %v5839
    %v5853 = vadd.f32 %v5825, %v5843
    %v5854 = vadd.f32 %v5826, %v5839
    %v5855 = vadd.f32 %v5827, %v5843
    %v5856 = vadd.f32 %v5828, %v5839
    %v5857 = vadd.f32 %v5829, %v5843
    %v5858 = vadd.f32 %v5830, %v5839
    %v5859 = vadd.f32 %v5831, %v5843
    %v5860 = vadd.f32 %v5832, %v5839
    %v5861 = vadd.f32 %v5833, %v5843
    %v5862 = vmax.f32 %v5846, 0.0
    %v5863 = vmax.f32 %v5847, 0.0
    %v5864 = vmax.f32 %v5848, 0.0
    %v5865 = vmax.f32 %v5849, 0.0
    %v5866 = vmax.f32 %v5850, 0.0
    %v5867 = vmax.f32 %v5851, 0.0
    %v5868 = vmax.f32 %v5852, 0.0
    %v5869 = vmax.f32 %v5853, 0.0
    %v5870 = vmax.f32 %v5854, 0.0
    %v5871 = vmax.f32 %v5855, 0.0
    %v5872 = vmax.f32 %v5856, 0.0
    %v5873 = vmax.f32 %v5857, 0.0
    %v5874 = vmax.f32 %v5858, 0.0
    %v5875 = vmax.f32 %v5859, 0.0
    %v5876 = vmax.f32 %v5860, 0.0
    %v5877 = vmax.f32 %v5861, 0.0
    %v5878 = vpack.c.bf16 %v5864, %v5862
    %v5879 = vpack.c.bf16 %v5865, %v5863
    %v5880 = vpack.c.bf16 %v5868, %v5866
    %v5881 = vpack.c.bf16 %v5869, %v5867
    %v5882 = vpack.c.bf16 %v5872, %v5870
    %v5883 = vpack.c.bf16 %v5873, %v5871
    %v5884 = vpack.c.bf16 %v5876, %v5874
    %v5885 = vpack.c.bf16 %v5877, %v5875
    %v5886 = vld [vmem:[%s22] sm:$0xff]
    %v5887 = vld [vmem:[%s22 + $0x8] sm:$0xff]
    %v5888 = vld [vmem:[%s22 + $0x10] sm:$0xff]
    %v5889 = vld [vmem:[%s22 + $0x18] sm:$0xff]
    %v5890 = vld [vmem:[%s22 + $0x20] sm:$0xff]
    %v5891 = vld [vmem:[%s22 + $0x28] sm:$0xff]
    %v5892 = vld [vmem:[%s22 + $0x30] sm:$0xff]
    %v5893 = vld [vmem:[%s22 + $0x38] sm:$0xff]
    %v5894 = vld [vmem:[%s22 + $0x40] sm:$0xff]
    %v5895 = vld [vmem:[%s22 + $0x48] sm:$0xff]
    %v5896 = vld [vmem:[%s22 + $0x50] sm:$0xff]
    %v5897 = vld [vmem:[%s22 + $0x58] sm:$0xff]
    %v5898 = vld [vmem:[%s22 + $0x60] sm:$0xff]
    %v5899 = vld [vmem:[%s22 + $0x68] sm:$0xff]
    %v5900 = vld [vmem:[%s22 + $0x70] sm:$0xff]
    %v5901 = vld [vmem:[%s22 + $0x78] sm:$0xff]
    %v5902 = vld [vmem:[%s22 + $0x80] sm:$0xff]
    %v5903 = vld [vmem:[%s22 + $0x88] sm:$0xff]
    %v5904 = vld [vmem:[%s22 + $0x90] sm:$0xff]
    %v5905 = vld [vmem:[%s22 + $0x98] sm:$0xff]
    %v5906 = vld [vmem:[%s22 + $0xa0] sm:$0xff]
    %v5907 = vld [vmem:[%s22 + $0xa8] sm:$0xff]
    %v5908 = vld [vmem:[%s22 + $0xb0] sm:$0xff]
    %v5909 = vld [vmem:[%s22 + $0xb8] sm:$0xff]
    %v5910 = vld [vmem:[%s22 + $0xc0] sm:$0xff]
    %v5911 = vld [vmem:[%s22 + $0xc8] sm:$0xff]
    %v5912 = vld [vmem:[%s22 + $0xd0] sm:$0xff]
    %v5913 = vld [vmem:[%s22 + $0xd8] sm:$0xff]
    %v5914 = vld [vmem:[%s22 + $0xe0] sm:$0xff]
    %v5915 = vld [vmem:[%s22 + $0xe8] sm:$0xff]
    %v5916 = vld [vmem:[%s22 + $0xf0] sm:$0xff]
    %v5917 = vld [vmem:[%s22 + $0xf8] sm:$0xff]
    %v5950 = vunpack.c.l.b16 %v5886
    %v5951 = vunpack.c.h.b16 %v5886
    %v5952 = vunpack.c.l.b16 %v5887
    %v5953 = vunpack.c.h.b16 %v5887
    %v5954 = vunpack.c.l.b16 %v5888
    %v5955 = vunpack.c.h.b16 %v5888
    %v5956 = vunpack.c.l.b16 %v5889
    %v5957 = vunpack.c.h.b16 %v5889
    %v5958 = vunpack.c.l.b16 %v5890
    %v5959 = vunpack.c.h.b16 %v5890
    %v5960 = vunpack.c.l.b16 %v5891
    %v5961 = vunpack.c.h.b16 %v5891
    %v5962 = vunpack.c.l.b16 %v5892
    %v5963 = vunpack.c.h.b16 %v5892
    %v5964 = vunpack.c.l.b16 %v5893
    %v5965 = vunpack.c.h.b16 %v5893
    %v5966 = vunpack.c.l.b16 %v5894
    %v5967 = vunpack.c.h.b16 %v5894
    %v5968 = vunpack.c.l.b16 %v5895
    %v5969 = vunpack.c.h.b16 %v5895
    %v5970 = vunpack.c.l.b16 %v5896
    %v5971 = vunpack.c.h.b16 %v5896
    %v5972 = vunpack.c.l.b16 %v5897
    %v5973 = vunpack.c.h.b16 %v5897
    %v5974 = vunpack.c.l.b16 %v5898
    %v5975 = vunpack.c.h.b16 %v5898
    %v5976 = vunpack.c.l.b16 %v5899
    %v5977 = vunpack.c.h.b16 %v5899
    %v5978 = vunpack.c.l.b16 %v5900
    %v5979 = vunpack.c.h.b16 %v5900
    %v5980 = vunpack.c.l.b16 %v5901
    %v5981 = vunpack.c.h.b16 %v5901
    %v5982 = vunpack.c.l.b16 %v5902
    %v5983 = vunpack.c.h.b16 %v5902
    %v5984 = vunpack.c.l.b16 %v5903
    %v5985 = vunpack.c.h.b16 %v5903
    %v5986 = vunpack.c.l.b16 %v5904
    %v5987 = vunpack.c.h.b16 %v5904
    %v5988 = vunpack.c.l.b16 %v5905
    %v5989 = vunpack.c.h.b16 %v5905
    %v5990 = vunpack.c.l.b16 %v5906
    %v5991 = vunpack.c.h.b16 %v5906
    %v5992 = vunpack.c.l.b16 %v5907
    %v5993 = vunpack.c.h.b16 %v5907
    %v5994 = vunpack.c.l.b16 %v5908
    %v5995 = vunpack.c.h.b16 %v5908
    %v5996 = vunpack.c.l.b16 %v5909
    %v5997 = vunpack.c.h.b16 %v5909
    %v5998 = vunpack.c.l.b16 %v5910
    %v5999 = vunpack.c.h.b16 %v5910
    %v6000 = vunpack.c.l.b16 %v5911
    %v6001 = vunpack.c.h.b16 %v5911
    %v6002 = vunpack.c.l.b16 %v5912
    %v6003 = vunpack.c.h.b16 %v5912
    %v6004 = vunpack.c.l.b16 %v5913
    %v6005 = vunpack.c.h.b16 %v5913
    %v6006 = vunpack.c.l.b16 %v5914
    %v6007 = vunpack.c.h.b16 %v5914
    %v6008 = vunpack.c.l.b16 %v5915
    %v6009 = vunpack.c.h.b16 %v5915
    %v6010 = vunpack.c.l.b16 %v5916
    %v6011 = vunpack.c.h.b16 %v5916
    %v6012 = vunpack.c.l.b16 %v5917
    %v6013 = vunpack.c.h.b16 %v5917
    %v6014 = vpack.c.b16 %v5952, %v5950
    %v6015 = vpack.c.b16 %v5953, %v5951
    %v6016 = vpack.c.b16 %v5956, %v5954
    %v6017 = vpack.c.b16 %v5957, %v5955
    %v6018 = vpack.c.b16 %v5960, %v5958
    %v6019 = vpack.c.b16 %v5961, %v5959
    %v6020 = vpack.c.b16 %v5964, %v5962
    %v6021 = vpack.c.b16 %v5965, %v5963
    %v6022 = vpack.c.b16 %v5968, %v5966
    %v6023 = vpack.c.b16 %v5969, %v5967
    %v6024 = vpack.c.b16 %v5972, %v5970
    %v6025 = vpack.c.b16 %v5973, %v5971
    %v6026 = vpack.c.b16 %v5976, %v5974
    %v6027 = vpack.c.b16 %v5977, %v5975
    %v6028 = vpack.c.b16 %v5980, %v5978
    %v6029 = vpack.c.b16 %v5981, %v5979
    %v6030 = vpack.c.b16 %v5984, %v5982
    %v6031 = vpack.c.b16 %v5985, %v5983
    %v6032 = vpack.c.b16 %v5988, %v5986
    %v6033 = vpack.c.b16 %v5989, %v5987
    %v6034 = vpack.c.b16 %v5992, %v5990
    %v6035 = vpack.c.b16 %v5993, %v5991
    %v6036 = vpack.c.b16 %v5996, %v5994
    %v6037 = vpack.c.b16 %v5997, %v5995
    %v6038 = vpack.c.b16 %v6000, %v5998
    %v6039 = vpack.c.b16 %v6001, %v5999
    %v6040 = vpack.c.b16 %v6004, %v6002
    %v6041 = vpack.c.b16 %v6005, %v6003
    %v6042 = vpack.c.b16 %v6008, %v6006
    %v6043 = vpack.c.b16 %v6009, %v6007
    %v6044 = vpack.c.b16 %v6012, %v6010
    %v6045 = vpack.c.b16 %v6013, %v6011
    %6078 = vmatprep.subr.bf16.mxu0 %v6029
    %6079 = vmatpush1.bf16.msra.mxu0 %v6028
    %6080 = vmatprep.subr.bf16.mxu0 %v6027
    %6081 = vmatpush1.bf16.msra.mxu0 %v6026
    %6082 = vmatprep.subr.bf16.mxu0 %v6025
    %6083 = vmatpush1.bf16.msra.mxu0 %v6024
    %6084 = vmatprep.subr.bf16.mxu0 %v6023
    %6085 = vmatpush1.bf16.msra.mxu0 %v6022
    %6086 = vmatprep.subr.bf16.mxu0 %v6021
    %6087 = vmatpush1.bf16.msra.mxu0 %v6020
    %6088 = vmatprep.subr.bf16.mxu0 %v6019
    %6089 = vmatpush1.bf16.msra.mxu0 %v6018
    %6090 = vmatprep.subr.bf16.mxu0 %v6017
    %6091 = vmatpush1.bf16.msra.mxu0 %v6016
    %6092 = vmatprep.subr.bf16.mxu0 %v6015
    %6093 = vmatpush1.bf16.msra.mxu0 %v6014
    %6094 = vmatprep.subr.bf16.mxu0 %v6045
    %6095 = vmatpush2.bf16.msra.mxu0 %v6044
    %6096 = vmatprep.subr.bf16.mxu0 %v6043
    %6097 = vmatpush2.bf16.msra.mxu0 %v6042
    %6098 = vmatprep.subr.bf16.mxu0 %v6041
    %6099 = vmatpush2.bf16.msra.mxu0 %v6040
    %6100 = vmatprep.subr.bf16.mxu0 %v6039
    %6101 = vmatpush2.bf16.msra.mxu0 %v6038
    %6102 = vmatprep.subr.bf16.mxu0 %v6037
    %6103 = vmatpush2.bf16.msra.mxu0 %v6036
    %6104 = vmatprep.subr.bf16.mxu0 %v6035
    %6105 = vmatpush2.bf16.msra.mxu0 %v6034
    %6106 = vmatprep.subr.bf16.mxu0 %v6033
    %6107 = vmatpush2.bf16.msra.mxu0 %v6032
    %6108 = vmatprep.subr.bf16.mxu0 %v6031
    %6109 = vmatpush2.bf16.msra.mxu0 %v6030
    %6110 = vmatprep.mubr.bf16.mxu0 %v5879
    %6111 = vmatmul.mubr.bf16.gmra.mxu0 %v5878
    %v6112 = vpop.f32.mrf.mxu0
    %v6113 = vadd.f32 0.0, %v6112
    %v6114 = vpop.f32.mrf.mxu0
    %v6115 = vadd.f32 0.0, %v6114
    %v6116 = vpop.f32.mrf.mxu0
    %v6117 = vadd.f32 0.0, %v6116
    %v6118 = vpop.f32.mrf.mxu0
    %v6119 = vadd.f32 0.0, %v6118
    %6120 = vmatprep.mubr.bf16.mxu0 %v5881
    %6121 = vmatmul.mubr.bf16.gmra.mxu0 %v5880
    %v6122 = vpop.f32.mrf.mxu0
    %v6123 = vadd.f32 0.0, %v6122
    %v6124 = vpop.f32.mrf.mxu0
    %v6125 = vadd.f32 0.0, %v6124
    %v6126 = vpop.f32.mrf.mxu0
    %v6127 = vadd.f32 0.0, %v6126
    %v6128 = vpop.f32.mrf.mxu0
    %v6129 = vadd.f32 0.0, %v6128
    %6130 = vmatprep.mubr.bf16.mxu0 %v5883
    %6131 = vmatmul.mubr.bf16.gmra.mxu0 %v5882
    %v6132 = vpop.f32.mrf.mxu0
    %v6133 = vadd.f32 0.0, %v6132
    %v6134 = vpop.f32.mrf.mxu0
    %v6135 = vadd.f32 0.0, %v6134
    %v6136 = vpop.f32.mrf.mxu0
    %v6137 = vadd.f32 0.0, %v6136
    %v6138 = vpop.f32.mrf.mxu0
    %v6139 = vadd.f32 0.0, %v6138
    %6140 = vmatprep.mubr.bf16.mxu0 %v5885
    %6141 = vmatmul.mubr.bf16.gmra.mxu0 %v5884
    %v6142 = vpop.f32.mrf.mxu0
    %v6143 = vadd.f32 0.0, %v6142
    %v6144 = vpop.f32.mrf.mxu0
    %v6145 = vadd.f32 0.0, %v6144
    %v6146 = vpop.f32.mrf.mxu0
    %v6147 = vadd.f32 0.0, %v6146
    %v6148 = vpop.f32.mrf.mxu0
    %v6149 = vadd.f32 0.0, %v6148
    %6150 = vdwg.mxu0
    %v6151 = vld [vmem:[%s21] sm:$0xf]
    %v6152 = vld [vmem:[%s21 + $0x4] sm:$0xf]
    %v6153 = vld [vmem:[%s21 + $0x8] sm:$0xf]
    %v6154 = vld [vmem:[%s21 + $0xc] sm:$0xf]
    %v6155 = vld [vmem:[%s21 + $0x10] sm:$0xf]
    %v6156 = vld [vmem:[%s21 + $0x14] sm:$0xf]
    %v6157 = vld [vmem:[%s21 + $0x18] sm:$0xf]
    %v6158 = vld [vmem:[%s21 + $0x1c] sm:$0xf]
    %v6159 = vld [vmem:[%s21 + $0x20] sm:$0xf]
    %v6160 = vld [vmem:[%s21 + $0x24] sm:$0xf]
    %v6161 = vld [vmem:[%s21 + $0x28] sm:$0xf]
    %v6162 = vld [vmem:[%s21 + $0x2c] sm:$0xf]
    %v6163 = vld [vmem:[%s21 + $0x30] sm:$0xf]
    %v6164 = vld [vmem:[%s21 + $0x34] sm:$0xf]
    %v6165 = vld [vmem:[%s21 + $0x38] sm:$0xf]
    %v6166 = vld [vmem:[%s21 + $0x3c] sm:$0xf]
    %v6167 = vpack.c.bf16 %v6117, %v6113
    %v6168 = vpack.c.bf16 %v6119, %v6115
    %v6169 = vpack.c.bf16 %v6127, %v6123
    %v6170 = vpack.c.bf16 %v6129, %v6125
    %v6171 = vpack.c.bf16 %v6137, %v6133
    %v6172 = vpack.c.bf16 %v6139, %v6135
    %v6173 = vpack.c.bf16 %v6147, %v6143
    %v6174 = vpack.c.bf16 %v6149, %v6145
    %s6175 = scalar_lea.vmem %s22, 256
    %v6176 = vld [vmem:[%s6175] sm:$0xff]
    %v6177 = vld [vmem:[%s6175 + $0x8] sm:$0xff]
    %v6178 = vld [vmem:[%s6175 + $0x10] sm:$0xff]
    %v6179 = vld [vmem:[%s6175 + $0x18] sm:$0xff]
    %v6180 = vld [vmem:[%s6175 + $0x20] sm:$0xff]
    %v6181 = vld [vmem:[%s6175 + $0x28] sm:$0xff]
    %v6182 = vld [vmem:[%s6175 + $0x30] sm:$0xff]
    %v6183 = vld [vmem:[%s6175 + $0x38] sm:$0xff]
    %v6184 = vld [vmem:[%s6175 + $0x40] sm:$0xff]
    %v6185 = vld [vmem:[%s6175 + $0x48] sm:$0xff]
    %v6186 = vld [vmem:[%s6175 + $0x50] sm:$0xff]
    %v6187 = vld [vmem:[%s6175 + $0x58] sm:$0xff]
    %v6188 = vld [vmem:[%s6175 + $0x60] sm:$0xff]
    %v6189 = vld [vmem:[%s6175 + $0x68] sm:$0xff]
    %v6190 = vld [vmem:[%s6175 + $0x70] sm:$0xff]
    %v6191 = vld [vmem:[%s6175 + $0x78] sm:$0xff]
    %v6192 = vld [vmem:[%s6175 + $0x80] sm:$0xff]
    %v6193 = vld [vmem:[%s6175 + $0x88] sm:$0xff]
    %v6194 = vld [vmem:[%s6175 + $0x90] sm:$0xff]
    %v6195 = vld [vmem:[%s6175 + $0x98] sm:$0xff]
    %v6196 = vld [vmem:[%s6175 + $0xa0] sm:$0xff]
    %v6197 = vld [vmem:[%s6175 + $0xa8] sm:$0xff]
    %v6198 = vld [vmem:[%s6175 + $0xb0] sm:$0xff]
    %v6199 = vld [vmem:[%s6175 + $0xb8] sm:$0xff]
    %v6200 = vld [vmem:[%s6175 + $0xc0] sm:$0xff]
    %v6201 = vld [vmem:[%s6175 + $0xc8] sm:$0xff]
    %v6202 = vld [vmem:[%s6175 + $0xd0] sm:$0xff]
    %v6203 = vld [vmem:[%s6175 + $0xd8] sm:$0xff]
    %v6204 = vld [vmem:[%s6175 + $0xe0] sm:$0xff]
    %v6205 = vld [vmem:[%s6175 + $0xe8] sm:$0xff]
    %v6206 = vld [vmem:[%s6175 + $0xf0] sm:$0xff]
    %v6207 = vld [vmem:[%s6175 + $0xf8] sm:$0xff]
    %v6240 = vunpack.c.l.b16 %v6176
    %v6241 = vunpack.c.h.b16 %v6176
    %v6242 = vunpack.c.l.b16 %v6177
    %v6243 = vunpack.c.h.b16 %v6177
    %v6244 = vunpack.c.l.b16 %v6178
    %v6245 = vunpack.c.h.b16 %v6178
    %v6246 = vunpack.c.l.b16 %v6179
    %v6247 = vunpack.c.h.b16 %v6179
    %v6248 = vunpack.c.l.b16 %v6180
    %v6249 = vunpack.c.h.b16 %v6180
    %v6250 = vunpack.c.l.b16 %v6181
    %v6251 = vunpack.c.h.b16 %v6181
    %v6252 = vunpack.c.l.b16 %v6182
    %v6253 = vunpack.c.h.b16 %v6182
    %v6254 = vunpack.c.l.b16 %v6183
    %v6255 = vunpack.c.h.b16 %v6183
    %v6256 = vunpack.c.l.b16 %v6184
    %v6257 = vunpack.c.h.b16 %v6184
    %v6258 = vunpack.c.l.b16 %v6185
    %v6259 = vunpack.c.h.b16 %v6185
    %v6260 = vunpack.c.l.b16 %v6186
    %v6261 = vunpack.c.h.b16 %v6186
    %v6262 = vunpack.c.l.b16 %v6187
    %v6263 = vunpack.c.h.b16 %v6187
    %v6264 = vunpack.c.l.b16 %v6188
    %v6265 = vunpack.c.h.b16 %v6188
    %v6266 = vunpack.c.l.b16 %v6189
    %v6267 = vunpack.c.h.b16 %v6189
    %v6268 = vunpack.c.l.b16 %v6190
    %v6269 = vunpack.c.h.b16 %v6190
    %v6270 = vunpack.c.l.b16 %v6191
    %v6271 = vunpack.c.h.b16 %v6191
    %v6272 = vunpack.c.l.b16 %v6192
    %v6273 = vunpack.c.h.b16 %v6192
    %v6274 = vunpack.c.l.b16 %v6193
    %v6275 = vunpack.c.h.b16 %v6193
    %v6276 = vunpack.c.l.b16 %v6194
    %v6277 = vunpack.c.h.b16 %v6194
    %v6278 = vunpack.c.l.b16 %v6195
    %v6279 = vunpack.c.h.b16 %v6195
    %v6280 = vunpack.c.l.b16 %v6196
    %v6281 = vunpack.c.h.b16 %v6196
    %v6282 = vunpack.c.l.b16 %v6197
    %v6283 = vunpack.c.h.b16 %v6197
    %v6284 = vunpack.c.l.b16 %v6198
    %v6285 = vunpack.c.h.b16 %v6198
    %v6286 = vunpack.c.l.b16 %v6199
    %v6287 = vunpack.c.h.b16 %v6199
    %v6288 = vunpack.c.l.b16 %v6200
    %v6289 = vunpack.c.h.b16 %v6200
    %v6290 = vunpack.c.l.b16 %v6201
    %v6291 = vunpack.c.h.b16 %v6201
    %v6292 = vunpack.c.l.b16 %v6202
    %v6293 = vunpack.c.h.b16 %v6202
    %v6294 = vunpack.c.l.b16 %v6203
    %v6295 = vunpack.c.h.b16 %v6203
    %v6296 = vunpack.c.l.b16 %v6204
    %v6297 = vunpack.c.h.b16 %v6204
    %v6298 = vunpack.c.l.b16 %v6205
    %v6299 = vunpack.c.h.b16 %v6205
    %v6300 = vunpack.c.l.b16 %v6206
    %v6301 = vunpack.c.h.b16 %v6206
    %v6302 = vunpack.c.l.b16 %v6207
    %v6303 = vunpack.c.h.b16 %v6207
    %v6304 = vpack.c.b16 %v6242, %v6240
    %v6305 = vpack.c.b16 %v6243, %v6241
    %v6306 = vpack.c.b16 %v6246, %v6244
    %v6307 = vpack.c.b16 %v6247, %v6245
    %v6308 = vpack.c.b16 %v6250, %v6248
    %v6309 = vpack.c.b16 %v6251, %v6249
    %v6310 = vpack.c.b16 %v6254, %v6252
    %v6311 = vpack.c.b16 %v6255, %v6253
    %v6312 = vpack.c.b16 %v6258, %v6256
    %v6313 = vpack.c.b16 %v6259, %v6257
    %v6314 = vpack.c.b16 %v6262, %v6260
    %v6315 = vpack.c.b16 %v6263, %v6261
    %v6316 = vpack.c.b16 %v6266, %v6264
    %v6317 = vpack.c.b16 %v6267, %v6265
    %v6318 = vpack.c.b16 %v6270, %v6268
    %v6319 = vpack.c.b16 %v6271, %v6269
    %v6320 = vpack.c.b16 %v6274, %v6272
    %v6321 = vpack.c.b16 %v6275, %v6273
    %v6322 = vpack.c.b16 %v6278, %v6276
    %v6323 = vpack.c.b16 %v6279, %v6277
    %v6324 = vpack.c.b16 %v6282, %v6280
    %v6325 = vpack.c.b16 %v6283, %v6281
    %v6326 = vpack.c.b16 %v6286, %v6284
    %v6327 = vpack.c.b16 %v6287, %v6285
    %v6328 = vpack.c.b16 %v6290, %v6288
    %v6329 = vpack.c.b16 %v6291, %v6289
    %v6330 = vpack.c.b16 %v6294, %v6292
    %v6331 = vpack.c.b16 %v6295, %v6293
    %v6332 = vpack.c.b16 %v6298, %v6296
    %v6333 = vpack.c.b16 %v6299, %v6297
    %v6334 = vpack.c.b16 %v6302, %v6300
    %v6335 = vpack.c.b16 %v6303, %v6301
    %6368 = vmatprep.subr.bf16.mxu0 %v6319
    %6369 = vmatpush1.bf16.msra.mxu0 %v6318
    %6370 = vmatprep.subr.bf16.mxu0 %v6317
    %6371 = vmatpush1.bf16.msra.mxu0 %v6316
    %6372 = vmatprep.subr.bf16.mxu0 %v6315
    %6373 = vmatpush1.bf16.msra.mxu0 %v6314
    %6374 = vmatprep.subr.bf16.mxu0 %v6313
    %6375 = vmatpush1.bf16.msra.mxu0 %v6312
    %6376 = vmatprep.subr.bf16.mxu0 %v6311
    %6377 = vmatpush1.bf16.msra.mxu0 %v6310
    %6378 = vmatprep.subr.bf16.mxu0 %v6309
    %6379 = vmatpush1.bf16.msra.mxu0 %v6308
    %6380 = vmatprep.subr.bf16.mxu0 %v6307
    %6381 = vmatpush1.bf16.msra.mxu0 %v6306
    %6382 = vmatprep.subr.bf16.mxu0 %v6305
    %6383 = vmatpush1.bf16.msra.mxu0 %v6304
    %6384 = vmatprep.subr.bf16.mxu0 %v6335
    %6385 = vmatpush2.bf16.msra.mxu0 %v6334
    %6386 = vmatprep.subr.bf16.mxu0 %v6333
    %6387 = vmatpush2.bf16.msra.mxu0 %v6332
    %6388 = vmatprep.subr.bf16.mxu0 %v6331
    %6389 = vmatpush2.bf16.msra.mxu0 %v6330
    %6390 = vmatprep.subr.bf16.mxu0 %v6329
    %6391 = vmatpush2.bf16.msra.mxu0 %v6328
    %6392 = vmatprep.subr.bf16.mxu0 %v6327
    %6393 = vmatpush2.bf16.msra.mxu0 %v6326
    %6394 = vmatprep.subr.bf16.mxu0 %v6325
    %6395 = vmatpush2.bf16.msra.mxu0 %v6324
    %6396 = vmatprep.subr.bf16.mxu0 %v6323
    %6397 = vmatpush2.bf16.msra.mxu0 %v6322
    %6398 = vmatprep.subr.bf16.mxu0 %v6321
    %6399 = vmatpush2.bf16.msra.mxu0 %v6320
    %6400 = vmatprep.mubr.bf16.mxu0 %v5879
    %6401 = vmatmul.mubr.bf16.gmra.mxu0 %v5878
    %v6402 = vpop.f32.mrf.mxu0
    %v6403 = vadd.f32 0.0, %v6402
    %v6404 = vpop.f32.mrf.mxu0
    %v6405 = vadd.f32 0.0, %v6404
    %v6406 = vpop.f32.mrf.mxu0
    %v6407 = vadd.f32 0.0, %v6406
    %v6408 = vpop.f32.mrf.mxu0
    %v6409 = vadd.f32 0.0, %v6408
    %6410 = vmatprep.mubr.bf16.mxu0 %v5881
    %6411 = vmatmul.mubr.bf16.gmra.mxu0 %v5880
    %v6412 = vpop.f32.mrf.mxu0
    %v6413 = vadd.f32 0.0, %v6412
    %v6414 = vpop.f32.mrf.mxu0
    %v6415 = vadd.f32 0.0, %v6414
    %v6416 = vpop.f32.mrf.mxu0
    %v6417 = vadd.f32 0.0, %v6416
    %v6418 = vpop.f32.mrf.mxu0
    %v6419 = vadd.f32 0.0, %v6418
    %6420 = vmatprep.mubr.bf16.mxu0 %v5883
    %6421 = vmatmul.mubr.bf16.gmra.mxu0 %v5882
    %v6422 = vpop.f32.mrf.mxu0
    %v6423 = vadd.f32 0.0, %v6422
    %v6424 = vpop.f32.mrf.mxu0
    %v6425 = vadd.f32 0.0, %v6424
    %v6426 = vpop.f32.mrf.mxu0
    %v6427 = vadd.f32 0.0, %v6426
    %v6428 = vpop.f32.mrf.mxu0
    %v6429 = vadd.f32 0.0, %v6428
    %6430 = vmatprep.mubr.bf16.mxu0 %v5885
    %6431 = vmatmul.mubr.bf16.gmra.mxu0 %v5884
    %v6432 = vpop.f32.mrf.mxu0
    %v6433 = vadd.f32 0.0, %v6432
    %v6434 = vpop.f32.mrf.mxu0
    %v6435 = vadd.f32 0.0, %v6434
    %v6436 = vpop.f32.mrf.mxu0
    %v6437 = vadd.f32 0.0, %v6436
    %v6438 = vpop.f32.mrf.mxu0
    %v6439 = vadd.f32 0.0, %v6438
    %6440 = vdwg.mxu0
    %s6441 = scalar_lea.vmem %s21, 64
    %v6442 = vld [vmem:[%s6441] sm:$0xf]
    %v6443 = vld [vmem:[%s6441 + $0x4] sm:$0xf]
    %v6444 = vld [vmem:[%s6441 + $0x8] sm:$0xf]
    %v6445 = vld [vmem:[%s6441 + $0xc] sm:$0xf]
    %v6446 = vld [vmem:[%s6441 + $0x10] sm:$0xf]
    %v6447 = vld [vmem:[%s6441 + $0x14] sm:$0xf]
    %v6448 = vld [vmem:[%s6441 + $0x18] sm:$0xf]
    %v6449 = vld [vmem:[%s6441 + $0x1c] sm:$0xf]
    %v6450 = vld [vmem:[%s6441 + $0x20] sm:$0xf]
    %v6451 = vld [vmem:[%s6441 + $0x24] sm:$0xf]
    %v6452 = vld [vmem:[%s6441 + $0x28] sm:$0xf]
    %v6453 = vld [vmem:[%s6441 + $0x2c] sm:$0xf]
    %v6454 = vld [vmem:[%s6441 + $0x30] sm:$0xf]
    %v6455 = vld [vmem:[%s6441 + $0x34] sm:$0xf]
    %v6456 = vld [vmem:[%s6441 + $0x38] sm:$0xf]
    %v6457 = vld [vmem:[%s6441 + $0x3c] sm:$0xf]
    %v6458 = vpack.c.bf16 %v6407, %v6403
    %v6459 = vpack.c.bf16 %v6409, %v6405
    %v6460 = vpack.c.bf16 %v6417, %v6413
    %v6461 = vpack.c.bf16 %v6419, %v6415
    %v6462 = vpack.c.bf16 %v6427, %v6423
    %v6463 = vpack.c.bf16 %v6429, %v6425
    %v6464 = vpack.c.bf16 %v6437, %v6433
    %v6465 = vpack.c.bf16 %v6439, %v6435
    %v6482 = vunpack.c.l.b16 %v6442
    %v6483 = vunpack.c.l.b16 %v6443
    %v6484 = vunpack.c.l.b16 %v6444
    %v6485 = vunpack.c.l.b16 %v6445
    %v6486 = vunpack.c.l.b16 %v6446
    %v6487 = vunpack.c.l.b16 %v6447
    %v6488 = vunpack.c.l.b16 %v6448
    %v6489 = vunpack.c.l.b16 %v6449
    %v6490 = vunpack.c.l.b16 %v6450
    %v6491 = vunpack.c.l.b16 %v6451
    %v6492 = vunpack.c.l.b16 %v6452
    %v6493 = vunpack.c.l.b16 %v6453
    %v6494 = vunpack.c.l.b16 %v6454
    %v6495 = vunpack.c.l.b16 %v6455
    %v6496 = vunpack.c.l.b16 %v6456
    %v6497 = vunpack.c.l.b16 %v6457
    %v6498 = vpack.c.b16 %v6483, %v6482
    %v6499 = vpack.c.b16 %v6485, %v6484
    %v6500 = vpack.c.b16 %v6487, %v6486
    %v6501 = vpack.c.b16 %v6489, %v6488
    %v6502 = vpack.c.b16 %v6491, %v6490
    %v6503 = vpack.c.b16 %v6493, %v6492
    %v6504 = vpack.c.b16 %v6495, %v6494
    %v6505 = vpack.c.b16 %v6497, %v6496
    %vm6506 = vcmask 523264
    %v6508 = vsel %vm6506, %v6498, 0
    %v6511 = vsel %vm6506, %v6499, 0
    %v6514 = vsel %vm6506, %v6500, 0
    %v6517 = vsel %vm6506, %v6501, 0
    %v6520 = vsel %vm6506, %v6502, 0
    %v6523 = vsel %vm6506, %v6503, 0
    %v6526 = vsel %vm6506, %v6504, 0
    %v6529 = vsel %vm6506, %v6505, 0
    %6531 = vmatprep.subr.bf16.mxu0 0
    %6532 = vmatpush1.bf16.msra.mxu0 0
    %6533 = vmatprep.subr.bf16.mxu0 0
    %6534 = vmatpush1.bf16.msra.mxu0 0
    %6535 = vmatprep.subr.bf16.mxu0 0
    %6536 = vmatpush1.bf16.msra.mxu0 0
    %6537 = vmatprep.subr.bf16.mxu0 0
    %6538 = vmatpush1.bf16.msra.mxu0 0
    %6539 = vmatprep.subr.bf16.mxu0 %v6465
    %6540 = vmatpush1.bf16.msra.mxu0 %v6464
    %6541 = vmatprep.subr.bf16.mxu0 %v6463
    %6542 = vmatpush1.bf16.msra.mxu0 %v6462
    %6543 = vmatprep.subr.bf16.mxu0 %v6461
    %6544 = vmatpush1.bf16.msra.mxu0 %v6460
    %6545 = vmatprep.subr.bf16.mxu0 %v6459
    %6546 = vmatpush1.bf16.msra.mxu0 %v6458
    %6547 = vmatprep.subr.bf16.mxu0 0
    %6548 = vmatpush2.bf16.msra.mxu0 0
    %6549 = vmatprep.subr.bf16.mxu0 0
    %6550 = vmatpush2.bf16.msra.mxu0 0
    %6551 = vmatprep.subr.bf16.mxu0 0
    %6552 = vmatpush2.bf16.msra.mxu0 0
    %6553 = vmatprep.subr.bf16.mxu0 0
    %6554 = vmatpush2.bf16.msra.mxu0 0
    %6555 = vmatprep.subr.bf16.mxu0 0
    %6556 = vmatpush2.bf16.msra.mxu0 0
    %6557 = vmatprep.subr.bf16.mxu0 0
    %6558 = vmatpush2.bf16.msra.mxu0 0
    %6559 = vmatprep.subr.bf16.mxu0 0
    %6560 = vmatpush2.bf16.msra.mxu0 0
    %6561 = vmatprep.subr.bf16.mxu0 0
    %6562 = vmatpush2.bf16.msra.mxu0 0
    %6563 = vmatprep.mubr.bf16.mxu0 0
    %6564 = vmatmul.mubr.bf16.gmra.mxu0 %v6508
    %v6565 = vpop.f32.mrf.mxu0
    %v6566 = vadd.f32 0.0, %v6565
    %v6567 = vpop.f32.mrf.mxu0
    %v6568 = vadd.f32 0.0, %v6567
    %v6569 = vpop.f32.mrf.mxu0
    %v6570 = vadd.f32 0.0, %v6569
    %v6571 = vpop.f32.mrf.mxu0
    %v6572 = vadd.f32 0.0, %v6571
    %6573 = vmatprep.mubr.bf16.mxu0 0
    %6574 = vmatmul.mubr.bf16.gmra.mxu0 %v6511
    %v6575 = vpop.f32.mrf.mxu0
    %v6576 = vadd.f32 0.0, %v6575
    %v6577 = vpop.f32.mrf.mxu0
    %v6578 = vadd.f32 0.0, %v6577
    %v6579 = vpop.f32.mrf.mxu0
    %v6580 = vadd.f32 0.0, %v6579
    %v6581 = vpop.f32.mrf.mxu0
    %v6582 = vadd.f32 0.0, %v6581
    %6583 = vmatprep.mubr.bf16.mxu0 0
    %6584 = vmatmul.mubr.bf16.gmra.mxu0 %v6514
    %v6585 = vpop.f32.mrf.mxu0
    %v6586 = vadd.f32 0.0, %v6585
    %v6587 = vpop.f32.mrf.mxu0
    %v6588 = vadd.f32 0.0, %v6587
    %v6589 = vpop.f32.mrf.mxu0
    %v6590 = vadd.f32 0.0, %v6589
    %v6591 = vpop.f32.mrf.mxu0
    %v6592 = vadd.f32 0.0, %v6591
    %6593 = vmatprep.mubr.bf16.mxu0 0
    %6594 = vmatmul.mubr.bf16.gmra.mxu0 %v6517
    %v6595 = vpop.f32.mrf.mxu0
    %v6596 = vadd.f32 0.0, %v6595
    %v6597 = vpop.f32.mrf.mxu0
    %v6598 = vadd.f32 0.0, %v6597
    %v6599 = vpop.f32.mrf.mxu0
    %v6600 = vadd.f32 0.0, %v6599
    %v6601 = vpop.f32.mrf.mxu0
    %v6602 = vadd.f32 0.0, %v6601
    %6603 = vmatprep.mubr.bf16.mxu0 0
    %6604 = vmatmul.mubr.bf16.gmra.mxu0 %v6520
    %v6605 = vpop.f32.mrf.mxu0
    %v6606 = vadd.f32 0.0, %v6605
    %v6607 = vpop.f32.mrf.mxu0
    %v6608 = vadd.f32 0.0, %v6607
    %v6609 = vpop.f32.mrf.mxu0
    %v6610 = vadd.f32 0.0, %v6609
    %v6611 = vpop.f32.mrf.mxu0
    %v6612 = vadd.f32 0.0, %v6611
    %6613 = vmatprep.mubr.bf16.mxu0 0
    %6614 = vmatmul.mubr.bf16.gmra.mxu0 %v6523
    %v6615 = vpop.f32.mrf.mxu0
    %v6616 = vadd.f32 0.0, %v6615
    %v6617 = vpop.f32.mrf.mxu0
    %v6618 = vadd.f32 0.0, %v6617
    %v6619 = vpop.f32.mrf.mxu0
    %v6620 = vadd.f32 0.0, %v6619
    %v6621 = vpop.f32.mrf.mxu0
    %v6622 = vadd.f32 0.0, %v6621
    %6623 = vmatprep.mubr.bf16.mxu0 0
    %6624 = vmatmul.mubr.bf16.gmra.mxu0 %v6526
    %v6625 = vpop.f32.mrf.mxu0
    %v6626 = vadd.f32 0.0, %v6625
    %v6627 = vpop.f32.mrf.mxu0
    %v6628 = vadd.f32 0.0, %v6627
    %v6629 = vpop.f32.mrf.mxu0
    %v6630 = vadd.f32 0.0, %v6629
    %v6631 = vpop.f32.mrf.mxu0
    %v6632 = vadd.f32 0.0, %v6631
    %6633 = vmatprep.mubr.bf16.mxu0 0
    %6634 = vmatmul.mubr.bf16.gmra.mxu0 %v6529
    %v6635 = vpop.f32.mrf.mxu0
    %v6636 = vadd.f32 0.0, %v6635
    %v6637 = vpop.f32.mrf.mxu0
    %v6638 = vadd.f32 0.0, %v6637
    %v6639 = vpop.f32.mrf.mxu0
    %v6640 = vadd.f32 0.0, %v6639
    %v6641 = vpop.f32.mrf.mxu0
    %v6642 = vadd.f32 0.0, %v6641
    %6643 = vdwg.mxu0
    %v6660 = vunpack.c.l.b16 %v6151
    %v6661 = vunpack.c.l.b16 %v6152
    %v6662 = vunpack.c.l.b16 %v6153
    %v6663 = vunpack.c.l.b16 %v6154
    %v6664 = vunpack.c.l.b16 %v6155
    %v6665 = vunpack.c.l.b16 %v6156
    %v6666 = vunpack.c.l.b16 %v6157
    %v6667 = vunpack.c.l.b16 %v6158
    %v6668 = vunpack.c.l.b16 %v6159
    %v6669 = vunpack.c.l.b16 %v6160
    %v6670 = vunpack.c.l.b16 %v6161
    %v6671 = vunpack.c.l.b16 %v6162
    %v6672 = vunpack.c.l.b16 %v6163
    %v6673 = vunpack.c.l.b16 %v6164
    %v6674 = vunpack.c.l.b16 %v6165
    %v6675 = vunpack.c.l.b16 %v6166
    %v6676 = vpack.c.b16 %v6661, %v6660
    %v6677 = vpack.c.b16 %v6663, %v6662
    %v6678 = vpack.c.b16 %v6665, %v6664
    %v6679 = vpack.c.b16 %v6667, %v6666
    %v6680 = vpack.c.b16 %v6669, %v6668
    %v6681 = vpack.c.b16 %v6671, %v6670
    %v6682 = vpack.c.b16 %v6673, %v6672
    %v6683 = vpack.c.b16 %v6675, %v6674
    %v6685 = vsel %vm6506, %v6676, 0
    %v6688 = vsel %vm6506, %v6677, 0
    %v6691 = vsel %vm6506, %v6678, 0
    %v6694 = vsel %vm6506, %v6679, 0
    %v6697 = vsel %vm6506, %v6680, 0
    %v6700 = vsel %vm6506, %v6681, 0
    %v6703 = vsel %vm6506, %v6682, 0
    %v6706 = vsel %vm6506, %v6683, 0
    %6708 = vmatprep.subr.bf16.mxu0 0
    %6709 = vmatpush1.bf16.msra.mxu0 0
    %6710 = vmatprep.subr.bf16.mxu0 0
    %6711 = vmatpush1.bf16.msra.mxu0 0
    %6712 = vmatprep.subr.bf16.mxu0 0
    %6713 = vmatpush1.bf16.msra.mxu0 0
    %6714 = vmatprep.subr.bf16.mxu0 0
    %6715 = vmatpush1.bf16.msra.mxu0 0
    %6716 = vmatprep.subr.bf16.mxu0 %v6174
    %6717 = vmatpush1.bf16.msra.mxu0 %v6173
    %6718 = vmatprep.subr.bf16.mxu0 %v6172
    %6719 = vmatpush1.bf16.msra.mxu0 %v6171
    %6720 = vmatprep.subr.bf16.mxu0 %v6170
    %6721 = vmatpush1.bf16.msra.mxu0 %v6169
    %6722 = vmatprep.subr.bf16.mxu0 %v6168
    %6723 = vmatpush1.bf16.msra.mxu0 %v6167
    %6724 = vmatprep.subr.bf16.mxu0 0
    %6725 = vmatpush2.bf16.msra.mxu0 0
    %6726 = vmatprep.subr.bf16.mxu0 0
    %6727 = vmatpush2.bf16.msra.mxu0 0
    %6728 = vmatprep.subr.bf16.mxu0 0
    %6729 = vmatpush2.bf16.msra.mxu0 0
    %6730 = vmatprep.subr.bf16.mxu0 0
    %6731 = vmatpush2.bf16.msra.mxu0 0
    %6732 = vmatprep.subr.bf16.mxu0 0
    %6733 = vmatpush2.bf16.msra.mxu0 0
    %6734 = vmatprep.subr.bf16.mxu0 0
    %6735 = vmatpush2.bf16.msra.mxu0 0
    %6736 = vmatprep.subr.bf16.mxu0 0
    %6737 = vmatpush2.bf16.msra.mxu0 0
    %6738 = vmatprep.subr.bf16.mxu0 0
    %6739 = vmatpush2.bf16.msra.mxu0 0
    %6740 = vmatprep.mubr.bf16.mxu0 0
    %6741 = vmatmul.mubr.bf16.gmra.mxu0 %v6685
    %v6742 = vpop.f32.mrf.mxu0
    %v6743 = vadd.f32 %v6566, %v6742
    %v6744 = vpop.f32.mrf.mxu0
    %v6745 = vadd.f32 %v6568, %v6744
    %v6746 = vpop.f32.mrf.mxu0
    %v6747 = vadd.f32 %v6570, %v6746
    %v6748 = vpop.f32.mrf.mxu0
    %v6749 = vadd.f32 %v6572, %v6748
    %6750 = vmatprep.mubr.bf16.mxu0 0
    %6751 = vmatmul.mubr.bf16.gmra.mxu0 %v6688
    %v6752 = vpop.f32.mrf.mxu0
    %v6753 = vadd.f32 %v6576, %v6752
    %v6754 = vpop.f32.mrf.mxu0
    %v6755 = vadd.f32 %v6578, %v6754
    %v6756 = vpop.f32.mrf.mxu0
    %v6757 = vadd.f32 %v6580, %v6756
    %v6758 = vpop.f32.mrf.mxu0
    %v6759 = vadd.f32 %v6582, %v6758
    %6760 = vmatprep.mubr.bf16.mxu0 0
    %6761 = vmatmul.mubr.bf16.gmra.mxu0 %v6691
    %v6762 = vpop.f32.mrf.mxu0
    %v6763 = vadd.f32 %v6586, %v6762
    %v6764 = vpop.f32.mrf.mxu0
    %v6765 = vadd.f32 %v6588, %v6764
    %v6766 = vpop.f32.mrf.mxu0
    %v6767 = vadd.f32 %v6590, %v6766
    %v6768 = vpop.f32.mrf.mxu0
    %v6769 = vadd.f32 %v6592, %v6768
    %6770 = vmatprep.mubr.bf16.mxu0 0
    %6771 = vmatmul.mubr.bf16.gmra.mxu0 %v6694
    %v6772 = vpop.f32.mrf.mxu0
    %v6773 = vadd.f32 %v6596, %v6772
    %v6774 = vpop.f32.mrf.mxu0
    %v6775 = vadd.f32 %v6598, %v6774
    %v6776 = vpop.f32.mrf.mxu0
    %v6777 = vadd.f32 %v6600, %v6776
    %v6778 = vpop.f32.mrf.mxu0
    %v6779 = vadd.f32 %v6602, %v6778
    %6780 = vmatprep.mubr.bf16.mxu0 0
    %6781 = vmatmul.mubr.bf16.gmra.mxu0 %v6697
    %v6782 = vpop.f32.mrf.mxu0
    %v6783 = vadd.f32 %v6606, %v6782
    %v6784 = vpop.f32.mrf.mxu0
    %v6785 = vadd.f32 %v6608, %v6784
    %v6786 = vpop.f32.mrf.mxu0
    %v6787 = vadd.f32 %v6610, %v6786
    %v6788 = vpop.f32.mrf.mxu0
    %v6789 = vadd.f32 %v6612, %v6788
    %6790 = vmatprep.mubr.bf16.mxu0 0
    %6791 = vmatmul.mubr.bf16.gmra.mxu0 %v6700
    %v6792 = vpop.f32.mrf.mxu0
    %v6793 = vadd.f32 %v6616, %v6792
    %v6794 = vpop.f32.mrf.mxu0
    %v6795 = vadd.f32 %v6618, %v6794
    %v6796 = vpop.f32.mrf.mxu0
    %v6797 = vadd.f32 %v6620, %v6796
    %v6798 = vpop.f32.mrf.mxu0
    %v6799 = vadd.f32 %v6622, %v6798
    %6800 = vmatprep.mubr.bf16.mxu0 0
    %6801 = vmatmul.mubr.bf16.gmra.mxu0 %v6703
    %v6802 = vpop.f32.mrf.mxu0
    %v6803 = vadd.f32 %v6626, %v6802
    %v6804 = vpop.f32.mrf.mxu0
    %v6805 = vadd.f32 %v6628, %v6804
    %v6806 = vpop.f32.mrf.mxu0
    %v6807 = vadd.f32 %v6630, %v6806
    %v6808 = vpop.f32.mrf.mxu0
    %v6809 = vadd.f32 %v6632, %v6808
    %6810 = vmatprep.mubr.bf16.mxu0 0
    %6811 = vmatmul.mubr.bf16.gmra.mxu0 %v6706
    %v6812 = vpop.f32.mrf.mxu0
    %v6813 = vadd.f32 %v6636, %v6812
    %v6814 = vpop.f32.mrf.mxu0
    %v6815 = vadd.f32 %v6638, %v6814
    %v6816 = vpop.f32.mrf.mxu0
    %v6817 = vadd.f32 %v6640, %v6816
    %v6818 = vpop.f32.mrf.mxu0
    %v6819 = vadd.f32 %v6642, %v6818
    %6820 = vdwg.mxu0
    %s6821 = scalar_lea.vmem %s22, 512
    %v6822 = vld [vmem:[%s6821] sm:$0xff]
    %v6823 = vld [vmem:[%s6821 + $0x8] sm:$0xff]
    %v6824 = vld [vmem:[%s6821 + $0x10] sm:$0xff]
    %v6825 = vld [vmem:[%s6821 + $0x18] sm:$0xff]
    %v6826 = vld [vmem:[%s6821 + $0x20] sm:$0xff]
    %v6827 = vld [vmem:[%s6821 + $0x28] sm:$0xff]
    %v6828 = vld [vmem:[%s6821 + $0x30] sm:$0xff]
    %v6829 = vld [vmem:[%s6821 + $0x38] sm:$0xff]
    %v6830 = vld [vmem:[%s6821 + $0x40] sm:$0xff]
    %v6831 = vld [vmem:[%s6821 + $0x48] sm:$0xff]
    %v6832 = vld [vmem:[%s6821 + $0x50] sm:$0xff]
    %v6833 = vld [vmem:[%s6821 + $0x58] sm:$0xff]
    %v6834 = vld [vmem:[%s6821 + $0x60] sm:$0xff]
    %v6835 = vld [vmem:[%s6821 + $0x68] sm:$0xff]
    %v6836 = vld [vmem:[%s6821 + $0x70] sm:$0xff]
    %v6837 = vld [vmem:[%s6821 + $0x78] sm:$0xff]
    %v6838 = vld [vmem:[%s6821 + $0x80] sm:$0xff]
    %v6839 = vld [vmem:[%s6821 + $0x88] sm:$0xff]
    %v6840 = vld [vmem:[%s6821 + $0x90] sm:$0xff]
    %v6841 = vld [vmem:[%s6821 + $0x98] sm:$0xff]
    %v6842 = vld [vmem:[%s6821 + $0xa0] sm:$0xff]
    %v6843 = vld [vmem:[%s6821 + $0xa8] sm:$0xff]
    %v6844 = vld [vmem:[%s6821 + $0xb0] sm:$0xff]
    %v6845 = vld [vmem:[%s6821 + $0xb8] sm:$0xff]
    %v6846 = vld [vmem:[%s6821 + $0xc0] sm:$0xff]
    %v6847 = vld [vmem:[%s6821 + $0xc8] sm:$0xff]
    %v6848 = vld [vmem:[%s6821 + $0xd0] sm:$0xff]
    %v6849 = vld [vmem:[%s6821 + $0xd8] sm:$0xff]
    %v6850 = vld [vmem:[%s6821 + $0xe0] sm:$0xff]
    %v6851 = vld [vmem:[%s6821 + $0xe8] sm:$0xff]
    %v6852 = vld [vmem:[%s6821 + $0xf0] sm:$0xff]
    %v6853 = vld [vmem:[%s6821 + $0xf8] sm:$0xff]
    %v6886 = vunpack.c.l.b16 %v6822
    %v6887 = vunpack.c.h.b16 %v6822
    %v6888 = vunpack.c.l.b16 %v6823
    %v6889 = vunpack.c.h.b16 %v6823
    %v6890 = vunpack.c.l.b16 %v6824
    %v6891 = vunpack.c.h.b16 %v6824
    %v6892 = vunpack.c.l.b16 %v6825
    %v6893 = vunpack.c.h.b16 %v6825
    %v6894 = vunpack.c.l.b16 %v6826
    %v6895 = vunpack.c.h.b16 %v6826
    %v6896 = vunpack.c.l.b16 %v6827
    %v6897 = vunpack.c.h.b16 %v6827
    %v6898 = vunpack.c.l.b16 %v6828
    %v6899 = vunpack.c.h.b16 %v6828
    %v6900 = vunpack.c.l.b16 %v6829
    %v6901 = vunpack.c.h.b16 %v6829
    %v6902 = vunpack.c.l.b16 %v6830
    %v6903 = vunpack.c.h.b16 %v6830
    %v6904 = vunpack.c.l.b16 %v6831
    %v6905 = vunpack.c.h.b16 %v6831
    %v6906 = vunpack.c.l.b16 %v6832
    %v6907 = vunpack.c.h.b16 %v6832
    %v6908 = vunpack.c.l.b16 %v6833
    %v6909 = vunpack.c.h.b16 %v6833
    %v6910 = vunpack.c.l.b16 %v6834
    %v6911 = vunpack.c.h.b16 %v6834
    %v6912 = vunpack.c.l.b16 %v6835
    %v6913 = vunpack.c.h.b16 %v6835
    %v6914 = vunpack.c.l.b16 %v6836
    %v6915 = vunpack.c.h.b16 %v6836
    %v6916 = vunpack.c.l.b16 %v6837
    %v6917 = vunpack.c.h.b16 %v6837
    %v6918 = vunpack.c.l.b16 %v6838
    %v6919 = vunpack.c.h.b16 %v6838
    %v6920 = vunpack.c.l.b16 %v6839
    %v6921 = vunpack.c.h.b16 %v6839
    %v6922 = vunpack.c.l.b16 %v6840
    %v6923 = vunpack.c.h.b16 %v6840
    %v6924 = vunpack.c.l.b16 %v6841
    %v6925 = vunpack.c.h.b16 %v6841
    %v6926 = vunpack.c.l.b16 %v6842
    %v6927 = vunpack.c.h.b16 %v6842
    %v6928 = vunpack.c.l.b16 %v6843
    %v6929 = vunpack.c.h.b16 %v6843
    %v6930 = vunpack.c.l.b16 %v6844
    %v6931 = vunpack.c.h.b16 %v6844
    %v6932 = vunpack.c.l.b16 %v6845
    %v6933 = vunpack.c.h.b16 %v6845
    %v6934 = vunpack.c.l.b16 %v6846
    %v6935 = vunpack.c.h.b16 %v6846
    %v6936 = vunpack.c.l.b16 %v6847
    %v6937 = vunpack.c.h.b16 %v6847
    %v6938 = vunpack.c.l.b16 %v6848
    %v6939 = vunpack.c.h.b16 %v6848
    %v6940 = vunpack.c.l.b16 %v6849
    %v6941 = vunpack.c.h.b16 %v6849
    %v6942 = vunpack.c.l.b16 %v6850
    %v6943 = vunpack.c.h.b16 %v6850
    %v6944 = vunpack.c.l.b16 %v6851
    %v6945 = vunpack.c.h.b16 %v6851
    %v6946 = vunpack.c.l.b16 %v6852
    %v6947 = vunpack.c.h.b16 %v6852
    %v6948 = vunpack.c.l.b16 %v6853
    %v6949 = vunpack.c.h.b16 %v6853
    %v6950 = vpack.c.b16 %v6888, %v6886
    %v6951 = vpack.c.b16 %v6889, %v6887
    %v6952 = vpack.c.b16 %v6892, %v6890
    %v6953 = vpack.c.b16 %v6893, %v6891
    %v6954 = vpack.c.b16 %v6896, %v6894
    %v6955 = vpack.c.b16 %v6897, %v6895
    %v6956 = vpack.c.b16 %v6900, %v6898
    %v6957 = vpack.c.b16 %v6901, %v6899
    %v6958 = vpack.c.b16 %v6904, %v6902
    %v6959 = vpack.c.b16 %v6905, %v6903
    %v6960 = vpack.c.b16 %v6908, %v6906
    %v6961 = vpack.c.b16 %v6909, %v6907
    %v6962 = vpack.c.b16 %v6912, %v6910
    %v6963 = vpack.c.b16 %v6913, %v6911
    %v6964 = vpack.c.b16 %v6916, %v6914
    %v6965 = vpack.c.b16 %v6917, %v6915
    %v6966 = vpack.c.b16 %v6920, %v6918
    %v6967 = vpack.c.b16 %v6921, %v6919
    %v6968 = vpack.c.b16 %v6924, %v6922
    %v6969 = vpack.c.b16 %v6925, %v6923
    %v6970 = vpack.c.b16 %v6928, %v6926
    %v6971 = vpack.c.b16 %v6929, %v6927
    %v6972 = vpack.c.b16 %v6932, %v6930
    %v6973 = vpack.c.b16 %v6933, %v6931
    %v6974 = vpack.c.b16 %v6936, %v6934
    %v6975 = vpack.c.b16 %v6937, %v6935
    %v6976 = vpack.c.b16 %v6940, %v6938
    %v6977 = vpack.c.b16 %v6941, %v6939
    %v6978 = vpack.c.b16 %v6944, %v6942
    %v6979 = vpack.c.b16 %v6945, %v6943
    %v6980 = vpack.c.b16 %v6948, %v6946
    %v6981 = vpack.c.b16 %v6949, %v6947
    %7014 = vmatprep.subr.bf16.mxu0 %v6965
    %7015 = vmatpush1.bf16.msra.mxu0 %v6964
    %7016 = vmatprep.subr.bf16.mxu0 %v6963
    %7017 = vmatpush1.bf16.msra.mxu0 %v6962
    %7018 = vmatprep.subr.bf16.mxu0 %v6961
    %7019 = vmatpush1.bf16.msra.mxu0 %v6960
    %7020 = vmatprep.subr.bf16.mxu0 %v6959
    %7021 = vmatpush1.bf16.msra.mxu0 %v6958
    %7022 = vmatprep.subr.bf16.mxu0 %v6957
    %7023 = vmatpush1.bf16.msra.mxu0 %v6956
    %7024 = vmatprep.subr.bf16.mxu0 %v6955
    %7025 = vmatpush1.bf16.msra.mxu0 %v6954
    %7026 = vmatprep.subr.bf16.mxu0 %v6953
    %7027 = vmatpush1.bf16.msra.mxu0 %v6952
    %7028 = vmatprep.subr.bf16.mxu0 %v6951
    %7029 = vmatpush1.bf16.msra.mxu0 %v6950
    %7030 = vmatprep.subr.bf16.mxu0 %v6981
    %7031 = vmatpush2.bf16.msra.mxu0 %v6980
    %7032 = vmatprep.subr.bf16.mxu0 %v6979
    %7033 = vmatpush2.bf16.msra.mxu0 %v6978
    %7034 = vmatprep.subr.bf16.mxu0 %v6977
    %7035 = vmatpush2.bf16.msra.mxu0 %v6976
    %7036 = vmatprep.subr.bf16.mxu0 %v6975
    %7037 = vmatpush2.bf16.msra.mxu0 %v6974
    %7038 = vmatprep.subr.bf16.mxu0 %v6973
    %7039 = vmatpush2.bf16.msra.mxu0 %v6972
    %7040 = vmatprep.subr.bf16.mxu0 %v6971
    %7041 = vmatpush2.bf16.msra.mxu0 %v6970
    %7042 = vmatprep.subr.bf16.mxu0 %v6969
    %7043 = vmatpush2.bf16.msra.mxu0 %v6968
    %7044 = vmatprep.subr.bf16.mxu0 %v6967
    %7045 = vmatpush2.bf16.msra.mxu0 %v6966
    %7046 = vmatprep.mubr.bf16.mxu0 %v5879
    %7047 = vmatmul.mubr.bf16.gmra.mxu0 %v5878
    %v7048 = vpop.f32.mrf.mxu0
    %v7049 = vadd.f32 0.0, %v7048
    %v7050 = vpop.f32.mrf.mxu0
    %v7051 = vadd.f32 0.0, %v7050
    %v7052 = vpop.f32.mrf.mxu0
    %v7053 = vadd.f32 0.0, %v7052
    %v7054 = vpop.f32.mrf.mxu0
    %v7055 = vadd.f32 0.0, %v7054
    %7056 = vmatprep.mubr.bf16.mxu0 %v5881
    %7057 = vmatmul.mubr.bf16.gmra.mxu0 %v5880
    %v7058 = vpop.f32.mrf.mxu0
    %v7059 = vadd.f32 0.0, %v7058
    %v7060 = vpop.f32.mrf.mxu0
    %v7061 = vadd.f32 0.0, %v7060
    %v7062 = vpop.f32.mrf.mxu0
    %v7063 = vadd.f32 0.0, %v7062
    %v7064 = vpop.f32.mrf.mxu0
    %v7065 = vadd.f32 0.0, %v7064
    %7066 = vmatprep.mubr.bf16.mxu0 %v5883
    %7067 = vmatmul.mubr.bf16.gmra.mxu0 %v5882
    %v7068 = vpop.f32.mrf.mxu0
    %v7069 = vadd.f32 0.0, %v7068
    %v7070 = vpop.f32.mrf.mxu0
    %v7071 = vadd.f32 0.0, %v7070
    %v7072 = vpop.f32.mrf.mxu0
    %v7073 = vadd.f32 0.0, %v7072
    %v7074 = vpop.f32.mrf.mxu0
    %v7075 = vadd.f32 0.0, %v7074
    %7076 = vmatprep.mubr.bf16.mxu0 %v5885
    %7077 = vmatmul.mubr.bf16.gmra.mxu0 %v5884
    %v7078 = vpop.f32.mrf.mxu0
    %v7079 = vadd.f32 0.0, %v7078
    %v7080 = vpop.f32.mrf.mxu0
    %v7081 = vadd.f32 0.0, %v7080
    %v7082 = vpop.f32.mrf.mxu0
    %v7083 = vadd.f32 0.0, %v7082
    %v7084 = vpop.f32.mrf.mxu0
    %v7085 = vadd.f32 0.0, %v7084
    %7086 = vdwg.mxu0
    %s7087 = scalar_lea.vmem %s21, 128
    %v7088 = vld [vmem:[%s7087] sm:$0xf]
    %v7089 = vld [vmem:[%s7087 + $0x4] sm:$0xf]
    %v7090 = vld [vmem:[%s7087 + $0x8] sm:$0xf]
    %v7091 = vld [vmem:[%s7087 + $0xc] sm:$0xf]
    %v7092 = vld [vmem:[%s7087 + $0x10] sm:$0xf]
    %v7093 = vld [vmem:[%s7087 + $0x14] sm:$0xf]
    %v7094 = vld [vmem:[%s7087 + $0x18] sm:$0xf]
    %v7095 = vld [vmem:[%s7087 + $0x1c] sm:$0xf]
    %v7096 = vld [vmem:[%s7087 + $0x20] sm:$0xf]
    %v7097 = vld [vmem:[%s7087 + $0x24] sm:$0xf]
    %v7098 = vld [vmem:[%s7087 + $0x28] sm:$0xf]
    %v7099 = vld [vmem:[%s7087 + $0x2c] sm:$0xf]
    %v7100 = vld [vmem:[%s7087 + $0x30] sm:$0xf]
    %v7101 = vld [vmem:[%s7087 + $0x34] sm:$0xf]
    %v7102 = vld [vmem:[%s7087 + $0x38] sm:$0xf]
    %v7103 = vld [vmem:[%s7087 + $0x3c] sm:$0xf]
    %v7104 = vpack.c.bf16 %v7053, %v7049
    %v7105 = vpack.c.bf16 %v7055, %v7051
    %v7106 = vpack.c.bf16 %v7063, %v7059
    %v7107 = vpack.c.bf16 %v7065, %v7061
    %v7108 = vpack.c.bf16 %v7073, %v7069
    %v7109 = vpack.c.bf16 %v7075, %v7071
    %v7110 = vpack.c.bf16 %v7083, %v7079
    %v7111 = vpack.c.bf16 %v7085, %v7081
    %v7128 = vunpack.c.l.b16 %v7088
    %v7129 = vunpack.c.l.b16 %v7089
    %v7130 = vunpack.c.l.b16 %v7090
    %v7131 = vunpack.c.l.b16 %v7091
    %v7132 = vunpack.c.l.b16 %v7092
    %v7133 = vunpack.c.l.b16 %v7093
    %v7134 = vunpack.c.l.b16 %v7094
    %v7135 = vunpack.c.l.b16 %v7095
    %v7136 = vunpack.c.l.b16 %v7096
    %v7137 = vunpack.c.l.b16 %v7097
    %v7138 = vunpack.c.l.b16 %v7098
    %v7139 = vunpack.c.l.b16 %v7099
    %v7140 = vunpack.c.l.b16 %v7100
    %v7141 = vunpack.c.l.b16 %v7101
    %v7142 = vunpack.c.l.b16 %v7102
    %v7143 = vunpack.c.l.b16 %v7103
    %v7144 = vpack.c.b16 %v7129, %v7128
    %v7145 = vpack.c.b16 %v7131, %v7130
    %v7146 = vpack.c.b16 %v7133, %v7132
    %v7147 = vpack.c.b16 %v7135, %v7134
    %v7148 = vpack.c.b16 %v7137, %v7136
    %v7149 = vpack.c.b16 %v7139, %v7138
    %v7150 = vpack.c.b16 %v7141, %v7140
    %v7151 = vpack.c.b16 %v7143, %v7142
    %v7153 = vsel %vm6506, %v7144, 0
    %v7156 = vsel %vm6506, %v7145, 0
    %v7159 = vsel %vm6506, %v7146, 0
    %v7162 = vsel %vm6506, %v7147, 0
    %v7165 = vsel %vm6506, %v7148, 0
    %v7168 = vsel %vm6506, %v7149, 0
    %v7171 = vsel %vm6506, %v7150, 0
    %v7174 = vsel %vm6506, %v7151, 0
    %7176 = vmatprep.subr.bf16.mxu0 0
    %7177 = vmatpush1.bf16.msra.mxu0 0
    %7178 = vmatprep.subr.bf16.mxu0 0
    %7179 = vmatpush1.bf16.msra.mxu0 0
    %7180 = vmatprep.subr.bf16.mxu0 0
    %7181 = vmatpush1.bf16.msra.mxu0 0
    %7182 = vmatprep.subr.bf16.mxu0 0
    %7183 = vmatpush1.bf16.msra.mxu0 0
    %7184 = vmatprep.subr.bf16.mxu0 %v7111
    %7185 = vmatpush1.bf16.msra.mxu0 %v7110
    %7186 = vmatprep.subr.bf16.mxu0 %v7109
    %7187 = vmatpush1.bf16.msra.mxu0 %v7108
    %7188 = vmatprep.subr.bf16.mxu0 %v7107
    %7189 = vmatpush1.bf16.msra.mxu0 %v7106
    %7190 = vmatprep.subr.bf16.mxu0 %v7105
    %7191 = vmatpush1.bf16.msra.mxu0 %v7104
    %7192 = vmatprep.subr.bf16.mxu0 0
    %7193 = vmatpush2.bf16.msra.mxu0 0
    %7194 = vmatprep.subr.bf16.mxu0 0
    %7195 = vmatpush2.bf16.msra.mxu0 0
    %7196 = vmatprep.subr.bf16.mxu0 0
    %7197 = vmatpush2.bf16.msra.mxu0 0
    %7198 = vmatprep.subr.bf16.mxu0 0
    %7199 = vmatpush2.bf16.msra.mxu0 0
    %7200 = vmatprep.subr.bf16.mxu0 0
    %7201 = vmatpush2.bf16.msra.mxu0 0
    %7202 = vmatprep.subr.bf16.mxu0 0
    %7203 = vmatpush2.bf16.msra.mxu0 0
    %7204 = vmatprep.subr.bf16.mxu0 0
    %7205 = vmatpush2.bf16.msra.mxu0 0
    %7206 = vmatprep.subr.bf16.mxu0 0
    %7207 = vmatpush2.bf16.msra.mxu0 0
    %7208 = vmatprep.mubr.bf16.mxu0 0
    %7209 = vmatmul.mubr.bf16.gmra.mxu0 %v7153
    %v7210 = vpop.f32.mrf.mxu0
    %v7211 = vadd.f32 0.0, %v7210
    %v7212 = vpop.f32.mrf.mxu0
    %v7213 = vadd.f32 0.0, %v7212
    %v7214 = vpop.f32.mrf.mxu0
    %v7215 = vadd.f32 0.0, %v7214
    %v7216 = vpop.f32.mrf.mxu0
    %v7217 = vadd.f32 0.0, %v7216
    %7218 = vmatprep.mubr.bf16.mxu0 0
    %7219 = vmatmul.mubr.bf16.gmra.mxu0 %v7156
    %v7220 = vpop.f32.mrf.mxu0
    %v7221 = vadd.f32 0.0, %v7220
    %v7222 = vpop.f32.mrf.mxu0
    %v7223 = vadd.f32 0.0, %v7222
    %v7224 = vpop.f32.mrf.mxu0
    %v7225 = vadd.f32 0.0, %v7224
    %v7226 = vpop.f32.mrf.mxu0
    %v7227 = vadd.f32 0.0, %v7226
    %7228 = vmatprep.mubr.bf16.mxu0 0
    %7229 = vmatmul.mubr.bf16.gmra.mxu0 %v7159
    %v7230 = vpop.f32.mrf.mxu0
    %v7231 = vadd.f32 0.0, %v7230
    %v7232 = vpop.f32.mrf.mxu0
    %v7233 = vadd.f32 0.0, %v7232
    %v7234 = vpop.f32.mrf.mxu0
    %v7235 = vadd.f32 0.0, %v7234
    %v7236 = vpop.f32.mrf.mxu0
    %v7237 = vadd.f32 0.0, %v7236
    %7238 = vmatprep.mubr.bf16.mxu0 0
    %7239 = vmatmul.mubr.bf16.gmra.mxu0 %v7162
    %v7240 = vpop.f32.mrf.mxu0
    %v7241 = vadd.f32 0.0, %v7240
    %v7242 = vpop.f32.mrf.mxu0
    %v7243 = vadd.f32 0.0, %v7242
    %v7244 = vpop.f32.mrf.mxu0
    %v7245 = vadd.f32 0.0, %v7244
    %v7246 = vpop.f32.mrf.mxu0
    %v7247 = vadd.f32 0.0, %v7246
    %7248 = vmatprep.mubr.bf16.mxu0 0
    %7249 = vmatmul.mubr.bf16.gmra.mxu0 %v7165
    %v7250 = vpop.f32.mrf.mxu0
    %v7251 = vadd.f32 0.0, %v7250
    %v7252 = vpop.f32.mrf.mxu0
    %v7253 = vadd.f32 0.0, %v7252
    %v7254 = vpop.f32.mrf.mxu0
    %v7255 = vadd.f32 0.0, %v7254
    %v7256 = vpop.f32.mrf.mxu0
    %v7257 = vadd.f32 0.0, %v7256
    %7258 = vmatprep.mubr.bf16.mxu0 0
    %7259 = vmatmul.mubr.bf16.gmra.mxu0 %v7168
    %v7260 = vpop.f32.mrf.mxu0
    %v7261 = vadd.f32 0.0, %v7260
    %v7262 = vpop.f32.mrf.mxu0
    %v7263 = vadd.f32 0.0, %v7262
    %v7264 = vpop.f32.mrf.mxu0
    %v7265 = vadd.f32 0.0, %v7264
    %v7266 = vpop.f32.mrf.mxu0
    %v7267 = vadd.f32 0.0, %v7266
    %7268 = vmatprep.mubr.bf16.mxu0 0
    %7269 = vmatmul.mubr.bf16.gmra.mxu0 %v7171
    %v7270 = vpop.f32.mrf.mxu0
    %v7271 = vadd.f32 0.0, %v7270
    %v7272 = vpop.f32.mrf.mxu0
    %v7273 = vadd.f32 0.0, %v7272
    %v7274 = vpop.f32.mrf.mxu0
    %v7275 = vadd.f32 0.0, %v7274
    %v7276 = vpop.f32.mrf.mxu0
    %v7277 = vadd.f32 0.0, %v7276
    %7278 = vmatprep.mubr.bf16.mxu0 0
    %7279 = vmatmul.mubr.bf16.gmra.mxu0 %v7174
    %v7280 = vpop.f32.mrf.mxu0
    %v7281 = vadd.f32 0.0, %v7280
    %v7282 = vpop.f32.mrf.mxu0
    %v7283 = vadd.f32 0.0, %v7282
    %v7284 = vpop.f32.mrf.mxu0
    %v7285 = vadd.f32 0.0, %v7284
    %v7286 = vpop.f32.mrf.mxu0
    %v7287 = vadd.f32 0.0, %v7286
    %7288 = vdwg.mxu0
    %v7289 = vadd.f32 %v6743, %v7211
    %v7290 = vadd.f32 %v6745, %v7213
    %v7291 = vadd.f32 %v6747, %v7215
    %v7292 = vadd.f32 %v6749, %v7217
    %v7293 = vadd.f32 %v6753, %v7221
    %v7294 = vadd.f32 %v6755, %v7223
    %v7295 = vadd.f32 %v6757, %v7225
    %v7296 = vadd.f32 %v6759, %v7227
    %v7297 = vadd.f32 %v6763, %v7231
    %v7298 = vadd.f32 %v6765, %v7233
    %v7299 = vadd.f32 %v6767, %v7235
    %v7300 = vadd.f32 %v6769, %v7237
    %v7301 = vadd.f32 %v6773, %v7241
    %v7302 = vadd.f32 %v6775, %v7243
    %v7303 = vadd.f32 %v6777, %v7245
    %v7304 = vadd.f32 %v6779, %v7247
    %v7305 = vadd.f32 %v6783, %v7251
    %v7306 = vadd.f32 %v6785, %v7253
    %v7307 = vadd.f32 %v6787, %v7255
    %v7308 = vadd.f32 %v6789, %v7257
    %v7309 = vadd.f32 %v6793, %v7261
    %v7310 = vadd.f32 %v6795, %v7263
    %v7311 = vadd.f32 %v6797, %v7265
    %v7312 = vadd.f32 %v6799, %v7267
    %v7313 = vadd.f32 %v6803, %v7271
    %v7314 = vadd.f32 %v6805, %v7273
    %v7315 = vadd.f32 %v6807, %v7275
    %v7316 = vadd.f32 %v6809, %v7277
    %v7317 = vadd.f32 %v6813, %v7281
    %v7318 = vadd.f32 %v6815, %v7283
    %v7319 = vadd.f32 %v6817, %v7285
    %v7320 = vadd.f32 %v6819, %v7287
    %s7321 = scalar_lea.vmem %s22, 768
    %v7322 = vld [vmem:[%s7321] sm:$0xff]
    %v7323 = vld [vmem:[%s7321 + $0x8] sm:$0xff]
    %v7324 = vld [vmem:[%s7321 + $0x10] sm:$0xff]
    %v7325 = vld [vmem:[%s7321 + $0x18] sm:$0xff]
    %v7326 = vld [vmem:[%s7321 + $0x20] sm:$0xff]
    %v7327 = vld [vmem:[%s7321 + $0x28] sm:$0xff]
    %v7328 = vld [vmem:[%s7321 + $0x30] sm:$0xff]
    %v7329 = vld [vmem:[%s7321 + $0x38] sm:$0xff]
    %v7330 = vld [vmem:[%s7321 + $0x40] sm:$0xff]
    %v7331 = vld [vmem:[%s7321 + $0x48] sm:$0xff]
    %v7332 = vld [vmem:[%s7321 + $0x50] sm:$0xff]
    %v7333 = vld [vmem:[%s7321 + $0x58] sm:$0xff]
    %v7334 = vld [vmem:[%s7321 + $0x60] sm:$0xff]
    %v7335 = vld [vmem:[%s7321 + $0x68] sm:$0xff]
    %v7336 = vld [vmem:[%s7321 + $0x70] sm:$0xff]
    %v7337 = vld [vmem:[%s7321 + $0x78] sm:$0xff]
    %v7338 = vld [vmem:[%s7321 + $0x80] sm:$0xff]
    %v7339 = vld [vmem:[%s7321 + $0x88] sm:$0xff]
    %v7340 = vld [vmem:[%s7321 + $0x90] sm:$0xff]
    %v7341 = vld [vmem:[%s7321 + $0x98] sm:$0xff]
    %v7342 = vld [vmem:[%s7321 + $0xa0] sm:$0xff]
    %v7343 = vld [vmem:[%s7321 + $0xa8] sm:$0xff]
    %v7344 = vld [vmem:[%s7321 + $0xb0] sm:$0xff]
    %v7345 = vld [vmem:[%s7321 + $0xb8] sm:$0xff]
    %v7346 = vld [vmem:[%s7321 + $0xc0] sm:$0xff]
    %v7347 = vld [vmem:[%s7321 + $0xc8] sm:$0xff]
    %v7348 = vld [vmem:[%s7321 + $0xd0] sm:$0xff]
    %v7349 = vld [vmem:[%s7321 + $0xd8] sm:$0xff]
    %v7350 = vld [vmem:[%s7321 + $0xe0] sm:$0xff]
    %v7351 = vld [vmem:[%s7321 + $0xe8] sm:$0xff]
    %v7352 = vld [vmem:[%s7321 + $0xf0] sm:$0xff]
    %v7353 = vld [vmem:[%s7321 + $0xf8] sm:$0xff]
    %v7386 = vunpack.c.l.b16 %v7322
    %v7387 = vunpack.c.h.b16 %v7322
    %v7388 = vunpack.c.l.b16 %v7323
    %v7389 = vunpack.c.h.b16 %v7323
    %v7390 = vunpack.c.l.b16 %v7324
    %v7391 = vunpack.c.h.b16 %v7324
    %v7392 = vunpack.c.l.b16 %v7325
    %v7393 = vunpack.c.h.b16 %v7325
    %v7394 = vunpack.c.l.b16 %v7326
    %v7395 = vunpack.c.h.b16 %v7326
    %v7396 = vunpack.c.l.b16 %v7327
    %v7397 = vunpack.c.h.b16 %v7327
    %v7398 = vunpack.c.l.b16 %v7328
    %v7399 = vunpack.c.h.b16 %v7328
    %v7400 = vunpack.c.l.b16 %v7329
    %v7401 = vunpack.c.h.b16 %v7329
    %v7402 = vunpack.c.l.b16 %v7330
    %v7403 = vunpack.c.h.b16 %v7330
    %v7404 = vunpack.c.l.b16 %v7331
    %v7405 = vunpack.c.h.b16 %v7331
    %v7406 = vunpack.c.l.b16 %v7332
    %v7407 = vunpack.c.h.b16 %v7332
    %v7408 = vunpack.c.l.b16 %v7333
    %v7409 = vunpack.c.h.b16 %v7333
    %v7410 = vunpack.c.l.b16 %v7334
    %v7411 = vunpack.c.h.b16 %v7334
    %v7412 = vunpack.c.l.b16 %v7335
    %v7413 = vunpack.c.h.b16 %v7335
    %v7414 = vunpack.c.l.b16 %v7336
    %v7415 = vunpack.c.h.b16 %v7336
    %v7416 = vunpack.c.l.b16 %v7337
    %v7417 = vunpack.c.h.b16 %v7337
    %v7418 = vunpack.c.l.b16 %v7338
    %v7419 = vunpack.c.h.b16 %v7338
    %v7420 = vunpack.c.l.b16 %v7339
    %v7421 = vunpack.c.h.b16 %v7339
    %v7422 = vunpack.c.l.b16 %v7340
    %v7423 = vunpack.c.h.b16 %v7340
    %v7424 = vunpack.c.l.b16 %v7341
    %v7425 = vunpack.c.h.b16 %v7341
    %v7426 = vunpack.c.l.b16 %v7342
    %v7427 = vunpack.c.h.b16 %v7342
    %v7428 = vunpack.c.l.b16 %v7343
    %v7429 = vunpack.c.h.b16 %v7343
    %v7430 = vunpack.c.l.b16 %v7344
    %v7431 = vunpack.c.h.b16 %v7344
    %v7432 = vunpack.c.l.b16 %v7345
    %v7433 = vunpack.c.h.b16 %v7345
    %v7434 = vunpack.c.l.b16 %v7346
    %v7435 = vunpack.c.h.b16 %v7346
    %v7436 = vunpack.c.l.b16 %v7347
    %v7437 = vunpack.c.h.b16 %v7347
    %v7438 = vunpack.c.l.b16 %v7348
    %v7439 = vunpack.c.h.b16 %v7348
    %v7440 = vunpack.c.l.b16 %v7349
    %v7441 = vunpack.c.h.b16 %v7349
    %v7442 = vunpack.c.l.b16 %v7350
    %v7443 = vunpack.c.h.b16 %v7350
    %v7444 = vunpack.c.l.b16 %v7351
    %v7445 = vunpack.c.h.b16 %v7351
    %v7446 = vunpack.c.l.b16 %v7352
    %v7447 = vunpack.c.h.b16 %v7352
    %v7448 = vunpack.c.l.b16 %v7353
    %v7449 = vunpack.c.h.b16 %v7353
    %v7450 = vpack.c.b16 %v7388, %v7386
    %v7451 = vpack.c.b16 %v7389, %v7387
    %v7452 = vpack.c.b16 %v7392, %v7390
    %v7453 = vpack.c.b16 %v7393, %v7391
    %v7454 = vpack.c.b16 %v7396, %v7394
    %v7455 = vpack.c.b16 %v7397, %v7395
    %v7456 = vpack.c.b16 %v7400, %v7398
    %v7457 = vpack.c.b16 %v7401, %v7399
    %v7458 = vpack.c.b16 %v7404, %v7402
    %v7459 = vpack.c.b16 %v7405, %v7403
    %v7460 = vpack.c.b16 %v7408, %v7406
    %v7461 = vpack.c.b16 %v7409, %v7407
    %v7462 = vpack.c.b16 %v7412, %v7410
    %v7463 = vpack.c.b16 %v7413, %v7411
    %v7464 = vpack.c.b16 %v7416, %v7414
    %v7465 = vpack.c.b16 %v7417, %v7415
    %v7466 = vpack.c.b16 %v7420, %v7418
    %v7467 = vpack.c.b16 %v7421, %v7419
    %v7468 = vpack.c.b16 %v7424, %v7422
    %v7469 = vpack.c.b16 %v7425, %v7423
    %v7470 = vpack.c.b16 %v7428, %v7426
    %v7471 = vpack.c.b16 %v7429, %v7427
    %v7472 = vpack.c.b16 %v7432, %v7430
    %v7473 = vpack.c.b16 %v7433, %v7431
    %v7474 = vpack.c.b16 %v7436, %v7434
    %v7475 = vpack.c.b16 %v7437, %v7435
    %v7476 = vpack.c.b16 %v7440, %v7438
    %v7477 = vpack.c.b16 %v7441, %v7439
    %v7478 = vpack.c.b16 %v7444, %v7442
    %v7479 = vpack.c.b16 %v7445, %v7443
    %v7480 = vpack.c.b16 %v7448, %v7446
    %v7481 = vpack.c.b16 %v7449, %v7447
    %7514 = vmatprep.subr.bf16.mxu0 %v7465
    %7515 = vmatpush1.bf16.msra.mxu0 %v7464
    %7516 = vmatprep.subr.bf16.mxu0 %v7463
    %7517 = vmatpush1.bf16.msra.mxu0 %v7462
    %7518 = vmatprep.subr.bf16.mxu0 %v7461
    %7519 = vmatpush1.bf16.msra.mxu0 %v7460
    %7520 = vmatprep.subr.bf16.mxu0 %v7459
    %7521 = vmatpush1.bf16.msra.mxu0 %v7458
    %7522 = vmatprep.subr.bf16.mxu0 %v7457
    %7523 = vmatpush1.bf16.msra.mxu0 %v7456
    %7524 = vmatprep.subr.bf16.mxu0 %v7455
    %7525 = vmatpush1.bf16.msra.mxu0 %v7454
    %7526 = vmatprep.subr.bf16.mxu0 %v7453
    %7527 = vmatpush1.bf16.msra.mxu0 %v7452
    %7528 = vmatprep.subr.bf16.mxu0 %v7451
    %7529 = vmatpush1.bf16.msra.mxu0 %v7450
    %7530 = vmatprep.subr.bf16.mxu0 %v7481
    %7531 = vmatpush2.bf16.msra.mxu0 %v7480
    %7532 = vmatprep.subr.bf16.mxu0 %v7479
    %7533 = vmatpush2.bf16.msra.mxu0 %v7478
    %7534 = vmatprep.subr.bf16.mxu0 %v7477
    %7535 = vmatpush2.bf16.msra.mxu0 %v7476
    %7536 = vmatprep.subr.bf16.mxu0 %v7475
    %7537 = vmatpush2.bf16.msra.mxu0 %v7474
    %7538 = vmatprep.subr.bf16.mxu0 %v7473
    %7539 = vmatpush2.bf16.msra.mxu0 %v7472
    %7540 = vmatprep.subr.bf16.mxu0 %v7471
    %7541 = vmatpush2.bf16.msra.mxu0 %v7470
    %7542 = vmatprep.subr.bf16.mxu0 %v7469
    %7543 = vmatpush2.bf16.msra.mxu0 %v7468
    %7544 = vmatprep.subr.bf16.mxu0 %v7467
    %7545 = vmatpush2.bf16.msra.mxu0 %v7466
    %7546 = vmatprep.mubr.bf16.mxu0 %v5879
    %7547 = vmatmul.mubr.bf16.gmra.mxu0 %v5878
    %v7548 = vpop.f32.mrf.mxu0
    %v7549 = vadd.f32 0.0, %v7548
    %v7550 = vpop.f32.mrf.mxu0
    %v7551 = vadd.f32 0.0, %v7550
    %v7552 = vpop.f32.mrf.mxu0
    %v7553 = vadd.f32 0.0, %v7552
    %v7554 = vpop.f32.mrf.mxu0
    %v7555 = vadd.f32 0.0, %v7554
    %7556 = vmatprep.mubr.bf16.mxu0 %v5881
    %7557 = vmatmul.mubr.bf16.gmra.mxu0 %v5880
    %v7558 = vpop.f32.mrf.mxu0
    %v7559 = vadd.f32 0.0, %v7558
    %v7560 = vpop.f32.mrf.mxu0
    %v7561 = vadd.f32 0.0, %v7560
    %v7562 = vpop.f32.mrf.mxu0
    %v7563 = vadd.f32 0.0, %v7562
    %v7564 = vpop.f32.mrf.mxu0
    %v7565 = vadd.f32 0.0, %v7564
    %7566 = vmatprep.mubr.bf16.mxu0 %v5883
    %7567 = vmatmul.mubr.bf16.gmra.mxu0 %v5882
    %v7568 = vpop.f32.mrf.mxu0
    %v7569 = vadd.f32 0.0, %v7568
    %v7570 = vpop.f32.mrf.mxu0
    %v7571 = vadd.f32 0.0, %v7570
    %v7572 = vpop.f32.mrf.mxu0
    %v7573 = vadd.f32 0.0, %v7572
    %v7574 = vpop.f32.mrf.mxu0
    %v7575 = vadd.f32 0.0, %v7574
    %7576 = vmatprep.mubr.bf16.mxu0 %v5885
    %7577 = vmatmul.mubr.bf16.gmra.mxu0 %v5884
    %v7578 = vpop.f32.mrf.mxu0
    %v7579 = vadd.f32 0.0, %v7578
    %v7580 = vpop.f32.mrf.mxu0
    %v7581 = vadd.f32 0.0, %v7580
    %v7582 = vpop.f32.mrf.mxu0
    %v7583 = vadd.f32 0.0, %v7582
    %v7584 = vpop.f32.mrf.mxu0
    %v7585 = vadd.f32 0.0, %v7584
    %7586 = vdwg.mxu0
    %s7587 = scalar_lea.vmem %s21, 192
    %v7588 = vld [vmem:[%s7587] sm:$0xf]
    %v7589 = vld [vmem:[%s7587 + $0x4] sm:$0xf]
    %v7590 = vld [vmem:[%s7587 + $0x8] sm:$0xf]
    %v7591 = vld [vmem:[%s7587 + $0xc] sm:$0xf]
    %v7592 = vld [vmem:[%s7587 + $0x10] sm:$0xf]
    %v7593 = vld [vmem:[%s7587 + $0x14] sm:$0xf]
    %v7594 = vld [vmem:[%s7587 + $0x18] sm:$0xf]
    %v7595 = vld [vmem:[%s7587 + $0x1c] sm:$0xf]
    %v7596 = vld [vmem:[%s7587 + $0x20] sm:$0xf]
    %v7597 = vld [vmem:[%s7587 + $0x24] sm:$0xf]
    %v7598 = vld [vmem:[%s7587 + $0x28] sm:$0xf]
    %v7599 = vld [vmem:[%s7587 + $0x2c] sm:$0xf]
    %v7600 = vld [vmem:[%s7587 + $0x30] sm:$0xf]
    %v7601 = vld [vmem:[%s7587 + $0x34] sm:$0xf]
    %v7602 = vld [vmem:[%s7587 + $0x38] sm:$0xf]
    %v7603 = vld [vmem:[%s7587 + $0x3c] sm:$0xf]
    %v7604 = vpack.c.bf16 %v7553, %v7549
    %v7605 = vpack.c.bf16 %v7555, %v7551
    %v7606 = vpack.c.bf16 %v7563, %v7559
    %v7607 = vpack.c.bf16 %v7565, %v7561
    %v7608 = vpack.c.bf16 %v7573, %v7569
    %v7609 = vpack.c.bf16 %v7575, %v7571
    %v7610 = vpack.c.bf16 %v7583, %v7579
    %v7611 = vpack.c.bf16 %v7585, %v7581
    %v7628 = vunpack.c.l.b16 %v7588
    %v7629 = vunpack.c.l.b16 %v7589
    %v7630 = vunpack.c.l.b16 %v7590
    %v7631 = vunpack.c.l.b16 %v7591
    %v7632 = vunpack.c.l.b16 %v7592
    %v7633 = vunpack.c.l.b16 %v7593
    %v7634 = vunpack.c.l.b16 %v7594
    %v7635 = vunpack.c.l.b16 %v7595
    %v7636 = vunpack.c.l.b16 %v7596
    %v7637 = vunpack.c.l.b16 %v7597
    %v7638 = vunpack.c.l.b16 %v7598
    %v7639 = vunpack.c.l.b16 %v7599
    %v7640 = vunpack.c.l.b16 %v7600
    %v7641 = vunpack.c.l.b16 %v7601
    %v7642 = vunpack.c.l.b16 %v7602
    %v7643 = vunpack.c.l.b16 %v7603
    %v7644 = vpack.c.b16 %v7629, %v7628
    %v7645 = vpack.c.b16 %v7631, %v7630
    %v7646 = vpack.c.b16 %v7633, %v7632
    %v7647 = vpack.c.b16 %v7635, %v7634
    %v7648 = vpack.c.b16 %v7637, %v7636
    %v7649 = vpack.c.b16 %v7639, %v7638
    %v7650 = vpack.c.b16 %v7641, %v7640
    %v7651 = vpack.c.b16 %v7643, %v7642
    %v7653 = vsel %vm6506, %v7644, 0
    %v7656 = vsel %vm6506, %v7645, 0
    %v7659 = vsel %vm6506, %v7646, 0
    %v7662 = vsel %vm6506, %v7647, 0
    %v7665 = vsel %vm6506, %v7648, 0
    %v7668 = vsel %vm6506, %v7649, 0
    %v7671 = vsel %vm6506, %v7650, 0
    %v7674 = vsel %vm6506, %v7651, 0
    %7676 = vmatprep.subr.bf16.mxu0 0
    %7677 = vmatpush1.bf16.msra.mxu0 0
    %7678 = vmatprep.subr.bf16.mxu0 0
    %7679 = vmatpush1.bf16.msra.mxu0 0
    %7680 = vmatprep.subr.bf16.mxu0 0
    %7681 = vmatpush1.bf16.msra.mxu0 0
    %7682 = vmatprep.subr.bf16.mxu0 0
    %7683 = vmatpush1.bf16.msra.mxu0 0
    %7684 = vmatprep.subr.bf16.mxu0 %v7611
    %7685 = vmatpush1.bf16.msra.mxu0 %v7610
    %7686 = vmatprep.subr.bf16.mxu0 %v7609
    %7687 = vmatpush1.bf16.msra.mxu0 %v7608
    %7688 = vmatprep.subr.bf16.mxu0 %v7607
    %7689 = vmatpush1.bf16.msra.mxu0 %v7606
    %7690 = vmatprep.subr.bf16.mxu0 %v7605
    %7691 = vmatpush1.bf16.msra.mxu0 %v7604
    %7692 = vmatprep.subr.bf16.mxu0 0
    %7693 = vmatpush2.bf16.msra.mxu0 0
    %7694 = vmatprep.subr.bf16.mxu0 0
    %7695 = vmatpush2.bf16.msra.mxu0 0
    %7696 = vmatprep.subr.bf16.mxu0 0
    %7697 = vmatpush2.bf16.msra.mxu0 0
    %7698 = vmatprep.subr.bf16.mxu0 0
    %7699 = vmatpush2.bf16.msra.mxu0 0
    %7700 = vmatprep.subr.bf16.mxu0 0
    %7701 = vmatpush2.bf16.msra.mxu0 0
    %7702 = vmatprep.subr.bf16.mxu0 0
    %7703 = vmatpush2.bf16.msra.mxu0 0
    %7704 = vmatprep.subr.bf16.mxu0 0
    %7705 = vmatpush2.bf16.msra.mxu0 0
    %7706 = vmatprep.subr.bf16.mxu0 0
    %7707 = vmatpush2.bf16.msra.mxu0 0
    %7708 = vmatprep.mubr.bf16.mxu0 0
    %7709 = vmatmul.mubr.bf16.gmra.mxu0 %v7653
    %v7710 = vpop.f32.mrf.mxu0
    %v7711 = vadd.f32 0.0, %v7710
    %v7712 = vpop.f32.mrf.mxu0
    %v7713 = vadd.f32 0.0, %v7712
    %v7714 = vpop.f32.mrf.mxu0
    %v7715 = vadd.f32 0.0, %v7714
    %v7716 = vpop.f32.mrf.mxu0
    %v7717 = vadd.f32 0.0, %v7716
    %7718 = vmatprep.mubr.bf16.mxu0 0
    %7719 = vmatmul.mubr.bf16.gmra.mxu0 %v7656
    %v7720 = vpop.f32.mrf.mxu0
    %v7721 = vadd.f32 0.0, %v7720
    %v7722 = vpop.f32.mrf.mxu0
    %v7723 = vadd.f32 0.0, %v7722
    %v7724 = vpop.f32.mrf.mxu0
    %v7725 = vadd.f32 0.0, %v7724
    %v7726 = vpop.f32.mrf.mxu0
    %v7727 = vadd.f32 0.0, %v7726
    %7728 = vmatprep.mubr.bf16.mxu0 0
    %7729 = vmatmul.mubr.bf16.gmra.mxu0 %v7659
    %v7730 = vpop.f32.mrf.mxu0
    %v7731 = vadd.f32 0.0, %v7730
    %v7732 = vpop.f32.mrf.mxu0
    %v7733 = vadd.f32 0.0, %v7732
    %v7734 = vpop.f32.mrf.mxu0
    %v7735 = vadd.f32 0.0, %v7734
    %v7736 = vpop.f32.mrf.mxu0
    %v7737 = vadd.f32 0.0, %v7736
    %7738 = vmatprep.mubr.bf16.mxu0 0
    %7739 = vmatmul.mubr.bf16.gmra.mxu0 %v7662
    %v7740 = vpop.f32.mrf.mxu0
    %v7741 = vadd.f32 0.0, %v7740
    %v7742 = vpop.f32.mrf.mxu0
    %v7743 = vadd.f32 0.0, %v7742
    %v7744 = vpop.f32.mrf.mxu0
    %v7745 = vadd.f32 0.0, %v7744
    %v7746 = vpop.f32.mrf.mxu0
    %v7747 = vadd.f32 0.0, %v7746
    %7748 = vmatprep.mubr.bf16.mxu0 0
    %7749 = vmatmul.mubr.bf16.gmra.mxu0 %v7665
    %v7750 = vpop.f32.mrf.mxu0
    %v7751 = vadd.f32 0.0, %v7750
    %v7752 = vpop.f32.mrf.mxu0
    %v7753 = vadd.f32 0.0, %v7752
    %v7754 = vpop.f32.mrf.mxu0
    %v7755 = vadd.f32 0.0, %v7754
    %v7756 = vpop.f32.mrf.mxu0
    %v7757 = vadd.f32 0.0, %v7756
    %7758 = vmatprep.mubr.bf16.mxu0 0
    %7759 = vmatmul.mubr.bf16.gmra.mxu0 %v7668
    %v7760 = vpop.f32.mrf.mxu0
    %v7761 = vadd.f32 0.0, %v7760
    %v7762 = vpop.f32.mrf.mxu0
    %v7763 = vadd.f32 0.0, %v7762
    %v7764 = vpop.f32.mrf.mxu0
    %v7765 = vadd.f32 0.0, %v7764
    %v7766 = vpop.f32.mrf.mxu0
    %v7767 = vadd.f32 0.0, %v7766
    %7768 = vmatprep.mubr.bf16.mxu0 0
    %7769 = vmatmul.mubr.bf16.gmra.mxu0 %v7671
    %v7770 = vpop.f32.mrf.mxu0
    %v7771 = vadd.f32 0.0, %v7770
    %v7772 = vpop.f32.mrf.mxu0
    %v7773 = vadd.f32 0.0, %v7772
    %v7774 = vpop.f32.mrf.mxu0
    %v7775 = vadd.f32 0.0, %v7774
    %v7776 = vpop.f32.mrf.mxu0
    %v7777 = vadd.f32 0.0, %v7776
    %7778 = vmatprep.mubr.bf16.mxu0 0
    %7779 = vmatmul.mubr.bf16.gmra.mxu0 %v7674
    %v7780 = vpop.f32.mrf.mxu0
    %v7781 = vadd.f32 0.0, %v7780
    %v7782 = vpop.f32.mrf.mxu0
    %v7783 = vadd.f32 0.0, %v7782
    %v7784 = vpop.f32.mrf.mxu0
    %v7785 = vadd.f32 0.0, %v7784
    %v7786 = vpop.f32.mrf.mxu0
    %v7787 = vadd.f32 0.0, %v7786
    %7788 = vdwg.mxu0
    %v7789 = vadd.f32 %v7289, %v7711
    %v7790 = vadd.f32 %v7290, %v7713
    %v7791 = vadd.f32 %v7291, %v7715
    %v7792 = vadd.f32 %v7292, %v7717
    %v7793 = vadd.f32 %v7293, %v7721
    %v7794 = vadd.f32 %v7294, %v7723
    %v7795 = vadd.f32 %v7295, %v7725
    %v7796 = vadd.f32 %v7296, %v7727
    %v7797 = vadd.f32 %v7297, %v7731
    %v7798 = vadd.f32 %v7298, %v7733
    %v7799 = vadd.f32 %v7299, %v7735
    %v7800 = vadd.f32 %v7300, %v7737
    %v7801 = vadd.f32 %v7301, %v7741
    %v7802 = vadd.f32 %v7302, %v7743
    %v7803 = vadd.f32 %v7303, %v7745
    %v7804 = vadd.f32 %v7304, %v7747
    %v7805 = vadd.f32 %v7305, %v7751
    %v7806 = vadd.f32 %v7306, %v7753
    %v7807 = vadd.f32 %v7307, %v7755
    %v7808 = vadd.f32 %v7308, %v7757
    %v7809 = vadd.f32 %v7309, %v7761
    %v7810 = vadd.f32 %v7310, %v7763
    %v7811 = vadd.f32 %v7311, %v7765
    %v7812 = vadd.f32 %v7312, %v7767
    %v7813 = vadd.f32 %v7313, %v7771
    %v7814 = vadd.f32 %v7314, %v7773
    %v7815 = vadd.f32 %v7315, %v7775
    %v7816 = vadd.f32 %v7316, %v7777
    %v7817 = vadd.f32 %v7317, %v7781
    %v7818 = vadd.f32 %v7318, %v7783
    %v7819 = vadd.f32 %v7319, %v7785
    %v7820 = vadd.f32 %v7320, %v7787
    %v7821 = vtanh.pop %v7789
    %v7822 = vtanh.pop %v7790
    %v7823 = vtanh.pop %v7791
    %v7824 = vtanh.pop %v7792
    %v7825 = vtanh.pop %v7793
    %v7826 = vtanh.pop %v7794
    %v7827 = vtanh.pop %v7795
    %v7828 = vtanh.pop %v7796
    %v7829 = vtanh.pop %v7797
    %v7830 = vtanh.pop %v7798
    %v7831 = vtanh.pop %v7799
    %v7832 = vtanh.pop %v7800
    %v7833 = vtanh.pop %v7801
    %v7834 = vtanh.pop %v7802
    %v7835 = vtanh.pop %v7803
    %v7836 = vtanh.pop %v7804
    %v7837 = vtanh.pop %v7805
    %v7838 = vtanh.pop %v7806
    %v7839 = vtanh.pop %v7807
    %v7840 = vtanh.pop %v7808
    %v7841 = vtanh.pop %v7809
    %v7842 = vtanh.pop %v7810
    %v7843 = vtanh.pop %v7811
    %v7844 = vtanh.pop %v7812
    %v7845 = vtanh.pop %v7813
    %v7846 = vtanh.pop %v7814
    %v7847 = vtanh.pop %v7815
    %v7848 = vtanh.pop %v7816
    %v7849 = vtanh.pop %v7817
    %v7850 = vtanh.pop %v7818
    %v7851 = vtanh.pop %v7819
    %v7852 = vtanh.pop %v7820
    %7853 = vst [vmem:[%s23] sm:$0xff] %v7821
    %7854 = vst.msk [vmem:[%s23 + $0x8] sm:$0xff] %vm6506, %v7822
    %7855 = vst [vmem:[%s23 + $0x10] sm:$0xff] %v7823
    %7856 = vst.msk [vmem:[%s23 + $0x18] sm:$0xff] %vm6506, %v7824
    %7857 = vst [vmem:[%s23 + $0x20] sm:$0xff] %v7825
    %7858 = vst.msk [vmem:[%s23 + $0x28] sm:$0xff] %vm6506, %v7826
    %7859 = vst [vmem:[%s23 + $0x30] sm:$0xff] %v7827
    %7860 = vst.msk [vmem:[%s23 + $0x38] sm:$0xff] %vm6506, %v7828
    %7861 = vst [vmem:[%s23 + $0x40] sm:$0xff] %v7829
    %7862 = vst.msk [vmem:[%s23 + $0x48] sm:$0xff] %vm6506, %v7830
    %7863 = vst [vmem:[%s23 + $0x50] sm:$0xff] %v7831
    %7864 = vst.msk [vmem:[%s23 + $0x58] sm:$0xff] %vm6506, %v7832
    %7865 = vst [vmem:[%s23 + $0x60] sm:$0xff] %v7833
    %7866 = vst.msk [vmem:[%s23 + $0x68] sm:$0xff] %vm6506, %v7834
    %7867 = vst [vmem:[%s23 + $0x70] sm:$0xff] %v7835
    %7868 = vst.msk [vmem:[%s23 + $0x78] sm:$0xff] %vm6506, %v7836
    %7869 = vst [vmem:[%s23 + $0x80] sm:$0xff] %v7837
    %7870 = vst.msk [vmem:[%s23 + $0x88] sm:$0xff] %vm6506, %v7838
    %7871 = vst [vmem:[%s23 + $0x90] sm:$0xff] %v7839
    %7872 = vst.msk [vmem:[%s23 + $0x98] sm:$0xff] %vm6506, %v7840
    %7873 = vst [vmem:[%s23 + $0xa0] sm:$0xff] %v7841
    %7874 = vst.msk [vmem:[%s23 + $0xa8] sm:$0xff] %vm6506, %v7842
    %7875 = vst [vmem:[%s23 + $0xb0] sm:$0xff] %v7843
    %7876 = vst.msk [vmem:[%s23 + $0xb8] sm:$0xff] %vm6506, %v7844
    %7877 = vst [vmem:[%s23 + $0xc0] sm:$0xff] %v7845
    %7878 = vst.msk [vmem:[%s23 + $0xc8] sm:$0xff] %vm6506, %v7846
    %7879 = vst [vmem:[%s23 + $0xd0] sm:$0xff] %v7847
    %7880 = vst.msk [vmem:[%s23 + $0xd8] sm:$0xff] %vm6506, %v7848
    %7881 = vst [vmem:[%s23 + $0xe0] sm:$0xff] %v7849
    %7882 = vst.msk [vmem:[%s23 + $0xe8] sm:$0xff] %vm6506, %v7850
    %7883 = vst [vmem:[%s23 + $0xf0] sm:$0xff] %v7851
    %7884 = vst.msk [vmem:[%s23 + $0xf8] sm:$0xff] %vm6506, %v7852
    // Predicated region
    $region114: #{model_forward.1} parent=1 // pred_check
      _
    $region115: #{model_forward.1} parent=1 // pred_check_branch
      %7886 = sbr.rel (0) target = $region117
    $region116: #{model_forward.1} parent=1 // pred_region
      _
    $region117: #{model_forward.1} parent=1 // pred_fallthru
      _
    // Predicated region
    $region118: #{model_forward.1} parent=1 // pred_check
      _
    $region119: #{model_forward.1} parent=1 // pred_check_branch
      %7888 = sbr.rel (0) target = $region121
    $region120: #{model_forward.1} parent=1 // pred_region
      _
    $region121: #{model_forward.1} parent=1 // pred_fallthru
      _
    %7889 = vsyncpa [#allocation3], 1
    %7890 = vsyncpa [#allocation5], 1
    %7891 = vsyncpa [#allocation8], 1

</llo_original>
